<compile_context>
chip_gen: v7x
topology: tpu7x:2x2x1
jax: 0.10.0
libtpu: 0.0.40
codegen_flags: <defaults>
</compile_context>

<pallas_src>
import numpy as np
import jax
import jax.numpy as jnp
from jax.experimental import pallas as pl
from jax.experimental.pallas import tpu as pltpu


def _round_up(n, m):
    return ((n + m - 1) // m) * m


def _prelu(v, a):
    # nn.PReLU(): x if x >= 0 else a * x  (computed in f32)
    return jnp.where(v >= 0, v, a * v)


# ---------------------------------------------------------------------------
# Fused kernel: Conv2d(1->7,k6,s2) + PReLU + MaxPool(2,2) + Linear(343,64)
#               + PReLU + Linear(64,28) + concat(x) + 5-layer MLP with PReLUs.
# One grid step == one batch tile of TB rows.
# ---------------------------------------------------------------------------
def kmpnet_kernel(x_ref, obs_ref,
                  wconv_ref, bconv_ref,
                  w1h_ref, b1h_ref, w2h_ref, b2h_ref,
                  w1z_ref, w1x_ref, b1m_ref,
                  w2m_ref, b2m_ref, w3m_ref, b3m_ref,
                  w4m_ref, b4m_ref, w5m_ref, b5m_ref,
                  alphas_ref, o_ref):
    f32 = jnp.float32
    bf16 = jnp.bfloat16

    # Hoist PReLU alpha scalar reads (SMEM) once per grid step.
    a_conv = alphas_ref[0]
    a_head = alphas_ref[1]
    a1 = alphas_ref[2]
    a2 = alphas_ref[3]
    a3 = alphas_ref[4]
    a4 = alphas_ref[5]

    # --- Encoder conv (dense-conv form) + PReLU + 2x2 maxpool ---------------
    # [TB, 1024] @ [1024, 4*384] -> [TB, 1536]; column group d*384 + (c*49 + p)
    # is the conv output at pool offset d, channel c, pooled position p.
    y = jnp.dot(obs_ref[...], wconv_ref[...],
                preferred_element_type=f32) + bconv_ref[...]
    y = _prelu(y, a_conv)
    # MaxPool(2,2) == elementwise max over the 4 pool-offset column groups
    # (static, 128-aligned lane slices -> no relayout).
    pooled = jnp.maximum(jnp.maximum(y[:, 0:384], y[:, 384:768]),
                         jnp.maximum(y[:, 768:1152], y[:, 1152:1536]))   # [TB,384] f32

    # --- Encoder head: Linear(343->64) (K padded to 384) + PReLU + Linear(64->28)
    h = jnp.dot(pooled.astype(bf16), w1h_ref[...],
                preferred_element_type=f32) + b1h_ref[...]               # [TB, 64]
    h = _prelu(h, a_head)
    z = jnp.dot(h.astype(bf16), w2h_ref[...],
                preferred_element_type=f32) + b2h_ref[...]               # [TB, 28]

    # --- MLP: cat((z, x), 1) @ W1 == z @ W1[:28] + x @ W1[28:] ---------------
    h = (jnp.dot(z.astype(bf16), w1z_ref[...], preferred_element_type=f32)
         + jnp.dot(x_ref[...], w1x_ref[...], preferred_element_type=f32)  # x kept f32
         + b1m_ref[...])
    h = _prelu(h, a1)
    # TODO(synk): nn.Dropout layers are identity here (eval/inference semantics).
    h = _prelu(jnp.dot(h.astype(bf16), w2m_ref[...], preferred_element_type=f32)
               + b2m_ref[...], a2)
    h = _prelu(jnp.dot(h.astype(bf16), w3m_ref[...], preferred_element_type=f32)
               + b3m_ref[...], a3)
    h = _prelu(jnp.dot(h.astype(bf16), w4m_ref[...], preferred_element_type=f32)
               + b4m_ref[...], a4)
    o_ref[...] = (jnp.dot(h.astype(bf16), w5m_ref[...], preferred_element_type=f32)
                  + b5m_ref[...])


# ---------------------------------------------------------------------------
# Host-side construction of the expanded ("dense") conv weight & bias.
# Column index = d*384 + c*49 + ph*7 + pw  (d = 2x2-pool offset, 343 padded to 384).
# Row index    = flat input pixel (r*32 + col) of the 32x32 image.
# ---------------------------------------------------------------------------
def _build_dense_conv(conv_w, conv_b, img=32, cp_pad=384):
    conv_w = np.asarray(conv_w, np.float32)        # [7, 1, 6, 6]
    conv_b = np.asarray(conv_b, np.float32)        # [7]
    c_out, _, kh_n, kw_n = conv_w.shape
    p = 7                                          # pooled spatial extent

    D, C, PH, PW, KH, KW = np.meshgrid(
        np.arange(4), np.arange(c_out), np.arange(p), np.arange(p),
        np.arange(kh_n), np.arange(kw_n), indexing="ij")
    dh, dw = D // 2, D % 2
    # input pixel feeding tap (KH,KW) of conv output (2*PH+dh, 2*PW+dw)
    rows = (4 * PH + 2 * dh + KH) * img + (4 * PW + 2 * dw + KW)
    cols = D * cp_pad + C * (p * p) + PH * p + PW

    w_dense = np.zeros((img * img, 4 * cp_pad), np.float32)
    w_dense[rows.ravel(), cols.ravel()] = conv_w[C, 0, KH, KW].ravel()

    b_dense = np.zeros((1, 4 * cp_pad), np.float32)
    Dg, Cg, Pg = np.meshgrid(np.arange(4), np.arange(c_out), np.arange(p * p),
                             indexing="ij")
    b_dense[0, (Dg * cp_pad + Cg * (p * p) + Pg).ravel()] = conv_b[Cg].ravel()

    return (jnp.asarray(w_dense).astype(jnp.bfloat16),
            jnp.asarray(b_dense, dtype=jnp.float32))


# ---------------------------------------------------------------------------
# Parameter init (deterministic, synthetic) in PyTorch conventions + the
# kernel-layout parameters derived from them.
# ---------------------------------------------------------------------------
def init_params(key, total_input_size=4, mlp_input_size=32, output_size=2):
    enc_out = mlp_input_size - total_input_size     # 28
    ks = jax.random.split(key, 9)

    def lin(k, fan_in, fan_out, scale=0.05):
        k_w, k_b = jax.random.split(k)
        w = jax.random.normal(k_w, (fan_out, fan_in), jnp.float32) * scale
        b = jax.random.normal(k_b, (fan_out,), jnp.float32) * scale
        return w, b

    conv_w = jax.random.normal(ks[0], (7, 1, 6, 6), jnp.float32) * 0.05
    conv_b = jax.random.normal(ks[1], (7,), jnp.float32) * 0.05
    w1h, b1h = lin(ks[2], 7 * 7 * 7, 64)            # Linear(343, 64)
    w2h, b2h = lin(ks[3], 64, enc_out)              # Linear(64, 28)
    w1m, b1m = lin(ks[4], mlp_input_size, 512)
    w2m, b2m = lin(ks[5], 512, 256)
    w3m, b3m = lin(ks[6], 256, 128)
    w4m, b4m = lin(ks[7], 128, 64)
    w5m, b5m = lin(ks[8], 64, output_size)

    raw = dict(conv_w=conv_w, conv_b=conv_b, w1h=w1h, b1h=b1h, w2h=w2h, b2h=b2h,
               w1m=w1m, b1m=b1m, w2m=w2m, b2m=b2m, w3m=w3m, b3m=b3m,
               w4m=w4m, b4m=b4m, w5m=w5m, b5m=b5m)

    bf = jnp.bfloat16
    wconv, bconv = _build_dense_conv(conv_w, conv_b)

    # Linear(343,64) weight padded to [384, 64]; rows ordered as PyTorch's
    # (c, h, w) flatten (matches the dense-conv column layout).
    w1h_pad = np.zeros((384, 64), np.float32)
    w1h_pad[:343, :] = np.asarray(w1h, np.float32).T

    w1m_T = np.asarray(w1m, np.float32).T           # [32, 512], rows = cat((z, x), 1)

    kparams = dict(
        wconv=wconv,                                # [1024, 1536] bf16
        bconv=bconv,                                # [1, 1536]    f32
        w1h=jnp.asarray(w1h_pad).astype(bf),        # [384, 64]
        b1h=b1h.reshape(1, -1),
        w2h=w2h.T.astype(bf), b2h=b2h.reshape(1, -1),
        w1z=jnp.asarray(w1m_T[:enc_out]).astype(bf),            # [28, 512]
        w1x=jnp.asarray(w1m_T[enc_out:], dtype=jnp.float32),    # [4, 512] f32 (parity)
        b1m=b1m.reshape(1, -1),
        w2m=w2m.T.astype(bf), b2m=b2m.reshape(1, -1),
        w3m=w3m.T.astype(bf), b3m=b3m.reshape(1, -1),
        w4m=w4m.T.astype(bf), b4m=b4m.reshape(1, -1),
        w5m=w5m.T.astype(bf), b5m=b5m.reshape(1, -1),
        alphas=jnp.full((6,), 0.25, jnp.float32),   # PyTorch PReLU default init
    )
    return raw, kparams


_WEIGHT_NAMES = ("wconv", "bconv", "w1h", "b1h", "w2h", "b2h",
                 "w1z", "w1x", "b1m", "w2m", "b2m", "w3m", "b3m",
                 "w4m", "b4m", "w5m", "b5m")


def _wspec(shape):
    zero_idx = (0,) * len(shape)
    # Full-array block, constant index -> VMEM-resident across grid steps.
    return pl.BlockSpec(tuple(shape), lambda b, _z=zero_idx: _z)


# ---------------------------------------------------------------------------
# KMPNet.forward(x, obs)
# ---------------------------------------------------------------------------
def kmpnet_forward(kparams, x, obs, max_batch_tile=256):
    B, in_size = x.shape
    out_size = kparams["w5m"].shape[1]

    # Batch tile: multiple of 8 (sublane); up to 256 (MXU-friendly on all gens);
    # keep >= 2 grid steps when possible so both v7x TensorCores get work.
    if B <= max_batch_tile:
        TB = _round_up(B, 8)
    else:
        TB = min(max_batch_tile, _round_up((B + 1) // 2, 8))
    B_pad = _round_up(B, TB)

    if B_pad != B:
        x = jnp.pad(x, ((0, B_pad - B), (0, 0)))
        obs = jnp.pad(obs, ((0, B_pad - B), (0, 0), (0, 0), (0, 0)))

    obs_flat = obs.reshape(B_pad, -1).astype(jnp.bfloat16)      # [B_pad, 1024]

    weights = [kparams[n] for n in _WEIGHT_NAMES]
    weight_specs = [_wspec(w.shape) for w in weights]

    out = pl.pallas_call(
        kmpnet_kernel,
        out_shape=jax.ShapeDtypeStruct((B_pad, out_size), jnp.float32),
        grid=(B_pad // TB,),
        in_specs=[
            pl.BlockSpec((TB, in_size), lambda b: (b, 0)),               # x
            pl.BlockSpec((TB, obs_flat.shape[1]), lambda b: (b, 0)),     # flat bf16 image
            *weight_specs,                                               # resident weights
            pl.BlockSpec(memory_space=pltpu.MemorySpace.SMEM),           # PReLU alphas
        ],
        out_specs=pl.BlockSpec((TB, out_size), lambda b: (b, 0)),
        compiler_params=pltpu.CompilerParams(
            dimension_semantics=("parallel",),
            vmem_limit_bytes=32 * 1024 * 1024,   # fits v7x's smaller VMEM too
        ),
    )(x, obs_flat, *weights, kparams["alphas"])

    return out[:B]


# ---------------------------------------------------------------------------
# Pure-JAX reference following the original PyTorch graph (emulates the
# kernel's bf16 rounding of matmul operands; f32 accumulation / elementwise).
# ---------------------------------------------------------------------------
def reference_forward(raw, x, obs, alpha=0.25):
    f32 = jnp.float32
    q = lambda a: a.astype(jnp.bfloat16).astype(f32)
    prelu = lambda v: jnp.where(v >= 0, v, alpha * v)
    B = x.shape[0]

    y = jax.lax.conv(q(obs), q(raw["conv_w"]), (2, 2), "VALID")     # [B,7,14,14]
    y = prelu(y + raw["conv_b"][None, :, None, None])
    y = y.reshape(B, 7, 7, 2, 7, 2).max(axis=(3, 5))                # MaxPool2d(2,2)
    z = y.reshape(B, 343)                                           # (c,h,w) flatten
    h = prelu(q(z) @ q(raw["w1h"].T) + raw["b1h"])
    z = q(h) @ q(raw["w2h"].T) + raw["b2h"]                         # [B, 28]

    n_enc = z.shape[1]
    w1 = raw["w1m"]                                                  # [512, 32]
    h = prelu(q(z) @ q(w1[:, :n_enc].T) + x @ w1[:, n_enc:].T + raw["b1m"])
    h = prelu(q(h) @ q(raw["w2m"].T) + raw["b2m"])
    h = prelu(q(h) @ q(raw["w3m"].T) + raw["b3m"])
    h = prelu(q(h) @ q(raw["w4m"].T) + raw["b4m"])
    return q(h) @ q(raw["w5m"].T) + raw["b5m"]


if __name__ == "__main__":
    key = jax.random.PRNGKey(0)
    kx, kobs, kparam = jax.random.split(key, 3)

    B = 2
    total_input_size, mlp_input_size, output_size = 4, 32, 2   # AE_input_size = 32

    x = jax.random.normal(kx, (B, total_input_size), jnp.float32)
    obs = jax.random.uniform(kobs, (B, 1, 32, 32), jnp.float32)  # NCHW like PyTorch

    raw, kparams = init_params(kparam, total_input_size, mlp_input_size, output_size)

    out = kmpnet_forward(kparams, x, obs)
    jax.block_until_ready(out)

    assert out.shape == (B, output_size) and out.dtype == jnp.float32
    assert bool(jnp.all(jnp.isfinite(out)))

    ref = reference_forward(raw, x, obs)
    assert bool(jnp.allclose(out, ref, atol=5e-3, rtol=5e-2)), (out, ref)

    print("KERNEL_OK")
</pallas_src>

<mosaic_0001>
module attributes {stable_mosaic.version = 11 : i64} {
  func.func @kmpnet_kernel(%arg0: i32, %arg1: memref<8x4xf32, #tpu.memory_space<vmem>>, %arg2: memref<8x1024xbf16, #tpu.memory_space<vmem>>, %arg3: memref<1024x1536xbf16, #tpu.memory_space<vmem>>, %arg4: memref<1x1536xf32, #tpu.memory_space<vmem>>, %arg5: memref<384x64xbf16, #tpu.memory_space<vmem>>, %arg6: memref<1x64xf32, #tpu.memory_space<vmem>>, %arg7: memref<64x28xbf16, #tpu.memory_space<vmem>>, %arg8: memref<1x28xf32, #tpu.memory_space<vmem>>, %arg9: memref<28x512xbf16, #tpu.memory_space<vmem>>, %arg10: memref<4x512xf32, #tpu.memory_space<vmem>>, %arg11: memref<1x512xf32, #tpu.memory_space<vmem>>, %arg12: memref<512x256xbf16, #tpu.memory_space<vmem>>, %arg13: memref<1x256xf32, #tpu.memory_space<vmem>>, %arg14: memref<256x128xbf16, #tpu.memory_space<vmem>>, %arg15: memref<1x128xf32, #tpu.memory_space<vmem>>, %arg16: memref<128x64xbf16, #tpu.memory_space<vmem>>, %arg17: memref<1x64xf32, #tpu.memory_space<vmem>>, %arg18: memref<64x2xbf16, #tpu.memory_space<vmem>>, %arg19: memref<1x2xf32, #tpu.memory_space<vmem>>, %arg20: memref<6xf32, #tpu.memory_space<smem>>, %arg21: memref<8x2xf32, #tpu.memory_space<vmem>>) attributes {dimension_semantics = [#tpu.dimension_semantics<parallel>], iteration_bounds = array<i64: 1>, scalar_prefetch = 0 : i64, scratch_operands = 0 : i64, tpu.core_type = #tpu.core_type<tc>, window_params = [{transform_indices = @transform_0, window_bounds = array<i64: 8, 4>}, {transform_indices = @transform_1, window_bounds = array<i64: 8, 1024>}, {pipeline_mode = #tpu.pipeline_mode<synchronous>, transform_indices = @transform_2, window_bounds = array<i64: 1024, 1536>}, {pipeline_mode = #tpu.pipeline_mode<synchronous>, transform_indices = @transform_3, window_bounds = array<i64: 1, 1536>}, {pipeline_mode = #tpu.pipeline_mode<synchronous>, transform_indices = @transform_4, window_bounds = array<i64: 384, 64>}, {pipeline_mode = #tpu.pipeline_mode<synchronous>, transform_indices = @transform_5, window_bounds = array<i64: 1, 64>}, {pipeline_mode = #tpu.pipeline_mode<synchronous>, transform_indices = @transform_6, window_bounds = array<i64: 64, 28>}, {pipeline_mode = #tpu.pipeline_mode<synchronous>, transform_indices = @transform_7, window_bounds = array<i64: 1, 28>}, {pipeline_mode = #tpu.pipeline_mode<synchronous>, transform_indices = @transform_8, window_bounds = array<i64: 28, 512>}, {pipeline_mode = #tpu.pipeline_mode<synchronous>, transform_indices = @transform_9, window_bounds = array<i64: 4, 512>}, {pipeline_mode = #tpu.pipeline_mode<synchronous>, transform_indices = @transform_10, window_bounds = array<i64: 1, 512>}, {pipeline_mode = #tpu.pipeline_mode<synchronous>, transform_indices = @transform_11, window_bounds = array<i64: 512, 256>}, {pipeline_mode = #tpu.pipeline_mode<synchronous>, transform_indices = @transform_12, window_bounds = array<i64: 1, 256>}, {pipeline_mode = #tpu.pipeline_mode<synchronous>, transform_indices = @transform_13, window_bounds = array<i64: 256, 128>}, {pipeline_mode = #tpu.pipeline_mode<synchronous>, transform_indices = @transform_14, window_bounds = array<i64: 1, 128>}, {pipeline_mode = #tpu.pipeline_mode<synchronous>, transform_indices = @transform_15, window_bounds = array<i64: 128, 64>}, {pipeline_mode = #tpu.pipeline_mode<synchronous>, transform_indices = @transform_16, window_bounds = array<i64: 1, 64>}, {pipeline_mode = #tpu.pipeline_mode<synchronous>, transform_indices = @transform_17, window_bounds = array<i64: 64, 2>}, {pipeline_mode = #tpu.pipeline_mode<synchronous>, transform_indices = @transform_18, window_bounds = array<i64: 1, 2>}, {transform_indices = @transform_19, window_bounds = array<i64: 6>}, {transform_indices = @transform_20, window_bounds = array<i64: 8, 2>}]} {
    %c0 = arith.constant 0 : index
    %0 = memref.load %arg20[%c0] : memref<6xf32, #tpu.memory_space<smem>>
    %c1 = arith.constant 1 : index
    %1 = memref.load %arg20[%c1] : memref<6xf32, #tpu.memory_space<smem>>
    %c2 = arith.constant 2 : index
    %2 = memref.load %arg20[%c2] : memref<6xf32, #tpu.memory_space<smem>>
    %c3 = arith.constant 3 : index
    %3 = memref.load %arg20[%c3] : memref<6xf32, #tpu.memory_space<smem>>
    %c4 = arith.constant 4 : index
    %4 = memref.load %arg20[%c4] : memref<6xf32, #tpu.memory_space<smem>>
    %c5 = arith.constant 5 : index
    %5 = memref.load %arg20[%c5] : memref<6xf32, #tpu.memory_space<smem>>
    %c0_0 = arith.constant 0 : index
    %c0_1 = arith.constant 0 : index
    %6 = vector.load %arg2[%c0_0, %c0_1] : memref<8x1024xbf16, #tpu.memory_space<vmem>>, vector<8x1024xbf16>
    %c0_2 = arith.constant 0 : index
    %c0_3 = arith.constant 0 : index
    %7 = vector.load %arg3[%c0_2, %c0_3] : memref<1024x1536xbf16, #tpu.memory_space<vmem>>, vector<1024x1536xbf16>
    %cst = arith.constant dense<0.000000e+00> : vector<8x1536xf32>
    %8 = tpu.matmul %6, %7, %cst {dimension_numbers = #tpu.dot_dimension_numbers<[1], [0], [0], [1], [0, 0, 1, 1], [], []>} : vector<8x1024xbf16>, vector<1024x1536xbf16>, vector<8x1536xf32> -> vector<8x1536xf32>
    %c0_4 = arith.constant 0 : index
    %c0_5 = arith.constant 0 : index
    %9 = vector.load %arg4[%c0_4, %c0_5] : memref<1x1536xf32, #tpu.memory_space<vmem>>, vector<1x1536xf32>
    %10 = vector.broadcast %9 : vector<1x1536xf32> to vector<8x1536xf32>
    %11 = arith.addf %8, %10 : vector<8x1536xf32>
    %cst_6 = arith.constant 0.000000e+00 : f32
    %12 = vector.broadcast %cst_6 : f32 to vector<8x1536xf32>
    %13 = arith.cmpf oge, %11, %12 : vector<8x1536xf32>
    %14 = vector.broadcast %0 : f32 to vector<8x1536xf32>
    %15 = arith.mulf %14, %11 : vector<8x1536xf32>
    %16 = arith.select %13, %11, %15 : vector<8x1536xi1>, vector<8x1536xf32>
    %17 = vector.extract_strided_slice %16 {offsets = [0, 0], sizes = [8, 384], strides = [1, 1]} : vector<8x1536xf32> to vector<8x384xf32>
    %18 = vector.extract_strided_slice %16 {offsets = [0, 384], sizes = [8, 384], strides = [1, 1]} : vector<8x1536xf32> to vector<8x384xf32>
    %19 = arith.maximumf %17, %18 : vector<8x384xf32>
    %20 = vector.extract_strided_slice %16 {offsets = [0, 768], sizes = [8, 384], strides = [1, 1]} : vector<8x1536xf32> to vector<8x384xf32>
    %21 = vector.extract_strided_slice %16 {offsets = [0, 1152], sizes = [8, 384], strides = [1, 1]} : vector<8x1536xf32> to vector<8x384xf32>
    %22 = arith.maximumf %20, %21 : vector<8x384xf32>
    %23 = arith.maximumf %19, %22 : vector<8x384xf32>
    %24 = arith.truncf %23 : vector<8x384xf32> to vector<8x384xbf16>
    %c0_7 = arith.constant 0 : index
    %c0_8 = arith.constant 0 : index
    %25 = vector.load %arg5[%c0_7, %c0_8] : memref<384x64xbf16, #tpu.memory_space<vmem>>, vector<384x64xbf16>
    %cst_9 = arith.constant dense<0.000000e+00> : vector<8x64xf32>
    %26 = tpu.matmul %24, %25, %cst_9 {dimension_numbers = #tpu.dot_dimension_numbers<[1], [0], [0], [1], [0, 0, 1, 1], [], []>} : vector<8x384xbf16>, vector<384x64xbf16>, vector<8x64xf32> -> vector<8x64xf32>
    %c0_10 = arith.constant 0 : index
    %c0_11 = arith.constant 0 : index
    %27 = vector.load %arg6[%c0_10, %c0_11] : memref<1x64xf32, #tpu.memory_space<vmem>>, vector<1x64xf32>
    %28 = vector.broadcast %27 : vector<1x64xf32> to vector<8x64xf32>
    %29 = arith.addf %26, %28 : vector<8x64xf32>
    %cst_12 = arith.constant 0.000000e+00 : f32
    %30 = vector.broadcast %cst_12 : f32 to vector<8x64xf32>
    %31 = arith.cmpf oge, %29, %30 : vector<8x64xf32>
    %32 = vector.broadcast %1 : f32 to vector<8x64xf32>
    %33 = arith.mulf %32, %29 : vector<8x64xf32>
    %34 = arith.select %31, %29, %33 : vector<8x64xi1>, vector<8x64xf32>
    %35 = arith.truncf %34 : vector<8x64xf32> to vector<8x64xbf16>
    %c0_13 = arith.constant 0 : index
    %c0_14 = arith.constant 0 : index
    %36 = vector.load %arg7[%c0_13, %c0_14] : memref<64x28xbf16, #tpu.memory_space<vmem>>, vector<64x28xbf16>
    %cst_15 = arith.constant dense<0.000000e+00> : vector<8x28xf32>
    %37 = tpu.matmul %35, %36, %cst_15 {dimension_numbers = #tpu.dot_dimension_numbers<[1], [0], [0], [1], [0, 0, 1, 1], [], []>} : vector<8x64xbf16>, vector<64x28xbf16>, vector<8x28xf32> -> vector<8x28xf32>
    %c0_16 = arith.constant 0 : index
    %c0_17 = arith.constant 0 : index
    %38 = vector.load %arg8[%c0_16, %c0_17] : memref<1x28xf32, #tpu.memory_space<vmem>>, vector<1x28xf32>
    %39 = vector.broadcast %38 : vector<1x28xf32> to vector<8x28xf32>
    %40 = arith.addf %37, %39 : vector<8x28xf32>
    %41 = arith.truncf %40 : vector<8x28xf32> to vector<8x28xbf16>
    %c0_18 = arith.constant 0 : index
    %c0_19 = arith.constant 0 : index
    %42 = vector.load %arg9[%c0_18, %c0_19] : memref<28x512xbf16, #tpu.memory_space<vmem>>, vector<28x512xbf16>
    %cst_20 = arith.constant dense<0.000000e+00> : vector<8x512xf32>
    %43 = tpu.matmul %41, %42, %cst_20 {dimension_numbers = #tpu.dot_dimension_numbers<[1], [0], [0], [1], [0, 0, 1, 1], [], []>} : vector<8x28xbf16>, vector<28x512xbf16>, vector<8x512xf32> -> vector<8x512xf32>
    %c0_21 = arith.constant 0 : index
    %c0_22 = arith.constant 0 : index
    %44 = vector.load %arg1[%c0_21, %c0_22] : memref<8x4xf32, #tpu.memory_space<vmem>>, vector<8x4xf32>
    %c0_23 = arith.constant 0 : index
    %c0_24 = arith.constant 0 : index
    %45 = vector.load %arg10[%c0_23, %c0_24] : memref<4x512xf32, #tpu.memory_space<vmem>>, vector<4x512xf32>
    %cst_25 = arith.constant dense<0.000000e+00> : vector<8x512xf32>
    %46 = tpu.matmul %44, %45, %cst_25 {dimension_numbers = #tpu.dot_dimension_numbers<[1], [0], [0], [1], [0, 0, 1, 1], [], []>} : vector<8x4xf32>, vector<4x512xf32>, vector<8x512xf32> -> vector<8x512xf32>
    %47 = arith.addf %43, %46 : vector<8x512xf32>
    %c0_26 = arith.constant 0 : index
    %c0_27 = arith.constant 0 : index
    %48 = vector.load %arg11[%c0_26, %c0_27] : memref<1x512xf32, #tpu.memory_space<vmem>>, vector<1x512xf32>
    %49 = vector.broadcast %48 : vector<1x512xf32> to vector<8x512xf32>
    %50 = arith.addf %47, %49 : vector<8x512xf32>
    %cst_28 = arith.constant 0.000000e+00 : f32
    %51 = vector.broadcast %cst_28 : f32 to vector<8x512xf32>
    %52 = arith.cmpf oge, %50, %51 : vector<8x512xf32>
    %53 = vector.broadcast %2 : f32 to vector<8x512xf32>
    %54 = arith.mulf %53, %50 : vector<8x512xf32>
    %55 = arith.select %52, %50, %54 : vector<8x512xi1>, vector<8x512xf32>
    %56 = arith.truncf %55 : vector<8x512xf32> to vector<8x512xbf16>
    %c0_29 = arith.constant 0 : index
    %c0_30 = arith.constant 0 : index
    %57 = vector.load %arg12[%c0_29, %c0_30] : memref<512x256xbf16, #tpu.memory_space<vmem>>, vector<512x256xbf16>
    %cst_31 = arith.constant dense<0.000000e+00> : vector<8x256xf32>
    %58 = tpu.matmul %56, %57, %cst_31 {dimension_numbers = #tpu.dot_dimension_numbers<[1], [0], [0], [1], [0, 0, 1, 1], [], []>} : vector<8x512xbf16>, vector<512x256xbf16>, vector<8x256xf32> -> vector<8x256xf32>
    %c0_32 = arith.constant 0 : index
    %c0_33 = arith.constant 0 : index
    %59 = vector.load %arg13[%c0_32, %c0_33] : memref<1x256xf32, #tpu.memory_space<vmem>>, vector<1x256xf32>
    %60 = vector.broadcast %59 : vector<1x256xf32> to vector<8x256xf32>
    %61 = arith.addf %58, %60 : vector<8x256xf32>
    %cst_34 = arith.constant 0.000000e+00 : f32
    %62 = vector.broadcast %cst_34 : f32 to vector<8x256xf32>
    %63 = arith.cmpf oge, %61, %62 : vector<8x256xf32>
    %64 = vector.broadcast %3 : f32 to vector<8x256xf32>
    %65 = arith.mulf %64, %61 : vector<8x256xf32>
    %66 = arith.select %63, %61, %65 : vector<8x256xi1>, vector<8x256xf32>
    %67 = arith.truncf %66 : vector<8x256xf32> to vector<8x256xbf16>
    %c0_35 = arith.constant 0 : index
    %c0_36 = arith.constant 0 : index
    %68 = vector.load %arg14[%c0_35, %c0_36] : memref<256x128xbf16, #tpu.memory_space<vmem>>, vector<256x128xbf16>
    %cst_37 = arith.constant dense<0.000000e+00> : vector<8x128xf32>
    %69 = tpu.matmul %67, %68, %cst_37 {dimension_numbers = #tpu.dot_dimension_numbers<[1], [0], [0], [1], [0, 0, 1, 1], [], []>} : vector<8x256xbf16>, vector<256x128xbf16>, vector<8x128xf32> -> vector<8x128xf32>
    %c0_38 = arith.constant 0 : index
    %c0_39 = arith.constant 0 : index
    %70 = vector.load %arg15[%c0_38, %c0_39] : memref<1x128xf32, #tpu.memory_space<vmem>>, vector<1x128xf32>
    %71 = vector.broadcast %70 : vector<1x128xf32> to vector<8x128xf32>
    %72 = arith.addf %69, %71 : vector<8x128xf32>
    %cst_40 = arith.constant 0.000000e+00 : f32
    %73 = vector.broadcast %cst_40 : f32 to vector<8x128xf32>
    %74 = arith.cmpf oge, %72, %73 : vector<8x128xf32>
    %75 = vector.broadcast %4 : f32 to vector<8x128xf32>
    %76 = arith.mulf %75, %72 : vector<8x128xf32>
    %77 = arith.select %74, %72, %76 : vector<8x128xi1>, vector<8x128xf32>
    %78 = arith.truncf %77 : vector<8x128xf32> to vector<8x128xbf16>
    %c0_41 = arith.constant 0 : index
    %c0_42 = arith.constant 0 : index
    %79 = vector.load %arg16[%c0_41, %c0_42] : memref<128x64xbf16, #tpu.memory_space<vmem>>, vector<128x64xbf16>
    %cst_43 = arith.constant dense<0.000000e+00> : vector<8x64xf32>
    %80 = tpu.matmul %78, %79, %cst_43 {dimension_numbers = #tpu.dot_dimension_numbers<[1], [0], [0], [1], [0, 0, 1, 1], [], []>} : vector<8x128xbf16>, vector<128x64xbf16>, vector<8x64xf32> -> vector<8x64xf32>
    %c0_44 = arith.constant 0 : index
    %c0_45 = arith.constant 0 : index
    %81 = vector.load %arg17[%c0_44, %c0_45] : memref<1x64xf32, #tpu.memory_space<vmem>>, vector<1x64xf32>
    %82 = vector.broadcast %81 : vector<1x64xf32> to vector<8x64xf32>
    %83 = arith.addf %80, %82 : vector<8x64xf32>
    %cst_46 = arith.constant 0.000000e+00 : f32
    %84 = vector.broadcast %cst_46 : f32 to vector<8x64xf32>
    %85 = arith.cmpf oge, %83, %84 : vector<8x64xf32>
    %86 = vector.broadcast %5 : f32 to vector<8x64xf32>
    %87 = arith.mulf %86, %83 : vector<8x64xf32>
    %88 = arith.select %85, %83, %87 : vector<8x64xi1>, vector<8x64xf32>
    %89 = arith.truncf %88 : vector<8x64xf32> to vector<8x64xbf16>
    %c0_47 = arith.constant 0 : index
    %c0_48 = arith.constant 0 : index
    %90 = vector.load %arg18[%c0_47, %c0_48] : memref<64x2xbf16, #tpu.memory_space<vmem>>, vector<64x2xbf16>
    %cst_49 = arith.constant dense<0.000000e+00> : vector<8x2xf32>
    %91 = tpu.matmul %89, %90, %cst_49 {dimension_numbers = #tpu.dot_dimension_numbers<[1], [0], [0], [1], [0, 0, 1, 1], [], []>} : vector<8x64xbf16>, vector<64x2xbf16>, vector<8x2xf32> -> vector<8x2xf32>
    %c0_50 = arith.constant 0 : index
    %c0_51 = arith.constant 0 : index
    %92 = vector.load %arg19[%c0_50, %c0_51] : memref<1x2xf32, #tpu.memory_space<vmem>>, vector<1x2xf32>
    %93 = vector.broadcast %92 : vector<1x2xf32> to vector<8x2xf32>
    %94 = arith.addf %91, %93 : vector<8x2xf32>
    %c0_52 = arith.constant 0 : index
    %c0_53 = arith.constant 0 : index
    %95 = vector.load %arg21[%c0_52, %c0_53] : memref<8x2xf32, #tpu.memory_space<vmem>>, vector<8x2xf32>
    tpu.vector_store %arg21[%c0_52, %c0_53], %94 {strides = array<i32>} : memref<8x2xf32, #tpu.memory_space<vmem>>, vector<8x2xf32>,
    return
  }
  func.func @transform_0(%arg0: i32) -> (i32, i32) {
    %c0_i32 = arith.constant 0 : i32
    %c0_i32_0 = arith.constant 0 : i32
    return %arg0, %c0_i32 : i32, i32
  }
  func.func @transform_1(%arg0: i32) -> (i32, i32) {
    %c0_i32 = arith.constant 0 : i32
    %c0_i32_0 = arith.constant 0 : i32
    return %arg0, %c0_i32 : i32, i32
  }
  func.func @transform_2(%arg0: i32) -> (i32, i32) {
    %c0_i32 = arith.constant 0 : i32
    %c0_i32_0 = arith.constant 0 : i32
    %c0_i32_1 = arith.constant 0 : i32
    return %c0_i32, %c0_i32_0 : i32, i32
  }
  func.func @transform_3(%arg0: i32) -> (i32, i32) {
    %c0_i32 = arith.constant 0 : i32
    %c0_i32_0 = arith.constant 0 : i32
    %c0_i32_1 = arith.constant 0 : i32
    return %c0_i32, %c0_i32_0 : i32, i32
  }
  func.func @transform_4(%arg0: i32) -> (i32, i32) {
    %c0_i32 = arith.constant 0 : i32
    %c0_i32_0 = arith.constant 0 : i32
    %c0_i32_1 = arith.constant 0 : i32
    return %c0_i32, %c0_i32_0 : i32, i32
  }
  func.func @transform_5(%arg0: i32) -> (i32, i32) {
    %c0_i32 = arith.constant 0 : i32
    %c0_i32_0 = arith.constant 0 : i32
    %c0_i32_1 = arith.constant 0 : i32
    return %c0_i32, %c0_i32_0 : i32, i32
  }
  func.func @transform_6(%arg0: i32) -> (i32, i32) {
    %c0_i32 = arith.constant 0 : i32
    %c0_i32_0 = arith.constant 0 : i32
    %c0_i32_1 = arith.constant 0 : i32
    return %c0_i32, %c0_i32_0 : i32, i32
  }
  func.func @transform_7(%arg0: i32) -> (i32, i32) {
    %c0_i32 = arith.constant 0 : i32
    %c0_i32_0 = arith.constant 0 : i32
    %c0_i32_1 = arith.constant 0 : i32
    return %c0_i32, %c0_i32_0 : i32, i32
  }
  func.func @transform_8(%arg0: i32) -> (i32, i32) {
    %c0_i32 = arith.constant 0 : i32
    %c0_i32_0 = arith.constant 0 : i32
    %c0_i32_1 = arith.constant 0 : i32
    return %c0_i32, %c0_i32_0 : i32, i32
  }
  func.func @transform_9(%arg0: i32) -> (i32, i32) {
    %c0_i32 = arith.constant 0 : i32
    %c0_i32_0 = arith.constant 0 : i32
    %c0_i32_1 = arith.constant 0 : i32
    return %c0_i32, %c0_i32_0 : i32, i32
  }
  func.func @transform_10(%arg0: i32) -> (i32, i32) {
    %c0_i32 = arith.constant 0 : i32
    %c0_i32_0 = arith.constant 0 : i32
    %c0_i32_1 = arith.constant 0 : i32
    return %c0_i32, %c0_i32_0 : i32, i32
  }
  func.func @transform_11(%arg0: i32) -> (i32, i32) {
    %c0_i32 = arith.constant 0 : i32
    %c0_i32_0 = arith.constant 0 : i32
    %c0_i32_1 = arith.constant 0 : i32
    return %c0_i32, %c0_i32_0 : i32, i32
  }
  func.func @transform_12(%arg0: i32) -> (i32, i32) {
    %c0_i32 = arith.constant 0 : i32
    %c0_i32_0 = arith.constant 0 : i32
    %c0_i32_1 = arith.constant 0 : i32
    return %c0_i32, %c0_i32_0 : i32, i32
  }
  func.func @transform_13(%arg0: i32) -> (i32, i32) {
    %c0_i32 = arith.constant 0 : i32
    %c0_i32_0 = arith.constant 0 : i32
    %c0_i32_1 = arith.constant 0 : i32
    return %c0_i32, %c0_i32_0 : i32, i32
  }
  func.func @transform_14(%arg0: i32) -> (i32, i32) {
    %c0_i32 = arith.constant 0 : i32
    %c0_i32_0 = arith.constant 0 : i32
    %c0_i32_1 = arith.constant 0 : i32
    return %c0_i32, %c0_i32_0 : i32, i32
  }
  func.func @transform_15(%arg0: i32) -> (i32, i32) {
    %c0_i32 = arith.constant 0 : i32
    %c0_i32_0 = arith.constant 0 : i32
    %c0_i32_1 = arith.constant 0 : i32
    return %c0_i32, %c0_i32_0 : i32, i32
  }
  func.func @transform_16(%arg0: i32) -> (i32, i32) {
    %c0_i32 = arith.constant 0 : i32
    %c0_i32_0 = arith.constant 0 : i32
    %c0_i32_1 = arith.constant 0 : i32
    return %c0_i32, %c0_i32_0 : i32, i32
  }
  func.func @transform_17(%arg0: i32) -> (i32, i32) {
    %c0_i32 = arith.constant 0 : i32
    %c0_i32_0 = arith.constant 0 : i32
    %c0_i32_1 = arith.constant 0 : i32
    return %c0_i32, %c0_i32_0 : i32, i32
  }
  func.func @transform_18(%arg0: i32) -> (i32, i32) {
    %c0_i32 = arith.constant 0 : i32
    %c0_i32_0 = arith.constant 0 : i32
    %c0_i32_1 = arith.constant 0 : i32
    return %c0_i32, %c0_i32_0 : i32, i32
  }
  func.func @transform_19(%arg0: i32) -> i32 {
    %c0_i32 = arith.constant 0 : i32
    %c0_i32_0 = arith.constant 0 : i32
    return %c0_i32 : i32
  }
  func.func @transform_20(%arg0: i32) -> (i32, i32) {
    %c0_i32 = arith.constant 0 : i32
    %c0_i32_0 = arith.constant 0 : i32
    return %arg0, %c0_i32 : i32, i32
  }
}

</mosaic_0001>

<llo_original>
// kernel: tpu_custom_call.1
$region0: #{tpu_custom_call.1}
  #allocation0 [shape = 'u32[]', space=smem, size = 0x4, offset = 0x4, fixed_abs, tag = 'smem constant byte address 0x4 - core index']
  #allocation1 [shape = 'u32[144,128]{1,0:T(1,128)}', space=vmem, size = 0x12000, scoped, tag = 'internal scratch']
  %s0 = inlined_call_operand.vmem [shape: f32[8,4], index: 0, kind: input, shape index: {}]
  %s1 = inlined_call_operand.hbm [shape: bf16[8,1024], index: 1, kind: input, shape index: {}]
  %s2 = inlined_call_operand.hbm [shape: bf16[1024,1536], index: 2, kind: input, shape index: {}]
  %s3 = inlined_call_operand.hbm [shape: f32[1,1536], index: 3, kind: input, shape index: {}]
  %s4 = inlined_call_operand.vmem [shape: bf16[384,64], index: 4, kind: input, shape index: {}]
  %s5 = inlined_call_operand.hbm [shape: f32[1,64], index: 5, kind: input, shape index: {}]
  %s6 = inlined_call_operand.vmem [shape: bf16[64,28], index: 6, kind: input, shape index: {}]
  %s7 = inlined_call_operand.hbm [shape: f32[1,28], index: 7, kind: input, shape index: {}]
  %s8 = inlined_call_operand.hbm [shape: bf16[28,512], index: 8, kind: input, shape index: {}]
  %s9 = inlined_call_operand.hbm [shape: f32[4,512], index: 9, kind: input, shape index: {}]
  %s10 = inlined_call_operand.hbm [shape: f32[1,512], index: 10, kind: input, shape index: {}]
  %s11 = inlined_call_operand.hbm [shape: bf16[512,256], index: 11, kind: input, shape index: {}]
  %s12 = inlined_call_operand.hbm [shape: f32[1,256], index: 12, kind: input, shape index: {}]
  %s13 = inlined_call_operand.hbm [shape: bf16[256,128], index: 13, kind: input, shape index: {}]
  %s14 = inlined_call_operand.hbm [shape: f32[1,128], index: 14, kind: input, shape index: {}]
  %s15 = inlined_call_operand.vmem [shape: bf16[128,64], index: 15, kind: input, shape index: {}]
  %s16 = inlined_call_operand.hbm [shape: f32[1,64], index: 16, kind: input, shape index: {}]
  %s17 = inlined_call_operand.vmem [shape: bf16[64,2], index: 17, kind: input, shape index: {}]
  %s18 = inlined_call_operand.hbm [shape: f32[1,2], index: 18, kind: input, shape index: {}]
  %s19 = inlined_call_operand.hbm [shape: f32[6], index: 19, kind: input, shape index: {}]
  %s20 = inlined_call_operand.vmem [shape: f32[8,2], index: 20, kind: output, shape index: {}]
  %s21 = sld [smem:[#allocation0]]
  $region150: #{tpu_custom_call.1} parent=0
    _
  %s23 = ssub.s32 1, %s21
  %s24 = scalar_select 0, %s23, %s21
  $region1: #{tpu_custom_call.1} parent=0
    #allocation2 [shape = 'u8[16384]{0}', space=vmem, size = 0x4000, scoped, tag = 'input window, operand 1, single buffered']
    #allocation3 [shape = 's32[1]{0}', space=sflag, size = 0x4, scoped, tag = 'scoped memory for tpu_custom_call.1']
    #allocation4 [shape = 's32[1]{0}', space=sflag, size = 0x4, scoped, tag = 'scoped memory for tpu_custom_call.1']
    #allocation5 [shape = 'u8[3145728]{0}', space=vmem, size = 0x300000, scoped, tag = 'input window, operand 2, single buffered']
    #allocation6 [shape = 's32[1]{0}', space=sflag, size = 0x4, scoped, tag = 'scoped memory for tpu_custom_call.1']
    #allocation7 [shape = 'u8[6144]{0}', space=vmem, size = 0x1800, scoped, tag = 'input window, operand 3, single buffered']
    #allocation8 [shape = 'u8[512]{0}', space=vmem, size = 0x400, scoped, tag = 'input window, operand 5, single buffered']
    #allocation9 [shape = 's32[1]{0}', space=sflag, size = 0x4, scoped, tag = 'scoped memory for tpu_custom_call.1']
    #allocation10 [shape = 'u8[512]{0}', space=vmem, size = 0x400, scoped, tag = 'input window, operand 7, single buffered']
    #allocation11 [shape = 'u8[32768]{0}', space=vmem, size = 0x8000, scoped, tag = 'input window, operand 8, single buffered']
    #allocation12 [shape = 's32[1]{0}', space=sflag, size = 0x4, scoped, tag = 'scoped memory for tpu_custom_call.1']
    #allocation13 [shape = 'u8[8192]{0}', space=vmem, size = 0x2000, scoped, tag = 'input window, operand 9, single buffered']
    #allocation14 [shape = 'u8[2048]{0}', space=vmem, size = 0x800, scoped, tag = 'input window, operand 10, single buffered']
    #allocation15 [shape = 's32[1]{0}', space=sflag, size = 0x4, scoped, tag = 'scoped memory for tpu_custom_call.1']
    #allocation16 [shape = 'u8[262144]{0}', space=vmem, size = 0x40000, scoped, tag = 'input window, operand 11, single buffered']
    #allocation17 [shape = 'u8[1024]{0}', space=vmem, size = 0x400, scoped, tag = 'input window, operand 12, single buffered']
    #allocation18 [shape = 's32[1]{0}', space=sflag, size = 0x4, scoped, tag = 'scoped memory for tpu_custom_call.1']
    #allocation19 [shape = 'u8[65536]{0}', space=vmem, size = 0x10000, scoped, tag = 'input window, operand 13, single buffered']
    #allocation20 [shape = 'u8[512]{0}', space=vmem, size = 0x400, scoped, tag = 'input window, operand 14, single buffered']
    #allocation21 [shape = 's32[1]{0}', space=sflag, size = 0x4, scoped, tag = 'scoped memory for tpu_custom_call.1']
    #allocation22 [shape = 'u8[512]{0}', space=vmem, size = 0x400, scoped, tag = 'input window, operand 16, single buffered']
    #allocation23 [shape = 'u8[512]{0}', space=vmem, size = 0x400, scoped, tag = 'input window, operand 18, single buffered']
    #allocation24 [shape = 's32[1]{0}', space=sflag, size = 0x4, scoped, tag = 'scoped memory for tpu_custom_call.1']
    #allocation25 [shape = 'u8[512]{0}', space=smem, size = 0x200, scoped, tag = 'input window, operand 19, single buffered']
    %25 = vsyncpa [#allocation3], 0
    %26 = vsyncpa [#allocation6], 0
    %27 = vsyncpa [#allocation9], 0
    %28 = vsyncpa [#allocation12], 0
    %29 = vsyncpa [#allocation15], 0
    %30 = vsyncpa [#allocation18], 0
    %31 = vsyncpa [#allocation21], 0
    %32 = vsyncpa [#allocation24], 0
    %33 = vsyncpa [#allocation4], 0
    // Predicated region
    $region2: #{tpu_custom_call.1} parent=1 // pred_check
      _
    $region3: #{tpu_custom_call.1} parent=1 // pred_check_branch
      %35 = sbr.rel (0) target = $region5
    $region4: #{tpu_custom_call.1} parent=1 // pred_region
      _
    $region5: #{tpu_custom_call.1} parent=1 // pred_fallthru
      _
    // Predicated region
    $region6: #{tpu_custom_call.1} parent=1 // pred_check
      _
    $region7: #{tpu_custom_call.1} parent=1 // pred_check_branch
      %37 = sbr.rel (0) target = $region9
    $region8: #{tpu_custom_call.1} parent=1 // pred_region
      %s39 = ssub.s32 512, 512
      %40 = vsyncadd [#allocation3], %s39
      %s42 = sshll.u32 [#allocation2], 4
      %s43 = int_to_ptr.vmem [resolvable:$true] %s42
      %45 = dma.hbm_to_vmem [thread:$0]  %s1, 512, %s43, [#allocation3]
    $region9: #{tpu_custom_call.1} parent=1 // pred_fallthru
      _
    // Predicated region
    $region10: #{tpu_custom_call.1} parent=1 // pred_check
      _
    $region11: #{tpu_custom_call.1} parent=1 // pred_check_branch
      %47 = sbr.rel (0) target = $region13
    $region12: #{tpu_custom_call.1} parent=1 // pred_region
      %s49 = ssub.s32 98304, 98304
      %50 = vsyncadd [#allocation6], %s49
      %s51 = sshll.u32 [#allocation5], 4
      %s52 = int_to_ptr.vmem [resolvable:$true] %s51
      %57 = dma.hbm_to_vmem [thread:$0]  %s2, 98304, %s52, [#allocation6], 768, 768, 48
    $region13: #{tpu_custom_call.1} parent=1 // pred_fallthru
      _
    // Predicated region
    $region14: #{tpu_custom_call.1} parent=1 // pred_check
      _
    $region15: #{tpu_custom_call.1} parent=1 // pred_check_branch
      %59 = sbr.rel (0) target = $region17
    $region16: #{tpu_custom_call.1} parent=1 // pred_region
      %s61 = ssub.s32 192, 192
      %62 = vsyncadd [#allocation6], %s61
      %s64 = sshll.u32 [#allocation7], 4
      %s65 = int_to_ptr.vmem [resolvable:$true] %s64
      %67 = dma.hbm_to_vmem [thread:$0]  %s3, 192, %s65, [#allocation6]
    $region17: #{tpu_custom_call.1} parent=1 // pred_fallthru
      _
    // Predicated region
    $region18: #{tpu_custom_call.1} parent=1 // pred_check
      _
    $region19: #{tpu_custom_call.1} parent=1 // pred_check_branch
      %69 = sbr.rel (0) target = $region21
    $region20: #{tpu_custom_call.1} parent=1 // pred_region
      _
    $region21: #{tpu_custom_call.1} parent=1 // pred_fallthru
      _
    // Predicated region
    $region22: #{tpu_custom_call.1} parent=1 // pred_check
      _
    $region23: #{tpu_custom_call.1} parent=1 // pred_check_branch
      %71 = sbr.rel (0) target = $region25
    $region24: #{tpu_custom_call.1} parent=1 // pred_region
      %s73 = ssub.s32 16, 16
      %74 = vsyncadd [#allocation9], %s73
      %s76 = sshll.u32 [#allocation8], 4
      %s77 = int_to_ptr.vmem [resolvable:$true] %s76
      %79 = dma.hbm_to_vmem [thread:$0]  %s5, 16, %s77, [#allocation9]
    $region25: #{tpu_custom_call.1} parent=1 // pred_fallthru
      _
    // Predicated region
    $region26: #{tpu_custom_call.1} parent=1 // pred_check
      _
    $region27: #{tpu_custom_call.1} parent=1 // pred_check_branch
      %81 = sbr.rel (0) target = $region29
    $region28: #{tpu_custom_call.1} parent=1 // pred_region
      _
    $region29: #{tpu_custom_call.1} parent=1 // pred_fallthru
      _
    // Predicated region
    $region30: #{tpu_custom_call.1} parent=1 // pred_check
      _
    $region31: #{tpu_custom_call.1} parent=1 // pred_check_branch
      %83 = sbr.rel (0) target = $region33
    $region32: #{tpu_custom_call.1} parent=1 // pred_region
      %s85 = ssub.s32 16, 16
      %86 = vsyncadd [#allocation9], %s85
      %s88 = sshll.u32 [#allocation10], 4
      %s89 = int_to_ptr.vmem [resolvable:$true] %s88
      %91 = dma.hbm_to_vmem [thread:$0]  %s7, 16, %s89, [#allocation9]
    $region33: #{tpu_custom_call.1} parent=1 // pred_fallthru
      _
    // Predicated region
    $region34: #{tpu_custom_call.1} parent=1 // pred_check
      _
    $region35: #{tpu_custom_call.1} parent=1 // pred_check_branch
      %93 = sbr.rel (0) target = $region37
    $region36: #{tpu_custom_call.1} parent=1 // pred_region
      %s95 = ssub.s32 1024, 1024
      %96 = vsyncadd [#allocation12], %s95
      %s97 = sshll.u32 [#allocation11], 4
      %s98 = int_to_ptr.vmem [resolvable:$true] %s97
      %103 = dma.hbm_to_vmem [thread:$0]  %s8, 1024, %s98, [#allocation12], 256, 256, 16
    $region37: #{tpu_custom_call.1} parent=1 // pred_fallthru
      _
    // Predicated region
    $region38: #{tpu_custom_call.1} parent=1 // pred_check
      _
    $region39: #{tpu_custom_call.1} parent=1 // pred_check_branch
      %105 = sbr.rel (0) target = $region41
    $region40: #{tpu_custom_call.1} parent=1 // pred_region
      %s107 = ssub.s32 256, 256
      %108 = vsyncadd [#allocation12], %s107
      %s110 = sshll.u32 [#allocation13], 4
      %s111 = int_to_ptr.vmem [resolvable:$true] %s110
      %113 = dma.hbm_to_vmem [thread:$0]  %s9, 256, %s111, [#allocation12]
    $region41: #{tpu_custom_call.1} parent=1 // pred_fallthru
      _
    // Predicated region
    $region42: #{tpu_custom_call.1} parent=1 // pred_check
      _
    $region43: #{tpu_custom_call.1} parent=1 // pred_check_branch
      %115 = sbr.rel (0) target = $region45
    $region44: #{tpu_custom_call.1} parent=1 // pred_region
      %s117 = ssub.s32 64, 64
      %118 = vsyncadd [#allocation15], %s117
      %s120 = sshll.u32 [#allocation14], 4
      %s121 = int_to_ptr.vmem [resolvable:$true] %s120
      %123 = dma.hbm_to_vmem [thread:$0]  %s10, 64, %s121, [#allocation15]
    $region45: #{tpu_custom_call.1} parent=1 // pred_fallthru
      _
    // Predicated region
    $region46: #{tpu_custom_call.1} parent=1 // pred_check
      _
    $region47: #{tpu_custom_call.1} parent=1 // pred_check_branch
      %125 = sbr.rel (0) target = $region49
    $region48: #{tpu_custom_call.1} parent=1 // pred_region
      %s127 = ssub.s32 8192, 8192
      %128 = vsyncadd [#allocation15], %s127
      %s129 = sshll.u32 [#allocation16], 4
      %s130 = int_to_ptr.vmem [resolvable:$true] %s129
      %135 = dma.hbm_to_vmem [thread:$0]  %s11, 8192, %s130, [#allocation15], 128, 128, 8
    $region49: #{tpu_custom_call.1} parent=1 // pred_fallthru
      _
    // Predicated region
    $region50: #{tpu_custom_call.1} parent=1 // pred_check
      _
    $region51: #{tpu_custom_call.1} parent=1 // pred_check_branch
      %137 = sbr.rel (0) target = $region53
    $region52: #{tpu_custom_call.1} parent=1 // pred_region
      %s139 = ssub.s32 32, 32
      %140 = vsyncadd [#allocation18], %s139
      %s142 = sshll.u32 [#allocation17], 4
      %s143 = int_to_ptr.vmem [resolvable:$true] %s142
      %145 = dma.hbm_to_vmem [thread:$0]  %s12, 32, %s143, [#allocation18]
    $region53: #{tpu_custom_call.1} parent=1 // pred_fallthru
      _
    // Predicated region
    $region54: #{tpu_custom_call.1} parent=1 // pred_check
      _
    $region55: #{tpu_custom_call.1} parent=1 // pred_check_branch
      %147 = sbr.rel (0) target = $region57
    $region56: #{tpu_custom_call.1} parent=1 // pred_region
      %s149 = ssub.s32 2048, 2048
      %150 = vsyncadd [#allocation18], %s149
      %s151 = sshll.u32 [#allocation19], 4
      %s152 = int_to_ptr.vmem [resolvable:$true] %s151
      %157 = dma.hbm_to_vmem [thread:$0]  %s13, 2048, %s152, [#allocation18], 64, 64, 4
    $region57: #{tpu_custom_call.1} parent=1 // pred_fallthru
      _
    // Predicated region
    $region58: #{tpu_custom_call.1} parent=1 // pred_check
      _
    $region59: #{tpu_custom_call.1} parent=1 // pred_check_branch
      %159 = sbr.rel (0) target = $region61
    $region60: #{tpu_custom_call.1} parent=1 // pred_region
      %s161 = ssub.s32 16, 16
      %162 = vsyncadd [#allocation21], %s161
      %s164 = sshll.u32 [#allocation20], 4
      %s165 = int_to_ptr.vmem [resolvable:$true] %s164
      %167 = dma.hbm_to_vmem [thread:$0]  %s14, 16, %s165, [#allocation21]
    $region61: #{tpu_custom_call.1} parent=1 // pred_fallthru
      _
    // Predicated region
    $region62: #{tpu_custom_call.1} parent=1 // pred_check
      _
    $region63: #{tpu_custom_call.1} parent=1 // pred_check_branch
      %169 = sbr.rel (0) target = $region65
    $region64: #{tpu_custom_call.1} parent=1 // pred_region
      _
    $region65: #{tpu_custom_call.1} parent=1 // pred_fallthru
      _
    // Predicated region
    $region66: #{tpu_custom_call.1} parent=1 // pred_check
      _
    $region67: #{tpu_custom_call.1} parent=1 // pred_check_branch
      %171 = sbr.rel (0) target = $region69
    $region68: #{tpu_custom_call.1} parent=1 // pred_region
      %s173 = ssub.s32 16, 16
      %174 = vsyncadd [#allocation21], %s173
      %s176 = sshll.u32 [#allocation22], 4
      %s177 = int_to_ptr.vmem [resolvable:$true] %s176
      %179 = dma.hbm_to_vmem [thread:$0]  %s16, 16, %s177, [#allocation21]
    $region69: #{tpu_custom_call.1} parent=1 // pred_fallthru
      _
    // Predicated region
    $region70: #{tpu_custom_call.1} parent=1 // pred_check
      _
    $region71: #{tpu_custom_call.1} parent=1 // pred_check_branch
      %181 = sbr.rel (0) target = $region73
    $region72: #{tpu_custom_call.1} parent=1 // pred_region
      _
    $region73: #{tpu_custom_call.1} parent=1 // pred_fallthru
      _
    // Predicated region
    $region74: #{tpu_custom_call.1} parent=1 // pred_check
      _
    $region75: #{tpu_custom_call.1} parent=1 // pred_check_branch
      %183 = sbr.rel (0) target = $region77
    $region76: #{tpu_custom_call.1} parent=1 // pred_region
      %s185 = ssub.s32 16, 16
      %186 = vsyncadd [#allocation24], %s185
      %s188 = sshll.u32 [#allocation23], 4
      %s189 = int_to_ptr.vmem [resolvable:$true] %s188
      %191 = dma.hbm_to_vmem [thread:$0]  %s18, 16, %s189, [#allocation24]
    $region77: #{tpu_custom_call.1} parent=1 // pred_fallthru
      _
    // Predicated region
    $region78: #{tpu_custom_call.1} parent=1 // pred_check
      _
    $region79: #{tpu_custom_call.1} parent=1 // pred_check_branch
      %193 = sbr.rel (0) target = $region81
    $region80: #{tpu_custom_call.1} parent=1 // pred_region
      %s195 = ssub.s32 16, 16
      %196 = vsyncadd [#allocation4], %s195
      %199 = dma.hbm_to_smem %s19, 16, [#allocation25], [#allocation4]
    $region81: #{tpu_custom_call.1} parent=1 // pred_fallthru
      _
    // Predicated region
    $region82: #{tpu_custom_call.1} parent=1 // pred_check
      _
    $region83: #{tpu_custom_call.1} parent=1 // pred_check_branch
      %201 = sbr.rel (0) target = $region85
    $region84: #{tpu_custom_call.1} parent=1 // pred_region
      %202 = dma.done [#allocation3], 512
    $region85: #{tpu_custom_call.1} parent=1 // pred_fallthru
      _
    // Predicated region
    $region86: #{tpu_custom_call.1} parent=1 // pred_check
      _
    $region87: #{tpu_custom_call.1} parent=1 // pred_check_branch
      %204 = sbr.rel (0) target = $region89
    $region88: #{tpu_custom_call.1} parent=1 // pred_region
      %205 = dma.done [#allocation6], 98304
    $region89: #{tpu_custom_call.1} parent=1 // pred_fallthru
      _
    // Predicated region
    $region90: #{tpu_custom_call.1} parent=1 // pred_check
      _
    $region91: #{tpu_custom_call.1} parent=1 // pred_check_branch
      %207 = sbr.rel (0) target = $region93
    $region92: #{tpu_custom_call.1} parent=1 // pred_region
      %208 = dma.done [#allocation6], 192
    $region93: #{tpu_custom_call.1} parent=1 // pred_fallthru
      _
    // Predicated region
    $region94: #{tpu_custom_call.1} parent=1 // pred_check
      _
    $region95: #{tpu_custom_call.1} parent=1 // pred_check_branch
      %210 = sbr.rel (0) target = $region97
    $region96: #{tpu_custom_call.1} parent=1 // pred_region
      %211 = dma.done [#allocation9], 16
    $region97: #{tpu_custom_call.1} parent=1 // pred_fallthru
      _
    // Predicated region
    $region98: #{tpu_custom_call.1} parent=1 // pred_check
      _
    $region99: #{tpu_custom_call.1} parent=1 // pred_check_branch
      %213 = sbr.rel (0) target = $region101
    $region100: #{tpu_custom_call.1} parent=1 // pred_region
      %214 = dma.done [#allocation9], 16
    $region101: #{tpu_custom_call.1} parent=1 // pred_fallthru
      _
    // Predicated region
    $region102: #{tpu_custom_call.1} parent=1 // pred_check
      _
    $region103: #{tpu_custom_call.1} parent=1 // pred_check_branch
      %216 = sbr.rel (0) target = $region105
    $region104: #{tpu_custom_call.1} parent=1 // pred_region
      %217 = dma.done [#allocation12], 1024
    $region105: #{tpu_custom_call.1} parent=1 // pred_fallthru
      _
    // Predicated region
    $region106: #{tpu_custom_call.1} parent=1 // pred_check
      _
    $region107: #{tpu_custom_call.1} parent=1 // pred_check_branch
      %219 = sbr.rel (0) target = $region109
    $region108: #{tpu_custom_call.1} parent=1 // pred_region
      %220 = dma.done [#allocation12], 256
    $region109: #{tpu_custom_call.1} parent=1 // pred_fallthru
      _
    // Predicated region
    $region110: #{tpu_custom_call.1} parent=1 // pred_check
      _
    $region111: #{tpu_custom_call.1} parent=1 // pred_check_branch
      %222 = sbr.rel (0) target = $region113
    $region112: #{tpu_custom_call.1} parent=1 // pred_region
      %223 = dma.done [#allocation15], 64
    $region113: #{tpu_custom_call.1} parent=1 // pred_fallthru
      _
    // Predicated region
    $region114: #{tpu_custom_call.1} parent=1 // pred_check
      _
    $region115: #{tpu_custom_call.1} parent=1 // pred_check_branch
      %225 = sbr.rel (0) target = $region117
    $region116: #{tpu_custom_call.1} parent=1 // pred_region
      %226 = dma.done [#allocation15], 8192
    $region117: #{tpu_custom_call.1} parent=1 // pred_fallthru
      _
    // Predicated region
    $region118: #{tpu_custom_call.1} parent=1 // pred_check
      _
    $region119: #{tpu_custom_call.1} parent=1 // pred_check_branch
      %228 = sbr.rel (0) target = $region121
    $region120: #{tpu_custom_call.1} parent=1 // pred_region
      %229 = dma.done [#allocation18], 32
    $region121: #{tpu_custom_call.1} parent=1 // pred_fallthru
      _
    // Predicated region
    $region122: #{tpu_custom_call.1} parent=1 // pred_check
      _
    $region123: #{tpu_custom_call.1} parent=1 // pred_check_branch
      %231 = sbr.rel (0) target = $region125
    $region124: #{tpu_custom_call.1} parent=1 // pred_region
      %232 = dma.done [#allocation18], 2048
    $region125: #{tpu_custom_call.1} parent=1 // pred_fallthru
      _
    // Predicated region
    $region126: #{tpu_custom_call.1} parent=1 // pred_check
      _
    $region127: #{tpu_custom_call.1} parent=1 // pred_check_branch
      %234 = sbr.rel (0) target = $region129
    $region128: #{tpu_custom_call.1} parent=1 // pred_region
      %235 = dma.done [#allocation21], 16
    $region129: #{tpu_custom_call.1} parent=1 // pred_fallthru
      _
    // Predicated region
    $region130: #{tpu_custom_call.1} parent=1 // pred_check
      _
    $region131: #{tpu_custom_call.1} parent=1 // pred_check_branch
      %237 = sbr.rel (0) target = $region133
    $region132: #{tpu_custom_call.1} parent=1 // pred_region
      %238 = dma.done [#allocation21], 16
    $region133: #{tpu_custom_call.1} parent=1 // pred_fallthru
      _
    // Predicated region
    $region134: #{tpu_custom_call.1} parent=1 // pred_check
      _
    $region135: #{tpu_custom_call.1} parent=1 // pred_check_branch
      %240 = sbr.rel (0) target = $region137
    $region136: #{tpu_custom_call.1} parent=1 // pred_region
      %241 = dma.done [#allocation24], 16
    $region137: #{tpu_custom_call.1} parent=1 // pred_fallthru
      _
    // Predicated region
    $region138: #{tpu_custom_call.1} parent=1 // pred_check
      _
    $region139: #{tpu_custom_call.1} parent=1 // pred_check_branch
      %243 = sbr.rel (0) target = $region141
    $region140: #{tpu_custom_call.1} parent=1 // pred_region
      %244 = dma.done [#allocation4], 16
    $region141: #{tpu_custom_call.1} parent=1 // pred_fallthru
      _
    %245 = sfence
    %s247 = sld [smem:[#allocation25]]
    %s248 = sld [smem:[#allocation25 + $0x1]]
    %s249 = sld [smem:[#allocation25 + $0x2]]
    %s250 = sld [smem:[#allocation25 + $0x3]]
    %s251 = sld [smem:[#allocation25 + $0x4]]
    %s252 = sld [smem:[#allocation25 + $0x5]]
    %v253 = vld [vmem:[#allocation2] sm:$0xff]
    %v254 = vld [vmem:[#allocation2 + $0x8] sm:$0xff]
    %v255 = vld [vmem:[#allocation2 + $0x10] sm:$0xff]
    %v256 = vld [vmem:[#allocation2 + $0x18] sm:$0xff]
    %v257 = vld [vmem:[#allocation5] sm:$0xff]
    %v258 = vld [vmem:[#allocation5 + $0x8] sm:$0xff]
    %v259 = vld [vmem:[#allocation5 + $0x10] sm:$0xff]
    %v260 = vld [vmem:[#allocation5 + $0x18] sm:$0xff]
    %v261 = vld [vmem:[#allocation5 + $0x20] sm:$0xff]
    %v262 = vld [vmem:[#allocation5 + $0x28] sm:$0xff]
    %v263 = vld [vmem:[#allocation5 + $0x30] sm:$0xff]
    %v264 = vld [vmem:[#allocation5 + $0x38] sm:$0xff]
    %v265 = vld [vmem:[#allocation5 + $0x40] sm:$0xff]
    %v266 = vld [vmem:[#allocation5 + $0x48] sm:$0xff]
    %v267 = vld [vmem:[#allocation5 + $0x50] sm:$0xff]
    %v268 = vld [vmem:[#allocation5 + $0x58] sm:$0xff]
    %v269 = vld [vmem:[#allocation5 + $0x60] sm:$0xff]
    %v270 = vld [vmem:[#allocation5 + $0x68] sm:$0xff]
    %v271 = vld [vmem:[#allocation5 + $0x70] sm:$0xff]
    %v272 = vld [vmem:[#allocation5 + $0x78] sm:$0xff]
    %v273 = vld [vmem:[#allocation5 + $0x80] sm:$0xff]
    %v274 = vld [vmem:[#allocation5 + $0x88] sm:$0xff]
    %v275 = vld [vmem:[#allocation5 + $0x90] sm:$0xff]
    %v276 = vld [vmem:[#allocation5 + $0x98] sm:$0xff]
    %v277 = vld [vmem:[#allocation5 + $0xa0] sm:$0xff]
    %v278 = vld [vmem:[#allocation5 + $0xa8] sm:$0xff]
    %v279 = vld [vmem:[#allocation5 + $0xb0] sm:$0xff]
    %v280 = vld [vmem:[#allocation5 + $0xb8] sm:$0xff]
    %v281 = vld [vmem:[#allocation5 + $0xc0] sm:$0xff]
    %v282 = vld [vmem:[#allocation5 + $0xc8] sm:$0xff]
    %v283 = vld [vmem:[#allocation5 + $0xd0] sm:$0xff]
    %v284 = vld [vmem:[#allocation5 + $0xd8] sm:$0xff]
    %v285 = vld [vmem:[#allocation5 + $0xe0] sm:$0xff]
    %v286 = vld [vmem:[#allocation5 + $0xe8] sm:$0xff]
    %v287 = vld [vmem:[#allocation5 + $0xf0] sm:$0xff]
    %v288 = vld [vmem:[#allocation5 + $0xf8] sm:$0xff]
    %v289 = vld [vmem:[#allocation5 + $0x100] sm:$0xff]
    %v290 = vld [vmem:[#allocation5 + $0x108] sm:$0xff]
    %v291 = vld [vmem:[#allocation5 + $0x110] sm:$0xff]
    %v292 = vld [vmem:[#allocation5 + $0x118] sm:$0xff]
    %v293 = vld [vmem:[#allocation5 + $0x120] sm:$0xff]
    %v294 = vld [vmem:[#allocation5 + $0x128] sm:$0xff]
    %v295 = vld [vmem:[#allocation5 + $0x130] sm:$0xff]
    %v296 = vld [vmem:[#allocation5 + $0x138] sm:$0xff]
    %v297 = vld [vmem:[#allocation5 + $0x140] sm:$0xff]
    %v298 = vld [vmem:[#allocation5 + $0x148] sm:$0xff]
    %v299 = vld [vmem:[#allocation5 + $0x150] sm:$0xff]
    %v300 = vld [vmem:[#allocation5 + $0x158] sm:$0xff]
    %v301 = vld [vmem:[#allocation5 + $0x160] sm:$0xff]
    %v302 = vld [vmem:[#allocation5 + $0x168] sm:$0xff]
    %v303 = vld [vmem:[#allocation5 + $0x170] sm:$0xff]
    %v304 = vld [vmem:[#allocation5 + $0x178] sm:$0xff]
    %v305 = vld [vmem:[#allocation5 + $0x180] sm:$0xff]
    %v306 = vld [vmem:[#allocation5 + $0x188] sm:$0xff]
    %v307 = vld [vmem:[#allocation5 + $0x190] sm:$0xff]
    %v308 = vld [vmem:[#allocation5 + $0x198] sm:$0xff]
    %v309 = vld [vmem:[#allocation5 + $0x1a0] sm:$0xff]
    %v310 = vld [vmem:[#allocation5 + $0x1a8] sm:$0xff]
    %v311 = vld [vmem:[#allocation5 + $0x1b0] sm:$0xff]
    %v312 = vld [vmem:[#allocation5 + $0x1b8] sm:$0xff]
    %v313 = vld [vmem:[#allocation5 + $0x1c0] sm:$0xff]
    %v314 = vld [vmem:[#allocation5 + $0x1c8] sm:$0xff]
    %v315 = vld [vmem:[#allocation5 + $0x1d0] sm:$0xff]
    %v316 = vld [vmem:[#allocation5 + $0x1d8] sm:$0xff]
    %v317 = vld [vmem:[#allocation5 + $0x1e0] sm:$0xff]
    %v318 = vld [vmem:[#allocation5 + $0x1e8] sm:$0xff]
    %v319 = vld [vmem:[#allocation5 + $0x1f0] sm:$0xff]
    %v320 = vld [vmem:[#allocation5 + $0x1f8] sm:$0xff]
    %v321 = vld [vmem:[#allocation5 + $0x200] sm:$0xff]
    %v322 = vld [vmem:[#allocation5 + $0x208] sm:$0xff]
    %v323 = vld [vmem:[#allocation5 + $0x210] sm:$0xff]
    %v324 = vld [vmem:[#allocation5 + $0x218] sm:$0xff]
    %v325 = vld [vmem:[#allocation5 + $0x220] sm:$0xff]
    %v326 = vld [vmem:[#allocation5 + $0x228] sm:$0xff]
    %v327 = vld [vmem:[#allocation5 + $0x230] sm:$0xff]
    %v328 = vld [vmem:[#allocation5 + $0x238] sm:$0xff]
    %v329 = vld [vmem:[#allocation5 + $0x240] sm:$0xff]
    %v330 = vld [vmem:[#allocation5 + $0x248] sm:$0xff]
    %v331 = vld [vmem:[#allocation5 + $0x250] sm:$0xff]
    %v332 = vld [vmem:[#allocation5 + $0x258] sm:$0xff]
    %v333 = vld [vmem:[#allocation5 + $0x260] sm:$0xff]
    %v334 = vld [vmem:[#allocation5 + $0x268] sm:$0xff]
    %v335 = vld [vmem:[#allocation5 + $0x270] sm:$0xff]
    %v336 = vld [vmem:[#allocation5 + $0x278] sm:$0xff]
    %v337 = vld [vmem:[#allocation5 + $0x280] sm:$0xff]
    %v338 = vld [vmem:[#allocation5 + $0x288] sm:$0xff]
    %v339 = vld [vmem:[#allocation5 + $0x290] sm:$0xff]
    %v340 = vld [vmem:[#allocation5 + $0x298] sm:$0xff]
    %v341 = vld [vmem:[#allocation5 + $0x2a0] sm:$0xff]
    %v342 = vld [vmem:[#allocation5 + $0x2a8] sm:$0xff]
    %v343 = vld [vmem:[#allocation5 + $0x2b0] sm:$0xff]
    %v344 = vld [vmem:[#allocation5 + $0x2b8] sm:$0xff]
    %v345 = vld [vmem:[#allocation5 + $0x2c0] sm:$0xff]
    %v346 = vld [vmem:[#allocation5 + $0x2c8] sm:$0xff]
    %v347 = vld [vmem:[#allocation5 + $0x2d0] sm:$0xff]
    %v348 = vld [vmem:[#allocation5 + $0x2d8] sm:$0xff]
    %v349 = vld [vmem:[#allocation5 + $0x2e0] sm:$0xff]
    %v350 = vld [vmem:[#allocation5 + $0x2e8] sm:$0xff]
    %v351 = vld [vmem:[#allocation5 + $0x2f0] sm:$0xff]
    %v352 = vld [vmem:[#allocation5 + $0x2f8] sm:$0xff]
    %v353 = vld [vmem:[#allocation5 + $0x300] sm:$0xff]
    %v354 = vld [vmem:[#allocation5 + $0x308] sm:$0xff]
    %v355 = vld [vmem:[#allocation5 + $0x310] sm:$0xff]
    %v356 = vld [vmem:[#allocation5 + $0x318] sm:$0xff]
    %v357 = vld [vmem:[#allocation5 + $0x320] sm:$0xff]
    %v358 = vld [vmem:[#allocation5 + $0x328] sm:$0xff]
    %v359 = vld [vmem:[#allocation5 + $0x330] sm:$0xff]
    %v360 = vld [vmem:[#allocation5 + $0x338] sm:$0xff]
    %v361 = vld [vmem:[#allocation5 + $0x340] sm:$0xff]
    %v362 = vld [vmem:[#allocation5 + $0x348] sm:$0xff]
    %v363 = vld [vmem:[#allocation5 + $0x350] sm:$0xff]
    %v364 = vld [vmem:[#allocation5 + $0x358] sm:$0xff]
    %v365 = vld [vmem:[#allocation5 + $0x360] sm:$0xff]
    %v366 = vld [vmem:[#allocation5 + $0x368] sm:$0xff]
    %v367 = vld [vmem:[#allocation5 + $0x370] sm:$0xff]
    %v368 = vld [vmem:[#allocation5 + $0x378] sm:$0xff]
    %v369 = vld [vmem:[#allocation5 + $0x380] sm:$0xff]
    %v370 = vld [vmem:[#allocation5 + $0x388] sm:$0xff]
    %v371 = vld [vmem:[#allocation5 + $0x390] sm:$0xff]
    %v372 = vld [vmem:[#allocation5 + $0x398] sm:$0xff]
    %v373 = vld [vmem:[#allocation5 + $0x3a0] sm:$0xff]
    %v374 = vld [vmem:[#allocation5 + $0x3a8] sm:$0xff]
    %v375 = vld [vmem:[#allocation5 + $0x3b0] sm:$0xff]
    %v376 = vld [vmem:[#allocation5 + $0x3b8] sm:$0xff]
    %v377 = vld [vmem:[#allocation5 + $0x3c0] sm:$0xff]
    %v378 = vld [vmem:[#allocation5 + $0x3c8] sm:$0xff]
    %v379 = vld [vmem:[#allocation5 + $0x3d0] sm:$0xff]
    %v380 = vld [vmem:[#allocation5 + $0x3d8] sm:$0xff]
    %v381 = vld [vmem:[#allocation5 + $0x3e0] sm:$0xff]
    %v382 = vld [vmem:[#allocation5 + $0x3e8] sm:$0xff]
    %v383 = vld [vmem:[#allocation5 + $0x3f0] sm:$0xff]
    %v384 = vld [vmem:[#allocation5 + $0x3f8] sm:$0xff]
    %v385 = vld [vmem:[#allocation5 + $0x400] sm:$0xff]
    %v386 = vld [vmem:[#allocation5 + $0x408] sm:$0xff]
    %v387 = vld [vmem:[#allocation5 + $0x410] sm:$0xff]
    %v388 = vld [vmem:[#allocation5 + $0x418] sm:$0xff]
    %v389 = vld [vmem:[#allocation5 + $0x420] sm:$0xff]
    %v390 = vld [vmem:[#allocation5 + $0x428] sm:$0xff]
    %v391 = vld [vmem:[#allocation5 + $0x430] sm:$0xff]
    %v392 = vld [vmem:[#allocation5 + $0x438] sm:$0xff]
    %v393 = vld [vmem:[#allocation5 + $0x440] sm:$0xff]
    %v394 = vld [vmem:[#allocation5 + $0x448] sm:$0xff]
    %v395 = vld [vmem:[#allocation5 + $0x450] sm:$0xff]
    %v396 = vld [vmem:[#allocation5 + $0x458] sm:$0xff]
    %v397 = vld [vmem:[#allocation5 + $0x460] sm:$0xff]
    %v398 = vld [vmem:[#allocation5 + $0x468] sm:$0xff]
    %v399 = vld [vmem:[#allocation5 + $0x470] sm:$0xff]
    %v400 = vld [vmem:[#allocation5 + $0x478] sm:$0xff]
    %v401 = vld [vmem:[#allocation5 + $0x480] sm:$0xff]
    %v402 = vld [vmem:[#allocation5 + $0x488] sm:$0xff]
    %v403 = vld [vmem:[#allocation5 + $0x490] sm:$0xff]
    %v404 = vld [vmem:[#allocation5 + $0x498] sm:$0xff]
    %v405 = vld [vmem:[#allocation5 + $0x4a0] sm:$0xff]
    %v406 = vld [vmem:[#allocation5 + $0x4a8] sm:$0xff]
    %v407 = vld [vmem:[#allocation5 + $0x4b0] sm:$0xff]
    %v408 = vld [vmem:[#allocation5 + $0x4b8] sm:$0xff]
    %v409 = vld [vmem:[#allocation5 + $0x4c0] sm:$0xff]
    %v410 = vld [vmem:[#allocation5 + $0x4c8] sm:$0xff]
    %v411 = vld [vmem:[#allocation5 + $0x4d0] sm:$0xff]
    %v412 = vld [vmem:[#allocation5 + $0x4d8] sm:$0xff]
    %v413 = vld [vmem:[#allocation5 + $0x4e0] sm:$0xff]
    %v414 = vld [vmem:[#allocation5 + $0x4e8] sm:$0xff]
    %v415 = vld [vmem:[#allocation5 + $0x4f0] sm:$0xff]
    %v416 = vld [vmem:[#allocation5 + $0x4f8] sm:$0xff]
    %v417 = vld [vmem:[#allocation5 + $0x500] sm:$0xff]
    %v418 = vld [vmem:[#allocation5 + $0x508] sm:$0xff]
    %v419 = vld [vmem:[#allocation5 + $0x510] sm:$0xff]
    %v420 = vld [vmem:[#allocation5 + $0x518] sm:$0xff]
    %v421 = vld [vmem:[#allocation5 + $0x520] sm:$0xff]
    %v422 = vld [vmem:[#allocation5 + $0x528] sm:$0xff]
    %v423 = vld [vmem:[#allocation5 + $0x530] sm:$0xff]
    %v424 = vld [vmem:[#allocation5 + $0x538] sm:$0xff]
    %v425 = vld [vmem:[#allocation5 + $0x540] sm:$0xff]
    %v426 = vld [vmem:[#allocation5 + $0x548] sm:$0xff]
    %v427 = vld [vmem:[#allocation5 + $0x550] sm:$0xff]
    %v428 = vld [vmem:[#allocation5 + $0x558] sm:$0xff]
    %v429 = vld [vmem:[#allocation5 + $0x560] sm:$0xff]
    %v430 = vld [vmem:[#allocation5 + $0x568] sm:$0xff]
    %v431 = vld [vmem:[#allocation5 + $0x570] sm:$0xff]
    %v432 = vld [vmem:[#allocation5 + $0x578] sm:$0xff]
    %v433 = vld [vmem:[#allocation5 + $0x580] sm:$0xff]
    %v434 = vld [vmem:[#allocation5 + $0x588] sm:$0xff]
    %v435 = vld [vmem:[#allocation5 + $0x590] sm:$0xff]
    %v436 = vld [vmem:[#allocation5 + $0x598] sm:$0xff]
    %v437 = vld [vmem:[#allocation5 + $0x5a0] sm:$0xff]
    %v438 = vld [vmem:[#allocation5 + $0x5a8] sm:$0xff]
    %v439 = vld [vmem:[#allocation5 + $0x5b0] sm:$0xff]
    %v440 = vld [vmem:[#allocation5 + $0x5b8] sm:$0xff]
    %v441 = vld [vmem:[#allocation5 + $0x5c0] sm:$0xff]
    %v442 = vld [vmem:[#allocation5 + $0x5c8] sm:$0xff]
    %v443 = vld [vmem:[#allocation5 + $0x5d0] sm:$0xff]
    %v444 = vld [vmem:[#allocation5 + $0x5d8] sm:$0xff]
    %v445 = vld [vmem:[#allocation5 + $0x5e0] sm:$0xff]
    %v446 = vld [vmem:[#allocation5 + $0x5e8] sm:$0xff]
    %v447 = vld [vmem:[#allocation5 + $0x5f0] sm:$0xff]
    %v448 = vld [vmem:[#allocation5 + $0x5f8] sm:$0xff]
    %v449 = vld [vmem:[#allocation5 + $0x600] sm:$0xff]
    %v450 = vld [vmem:[#allocation5 + $0x608] sm:$0xff]
    %v451 = vld [vmem:[#allocation5 + $0x610] sm:$0xff]
    %v452 = vld [vmem:[#allocation5 + $0x618] sm:$0xff]
    %v453 = vld [vmem:[#allocation5 + $0x620] sm:$0xff]
    %v454 = vld [vmem:[#allocation5 + $0x628] sm:$0xff]
    %v455 = vld [vmem:[#allocation5 + $0x630] sm:$0xff]
    %v456 = vld [vmem:[#allocation5 + $0x638] sm:$0xff]
    %v457 = vld [vmem:[#allocation5 + $0x640] sm:$0xff]
    %v458 = vld [vmem:[#allocation5 + $0x648] sm:$0xff]
    %v459 = vld [vmem:[#allocation5 + $0x650] sm:$0xff]
    %v460 = vld [vmem:[#allocation5 + $0x658] sm:$0xff]
    %v461 = vld [vmem:[#allocation5 + $0x660] sm:$0xff]
    %v462 = vld [vmem:[#allocation5 + $0x668] sm:$0xff]
    %v463 = vld [vmem:[#allocation5 + $0x670] sm:$0xff]
    %v464 = vld [vmem:[#allocation5 + $0x678] sm:$0xff]
    %v465 = vld [vmem:[#allocation5 + $0x680] sm:$0xff]
    %v466 = vld [vmem:[#allocation5 + $0x688] sm:$0xff]
    %v467 = vld [vmem:[#allocation5 + $0x690] sm:$0xff]
    %v468 = vld [vmem:[#allocation5 + $0x698] sm:$0xff]
    %v469 = vld [vmem:[#allocation5 + $0x6a0] sm:$0xff]
    %v470 = vld [vmem:[#allocation5 + $0x6a8] sm:$0xff]
    %v471 = vld [vmem:[#allocation5 + $0x6b0] sm:$0xff]
    %v472 = vld [vmem:[#allocation5 + $0x6b8] sm:$0xff]
    %v473 = vld [vmem:[#allocation5 + $0x6c0] sm:$0xff]
    %v474 = vld [vmem:[#allocation5 + $0x6c8] sm:$0xff]
    %v475 = vld [vmem:[#allocation5 + $0x6d0] sm:$0xff]
    %v476 = vld [vmem:[#allocation5 + $0x6d8] sm:$0xff]
    %v477 = vld [vmem:[#allocation5 + $0x6e0] sm:$0xff]
    %v478 = vld [vmem:[#allocation5 + $0x6e8] sm:$0xff]
    %v479 = vld [vmem:[#allocation5 + $0x6f0] sm:$0xff]
    %v480 = vld [vmem:[#allocation5 + $0x6f8] sm:$0xff]
    %v481 = vld [vmem:[#allocation5 + $0x700] sm:$0xff]
    %v482 = vld [vmem:[#allocation5 + $0x708] sm:$0xff]
    %v483 = vld [vmem:[#allocation5 + $0x710] sm:$0xff]
    %v484 = vld [vmem:[#allocation5 + $0x718] sm:$0xff]
    %v485 = vld [vmem:[#allocation5 + $0x720] sm:$0xff]
    %v486 = vld [vmem:[#allocation5 + $0x728] sm:$0xff]
    %v487 = vld [vmem:[#allocation5 + $0x730] sm:$0xff]
    %v488 = vld [vmem:[#allocation5 + $0x738] sm:$0xff]
    %v489 = vld [vmem:[#allocation5 + $0x740] sm:$0xff]
    %v490 = vld [vmem:[#allocation5 + $0x748] sm:$0xff]
    %v491 = vld [vmem:[#allocation5 + $0x750] sm:$0xff]
    %v492 = vld [vmem:[#allocation5 + $0x758] sm:$0xff]
    %v493 = vld [vmem:[#allocation5 + $0x760] sm:$0xff]
    %v494 = vld [vmem:[#allocation5 + $0x768] sm:$0xff]
    %v495 = vld [vmem:[#allocation5 + $0x770] sm:$0xff]
    %v496 = vld [vmem:[#allocation5 + $0x778] sm:$0xff]
    %v497 = vld [vmem:[#allocation5 + $0x780] sm:$0xff]
    %v498 = vld [vmem:[#allocation5 + $0x788] sm:$0xff]
    %v499 = vld [vmem:[#allocation5 + $0x790] sm:$0xff]
    %v500 = vld [vmem:[#allocation5 + $0x798] sm:$0xff]
    %v501 = vld [vmem:[#allocation5 + $0x7a0] sm:$0xff]
    %v502 = vld [vmem:[#allocation5 + $0x7a8] sm:$0xff]
    %v503 = vld [vmem:[#allocation5 + $0x7b0] sm:$0xff]
    %v504 = vld [vmem:[#allocation5 + $0x7b8] sm:$0xff]
    %v505 = vld [vmem:[#allocation5 + $0x7c0] sm:$0xff]
    %v506 = vld [vmem:[#allocation5 + $0x7c8] sm:$0xff]
    %v507 = vld [vmem:[#allocation5 + $0x7d0] sm:$0xff]
    %v508 = vld [vmem:[#allocation5 + $0x7d8] sm:$0xff]
    %v509 = vld [vmem:[#allocation5 + $0x7e0] sm:$0xff]
    %v510 = vld [vmem:[#allocation5 + $0x7e8] sm:$0xff]
    %v511 = vld [vmem:[#allocation5 + $0x7f0] sm:$0xff]
    %v512 = vld [vmem:[#allocation5 + $0x7f8] sm:$0xff]
    %v513 = vld [vmem:[#allocation5 + $0x800] sm:$0xff]
    %v514 = vld [vmem:[#allocation5 + $0x808] sm:$0xff]
    %v515 = vld [vmem:[#allocation5 + $0x810] sm:$0xff]
    %v516 = vld [vmem:[#allocation5 + $0x818] sm:$0xff]
    %v517 = vld [vmem:[#allocation5 + $0x820] sm:$0xff]
    %v518 = vld [vmem:[#allocation5 + $0x828] sm:$0xff]
    %v519 = vld [vmem:[#allocation5 + $0x830] sm:$0xff]
    %v520 = vld [vmem:[#allocation5 + $0x838] sm:$0xff]
    %v521 = vld [vmem:[#allocation5 + $0x840] sm:$0xff]
    %v522 = vld [vmem:[#allocation5 + $0x848] sm:$0xff]
    %v523 = vld [vmem:[#allocation5 + $0x850] sm:$0xff]
    %v524 = vld [vmem:[#allocation5 + $0x858] sm:$0xff]
    %v525 = vld [vmem:[#allocation5 + $0x860] sm:$0xff]
    %v526 = vld [vmem:[#allocation5 + $0x868] sm:$0xff]
    %v527 = vld [vmem:[#allocation5 + $0x870] sm:$0xff]
    %v528 = vld [vmem:[#allocation5 + $0x878] sm:$0xff]
    %v529 = vld [vmem:[#allocation5 + $0x880] sm:$0xff]
    %v530 = vld [vmem:[#allocation5 + $0x888] sm:$0xff]
    %v531 = vld [vmem:[#allocation5 + $0x890] sm:$0xff]
    %v532 = vld [vmem:[#allocation5 + $0x898] sm:$0xff]
    %v533 = vld [vmem:[#allocation5 + $0x8a0] sm:$0xff]
    %v534 = vld [vmem:[#allocation5 + $0x8a8] sm:$0xff]
    %v535 = vld [vmem:[#allocation5 + $0x8b0] sm:$0xff]
    %v536 = vld [vmem:[#allocation5 + $0x8b8] sm:$0xff]
    %v537 = vld [vmem:[#allocation5 + $0x8c0] sm:$0xff]
    %v538 = vld [vmem:[#allocation5 + $0x8c8] sm:$0xff]
    %v539 = vld [vmem:[#allocation5 + $0x8d0] sm:$0xff]
    %v540 = vld [vmem:[#allocation5 + $0x8d8] sm:$0xff]
    %v541 = vld [vmem:[#allocation5 + $0x8e0] sm:$0xff]
    %v542 = vld [vmem:[#allocation5 + $0x8e8] sm:$0xff]
    %v543 = vld [vmem:[#allocation5 + $0x8f0] sm:$0xff]
    %v544 = vld [vmem:[#allocation5 + $0x8f8] sm:$0xff]
    %v545 = vld [vmem:[#allocation5 + $0x900] sm:$0xff]
    %v546 = vld [vmem:[#allocation5 + $0x908] sm:$0xff]
    %v547 = vld [vmem:[#allocation5 + $0x910] sm:$0xff]
    %v548 = vld [vmem:[#allocation5 + $0x918] sm:$0xff]
    %v549 = vld [vmem:[#allocation5 + $0x920] sm:$0xff]
    %v550 = vld [vmem:[#allocation5 + $0x928] sm:$0xff]
    %v551 = vld [vmem:[#allocation5 + $0x930] sm:$0xff]
    %v552 = vld [vmem:[#allocation5 + $0x938] sm:$0xff]
    %v553 = vld [vmem:[#allocation5 + $0x940] sm:$0xff]
    %v554 = vld [vmem:[#allocation5 + $0x948] sm:$0xff]
    %v555 = vld [vmem:[#allocation5 + $0x950] sm:$0xff]
    %v556 = vld [vmem:[#allocation5 + $0x958] sm:$0xff]
    %v557 = vld [vmem:[#allocation5 + $0x960] sm:$0xff]
    %v558 = vld [vmem:[#allocation5 + $0x968] sm:$0xff]
    %v559 = vld [vmem:[#allocation5 + $0x970] sm:$0xff]
    %v560 = vld [vmem:[#allocation5 + $0x978] sm:$0xff]
    %v561 = vld [vmem:[#allocation5 + $0x980] sm:$0xff]
    %v562 = vld [vmem:[#allocation5 + $0x988] sm:$0xff]
    %v563 = vld [vmem:[#allocation5 + $0x990] sm:$0xff]
    %v564 = vld [vmem:[#allocation5 + $0x998] sm:$0xff]
    %v565 = vld [vmem:[#allocation5 + $0x9a0] sm:$0xff]
    %v566 = vld [vmem:[#allocation5 + $0x9a8] sm:$0xff]
    %v567 = vld [vmem:[#allocation5 + $0x9b0] sm:$0xff]
    %v568 = vld [vmem:[#allocation5 + $0x9b8] sm:$0xff]
    %v569 = vld [vmem:[#allocation5 + $0x9c0] sm:$0xff]
    %v570 = vld [vmem:[#allocation5 + $0x9c8] sm:$0xff]
    %v571 = vld [vmem:[#allocation5 + $0x9d0] sm:$0xff]
    %v572 = vld [vmem:[#allocation5 + $0x9d8] sm:$0xff]
    %v573 = vld [vmem:[#allocation5 + $0x9e0] sm:$0xff]
    %v574 = vld [vmem:[#allocation5 + $0x9e8] sm:$0xff]
    %v575 = vld [vmem:[#allocation5 + $0x9f0] sm:$0xff]
    %v576 = vld [vmem:[#allocation5 + $0x9f8] sm:$0xff]
    %v577 = vld [vmem:[#allocation5 + $0xa00] sm:$0xff]
    %v578 = vld [vmem:[#allocation5 + $0xa08] sm:$0xff]
    %v579 = vld [vmem:[#allocation5 + $0xa10] sm:$0xff]
    %v580 = vld [vmem:[#allocation5 + $0xa18] sm:$0xff]
    %v581 = vld [vmem:[#allocation5 + $0xa20] sm:$0xff]
    %v582 = vld [vmem:[#allocation5 + $0xa28] sm:$0xff]
    %v583 = vld [vmem:[#allocation5 + $0xa30] sm:$0xff]
    %v584 = vld [vmem:[#allocation5 + $0xa38] sm:$0xff]
    %v585 = vld [vmem:[#allocation5 + $0xa40] sm:$0xff]
    %v586 = vld [vmem:[#allocation5 + $0xa48] sm:$0xff]
    %v587 = vld [vmem:[#allocation5 + $0xa50] sm:$0xff]
    %v588 = vld [vmem:[#allocation5 + $0xa58] sm:$0xff]
    %v589 = vld [vmem:[#allocation5 + $0xa60] sm:$0xff]
    %v590 = vld [vmem:[#allocation5 + $0xa68] sm:$0xff]
    %v591 = vld [vmem:[#allocation5 + $0xa70] sm:$0xff]
    %v592 = vld [vmem:[#allocation5 + $0xa78] sm:$0xff]
    %v593 = vld [vmem:[#allocation5 + $0xa80] sm:$0xff]
    %v594 = vld [vmem:[#allocation5 + $0xa88] sm:$0xff]
    %v595 = vld [vmem:[#allocation5 + $0xa90] sm:$0xff]
    %v596 = vld [vmem:[#allocation5 + $0xa98] sm:$0xff]
    %v597 = vld [vmem:[#allocation5 + $0xaa0] sm:$0xff]
    %v598 = vld [vmem:[#allocation5 + $0xaa8] sm:$0xff]
    %v599 = vld [vmem:[#allocation5 + $0xab0] sm:$0xff]
    %v600 = vld [vmem:[#allocation5 + $0xab8] sm:$0xff]
    %v601 = vld [vmem:[#allocation5 + $0xac0] sm:$0xff]
    %v602 = vld [vmem:[#allocation5 + $0xac8] sm:$0xff]
    %v603 = vld [vmem:[#allocation5 + $0xad0] sm:$0xff]
    %v604 = vld [vmem:[#allocation5 + $0xad8] sm:$0xff]
    %v605 = vld [vmem:[#allocation5 + $0xae0] sm:$0xff]
    %v606 = vld [vmem:[#allocation5 + $0xae8] sm:$0xff]
    %v607 = vld [vmem:[#allocation5 + $0xaf0] sm:$0xff]
    %v608 = vld [vmem:[#allocation5 + $0xaf8] sm:$0xff]
    %v609 = vld [vmem:[#allocation5 + $0xb00] sm:$0xff]
    %v610 = vld [vmem:[#allocation5 + $0xb08] sm:$0xff]
    %v611 = vld [vmem:[#allocation5 + $0xb10] sm:$0xff]
    %v612 = vld [vmem:[#allocation5 + $0xb18] sm:$0xff]
    %v613 = vld [vmem:[#allocation5 + $0xb20] sm:$0xff]
    %v614 = vld [vmem:[#allocation5 + $0xb28] sm:$0xff]
    %v615 = vld [vmem:[#allocation5 + $0xb30] sm:$0xff]
    %v616 = vld [vmem:[#allocation5 + $0xb38] sm:$0xff]
    %v617 = vld [vmem:[#allocation5 + $0xb40] sm:$0xff]
    %v618 = vld [vmem:[#allocation5 + $0xb48] sm:$0xff]
    %v619 = vld [vmem:[#allocation5 + $0xb50] sm:$0xff]
    %v620 = vld [vmem:[#allocation5 + $0xb58] sm:$0xff]
    %v621 = vld [vmem:[#allocation5 + $0xb60] sm:$0xff]
    %v622 = vld [vmem:[#allocation5 + $0xb68] sm:$0xff]
    %v623 = vld [vmem:[#allocation5 + $0xb70] sm:$0xff]
    %v624 = vld [vmem:[#allocation5 + $0xb78] sm:$0xff]
    %v625 = vld [vmem:[#allocation5 + $0xb80] sm:$0xff]
    %v626 = vld [vmem:[#allocation5 + $0xb88] sm:$0xff]
    %v627 = vld [vmem:[#allocation5 + $0xb90] sm:$0xff]
    %v628 = vld [vmem:[#allocation5 + $0xb98] sm:$0xff]
    %v629 = vld [vmem:[#allocation5 + $0xba0] sm:$0xff]
    %v630 = vld [vmem:[#allocation5 + $0xba8] sm:$0xff]
    %v631 = vld [vmem:[#allocation5 + $0xbb0] sm:$0xff]
    %v632 = vld [vmem:[#allocation5 + $0xbb8] sm:$0xff]
    %v633 = vld [vmem:[#allocation5 + $0xbc0] sm:$0xff]
    %v634 = vld [vmem:[#allocation5 + $0xbc8] sm:$0xff]
    %v635 = vld [vmem:[#allocation5 + $0xbd0] sm:$0xff]
    %v636 = vld [vmem:[#allocation5 + $0xbd8] sm:$0xff]
    %v637 = vld [vmem:[#allocation5 + $0xbe0] sm:$0xff]
    %v638 = vld [vmem:[#allocation5 + $0xbe8] sm:$0xff]
    %v639 = vld [vmem:[#allocation5 + $0xbf0] sm:$0xff]
    %v640 = vld [vmem:[#allocation5 + $0xbf8] sm:$0xff]
    %v641 = vld [vmem:[#allocation5 + $0xc00] sm:$0xff]
    %v642 = vld [vmem:[#allocation5 + $0xc08] sm:$0xff]
    %v643 = vld [vmem:[#allocation5 + $0xc10] sm:$0xff]
    %v644 = vld [vmem:[#allocation5 + $0xc18] sm:$0xff]
    %v645 = vld [vmem:[#allocation5 + $0xc20] sm:$0xff]
    %v646 = vld [vmem:[#allocation5 + $0xc28] sm:$0xff]
    %v647 = vld [vmem:[#allocation5 + $0xc30] sm:$0xff]
    %v648 = vld [vmem:[#allocation5 + $0xc38] sm:$0xff]
    %v649 = vld [vmem:[#allocation5 + $0xc40] sm:$0xff]
    %v650 = vld [vmem:[#allocation5 + $0xc48] sm:$0xff]
    %v651 = vld [vmem:[#allocation5 + $0xc50] sm:$0xff]
    %v652 = vld [vmem:[#allocation5 + $0xc58] sm:$0xff]
    %v653 = vld [vmem:[#allocation5 + $0xc60] sm:$0xff]
    %v654 = vld [vmem:[#allocation5 + $0xc68] sm:$0xff]
    %v655 = vld [vmem:[#allocation5 + $0xc70] sm:$0xff]
    %v656 = vld [vmem:[#allocation5 + $0xc78] sm:$0xff]
    %v657 = vld [vmem:[#allocation5 + $0xc80] sm:$0xff]
    %v658 = vld [vmem:[#allocation5 + $0xc88] sm:$0xff]
    %v659 = vld [vmem:[#allocation5 + $0xc90] sm:$0xff]
    %v660 = vld [vmem:[#allocation5 + $0xc98] sm:$0xff]
    %v661 = vld [vmem:[#allocation5 + $0xca0] sm:$0xff]
    %v662 = vld [vmem:[#allocation5 + $0xca8] sm:$0xff]
    %v663 = vld [vmem:[#allocation5 + $0xcb0] sm:$0xff]
    %v664 = vld [vmem:[#allocation5 + $0xcb8] sm:$0xff]
    %v665 = vld [vmem:[#allocation5 + $0xcc0] sm:$0xff]
    %v666 = vld [vmem:[#allocation5 + $0xcc8] sm:$0xff]
    %v667 = vld [vmem:[#allocation5 + $0xcd0] sm:$0xff]
    %v668 = vld [vmem:[#allocation5 + $0xcd8] sm:$0xff]
    %v669 = vld [vmem:[#allocation5 + $0xce0] sm:$0xff]
    %v670 = vld [vmem:[#allocation5 + $0xce8] sm:$0xff]
    %v671 = vld [vmem:[#allocation5 + $0xcf0] sm:$0xff]
    %v672 = vld [vmem:[#allocation5 + $0xcf8] sm:$0xff]
    %v673 = vld [vmem:[#allocation5 + $0xd00] sm:$0xff]
    %v674 = vld [vmem:[#allocation5 + $0xd08] sm:$0xff]
    %v675 = vld [vmem:[#allocation5 + $0xd10] sm:$0xff]
    %v676 = vld [vmem:[#allocation5 + $0xd18] sm:$0xff]
    %v677 = vld [vmem:[#allocation5 + $0xd20] sm:$0xff]
    %v678 = vld [vmem:[#allocation5 + $0xd28] sm:$0xff]
    %v679 = vld [vmem:[#allocation5 + $0xd30] sm:$0xff]
    %v680 = vld [vmem:[#allocation5 + $0xd38] sm:$0xff]
    %v681 = vld [vmem:[#allocation5 + $0xd40] sm:$0xff]
    %v682 = vld [vmem:[#allocation5 + $0xd48] sm:$0xff]
    %v683 = vld [vmem:[#allocation5 + $0xd50] sm:$0xff]
    %v684 = vld [vmem:[#allocation5 + $0xd58] sm:$0xff]
    %v685 = vld [vmem:[#allocation5 + $0xd60] sm:$0xff]
    %v686 = vld [vmem:[#allocation5 + $0xd68] sm:$0xff]
    %v687 = vld [vmem:[#allocation5 + $0xd70] sm:$0xff]
    %v688 = vld [vmem:[#allocation5 + $0xd78] sm:$0xff]
    %v689 = vld [vmem:[#allocation5 + $0xd80] sm:$0xff]
    %v690 = vld [vmem:[#allocation5 + $0xd88] sm:$0xff]
    %v691 = vld [vmem:[#allocation5 + $0xd90] sm:$0xff]
    %v692 = vld [vmem:[#allocation5 + $0xd98] sm:$0xff]
    %v693 = vld [vmem:[#allocation5 + $0xda0] sm:$0xff]
    %v694 = vld [vmem:[#allocation5 + $0xda8] sm:$0xff]
    %v695 = vld [vmem:[#allocation5 + $0xdb0] sm:$0xff]
    %v696 = vld [vmem:[#allocation5 + $0xdb8] sm:$0xff]
    %v697 = vld [vmem:[#allocation5 + $0xdc0] sm:$0xff]
    %v698 = vld [vmem:[#allocation5 + $0xdc8] sm:$0xff]
    %v699 = vld [vmem:[#allocation5 + $0xdd0] sm:$0xff]
    %v700 = vld [vmem:[#allocation5 + $0xdd8] sm:$0xff]
    %v701 = vld [vmem:[#allocation5 + $0xde0] sm:$0xff]
    %v702 = vld [vmem:[#allocation5 + $0xde8] sm:$0xff]
    %v703 = vld [vmem:[#allocation5 + $0xdf0] sm:$0xff]
    %v704 = vld [vmem:[#allocation5 + $0xdf8] sm:$0xff]
    %v705 = vld [vmem:[#allocation5 + $0xe00] sm:$0xff]
    %v706 = vld [vmem:[#allocation5 + $0xe08] sm:$0xff]
    %v707 = vld [vmem:[#allocation5 + $0xe10] sm:$0xff]
    %v708 = vld [vmem:[#allocation5 + $0xe18] sm:$0xff]
    %v709 = vld [vmem:[#allocation5 + $0xe20] sm:$0xff]
    %v710 = vld [vmem:[#allocation5 + $0xe28] sm:$0xff]
    %v711 = vld [vmem:[#allocation5 + $0xe30] sm:$0xff]
    %v712 = vld [vmem:[#allocation5 + $0xe38] sm:$0xff]
    %v713 = vld [vmem:[#allocation5 + $0xe40] sm:$0xff]
    %v714 = vld [vmem:[#allocation5 + $0xe48] sm:$0xff]
    %v715 = vld [vmem:[#allocation5 + $0xe50] sm:$0xff]
    %v716 = vld [vmem:[#allocation5 + $0xe58] sm:$0xff]
    %v717 = vld [vmem:[#allocation5 + $0xe60] sm:$0xff]
    %v718 = vld [vmem:[#allocation5 + $0xe68] sm:$0xff]
    %v719 = vld [vmem:[#allocation5 + $0xe70] sm:$0xff]
    %v720 = vld [vmem:[#allocation5 + $0xe78] sm:$0xff]
    %v721 = vld [vmem:[#allocation5 + $0xe80] sm:$0xff]
    %v722 = vld [vmem:[#allocation5 + $0xe88] sm:$0xff]
    %v723 = vld [vmem:[#allocation5 + $0xe90] sm:$0xff]
    %v724 = vld [vmem:[#allocation5 + $0xe98] sm:$0xff]
    %v725 = vld [vmem:[#allocation5 + $0xea0] sm:$0xff]
    %v726 = vld [vmem:[#allocation5 + $0xea8] sm:$0xff]
    %v727 = vld [vmem:[#allocation5 + $0xeb0] sm:$0xff]
    %v728 = vld [vmem:[#allocation5 + $0xeb8] sm:$0xff]
    %v729 = vld [vmem:[#allocation5 + $0xec0] sm:$0xff]
    %v730 = vld [vmem:[#allocation5 + $0xec8] sm:$0xff]
    %v731 = vld [vmem:[#allocation5 + $0xed0] sm:$0xff]
    %v732 = vld [vmem:[#allocation5 + $0xed8] sm:$0xff]
    %v733 = vld [vmem:[#allocation5 + $0xee0] sm:$0xff]
    %v734 = vld [vmem:[#allocation5 + $0xee8] sm:$0xff]
    %v735 = vld [vmem:[#allocation5 + $0xef0] sm:$0xff]
    %v736 = vld [vmem:[#allocation5 + $0xef8] sm:$0xff]
    %v737 = vld [vmem:[#allocation5 + $0xf00] sm:$0xff]
    %v738 = vld [vmem:[#allocation5 + $0xf08] sm:$0xff]
    %v739 = vld [vmem:[#allocation5 + $0xf10] sm:$0xff]
    %v740 = vld [vmem:[#allocation5 + $0xf18] sm:$0xff]
    %v741 = vld [vmem:[#allocation5 + $0xf20] sm:$0xff]
    %v742 = vld [vmem:[#allocation5 + $0xf28] sm:$0xff]
    %v743 = vld [vmem:[#allocation5 + $0xf30] sm:$0xff]
    %v744 = vld [vmem:[#allocation5 + $0xf38] sm:$0xff]
    %v745 = vld [vmem:[#allocation5 + $0xf40] sm:$0xff]
    %v746 = vld [vmem:[#allocation5 + $0xf48] sm:$0xff]
    %v747 = vld [vmem:[#allocation5 + $0xf50] sm:$0xff]
    %v748 = vld [vmem:[#allocation5 + $0xf58] sm:$0xff]
    %v749 = vld [vmem:[#allocation5 + $0xf60] sm:$0xff]
    %v750 = vld [vmem:[#allocation5 + $0xf68] sm:$0xff]
    %v751 = vld [vmem:[#allocation5 + $0xf70] sm:$0xff]
    %v752 = vld [vmem:[#allocation5 + $0xf78] sm:$0xff]
    %v753 = vld [vmem:[#allocation5 + $0xf80] sm:$0xff]
    %v754 = vld [vmem:[#allocation5 + $0xf88] sm:$0xff]
    %v755 = vld [vmem:[#allocation5 + $0xf90] sm:$0xff]
    %v756 = vld [vmem:[#allocation5 + $0xf98] sm:$0xff]
    %v757 = vld [vmem:[#allocation5 + $0xfa0] sm:$0xff]
    %v758 = vld [vmem:[#allocation5 + $0xfa8] sm:$0xff]
    %v759 = vld [vmem:[#allocation5 + $0xfb0] sm:$0xff]
    %v760 = vld [vmem:[#allocation5 + $0xfb8] sm:$0xff]
    %v761 = vld [vmem:[#allocation5 + $0xfc0] sm:$0xff]
    %v762 = vld [vmem:[#allocation5 + $0xfc8] sm:$0xff]
    %v763 = vld [vmem:[#allocation5 + $0xfd0] sm:$0xff]
    %v764 = vld [vmem:[#allocation5 + $0xfd8] sm:$0xff]
    %v765 = vld [vmem:[#allocation5 + $0xfe0] sm:$0xff]
    %v766 = vld [vmem:[#allocation5 + $0xfe8] sm:$0xff]
    %v767 = vld [vmem:[#allocation5 + $0xff0] sm:$0xff]
    %v768 = vld [vmem:[#allocation5 + $0xff8] sm:$0xff]
    %v769 = vld [vmem:[#allocation5 + $0x1000] sm:$0xff]
    %v770 = vld [vmem:[#allocation5 + $0x1008] sm:$0xff]
    %v771 = vld [vmem:[#allocation5 + $0x1010] sm:$0xff]
    %v772 = vld [vmem:[#allocation5 + $0x1018] sm:$0xff]
    %v773 = vld [vmem:[#allocation5 + $0x1020] sm:$0xff]
    %v774 = vld [vmem:[#allocation5 + $0x1028] sm:$0xff]
    %v775 = vld [vmem:[#allocation5 + $0x1030] sm:$0xff]
    %v776 = vld [vmem:[#allocation5 + $0x1038] sm:$0xff]
    %v777 = vld [vmem:[#allocation5 + $0x1040] sm:$0xff]
    %v778 = vld [vmem:[#allocation5 + $0x1048] sm:$0xff]
    %v779 = vld [vmem:[#allocation5 + $0x1050] sm:$0xff]
    %v780 = vld [vmem:[#allocation5 + $0x1058] sm:$0xff]
    %v781 = vld [vmem:[#allocation5 + $0x1060] sm:$0xff]
    %v782 = vld [vmem:[#allocation5 + $0x1068] sm:$0xff]
    %v783 = vld [vmem:[#allocation5 + $0x1070] sm:$0xff]
    %v784 = vld [vmem:[#allocation5 + $0x1078] sm:$0xff]
    %v785 = vld [vmem:[#allocation5 + $0x1080] sm:$0xff]
    %v786 = vld [vmem:[#allocation5 + $0x1088] sm:$0xff]
    %v787 = vld [vmem:[#allocation5 + $0x1090] sm:$0xff]
    %v788 = vld [vmem:[#allocation5 + $0x1098] sm:$0xff]
    %v789 = vld [vmem:[#allocation5 + $0x10a0] sm:$0xff]
    %v790 = vld [vmem:[#allocation5 + $0x10a8] sm:$0xff]
    %v791 = vld [vmem:[#allocation5 + $0x10b0] sm:$0xff]
    %v792 = vld [vmem:[#allocation5 + $0x10b8] sm:$0xff]
    %v793 = vld [vmem:[#allocation5 + $0x10c0] sm:$0xff]
    %v794 = vld [vmem:[#allocation5 + $0x10c8] sm:$0xff]
    %v795 = vld [vmem:[#allocation5 + $0x10d0] sm:$0xff]
    %v796 = vld [vmem:[#allocation5 + $0x10d8] sm:$0xff]
    %v797 = vld [vmem:[#allocation5 + $0x10e0] sm:$0xff]
    %v798 = vld [vmem:[#allocation5 + $0x10e8] sm:$0xff]
    %v799 = vld [vmem:[#allocation5 + $0x10f0] sm:$0xff]
    %v800 = vld [vmem:[#allocation5 + $0x10f8] sm:$0xff]
    %v801 = vld [vmem:[#allocation5 + $0x1100] sm:$0xff]
    %v802 = vld [vmem:[#allocation5 + $0x1108] sm:$0xff]
    %v803 = vld [vmem:[#allocation5 + $0x1110] sm:$0xff]
    %v804 = vld [vmem:[#allocation5 + $0x1118] sm:$0xff]
    %v805 = vld [vmem:[#allocation5 + $0x1120] sm:$0xff]
    %v806 = vld [vmem:[#allocation5 + $0x1128] sm:$0xff]
    %v807 = vld [vmem:[#allocation5 + $0x1130] sm:$0xff]
    %v808 = vld [vmem:[#allocation5 + $0x1138] sm:$0xff]
    %v809 = vld [vmem:[#allocation5 + $0x1140] sm:$0xff]
    %v810 = vld [vmem:[#allocation5 + $0x1148] sm:$0xff]
    %v811 = vld [vmem:[#allocation5 + $0x1150] sm:$0xff]
    %v812 = vld [vmem:[#allocation5 + $0x1158] sm:$0xff]
    %v813 = vld [vmem:[#allocation5 + $0x1160] sm:$0xff]
    %v814 = vld [vmem:[#allocation5 + $0x1168] sm:$0xff]
    %v815 = vld [vmem:[#allocation5 + $0x1170] sm:$0xff]
    %v816 = vld [vmem:[#allocation5 + $0x1178] sm:$0xff]
    %v817 = vld [vmem:[#allocation5 + $0x1180] sm:$0xff]
    %v818 = vld [vmem:[#allocation5 + $0x1188] sm:$0xff]
    %v819 = vld [vmem:[#allocation5 + $0x1190] sm:$0xff]
    %v820 = vld [vmem:[#allocation5 + $0x1198] sm:$0xff]
    %v821 = vld [vmem:[#allocation5 + $0x11a0] sm:$0xff]
    %v822 = vld [vmem:[#allocation5 + $0x11a8] sm:$0xff]
    %v823 = vld [vmem:[#allocation5 + $0x11b0] sm:$0xff]
    %v824 = vld [vmem:[#allocation5 + $0x11b8] sm:$0xff]
    %v825 = vld [vmem:[#allocation5 + $0x11c0] sm:$0xff]
    %v826 = vld [vmem:[#allocation5 + $0x11c8] sm:$0xff]
    %v827 = vld [vmem:[#allocation5 + $0x11d0] sm:$0xff]
    %v828 = vld [vmem:[#allocation5 + $0x11d8] sm:$0xff]
    %v829 = vld [vmem:[#allocation5 + $0x11e0] sm:$0xff]
    %v830 = vld [vmem:[#allocation5 + $0x11e8] sm:$0xff]
    %v831 = vld [vmem:[#allocation5 + $0x11f0] sm:$0xff]
    %v832 = vld [vmem:[#allocation5 + $0x11f8] sm:$0xff]
    %v833 = vld [vmem:[#allocation5 + $0x1200] sm:$0xff]
    %v834 = vld [vmem:[#allocation5 + $0x1208] sm:$0xff]
    %v835 = vld [vmem:[#allocation5 + $0x1210] sm:$0xff]
    %v836 = vld [vmem:[#allocation5 + $0x1218] sm:$0xff]
    %v837 = vld [vmem:[#allocation5 + $0x1220] sm:$0xff]
    %v838 = vld [vmem:[#allocation5 + $0x1228] sm:$0xff]
    %v839 = vld [vmem:[#allocation5 + $0x1230] sm:$0xff]
    %v840 = vld [vmem:[#allocation5 + $0x1238] sm:$0xff]
    %v841 = vld [vmem:[#allocation5 + $0x1240] sm:$0xff]
    %v842 = vld [vmem:[#allocation5 + $0x1248] sm:$0xff]
    %v843 = vld [vmem:[#allocation5 + $0x1250] sm:$0xff]
    %v844 = vld [vmem:[#allocation5 + $0x1258] sm:$0xff]
    %v845 = vld [vmem:[#allocation5 + $0x1260] sm:$0xff]
    %v846 = vld [vmem:[#allocation5 + $0x1268] sm:$0xff]
    %v847 = vld [vmem:[#allocation5 + $0x1270] sm:$0xff]
    %v848 = vld [vmem:[#allocation5 + $0x1278] sm:$0xff]
    %v849 = vld [vmem:[#allocation5 + $0x1280] sm:$0xff]
    %v850 = vld [vmem:[#allocation5 + $0x1288] sm:$0xff]
    %v851 = vld [vmem:[#allocation5 + $0x1290] sm:$0xff]
    %v852 = vld [vmem:[#allocation5 + $0x1298] sm:$0xff]
    %v853 = vld [vmem:[#allocation5 + $0x12a0] sm:$0xff]
    %v854 = vld [vmem:[#allocation5 + $0x12a8] sm:$0xff]
    %v855 = vld [vmem:[#allocation5 + $0x12b0] sm:$0xff]
    %v856 = vld [vmem:[#allocation5 + $0x12b8] sm:$0xff]
    %v857 = vld [vmem:[#allocation5 + $0x12c0] sm:$0xff]
    %v858 = vld [vmem:[#allocation5 + $0x12c8] sm:$0xff]
    %v859 = vld [vmem:[#allocation5 + $0x12d0] sm:$0xff]
    %v860 = vld [vmem:[#allocation5 + $0x12d8] sm:$0xff]
    %v861 = vld [vmem:[#allocation5 + $0x12e0] sm:$0xff]
    %v862 = vld [vmem:[#allocation5 + $0x12e8] sm:$0xff]
    %v863 = vld [vmem:[#allocation5 + $0x12f0] sm:$0xff]
    %v864 = vld [vmem:[#allocation5 + $0x12f8] sm:$0xff]
    %v865 = vld [vmem:[#allocation5 + $0x1300] sm:$0xff]
    %v866 = vld [vmem:[#allocation5 + $0x1308] sm:$0xff]
    %v867 = vld [vmem:[#allocation5 + $0x1310] sm:$0xff]
    %v868 = vld [vmem:[#allocation5 + $0x1318] sm:$0xff]
    %v869 = vld [vmem:[#allocation5 + $0x1320] sm:$0xff]
    %v870 = vld [vmem:[#allocation5 + $0x1328] sm:$0xff]
    %v871 = vld [vmem:[#allocation5 + $0x1330] sm:$0xff]
    %v872 = vld [vmem:[#allocation5 + $0x1338] sm:$0xff]
    %v873 = vld [vmem:[#allocation5 + $0x1340] sm:$0xff]
    %v874 = vld [vmem:[#allocation5 + $0x1348] sm:$0xff]
    %v875 = vld [vmem:[#allocation5 + $0x1350] sm:$0xff]
    %v876 = vld [vmem:[#allocation5 + $0x1358] sm:$0xff]
    %v877 = vld [vmem:[#allocation5 + $0x1360] sm:$0xff]
    %v878 = vld [vmem:[#allocation5 + $0x1368] sm:$0xff]
    %v879 = vld [vmem:[#allocation5 + $0x1370] sm:$0xff]
    %v880 = vld [vmem:[#allocation5 + $0x1378] sm:$0xff]
    %v881 = vld [vmem:[#allocation5 + $0x1380] sm:$0xff]
    %v882 = vld [vmem:[#allocation5 + $0x1388] sm:$0xff]
    %v883 = vld [vmem:[#allocation5 + $0x1390] sm:$0xff]
    %v884 = vld [vmem:[#allocation5 + $0x1398] sm:$0xff]
    %v885 = vld [vmem:[#allocation5 + $0x13a0] sm:$0xff]
    %v886 = vld [vmem:[#allocation5 + $0x13a8] sm:$0xff]
    %v887 = vld [vmem:[#allocation5 + $0x13b0] sm:$0xff]
    %v888 = vld [vmem:[#allocation5 + $0x13b8] sm:$0xff]
    %v889 = vld [vmem:[#allocation5 + $0x13c0] sm:$0xff]
    %v890 = vld [vmem:[#allocation5 + $0x13c8] sm:$0xff]
    %v891 = vld [vmem:[#allocation5 + $0x13d0] sm:$0xff]
    %v892 = vld [vmem:[#allocation5 + $0x13d8] sm:$0xff]
    %v893 = vld [vmem:[#allocation5 + $0x13e0] sm:$0xff]
    %v894 = vld [vmem:[#allocation5 + $0x13e8] sm:$0xff]
    %v895 = vld [vmem:[#allocation5 + $0x13f0] sm:$0xff]
    %v896 = vld [vmem:[#allocation5 + $0x13f8] sm:$0xff]
    %v897 = vld [vmem:[#allocation5 + $0x1400] sm:$0xff]
    %v898 = vld [vmem:[#allocation5 + $0x1408] sm:$0xff]
    %v899 = vld [vmem:[#allocation5 + $0x1410] sm:$0xff]
    %v900 = vld [vmem:[#allocation5 + $0x1418] sm:$0xff]
    %v901 = vld [vmem:[#allocation5 + $0x1420] sm:$0xff]
    %v902 = vld [vmem:[#allocation5 + $0x1428] sm:$0xff]
    %v903 = vld [vmem:[#allocation5 + $0x1430] sm:$0xff]
    %v904 = vld [vmem:[#allocation5 + $0x1438] sm:$0xff]
    %v905 = vld [vmem:[#allocation5 + $0x1440] sm:$0xff]
    %v906 = vld [vmem:[#allocation5 + $0x1448] sm:$0xff]
    %v907 = vld [vmem:[#allocation5 + $0x1450] sm:$0xff]
    %v908 = vld [vmem:[#allocation5 + $0x1458] sm:$0xff]
    %v909 = vld [vmem:[#allocation5 + $0x1460] sm:$0xff]
    %v910 = vld [vmem:[#allocation5 + $0x1468] sm:$0xff]
    %v911 = vld [vmem:[#allocation5 + $0x1470] sm:$0xff]
    %v912 = vld [vmem:[#allocation5 + $0x1478] sm:$0xff]
    %v913 = vld [vmem:[#allocation5 + $0x1480] sm:$0xff]
    %v914 = vld [vmem:[#allocation5 + $0x1488] sm:$0xff]
    %v915 = vld [vmem:[#allocation5 + $0x1490] sm:$0xff]
    %v916 = vld [vmem:[#allocation5 + $0x1498] sm:$0xff]
    %v917 = vld [vmem:[#allocation5 + $0x14a0] sm:$0xff]
    %v918 = vld [vmem:[#allocation5 + $0x14a8] sm:$0xff]
    %v919 = vld [vmem:[#allocation5 + $0x14b0] sm:$0xff]
    %v920 = vld [vmem:[#allocation5 + $0x14b8] sm:$0xff]
    %v921 = vld [vmem:[#allocation5 + $0x14c0] sm:$0xff]
    %v922 = vld [vmem:[#allocation5 + $0x14c8] sm:$0xff]
    %v923 = vld [vmem:[#allocation5 + $0x14d0] sm:$0xff]
    %v924 = vld [vmem:[#allocation5 + $0x14d8] sm:$0xff]
    %v925 = vld [vmem:[#allocation5 + $0x14e0] sm:$0xff]
    %v926 = vld [vmem:[#allocation5 + $0x14e8] sm:$0xff]
    %v927 = vld [vmem:[#allocation5 + $0x14f0] sm:$0xff]
    %v928 = vld [vmem:[#allocation5 + $0x14f8] sm:$0xff]
    %v929 = vld [vmem:[#allocation5 + $0x1500] sm:$0xff]
    %v930 = vld [vmem:[#allocation5 + $0x1508] sm:$0xff]
    %v931 = vld [vmem:[#allocation5 + $0x1510] sm:$0xff]
    %v932 = vld [vmem:[#allocation5 + $0x1518] sm:$0xff]
    %v933 = vld [vmem:[#allocation5 + $0x1520] sm:$0xff]
    %v934 = vld [vmem:[#allocation5 + $0x1528] sm:$0xff]
    %v935 = vld [vmem:[#allocation5 + $0x1530] sm:$0xff]
    %v936 = vld [vmem:[#allocation5 + $0x1538] sm:$0xff]
    %v937 = vld [vmem:[#allocation5 + $0x1540] sm:$0xff]
    %v938 = vld [vmem:[#allocation5 + $0x1548] sm:$0xff]
    %v939 = vld [vmem:[#allocation5 + $0x1550] sm:$0xff]
    %v940 = vld [vmem:[#allocation5 + $0x1558] sm:$0xff]
    %v941 = vld [vmem:[#allocation5 + $0x1560] sm:$0xff]
    %v942 = vld [vmem:[#allocation5 + $0x1568] sm:$0xff]
    %v943 = vld [vmem:[#allocation5 + $0x1570] sm:$0xff]
    %v944 = vld [vmem:[#allocation5 + $0x1578] sm:$0xff]
    %v945 = vld [vmem:[#allocation5 + $0x1580] sm:$0xff]
    %v946 = vld [vmem:[#allocation5 + $0x1588] sm:$0xff]
    %v947 = vld [vmem:[#allocation5 + $0x1590] sm:$0xff]
    %v948 = vld [vmem:[#allocation5 + $0x1598] sm:$0xff]
    %v949 = vld [vmem:[#allocation5 + $0x15a0] sm:$0xff]
    %v950 = vld [vmem:[#allocation5 + $0x15a8] sm:$0xff]
    %v951 = vld [vmem:[#allocation5 + $0x15b0] sm:$0xff]
    %v952 = vld [vmem:[#allocation5 + $0x15b8] sm:$0xff]
    %v953 = vld [vmem:[#allocation5 + $0x15c0] sm:$0xff]
    %v954 = vld [vmem:[#allocation5 + $0x15c8] sm:$0xff]
    %v955 = vld [vmem:[#allocation5 + $0x15d0] sm:$0xff]
    %v956 = vld [vmem:[#allocation5 + $0x15d8] sm:$0xff]
    %v957 = vld [vmem:[#allocation5 + $0x15e0] sm:$0xff]
    %v958 = vld [vmem:[#allocation5 + $0x15e8] sm:$0xff]
    %v959 = vld [vmem:[#allocation5 + $0x15f0] sm:$0xff]
    %v960 = vld [vmem:[#allocation5 + $0x15f8] sm:$0xff]
    %v961 = vld [vmem:[#allocation5 + $0x1600] sm:$0xff]
    %v962 = vld [vmem:[#allocation5 + $0x1608] sm:$0xff]
    %v963 = vld [vmem:[#allocation5 + $0x1610] sm:$0xff]
    %v964 = vld [vmem:[#allocation5 + $0x1618] sm:$0xff]
    %v965 = vld [vmem:[#allocation5 + $0x1620] sm:$0xff]
    %v966 = vld [vmem:[#allocation5 + $0x1628] sm:$0xff]
    %v967 = vld [vmem:[#allocation5 + $0x1630] sm:$0xff]
    %v968 = vld [vmem:[#allocation5 + $0x1638] sm:$0xff]
    %v969 = vld [vmem:[#allocation5 + $0x1640] sm:$0xff]
    %v970 = vld [vmem:[#allocation5 + $0x1648] sm:$0xff]
    %v971 = vld [vmem:[#allocation5 + $0x1650] sm:$0xff]
    %v972 = vld [vmem:[#allocation5 + $0x1658] sm:$0xff]
    %v973 = vld [vmem:[#allocation5 + $0x1660] sm:$0xff]
    %v974 = vld [vmem:[#allocation5 + $0x1668] sm:$0xff]
    %v975 = vld [vmem:[#allocation5 + $0x1670] sm:$0xff]
    %v976 = vld [vmem:[#allocation5 + $0x1678] sm:$0xff]
    %v977 = vld [vmem:[#allocation5 + $0x1680] sm:$0xff]
    %v978 = vld [vmem:[#allocation5 + $0x1688] sm:$0xff]
    %v979 = vld [vmem:[#allocation5 + $0x1690] sm:$0xff]
    %v980 = vld [vmem:[#allocation5 + $0x1698] sm:$0xff]
    %v981 = vld [vmem:[#allocation5 + $0x16a0] sm:$0xff]
    %v982 = vld [vmem:[#allocation5 + $0x16a8] sm:$0xff]
    %v983 = vld [vmem:[#allocation5 + $0x16b0] sm:$0xff]
    %v984 = vld [vmem:[#allocation5 + $0x16b8] sm:$0xff]
    %v985 = vld [vmem:[#allocation5 + $0x16c0] sm:$0xff]
    %v986 = vld [vmem:[#allocation5 + $0x16c8] sm:$0xff]
    %v987 = vld [vmem:[#allocation5 + $0x16d0] sm:$0xff]
    %v988 = vld [vmem:[#allocation5 + $0x16d8] sm:$0xff]
    %v989 = vld [vmem:[#allocation5 + $0x16e0] sm:$0xff]
    %v990 = vld [vmem:[#allocation5 + $0x16e8] sm:$0xff]
    %v991 = vld [vmem:[#allocation5 + $0x16f0] sm:$0xff]
    %v992 = vld [vmem:[#allocation5 + $0x16f8] sm:$0xff]
    %v993 = vld [vmem:[#allocation5 + $0x1700] sm:$0xff]
    %v994 = vld [vmem:[#allocation5 + $0x1708] sm:$0xff]
    %v995 = vld [vmem:[#allocation5 + $0x1710] sm:$0xff]
    %v996 = vld [vmem:[#allocation5 + $0x1718] sm:$0xff]
    %v997 = vld [vmem:[#allocation5 + $0x1720] sm:$0xff]
    %v998 = vld [vmem:[#allocation5 + $0x1728] sm:$0xff]
    %v999 = vld [vmem:[#allocation5 + $0x1730] sm:$0xff]
    %v1000 = vld [vmem:[#allocation5 + $0x1738] sm:$0xff]
    %v1001 = vld [vmem:[#allocation5 + $0x1740] sm:$0xff]
    %v1002 = vld [vmem:[#allocation5 + $0x1748] sm:$0xff]
    %v1003 = vld [vmem:[#allocation5 + $0x1750] sm:$0xff]
    %v1004 = vld [vmem:[#allocation5 + $0x1758] sm:$0xff]
    %v1005 = vld [vmem:[#allocation5 + $0x1760] sm:$0xff]
    %v1006 = vld [vmem:[#allocation5 + $0x1768] sm:$0xff]
    %v1007 = vld [vmem:[#allocation5 + $0x1770] sm:$0xff]
    %v1008 = vld [vmem:[#allocation5 + $0x1778] sm:$0xff]
    %v1009 = vld [vmem:[#allocation5 + $0x1780] sm:$0xff]
    %v1010 = vld [vmem:[#allocation5 + $0x1788] sm:$0xff]
    %v1011 = vld [vmem:[#allocation5 + $0x1790] sm:$0xff]
    %v1012 = vld [vmem:[#allocation5 + $0x1798] sm:$0xff]
    %v1013 = vld [vmem:[#allocation5 + $0x17a0] sm:$0xff]
    %v1014 = vld [vmem:[#allocation5 + $0x17a8] sm:$0xff]
    %v1015 = vld [vmem:[#allocation5 + $0x17b0] sm:$0xff]
    %v1016 = vld [vmem:[#allocation5 + $0x17b8] sm:$0xff]
    %v1017 = vld [vmem:[#allocation5 + $0x17c0] sm:$0xff]
    %v1018 = vld [vmem:[#allocation5 + $0x17c8] sm:$0xff]
    %v1019 = vld [vmem:[#allocation5 + $0x17d0] sm:$0xff]
    %v1020 = vld [vmem:[#allocation5 + $0x17d8] sm:$0xff]
    %v1021 = vld [vmem:[#allocation5 + $0x17e0] sm:$0xff]
    %v1022 = vld [vmem:[#allocation5 + $0x17e8] sm:$0xff]
    %v1023 = vld [vmem:[#allocation5 + $0x17f0] sm:$0xff]
    %v1024 = vld [vmem:[#allocation5 + $0x17f8] sm:$0xff]
    %v1025 = vld [vmem:[#allocation7] sm:$0xff]
    %v1026 = vld [vmem:[#allocation7 + $0x8] sm:$0xf]
    %v1029 = vlaneseq
    %v1030 = vshrl.u32 %v1029, 7
    %v1031 = vsub.s32 0, %v1030
    %v1032 = vrot.slane %v1025, %v1031
    %v1033 = vlaneseq
    %v1034 = vshrl.u32 %v1033, 7
    %v1035 = vsub.s32 1, %v1034
    %v1036 = vrot.slane %v1025, %v1035
    %v1037 = vlaneseq
    %v1038 = vshrl.u32 %v1037, 7
    %v1039 = vsub.s32 2, %v1038
    %v1040 = vrot.slane %v1025, %v1039
    %v1041 = vlaneseq
    %v1042 = vshrl.u32 %v1041, 7
    %v1043 = vsub.s32 3, %v1042
    %v1044 = vrot.slane %v1025, %v1043
    %v1045 = vlaneseq
    %v1046 = vshrl.u32 %v1045, 7
    %v1047 = vsub.s32 4, %v1046
    %v1048 = vrot.slane %v1025, %v1047
    %v1049 = vlaneseq
    %v1050 = vshrl.u32 %v1049, 7
    %v1051 = vsub.s32 5, %v1050
    %v1052 = vrot.slane %v1025, %v1051
    %v1053 = vlaneseq
    %v1054 = vshrl.u32 %v1053, 7
    %v1055 = vsub.s32 6, %v1054
    %v1056 = vrot.slane %v1025, %v1055
    %v1057 = vlaneseq
    %v1058 = vshrl.u32 %v1057, 7
    %v1059 = vsub.s32 7, %v1058
    %v1060 = vrot.slane %v1025, %v1059
    %v1061 = vlaneseq
    %v1062 = vshrl.u32 %v1061, 7
    %v1063 = vsub.s32 0, %v1062
    %v1064 = vrot.slane %v1026, %v1063
    %v1065 = vlaneseq
    %v1066 = vshrl.u32 %v1065, 7
    %v1067 = vsub.s32 1, %v1066
    %v1068 = vrot.slane %v1026, %v1067
    %v1069 = vlaneseq
    %v1070 = vshrl.u32 %v1069, 7
    %v1071 = vsub.s32 2, %v1070
    %v1072 = vrot.slane %v1026, %v1071
    %v1073 = vlaneseq
    %v1074 = vshrl.u32 %v1073, 7
    %v1075 = vsub.s32 3, %v1074
    %v1076 = vrot.slane %v1026, %v1075
    %v1093 = vunpack.c.l.b16 %v253
    %v1094 = vunpack.c.h.b16 %v253
    %v1095 = vunpack.c.l.b16 %v254
    %v1096 = vunpack.c.h.b16 %v254
    %v1097 = vunpack.c.l.b16 %v255
    %v1098 = vunpack.c.h.b16 %v255
    %v1099 = vunpack.c.l.b16 %v256
    %v1100 = vunpack.c.h.b16 %v256
    %v1101 = vpack.c.b16 %v1093, %v1093
    %v1102 = vpack.c.b16 %v1094, %v1094
    %v1103 = vpack.c.b16 %v1095, %v1095
    %v1104 = vpack.c.b16 %v1096, %v1096
    %v1105 = vpack.c.b16 %v1097, %v1097
    %v1106 = vpack.c.b16 %v1098, %v1098
    %v1107 = vpack.c.b16 %v1099, %v1099
    %v1108 = vpack.c.b16 %v1100, %v1100
    %v1885 = vunpack.c.l.b16 %v257
    %v1886 = vunpack.c.h.b16 %v257
    %v1887 = vunpack.c.l.b16 %v258
    %v1888 = vunpack.c.h.b16 %v258
    %v1889 = vunpack.c.l.b16 %v259
    %v1890 = vunpack.c.h.b16 %v259
    %v1891 = vunpack.c.l.b16 %v260
    %v1892 = vunpack.c.h.b16 %v260
    %v1893 = vunpack.c.l.b16 %v261
    %v1894 = vunpack.c.h.b16 %v261
    %v1895 = vunpack.c.l.b16 %v262
    %v1896 = vunpack.c.h.b16 %v262
    %v1897 = vunpack.c.l.b16 %v263
    %v1898 = vunpack.c.h.b16 %v263
    %v1899 = vunpack.c.l.b16 %v264
    %v1900 = vunpack.c.h.b16 %v264
    %v1901 = vunpack.c.l.b16 %v265
    %v1902 = vunpack.c.h.b16 %v265
    %v1903 = vunpack.c.l.b16 %v266
    %v1904 = vunpack.c.h.b16 %v266
    %v1905 = vunpack.c.l.b16 %v267
    %v1906 = vunpack.c.h.b16 %v267
    %v1907 = vunpack.c.l.b16 %v268
    %v1908 = vunpack.c.h.b16 %v268
    %v1909 = vunpack.c.l.b16 %v269
    %v1910 = vunpack.c.h.b16 %v269
    %v1911 = vunpack.c.l.b16 %v270
    %v1912 = vunpack.c.h.b16 %v270
    %v1913 = vunpack.c.l.b16 %v271
    %v1914 = vunpack.c.h.b16 %v271
    %v1915 = vunpack.c.l.b16 %v272
    %v1916 = vunpack.c.h.b16 %v272
    %v1917 = vunpack.c.l.b16 %v273
    %v1918 = vunpack.c.h.b16 %v273
    %v1919 = vunpack.c.l.b16 %v274
    %v1920 = vunpack.c.h.b16 %v274
    %v1921 = vunpack.c.l.b16 %v275
    %v1922 = vunpack.c.h.b16 %v275
    %v1923 = vunpack.c.l.b16 %v276
    %v1924 = vunpack.c.h.b16 %v276
    %v1925 = vunpack.c.l.b16 %v277
    %v1926 = vunpack.c.h.b16 %v277
    %v1927 = vunpack.c.l.b16 %v278
    %v1928 = vunpack.c.h.b16 %v278
    %v1929 = vunpack.c.l.b16 %v279
    %v1930 = vunpack.c.h.b16 %v279
    %v1931 = vunpack.c.l.b16 %v280
    %v1932 = vunpack.c.h.b16 %v280
    %v1933 = vunpack.c.l.b16 %v281
    %v1934 = vunpack.c.h.b16 %v281
    %v1935 = vunpack.c.l.b16 %v282
    %v1936 = vunpack.c.h.b16 %v282
    %v1937 = vunpack.c.l.b16 %v283
    %v1938 = vunpack.c.h.b16 %v283
    %v1939 = vunpack.c.l.b16 %v284
    %v1940 = vunpack.c.h.b16 %v284
    %v1941 = vunpack.c.l.b16 %v285
    %v1942 = vunpack.c.h.b16 %v285
    %v1943 = vunpack.c.l.b16 %v286
    %v1944 = vunpack.c.h.b16 %v286
    %v1945 = vunpack.c.l.b16 %v287
    %v1946 = vunpack.c.h.b16 %v287
    %v1947 = vunpack.c.l.b16 %v288
    %v1948 = vunpack.c.h.b16 %v288
    %v1949 = vunpack.c.l.b16 %v289
    %v1950 = vunpack.c.h.b16 %v289
    %v1951 = vunpack.c.l.b16 %v290
    %v1952 = vunpack.c.h.b16 %v290
    %v1953 = vunpack.c.l.b16 %v291
    %v1954 = vunpack.c.h.b16 %v291
    %v1955 = vunpack.c.l.b16 %v292
    %v1956 = vunpack.c.h.b16 %v292
    %v1957 = vunpack.c.l.b16 %v293
    %v1958 = vunpack.c.h.b16 %v293
    %v1959 = vunpack.c.l.b16 %v294
    %v1960 = vunpack.c.h.b16 %v294
    %v1961 = vunpack.c.l.b16 %v295
    %v1962 = vunpack.c.h.b16 %v295
    %v1963 = vunpack.c.l.b16 %v296
    %v1964 = vunpack.c.h.b16 %v296
    %v1965 = vunpack.c.l.b16 %v297
    %v1966 = vunpack.c.h.b16 %v297
    %v1967 = vunpack.c.l.b16 %v298
    %v1968 = vunpack.c.h.b16 %v298
    %v1969 = vunpack.c.l.b16 %v299
    %v1970 = vunpack.c.h.b16 %v299
    %v1971 = vunpack.c.l.b16 %v300
    %v1972 = vunpack.c.h.b16 %v300
    %v1973 = vunpack.c.l.b16 %v301
    %v1974 = vunpack.c.h.b16 %v301
    %v1975 = vunpack.c.l.b16 %v302
    %v1976 = vunpack.c.h.b16 %v302
    %v1977 = vunpack.c.l.b16 %v303
    %v1978 = vunpack.c.h.b16 %v303
    %v1979 = vunpack.c.l.b16 %v304
    %v1980 = vunpack.c.h.b16 %v304
    %v1981 = vunpack.c.l.b16 %v305
    %v1982 = vunpack.c.h.b16 %v305
    %v1983 = vunpack.c.l.b16 %v306
    %v1984 = vunpack.c.h.b16 %v306
    %v1985 = vunpack.c.l.b16 %v307
    %v1986 = vunpack.c.h.b16 %v307
    %v1987 = vunpack.c.l.b16 %v308
    %v1988 = vunpack.c.h.b16 %v308
    %v1989 = vunpack.c.l.b16 %v309
    %v1990 = vunpack.c.h.b16 %v309
    %v1991 = vunpack.c.l.b16 %v310
    %v1992 = vunpack.c.h.b16 %v310
    %v1993 = vunpack.c.l.b16 %v311
    %v1994 = vunpack.c.h.b16 %v311
    %v1995 = vunpack.c.l.b16 %v312
    %v1996 = vunpack.c.h.b16 %v312
    %v1997 = vunpack.c.l.b16 %v313
    %v1998 = vunpack.c.h.b16 %v313
    %v1999 = vunpack.c.l.b16 %v314
    %v2000 = vunpack.c.h.b16 %v314
    %v2001 = vunpack.c.l.b16 %v315
    %v2002 = vunpack.c.h.b16 %v315
    %v2003 = vunpack.c.l.b16 %v316
    %v2004 = vunpack.c.h.b16 %v316
    %v2005 = vunpack.c.l.b16 %v317
    %v2006 = vunpack.c.h.b16 %v317
    %v2007 = vunpack.c.l.b16 %v318
    %v2008 = vunpack.c.h.b16 %v318
    %v2009 = vunpack.c.l.b16 %v319
    %v2010 = vunpack.c.h.b16 %v319
    %v2011 = vunpack.c.l.b16 %v320
    %v2012 = vunpack.c.h.b16 %v320
    %v2013 = vunpack.c.l.b16 %v321
    %v2014 = vunpack.c.h.b16 %v321
    %v2015 = vunpack.c.l.b16 %v322
    %v2016 = vunpack.c.h.b16 %v322
    %v2017 = vunpack.c.l.b16 %v323
    %v2018 = vunpack.c.h.b16 %v323
    %v2019 = vunpack.c.l.b16 %v324
    %v2020 = vunpack.c.h.b16 %v324
    %v2021 = vunpack.c.l.b16 %v325
    %v2022 = vunpack.c.h.b16 %v325
    %v2023 = vunpack.c.l.b16 %v326
    %v2024 = vunpack.c.h.b16 %v326
    %v2025 = vunpack.c.l.b16 %v327
    %v2026 = vunpack.c.h.b16 %v327
    %v2027 = vunpack.c.l.b16 %v328
    %v2028 = vunpack.c.h.b16 %v328
    %v2029 = vunpack.c.l.b16 %v329
    %v2030 = vunpack.c.h.b16 %v329
    %v2031 = vunpack.c.l.b16 %v330
    %v2032 = vunpack.c.h.b16 %v330
    %v2033 = vunpack.c.l.b16 %v331
    %v2034 = vunpack.c.h.b16 %v331
    %v2035 = vunpack.c.l.b16 %v332
    %v2036 = vunpack.c.h.b16 %v332
    %v2037 = vunpack.c.l.b16 %v333
    %v2038 = vunpack.c.h.b16 %v333
    %v2039 = vunpack.c.l.b16 %v334
    %v2040 = vunpack.c.h.b16 %v334
    %v2041 = vunpack.c.l.b16 %v335
    %v2042 = vunpack.c.h.b16 %v335
    %v2043 = vunpack.c.l.b16 %v336
    %v2044 = vunpack.c.h.b16 %v336
    %v2045 = vunpack.c.l.b16 %v337
    %v2046 = vunpack.c.h.b16 %v337
    %v2047 = vunpack.c.l.b16 %v338
    %v2048 = vunpack.c.h.b16 %v338
    %v2049 = vunpack.c.l.b16 %v339
    %v2050 = vunpack.c.h.b16 %v339
    %v2051 = vunpack.c.l.b16 %v340
    %v2052 = vunpack.c.h.b16 %v340
    %v2053 = vunpack.c.l.b16 %v341
    %v2054 = vunpack.c.h.b16 %v341
    %v2055 = vunpack.c.l.b16 %v342
    %v2056 = vunpack.c.h.b16 %v342
    %v2057 = vunpack.c.l.b16 %v343
    %v2058 = vunpack.c.h.b16 %v343
    %v2059 = vunpack.c.l.b16 %v344
    %v2060 = vunpack.c.h.b16 %v344
    %v2061 = vunpack.c.l.b16 %v345
    %v2062 = vunpack.c.h.b16 %v345
    %v2063 = vunpack.c.l.b16 %v346
    %v2064 = vunpack.c.h.b16 %v346
    %v2065 = vunpack.c.l.b16 %v347
    %v2066 = vunpack.c.h.b16 %v347
    %v2067 = vunpack.c.l.b16 %v348
    %v2068 = vunpack.c.h.b16 %v348
    %v2069 = vunpack.c.l.b16 %v349
    %v2070 = vunpack.c.h.b16 %v349
    %v2071 = vunpack.c.l.b16 %v350
    %v2072 = vunpack.c.h.b16 %v350
    %v2073 = vunpack.c.l.b16 %v351
    %v2074 = vunpack.c.h.b16 %v351
    %v2075 = vunpack.c.l.b16 %v352
    %v2076 = vunpack.c.h.b16 %v352
    %v2077 = vunpack.c.l.b16 %v353
    %v2078 = vunpack.c.h.b16 %v353
    %v2079 = vunpack.c.l.b16 %v354
    %v2080 = vunpack.c.h.b16 %v354
    %v2081 = vunpack.c.l.b16 %v355
    %v2082 = vunpack.c.h.b16 %v355
    %v2083 = vunpack.c.l.b16 %v356
    %v2084 = vunpack.c.h.b16 %v356
    %v2085 = vunpack.c.l.b16 %v357
    %v2086 = vunpack.c.h.b16 %v357
    %v2087 = vunpack.c.l.b16 %v358
    %v2088 = vunpack.c.h.b16 %v358
    %v2089 = vunpack.c.l.b16 %v359
    %v2090 = vunpack.c.h.b16 %v359
    %v2091 = vunpack.c.l.b16 %v360
    %v2092 = vunpack.c.h.b16 %v360
    %v2093 = vunpack.c.l.b16 %v361
    %v2094 = vunpack.c.h.b16 %v361
    %v2095 = vunpack.c.l.b16 %v362
    %v2096 = vunpack.c.h.b16 %v362
    %v2097 = vunpack.c.l.b16 %v363
    %v2098 = vunpack.c.h.b16 %v363
    %v2099 = vunpack.c.l.b16 %v364
    %v2100 = vunpack.c.h.b16 %v364
    %v2101 = vunpack.c.l.b16 %v365
    %v2102 = vunpack.c.h.b16 %v365
    %v2103 = vunpack.c.l.b16 %v366
    %v2104 = vunpack.c.h.b16 %v366
    %v2105 = vunpack.c.l.b16 %v367
    %v2106 = vunpack.c.h.b16 %v367
    %v2107 = vunpack.c.l.b16 %v368
    %v2108 = vunpack.c.h.b16 %v368
    %v2109 = vunpack.c.l.b16 %v369
    %v2110 = vunpack.c.h.b16 %v369
    %v2111 = vunpack.c.l.b16 %v370
    %v2112 = vunpack.c.h.b16 %v370
    %v2113 = vunpack.c.l.b16 %v371
    %v2114 = vunpack.c.h.b16 %v371
    %v2115 = vunpack.c.l.b16 %v372
    %v2116 = vunpack.c.h.b16 %v372
    %v2117 = vunpack.c.l.b16 %v373
    %v2118 = vunpack.c.h.b16 %v373
    %v2119 = vunpack.c.l.b16 %v374
    %v2120 = vunpack.c.h.b16 %v374
    %v2121 = vunpack.c.l.b16 %v375
    %v2122 = vunpack.c.h.b16 %v375
    %v2123 = vunpack.c.l.b16 %v376
    %v2124 = vunpack.c.h.b16 %v376
    %v2125 = vunpack.c.l.b16 %v377
    %v2126 = vunpack.c.h.b16 %v377
    %v2127 = vunpack.c.l.b16 %v378
    %v2128 = vunpack.c.h.b16 %v378
    %v2129 = vunpack.c.l.b16 %v379
    %v2130 = vunpack.c.h.b16 %v379
    %v2131 = vunpack.c.l.b16 %v380
    %v2132 = vunpack.c.h.b16 %v380
    %v2133 = vunpack.c.l.b16 %v381
    %v2134 = vunpack.c.h.b16 %v381
    %v2135 = vunpack.c.l.b16 %v382
    %v2136 = vunpack.c.h.b16 %v382
    %v2137 = vunpack.c.l.b16 %v383
    %v2138 = vunpack.c.h.b16 %v383
    %v2139 = vunpack.c.l.b16 %v384
    %v2140 = vunpack.c.h.b16 %v384
    %v2141 = vunpack.c.l.b16 %v385
    %v2142 = vunpack.c.h.b16 %v385
    %v2143 = vunpack.c.l.b16 %v386
    %v2144 = vunpack.c.h.b16 %v386
    %v2145 = vunpack.c.l.b16 %v387
    %v2146 = vunpack.c.h.b16 %v387
    %v2147 = vunpack.c.l.b16 %v388
    %v2148 = vunpack.c.h.b16 %v388
    %v2149 = vunpack.c.l.b16 %v389
    %v2150 = vunpack.c.h.b16 %v389
    %v2151 = vunpack.c.l.b16 %v390
    %v2152 = vunpack.c.h.b16 %v390
    %v2153 = vunpack.c.l.b16 %v391
    %v2154 = vunpack.c.h.b16 %v391
    %v2155 = vunpack.c.l.b16 %v392
    %v2156 = vunpack.c.h.b16 %v392
    %v2157 = vunpack.c.l.b16 %v393
    %v2158 = vunpack.c.h.b16 %v393
    %v2159 = vunpack.c.l.b16 %v394
    %v2160 = vunpack.c.h.b16 %v394
    %v2161 = vunpack.c.l.b16 %v395
    %v2162 = vunpack.c.h.b16 %v395
    %v2163 = vunpack.c.l.b16 %v396
    %v2164 = vunpack.c.h.b16 %v396
    %v2165 = vunpack.c.l.b16 %v397
    %v2166 = vunpack.c.h.b16 %v397
    %v2167 = vunpack.c.l.b16 %v398
    %v2168 = vunpack.c.h.b16 %v398
    %v2169 = vunpack.c.l.b16 %v399
    %v2170 = vunpack.c.h.b16 %v399
    %v2171 = vunpack.c.l.b16 %v400
    %v2172 = vunpack.c.h.b16 %v400
    %v2173 = vunpack.c.l.b16 %v401
    %v2174 = vunpack.c.h.b16 %v401
    %v2175 = vunpack.c.l.b16 %v402
    %v2176 = vunpack.c.h.b16 %v402
    %v2177 = vunpack.c.l.b16 %v403
    %v2178 = vunpack.c.h.b16 %v403
    %v2179 = vunpack.c.l.b16 %v404
    %v2180 = vunpack.c.h.b16 %v404
    %v2181 = vunpack.c.l.b16 %v405
    %v2182 = vunpack.c.h.b16 %v405
    %v2183 = vunpack.c.l.b16 %v406
    %v2184 = vunpack.c.h.b16 %v406
    %v2185 = vunpack.c.l.b16 %v407
    %v2186 = vunpack.c.h.b16 %v407
    %v2187 = vunpack.c.l.b16 %v408
    %v2188 = vunpack.c.h.b16 %v408
    %v2189 = vunpack.c.l.b16 %v409
    %v2190 = vunpack.c.h.b16 %v409
    %v2191 = vunpack.c.l.b16 %v410
    %v2192 = vunpack.c.h.b16 %v410
    %v2193 = vunpack.c.l.b16 %v411
    %v2194 = vunpack.c.h.b16 %v411
    %v2195 = vunpack.c.l.b16 %v412
    %v2196 = vunpack.c.h.b16 %v412
    %v2197 = vunpack.c.l.b16 %v413
    %v2198 = vunpack.c.h.b16 %v413
    %v2199 = vunpack.c.l.b16 %v414
    %v2200 = vunpack.c.h.b16 %v414
    %v2201 = vunpack.c.l.b16 %v415
    %v2202 = vunpack.c.h.b16 %v415
    %v2203 = vunpack.c.l.b16 %v416
    %v2204 = vunpack.c.h.b16 %v416
    %v2205 = vunpack.c.l.b16 %v417
    %v2206 = vunpack.c.h.b16 %v417
    %v2207 = vunpack.c.l.b16 %v418
    %v2208 = vunpack.c.h.b16 %v418
    %v2209 = vunpack.c.l.b16 %v419
    %v2210 = vunpack.c.h.b16 %v419
    %v2211 = vunpack.c.l.b16 %v420
    %v2212 = vunpack.c.h.b16 %v420
    %v2213 = vunpack.c.l.b16 %v421
    %v2214 = vunpack.c.h.b16 %v421
    %v2215 = vunpack.c.l.b16 %v422
    %v2216 = vunpack.c.h.b16 %v422
    %v2217 = vunpack.c.l.b16 %v423
    %v2218 = vunpack.c.h.b16 %v423
    %v2219 = vunpack.c.l.b16 %v424
    %v2220 = vunpack.c.h.b16 %v424
    %v2221 = vunpack.c.l.b16 %v425
    %v2222 = vunpack.c.h.b16 %v425
    %v2223 = vunpack.c.l.b16 %v426
    %v2224 = vunpack.c.h.b16 %v426
    %v2225 = vunpack.c.l.b16 %v427
    %v2226 = vunpack.c.h.b16 %v427
    %v2227 = vunpack.c.l.b16 %v428
    %v2228 = vunpack.c.h.b16 %v428
    %v2229 = vunpack.c.l.b16 %v429
    %v2230 = vunpack.c.h.b16 %v429
    %v2231 = vunpack.c.l.b16 %v430
    %v2232 = vunpack.c.h.b16 %v430
    %v2233 = vunpack.c.l.b16 %v431
    %v2234 = vunpack.c.h.b16 %v431
    %v2235 = vunpack.c.l.b16 %v432
    %v2236 = vunpack.c.h.b16 %v432
    %v2237 = vunpack.c.l.b16 %v433
    %v2238 = vunpack.c.h.b16 %v433
    %v2239 = vunpack.c.l.b16 %v434
    %v2240 = vunpack.c.h.b16 %v434
    %v2241 = vunpack.c.l.b16 %v435
    %v2242 = vunpack.c.h.b16 %v435
    %v2243 = vunpack.c.l.b16 %v436
    %v2244 = vunpack.c.h.b16 %v436
    %v2245 = vunpack.c.l.b16 %v437
    %v2246 = vunpack.c.h.b16 %v437
    %v2247 = vunpack.c.l.b16 %v438
    %v2248 = vunpack.c.h.b16 %v438
    %v2249 = vunpack.c.l.b16 %v439
    %v2250 = vunpack.c.h.b16 %v439
    %v2251 = vunpack.c.l.b16 %v440
    %v2252 = vunpack.c.h.b16 %v440
    %v2253 = vunpack.c.l.b16 %v441
    %v2254 = vunpack.c.h.b16 %v441
    %v2255 = vunpack.c.l.b16 %v442
    %v2256 = vunpack.c.h.b16 %v442
    %v2257 = vunpack.c.l.b16 %v443
    %v2258 = vunpack.c.h.b16 %v443
    %v2259 = vunpack.c.l.b16 %v444
    %v2260 = vunpack.c.h.b16 %v444
    %v2261 = vunpack.c.l.b16 %v445
    %v2262 = vunpack.c.h.b16 %v445
    %v2263 = vunpack.c.l.b16 %v446
    %v2264 = vunpack.c.h.b16 %v446
    %v2265 = vunpack.c.l.b16 %v447
    %v2266 = vunpack.c.h.b16 %v447
    %v2267 = vunpack.c.l.b16 %v448
    %v2268 = vunpack.c.h.b16 %v448
    %v2269 = vunpack.c.l.b16 %v449
    %v2270 = vunpack.c.h.b16 %v449
    %v2271 = vunpack.c.l.b16 %v450
    %v2272 = vunpack.c.h.b16 %v450
    %v2273 = vunpack.c.l.b16 %v451
    %v2274 = vunpack.c.h.b16 %v451
    %v2275 = vunpack.c.l.b16 %v452
    %v2276 = vunpack.c.h.b16 %v452
    %v2277 = vunpack.c.l.b16 %v453
    %v2278 = vunpack.c.h.b16 %v453
    %v2279 = vunpack.c.l.b16 %v454
    %v2280 = vunpack.c.h.b16 %v454
    %v2281 = vunpack.c.l.b16 %v455
    %v2282 = vunpack.c.h.b16 %v455
    %v2283 = vunpack.c.l.b16 %v456
    %v2284 = vunpack.c.h.b16 %v456
    %v2285 = vunpack.c.l.b16 %v457
    %v2286 = vunpack.c.h.b16 %v457
    %v2287 = vunpack.c.l.b16 %v458
    %v2288 = vunpack.c.h.b16 %v458
    %v2289 = vunpack.c.l.b16 %v459
    %v2290 = vunpack.c.h.b16 %v459
    %v2291 = vunpack.c.l.b16 %v460
    %v2292 = vunpack.c.h.b16 %v460
    %v2293 = vunpack.c.l.b16 %v461
    %v2294 = vunpack.c.h.b16 %v461
    %v2295 = vunpack.c.l.b16 %v462
    %v2296 = vunpack.c.h.b16 %v462
    %v2297 = vunpack.c.l.b16 %v463
    %v2298 = vunpack.c.h.b16 %v463
    %v2299 = vunpack.c.l.b16 %v464
    %v2300 = vunpack.c.h.b16 %v464
    %v2301 = vunpack.c.l.b16 %v465
    %v2302 = vunpack.c.h.b16 %v465
    %v2303 = vunpack.c.l.b16 %v466
    %v2304 = vunpack.c.h.b16 %v466
    %v2305 = vunpack.c.l.b16 %v467
    %v2306 = vunpack.c.h.b16 %v467
    %v2307 = vunpack.c.l.b16 %v468
    %v2308 = vunpack.c.h.b16 %v468
    %v2309 = vunpack.c.l.b16 %v469
    %v2310 = vunpack.c.h.b16 %v469
    %v2311 = vunpack.c.l.b16 %v470
    %v2312 = vunpack.c.h.b16 %v470
    %v2313 = vunpack.c.l.b16 %v471
    %v2314 = vunpack.c.h.b16 %v471
    %v2315 = vunpack.c.l.b16 %v472
    %v2316 = vunpack.c.h.b16 %v472
    %v2317 = vunpack.c.l.b16 %v473
    %v2318 = vunpack.c.h.b16 %v473
    %v2319 = vunpack.c.l.b16 %v474
    %v2320 = vunpack.c.h.b16 %v474
    %v2321 = vunpack.c.l.b16 %v475
    %v2322 = vunpack.c.h.b16 %v475
    %v2323 = vunpack.c.l.b16 %v476
    %v2324 = vunpack.c.h.b16 %v476
    %v2325 = vunpack.c.l.b16 %v477
    %v2326 = vunpack.c.h.b16 %v477
    %v2327 = vunpack.c.l.b16 %v478
    %v2328 = vunpack.c.h.b16 %v478
    %v2329 = vunpack.c.l.b16 %v479
    %v2330 = vunpack.c.h.b16 %v479
    %v2331 = vunpack.c.l.b16 %v480
    %v2332 = vunpack.c.h.b16 %v480
    %v2333 = vunpack.c.l.b16 %v481
    %v2334 = vunpack.c.h.b16 %v481
    %v2335 = vunpack.c.l.b16 %v482
    %v2336 = vunpack.c.h.b16 %v482
    %v2337 = vunpack.c.l.b16 %v483
    %v2338 = vunpack.c.h.b16 %v483
    %v2339 = vunpack.c.l.b16 %v484
    %v2340 = vunpack.c.h.b16 %v484
    %v2341 = vunpack.c.l.b16 %v485
    %v2342 = vunpack.c.h.b16 %v485
    %v2343 = vunpack.c.l.b16 %v486
    %v2344 = vunpack.c.h.b16 %v486
    %v2345 = vunpack.c.l.b16 %v487
    %v2346 = vunpack.c.h.b16 %v487
    %v2347 = vunpack.c.l.b16 %v488
    %v2348 = vunpack.c.h.b16 %v488
    %v2349 = vunpack.c.l.b16 %v489
    %v2350 = vunpack.c.h.b16 %v489
    %v2351 = vunpack.c.l.b16 %v490
    %v2352 = vunpack.c.h.b16 %v490
    %v2353 = vunpack.c.l.b16 %v491
    %v2354 = vunpack.c.h.b16 %v491
    %v2355 = vunpack.c.l.b16 %v492
    %v2356 = vunpack.c.h.b16 %v492
    %v2357 = vunpack.c.l.b16 %v493
    %v2358 = vunpack.c.h.b16 %v493
    %v2359 = vunpack.c.l.b16 %v494
    %v2360 = vunpack.c.h.b16 %v494
    %v2361 = vunpack.c.l.b16 %v495
    %v2362 = vunpack.c.h.b16 %v495
    %v2363 = vunpack.c.l.b16 %v496
    %v2364 = vunpack.c.h.b16 %v496
    %v2365 = vunpack.c.l.b16 %v497
    %v2366 = vunpack.c.h.b16 %v497
    %v2367 = vunpack.c.l.b16 %v498
    %v2368 = vunpack.c.h.b16 %v498
    %v2369 = vunpack.c.l.b16 %v499
    %v2370 = vunpack.c.h.b16 %v499
    %v2371 = vunpack.c.l.b16 %v500
    %v2372 = vunpack.c.h.b16 %v500
    %v2373 = vunpack.c.l.b16 %v501
    %v2374 = vunpack.c.h.b16 %v501
    %v2375 = vunpack.c.l.b16 %v502
    %v2376 = vunpack.c.h.b16 %v502
    %v2377 = vunpack.c.l.b16 %v503
    %v2378 = vunpack.c.h.b16 %v503
    %v2379 = vunpack.c.l.b16 %v504
    %v2380 = vunpack.c.h.b16 %v504
    %v2381 = vunpack.c.l.b16 %v505
    %v2382 = vunpack.c.h.b16 %v505
    %v2383 = vunpack.c.l.b16 %v506
    %v2384 = vunpack.c.h.b16 %v506
    %v2385 = vunpack.c.l.b16 %v507
    %v2386 = vunpack.c.h.b16 %v507
    %v2387 = vunpack.c.l.b16 %v508
    %v2388 = vunpack.c.h.b16 %v508
    %v2389 = vunpack.c.l.b16 %v509
    %v2390 = vunpack.c.h.b16 %v509
    %v2391 = vunpack.c.l.b16 %v510
    %v2392 = vunpack.c.h.b16 %v510
    %v2393 = vunpack.c.l.b16 %v511
    %v2394 = vunpack.c.h.b16 %v511
    %v2395 = vunpack.c.l.b16 %v512
    %v2396 = vunpack.c.h.b16 %v512
    %v2397 = vunpack.c.l.b16 %v513
    %v2398 = vunpack.c.h.b16 %v513
    %v2399 = vunpack.c.l.b16 %v514
    %v2400 = vunpack.c.h.b16 %v514
    %v2401 = vunpack.c.l.b16 %v515
    %v2402 = vunpack.c.h.b16 %v515
    %v2403 = vunpack.c.l.b16 %v516
    %v2404 = vunpack.c.h.b16 %v516
    %v2405 = vunpack.c.l.b16 %v517
    %v2406 = vunpack.c.h.b16 %v517
    %v2407 = vunpack.c.l.b16 %v518
    %v2408 = vunpack.c.h.b16 %v518
    %v2409 = vunpack.c.l.b16 %v519
    %v2410 = vunpack.c.h.b16 %v519
    %v2411 = vunpack.c.l.b16 %v520
    %v2412 = vunpack.c.h.b16 %v520
    %v2413 = vunpack.c.l.b16 %v521
    %v2414 = vunpack.c.h.b16 %v521
    %v2415 = vunpack.c.l.b16 %v522
    %v2416 = vunpack.c.h.b16 %v522
    %v2417 = vunpack.c.l.b16 %v523
    %v2418 = vunpack.c.h.b16 %v523
    %v2419 = vunpack.c.l.b16 %v524
    %v2420 = vunpack.c.h.b16 %v524
    %v2421 = vunpack.c.l.b16 %v525
    %v2422 = vunpack.c.h.b16 %v525
    %v2423 = vunpack.c.l.b16 %v526
    %v2424 = vunpack.c.h.b16 %v526
    %v2425 = vunpack.c.l.b16 %v527
    %v2426 = vunpack.c.h.b16 %v527
    %v2427 = vunpack.c.l.b16 %v528
    %v2428 = vunpack.c.h.b16 %v528
    %v2429 = vunpack.c.l.b16 %v529
    %v2430 = vunpack.c.h.b16 %v529
    %v2431 = vunpack.c.l.b16 %v530
    %v2432 = vunpack.c.h.b16 %v530
    %v2433 = vunpack.c.l.b16 %v531
    %v2434 = vunpack.c.h.b16 %v531
    %v2435 = vunpack.c.l.b16 %v532
    %v2436 = vunpack.c.h.b16 %v532
    %v2437 = vunpack.c.l.b16 %v533
    %v2438 = vunpack.c.h.b16 %v533
    %v2439 = vunpack.c.l.b16 %v534
    %v2440 = vunpack.c.h.b16 %v534
    %v2441 = vunpack.c.l.b16 %v535
    %v2442 = vunpack.c.h.b16 %v535
    %v2443 = vunpack.c.l.b16 %v536
    %v2444 = vunpack.c.h.b16 %v536
    %v2445 = vunpack.c.l.b16 %v537
    %v2446 = vunpack.c.h.b16 %v537
    %v2447 = vunpack.c.l.b16 %v538
    %v2448 = vunpack.c.h.b16 %v538
    %v2449 = vunpack.c.l.b16 %v539
    %v2450 = vunpack.c.h.b16 %v539
    %v2451 = vunpack.c.l.b16 %v540
    %v2452 = vunpack.c.h.b16 %v540
    %v2453 = vunpack.c.l.b16 %v541
    %v2454 = vunpack.c.h.b16 %v541
    %v2455 = vunpack.c.l.b16 %v542
    %v2456 = vunpack.c.h.b16 %v542
    %v2457 = vunpack.c.l.b16 %v543
    %v2458 = vunpack.c.h.b16 %v543
    %v2459 = vunpack.c.l.b16 %v544
    %v2460 = vunpack.c.h.b16 %v544
    %v2461 = vunpack.c.l.b16 %v545
    %v2462 = vunpack.c.h.b16 %v545
    %v2463 = vunpack.c.l.b16 %v546
    %v2464 = vunpack.c.h.b16 %v546
    %v2465 = vunpack.c.l.b16 %v547
    %v2466 = vunpack.c.h.b16 %v547
    %v2467 = vunpack.c.l.b16 %v548
    %v2468 = vunpack.c.h.b16 %v548
    %v2469 = vunpack.c.l.b16 %v549
    %v2470 = vunpack.c.h.b16 %v549
    %v2471 = vunpack.c.l.b16 %v550
    %v2472 = vunpack.c.h.b16 %v550
    %v2473 = vunpack.c.l.b16 %v551
    %v2474 = vunpack.c.h.b16 %v551
    %v2475 = vunpack.c.l.b16 %v552
    %v2476 = vunpack.c.h.b16 %v552
    %v2477 = vunpack.c.l.b16 %v553
    %v2478 = vunpack.c.h.b16 %v553
    %v2479 = vunpack.c.l.b16 %v554
    %v2480 = vunpack.c.h.b16 %v554
    %v2481 = vunpack.c.l.b16 %v555
    %v2482 = vunpack.c.h.b16 %v555
    %v2483 = vunpack.c.l.b16 %v556
    %v2484 = vunpack.c.h.b16 %v556
    %v2485 = vunpack.c.l.b16 %v557
    %v2486 = vunpack.c.h.b16 %v557
    %v2487 = vunpack.c.l.b16 %v558
    %v2488 = vunpack.c.h.b16 %v558
    %v2489 = vunpack.c.l.b16 %v559
    %v2490 = vunpack.c.h.b16 %v559
    %v2491 = vunpack.c.l.b16 %v560
    %v2492 = vunpack.c.h.b16 %v560
    %v2493 = vunpack.c.l.b16 %v561
    %v2494 = vunpack.c.h.b16 %v561
    %v2495 = vunpack.c.l.b16 %v562
    %v2496 = vunpack.c.h.b16 %v562
    %v2497 = vunpack.c.l.b16 %v563
    %v2498 = vunpack.c.h.b16 %v563
    %v2499 = vunpack.c.l.b16 %v564
    %v2500 = vunpack.c.h.b16 %v564
    %v2501 = vunpack.c.l.b16 %v565
    %v2502 = vunpack.c.h.b16 %v565
    %v2503 = vunpack.c.l.b16 %v566
    %v2504 = vunpack.c.h.b16 %v566
    %v2505 = vunpack.c.l.b16 %v567
    %v2506 = vunpack.c.h.b16 %v567
    %v2507 = vunpack.c.l.b16 %v568
    %v2508 = vunpack.c.h.b16 %v568
    %v2509 = vunpack.c.l.b16 %v569
    %v2510 = vunpack.c.h.b16 %v569
    %v2511 = vunpack.c.l.b16 %v570
    %v2512 = vunpack.c.h.b16 %v570
    %v2513 = vunpack.c.l.b16 %v571
    %v2514 = vunpack.c.h.b16 %v571
    %v2515 = vunpack.c.l.b16 %v572
    %v2516 = vunpack.c.h.b16 %v572
    %v2517 = vunpack.c.l.b16 %v573
    %v2518 = vunpack.c.h.b16 %v573
    %v2519 = vunpack.c.l.b16 %v574
    %v2520 = vunpack.c.h.b16 %v574
    %v2521 = vunpack.c.l.b16 %v575
    %v2522 = vunpack.c.h.b16 %v575
    %v2523 = vunpack.c.l.b16 %v576
    %v2524 = vunpack.c.h.b16 %v576
    %v2525 = vunpack.c.l.b16 %v577
    %v2526 = vunpack.c.h.b16 %v577
    %v2527 = vunpack.c.l.b16 %v578
    %v2528 = vunpack.c.h.b16 %v578
    %v2529 = vunpack.c.l.b16 %v579
    %v2530 = vunpack.c.h.b16 %v579
    %v2531 = vunpack.c.l.b16 %v580
    %v2532 = vunpack.c.h.b16 %v580
    %v2533 = vunpack.c.l.b16 %v581
    %v2534 = vunpack.c.h.b16 %v581
    %v2535 = vunpack.c.l.b16 %v582
    %v2536 = vunpack.c.h.b16 %v582
    %v2537 = vunpack.c.l.b16 %v583
    %v2538 = vunpack.c.h.b16 %v583
    %v2539 = vunpack.c.l.b16 %v584
    %v2540 = vunpack.c.h.b16 %v584
    %v2541 = vunpack.c.l.b16 %v585
    %v2542 = vunpack.c.h.b16 %v585
    %v2543 = vunpack.c.l.b16 %v586
    %v2544 = vunpack.c.h.b16 %v586
    %v2545 = vunpack.c.l.b16 %v587
    %v2546 = vunpack.c.h.b16 %v587
    %v2547 = vunpack.c.l.b16 %v588
    %v2548 = vunpack.c.h.b16 %v588
    %v2549 = vunpack.c.l.b16 %v589
    %v2550 = vunpack.c.h.b16 %v589
    %v2551 = vunpack.c.l.b16 %v590
    %v2552 = vunpack.c.h.b16 %v590
    %v2553 = vunpack.c.l.b16 %v591
    %v2554 = vunpack.c.h.b16 %v591
    %v2555 = vunpack.c.l.b16 %v592
    %v2556 = vunpack.c.h.b16 %v592
    %v2557 = vunpack.c.l.b16 %v593
    %v2558 = vunpack.c.h.b16 %v593
    %v2559 = vunpack.c.l.b16 %v594
    %v2560 = vunpack.c.h.b16 %v594
    %v2561 = vunpack.c.l.b16 %v595
    %v2562 = vunpack.c.h.b16 %v595
    %v2563 = vunpack.c.l.b16 %v596
    %v2564 = vunpack.c.h.b16 %v596
    %v2565 = vunpack.c.l.b16 %v597
    %v2566 = vunpack.c.h.b16 %v597
    %v2567 = vunpack.c.l.b16 %v598
    %v2568 = vunpack.c.h.b16 %v598
    %v2569 = vunpack.c.l.b16 %v599
    %v2570 = vunpack.c.h.b16 %v599
    %v2571 = vunpack.c.l.b16 %v600
    %v2572 = vunpack.c.h.b16 %v600
    %v2573 = vunpack.c.l.b16 %v601
    %v2574 = vunpack.c.h.b16 %v601
    %v2575 = vunpack.c.l.b16 %v602
    %v2576 = vunpack.c.h.b16 %v602
    %v2577 = vunpack.c.l.b16 %v603
    %v2578 = vunpack.c.h.b16 %v603
    %v2579 = vunpack.c.l.b16 %v604
    %v2580 = vunpack.c.h.b16 %v604
    %v2581 = vunpack.c.l.b16 %v605
    %v2582 = vunpack.c.h.b16 %v605
    %v2583 = vunpack.c.l.b16 %v606
    %v2584 = vunpack.c.h.b16 %v606
    %v2585 = vunpack.c.l.b16 %v607
    %v2586 = vunpack.c.h.b16 %v607
    %v2587 = vunpack.c.l.b16 %v608
    %v2588 = vunpack.c.h.b16 %v608
    %v2589 = vunpack.c.l.b16 %v609
    %v2590 = vunpack.c.h.b16 %v609
    %v2591 = vunpack.c.l.b16 %v610
    %v2592 = vunpack.c.h.b16 %v610
    %v2593 = vunpack.c.l.b16 %v611
    %v2594 = vunpack.c.h.b16 %v611
    %v2595 = vunpack.c.l.b16 %v612
    %v2596 = vunpack.c.h.b16 %v612
    %v2597 = vunpack.c.l.b16 %v613
    %v2598 = vunpack.c.h.b16 %v613
    %v2599 = vunpack.c.l.b16 %v614
    %v2600 = vunpack.c.h.b16 %v614
    %v2601 = vunpack.c.l.b16 %v615
    %v2602 = vunpack.c.h.b16 %v615
    %v2603 = vunpack.c.l.b16 %v616
    %v2604 = vunpack.c.h.b16 %v616
    %v2605 = vunpack.c.l.b16 %v617
    %v2606 = vunpack.c.h.b16 %v617
    %v2607 = vunpack.c.l.b16 %v618
    %v2608 = vunpack.c.h.b16 %v618
    %v2609 = vunpack.c.l.b16 %v619
    %v2610 = vunpack.c.h.b16 %v619
    %v2611 = vunpack.c.l.b16 %v620
    %v2612 = vunpack.c.h.b16 %v620
    %v2613 = vunpack.c.l.b16 %v621
    %v2614 = vunpack.c.h.b16 %v621
    %v2615 = vunpack.c.l.b16 %v622
    %v2616 = vunpack.c.h.b16 %v622
    %v2617 = vunpack.c.l.b16 %v623
    %v2618 = vunpack.c.h.b16 %v623
    %v2619 = vunpack.c.l.b16 %v624
    %v2620 = vunpack.c.h.b16 %v624
    %v2621 = vunpack.c.l.b16 %v625
    %v2622 = vunpack.c.h.b16 %v625
    %v2623 = vunpack.c.l.b16 %v626
    %v2624 = vunpack.c.h.b16 %v626
    %v2625 = vunpack.c.l.b16 %v627
    %v2626 = vunpack.c.h.b16 %v627
    %v2627 = vunpack.c.l.b16 %v628
    %v2628 = vunpack.c.h.b16 %v628
    %v2629 = vunpack.c.l.b16 %v629
    %v2630 = vunpack.c.h.b16 %v629
    %v2631 = vunpack.c.l.b16 %v630
    %v2632 = vunpack.c.h.b16 %v630
    %v2633 = vunpack.c.l.b16 %v631
    %v2634 = vunpack.c.h.b16 %v631
    %v2635 = vunpack.c.l.b16 %v632
    %v2636 = vunpack.c.h.b16 %v632
    %v2637 = vunpack.c.l.b16 %v633
    %v2638 = vunpack.c.h.b16 %v633
    %v2639 = vunpack.c.l.b16 %v634
    %v2640 = vunpack.c.h.b16 %v634
    %v2641 = vunpack.c.l.b16 %v635
    %v2642 = vunpack.c.h.b16 %v635
    %v2643 = vunpack.c.l.b16 %v636
    %v2644 = vunpack.c.h.b16 %v636
    %v2645 = vunpack.c.l.b16 %v637
    %v2646 = vunpack.c.h.b16 %v637
    %v2647 = vunpack.c.l.b16 %v638
    %v2648 = vunpack.c.h.b16 %v638
    %v2649 = vunpack.c.l.b16 %v639
    %v2650 = vunpack.c.h.b16 %v639
    %v2651 = vunpack.c.l.b16 %v640
    %v2652 = vunpack.c.h.b16 %v640
    %v2653 = vunpack.c.l.b16 %v641
    %v2654 = vunpack.c.h.b16 %v641
    %v2655 = vunpack.c.l.b16 %v642
    %v2656 = vunpack.c.h.b16 %v642
    %v2657 = vunpack.c.l.b16 %v643
    %v2658 = vunpack.c.h.b16 %v643
    %v2659 = vunpack.c.l.b16 %v644
    %v2660 = vunpack.c.h.b16 %v644
    %v2661 = vunpack.c.l.b16 %v645
    %v2662 = vunpack.c.h.b16 %v645
    %v2663 = vunpack.c.l.b16 %v646
    %v2664 = vunpack.c.h.b16 %v646
    %v2665 = vunpack.c.l.b16 %v647
    %v2666 = vunpack.c.h.b16 %v647
    %v2667 = vunpack.c.l.b16 %v648
    %v2668 = vunpack.c.h.b16 %v648
    %v2669 = vunpack.c.l.b16 %v649
    %v2670 = vunpack.c.h.b16 %v649
    %v2671 = vunpack.c.l.b16 %v650
    %v2672 = vunpack.c.h.b16 %v650
    %v2673 = vunpack.c.l.b16 %v651
    %v2674 = vunpack.c.h.b16 %v651
    %v2675 = vunpack.c.l.b16 %v652
    %v2676 = vunpack.c.h.b16 %v652
    %v2677 = vunpack.c.l.b16 %v653
    %v2678 = vunpack.c.h.b16 %v653
    %v2679 = vunpack.c.l.b16 %v654
    %v2680 = vunpack.c.h.b16 %v654
    %v2681 = vunpack.c.l.b16 %v655
    %v2682 = vunpack.c.h.b16 %v655
    %v2683 = vunpack.c.l.b16 %v656
    %v2684 = vunpack.c.h.b16 %v656
    %v2685 = vunpack.c.l.b16 %v657
    %v2686 = vunpack.c.h.b16 %v657
    %v2687 = vunpack.c.l.b16 %v658
    %v2688 = vunpack.c.h.b16 %v658
    %v2689 = vunpack.c.l.b16 %v659
    %v2690 = vunpack.c.h.b16 %v659
    %v2691 = vunpack.c.l.b16 %v660
    %v2692 = vunpack.c.h.b16 %v660
    %v2693 = vunpack.c.l.b16 %v661
    %v2694 = vunpack.c.h.b16 %v661
    %v2695 = vunpack.c.l.b16 %v662
    %v2696 = vunpack.c.h.b16 %v662
    %v2697 = vunpack.c.l.b16 %v663
    %v2698 = vunpack.c.h.b16 %v663
    %v2699 = vunpack.c.l.b16 %v664
    %v2700 = vunpack.c.h.b16 %v664
    %v2701 = vunpack.c.l.b16 %v665
    %v2702 = vunpack.c.h.b16 %v665
    %v2703 = vunpack.c.l.b16 %v666
    %v2704 = vunpack.c.h.b16 %v666
    %v2705 = vunpack.c.l.b16 %v667
    %v2706 = vunpack.c.h.b16 %v667
    %v2707 = vunpack.c.l.b16 %v668
    %v2708 = vunpack.c.h.b16 %v668
    %v2709 = vunpack.c.l.b16 %v669
    %v2710 = vunpack.c.h.b16 %v669
    %v2711 = vunpack.c.l.b16 %v670
    %v2712 = vunpack.c.h.b16 %v670
    %v2713 = vunpack.c.l.b16 %v671
    %v2714 = vunpack.c.h.b16 %v671
    %v2715 = vunpack.c.l.b16 %v672
    %v2716 = vunpack.c.h.b16 %v672
    %v2717 = vunpack.c.l.b16 %v673
    %v2718 = vunpack.c.h.b16 %v673
    %v2719 = vunpack.c.l.b16 %v674
    %v2720 = vunpack.c.h.b16 %v674
    %v2721 = vunpack.c.l.b16 %v675
    %v2722 = vunpack.c.h.b16 %v675
    %v2723 = vunpack.c.l.b16 %v676
    %v2724 = vunpack.c.h.b16 %v676
    %v2725 = vunpack.c.l.b16 %v677
    %v2726 = vunpack.c.h.b16 %v677
    %v2727 = vunpack.c.l.b16 %v678
    %v2728 = vunpack.c.h.b16 %v678
    %v2729 = vunpack.c.l.b16 %v679
    %v2730 = vunpack.c.h.b16 %v679
    %v2731 = vunpack.c.l.b16 %v680
    %v2732 = vunpack.c.h.b16 %v680
    %v2733 = vunpack.c.l.b16 %v681
    %v2734 = vunpack.c.h.b16 %v681
    %v2735 = vunpack.c.l.b16 %v682
    %v2736 = vunpack.c.h.b16 %v682
    %v2737 = vunpack.c.l.b16 %v683
    %v2738 = vunpack.c.h.b16 %v683
    %v2739 = vunpack.c.l.b16 %v684
    %v2740 = vunpack.c.h.b16 %v684
    %v2741 = vunpack.c.l.b16 %v685
    %v2742 = vunpack.c.h.b16 %v685
    %v2743 = vunpack.c.l.b16 %v686
    %v2744 = vunpack.c.h.b16 %v686
    %v2745 = vunpack.c.l.b16 %v687
    %v2746 = vunpack.c.h.b16 %v687
    %v2747 = vunpack.c.l.b16 %v688
    %v2748 = vunpack.c.h.b16 %v688
    %v2749 = vunpack.c.l.b16 %v689
    %v2750 = vunpack.c.h.b16 %v689
    %v2751 = vunpack.c.l.b16 %v690
    %v2752 = vunpack.c.h.b16 %v690
    %v2753 = vunpack.c.l.b16 %v691
    %v2754 = vunpack.c.h.b16 %v691
    %v2755 = vunpack.c.l.b16 %v692
    %v2756 = vunpack.c.h.b16 %v692
    %v2757 = vunpack.c.l.b16 %v693
    %v2758 = vunpack.c.h.b16 %v693
    %v2759 = vunpack.c.l.b16 %v694
    %v2760 = vunpack.c.h.b16 %v694
    %v2761 = vunpack.c.l.b16 %v695
    %v2762 = vunpack.c.h.b16 %v695
    %v2763 = vunpack.c.l.b16 %v696
    %v2764 = vunpack.c.h.b16 %v696
    %v2765 = vunpack.c.l.b16 %v697
    %v2766 = vunpack.c.h.b16 %v697
    %v2767 = vunpack.c.l.b16 %v698
    %v2768 = vunpack.c.h.b16 %v698
    %v2769 = vunpack.c.l.b16 %v699
    %v2770 = vunpack.c.h.b16 %v699
    %v2771 = vunpack.c.l.b16 %v700
    %v2772 = vunpack.c.h.b16 %v700
    %v2773 = vunpack.c.l.b16 %v701
    %v2774 = vunpack.c.h.b16 %v701
    %v2775 = vunpack.c.l.b16 %v702
    %v2776 = vunpack.c.h.b16 %v702
    %v2777 = vunpack.c.l.b16 %v703
    %v2778 = vunpack.c.h.b16 %v703
    %v2779 = vunpack.c.l.b16 %v704
    %v2780 = vunpack.c.h.b16 %v704
    %v2781 = vunpack.c.l.b16 %v705
    %v2782 = vunpack.c.h.b16 %v705
    %v2783 = vunpack.c.l.b16 %v706
    %v2784 = vunpack.c.h.b16 %v706
    %v2785 = vunpack.c.l.b16 %v707
    %v2786 = vunpack.c.h.b16 %v707
    %v2787 = vunpack.c.l.b16 %v708
    %v2788 = vunpack.c.h.b16 %v708
    %v2789 = vunpack.c.l.b16 %v709
    %v2790 = vunpack.c.h.b16 %v709
    %v2791 = vunpack.c.l.b16 %v710
    %v2792 = vunpack.c.h.b16 %v710
    %v2793 = vunpack.c.l.b16 %v711
    %v2794 = vunpack.c.h.b16 %v711
    %v2795 = vunpack.c.l.b16 %v712
    %v2796 = vunpack.c.h.b16 %v712
    %v2797 = vunpack.c.l.b16 %v713
    %v2798 = vunpack.c.h.b16 %v713
    %v2799 = vunpack.c.l.b16 %v714
    %v2800 = vunpack.c.h.b16 %v714
    %v2801 = vunpack.c.l.b16 %v715
    %v2802 = vunpack.c.h.b16 %v715
    %v2803 = vunpack.c.l.b16 %v716
    %v2804 = vunpack.c.h.b16 %v716
    %v2805 = vunpack.c.l.b16 %v717
    %v2806 = vunpack.c.h.b16 %v717
    %v2807 = vunpack.c.l.b16 %v718
    %v2808 = vunpack.c.h.b16 %v718
    %v2809 = vunpack.c.l.b16 %v719
    %v2810 = vunpack.c.h.b16 %v719
    %v2811 = vunpack.c.l.b16 %v720
    %v2812 = vunpack.c.h.b16 %v720
    %v2813 = vunpack.c.l.b16 %v721
    %v2814 = vunpack.c.h.b16 %v721
    %v2815 = vunpack.c.l.b16 %v722
    %v2816 = vunpack.c.h.b16 %v722
    %v2817 = vunpack.c.l.b16 %v723
    %v2818 = vunpack.c.h.b16 %v723
    %v2819 = vunpack.c.l.b16 %v724
    %v2820 = vunpack.c.h.b16 %v724
    %v2821 = vunpack.c.l.b16 %v725
    %v2822 = vunpack.c.h.b16 %v725
    %v2823 = vunpack.c.l.b16 %v726
    %v2824 = vunpack.c.h.b16 %v726
    %v2825 = vunpack.c.l.b16 %v727
    %v2826 = vunpack.c.h.b16 %v727
    %v2827 = vunpack.c.l.b16 %v728
    %v2828 = vunpack.c.h.b16 %v728
    %v2829 = vunpack.c.l.b16 %v729
    %v2830 = vunpack.c.h.b16 %v729
    %v2831 = vunpack.c.l.b16 %v730
    %v2832 = vunpack.c.h.b16 %v730
    %v2833 = vunpack.c.l.b16 %v731
    %v2834 = vunpack.c.h.b16 %v731
    %v2835 = vunpack.c.l.b16 %v732
    %v2836 = vunpack.c.h.b16 %v732
    %v2837 = vunpack.c.l.b16 %v733
    %v2838 = vunpack.c.h.b16 %v733
    %v2839 = vunpack.c.l.b16 %v734
    %v2840 = vunpack.c.h.b16 %v734
    %v2841 = vunpack.c.l.b16 %v735
    %v2842 = vunpack.c.h.b16 %v735
    %v2843 = vunpack.c.l.b16 %v736
    %v2844 = vunpack.c.h.b16 %v736
    %v2845 = vunpack.c.l.b16 %v737
    %v2846 = vunpack.c.h.b16 %v737
    %v2847 = vunpack.c.l.b16 %v738
    %v2848 = vunpack.c.h.b16 %v738
    %v2849 = vunpack.c.l.b16 %v739
    %v2850 = vunpack.c.h.b16 %v739
    %v2851 = vunpack.c.l.b16 %v740
    %v2852 = vunpack.c.h.b16 %v740
    %v2853 = vunpack.c.l.b16 %v741
    %v2854 = vunpack.c.h.b16 %v741
    %v2855 = vunpack.c.l.b16 %v742
    %v2856 = vunpack.c.h.b16 %v742
    %v2857 = vunpack.c.l.b16 %v743
    %v2858 = vunpack.c.h.b16 %v743
    %v2859 = vunpack.c.l.b16 %v744
    %v2860 = vunpack.c.h.b16 %v744
    %v2861 = vunpack.c.l.b16 %v745
    %v2862 = vunpack.c.h.b16 %v745
    %v2863 = vunpack.c.l.b16 %v746
    %v2864 = vunpack.c.h.b16 %v746
    %v2865 = vunpack.c.l.b16 %v747
    %v2866 = vunpack.c.h.b16 %v747
    %v2867 = vunpack.c.l.b16 %v748
    %v2868 = vunpack.c.h.b16 %v748
    %v2869 = vunpack.c.l.b16 %v749
    %v2870 = vunpack.c.h.b16 %v749
    %v2871 = vunpack.c.l.b16 %v750
    %v2872 = vunpack.c.h.b16 %v750
    %v2873 = vunpack.c.l.b16 %v751
    %v2874 = vunpack.c.h.b16 %v751
    %v2875 = vunpack.c.l.b16 %v752
    %v2876 = vunpack.c.h.b16 %v752
    %v2877 = vunpack.c.l.b16 %v753
    %v2878 = vunpack.c.h.b16 %v753
    %v2879 = vunpack.c.l.b16 %v754
    %v2880 = vunpack.c.h.b16 %v754
    %v2881 = vunpack.c.l.b16 %v755
    %v2882 = vunpack.c.h.b16 %v755
    %v2883 = vunpack.c.l.b16 %v756
    %v2884 = vunpack.c.h.b16 %v756
    %v2885 = vunpack.c.l.b16 %v757
    %v2886 = vunpack.c.h.b16 %v757
    %v2887 = vunpack.c.l.b16 %v758
    %v2888 = vunpack.c.h.b16 %v758
    %v2889 = vunpack.c.l.b16 %v759
    %v2890 = vunpack.c.h.b16 %v759
    %v2891 = vunpack.c.l.b16 %v760
    %v2892 = vunpack.c.h.b16 %v760
    %v2893 = vunpack.c.l.b16 %v761
    %v2894 = vunpack.c.h.b16 %v761
    %v2895 = vunpack.c.l.b16 %v762
    %v2896 = vunpack.c.h.b16 %v762
    %v2897 = vunpack.c.l.b16 %v763
    %v2898 = vunpack.c.h.b16 %v763
    %v2899 = vunpack.c.l.b16 %v764
    %v2900 = vunpack.c.h.b16 %v764
    %v2901 = vunpack.c.l.b16 %v765
    %v2902 = vunpack.c.h.b16 %v765
    %v2903 = vunpack.c.l.b16 %v766
    %v2904 = vunpack.c.h.b16 %v766
    %v2905 = vunpack.c.l.b16 %v767
    %v2906 = vunpack.c.h.b16 %v767
    %v2907 = vunpack.c.l.b16 %v768
    %v2908 = vunpack.c.h.b16 %v768
    %v2909 = vunpack.c.l.b16 %v769
    %v2910 = vunpack.c.h.b16 %v769
    %v2911 = vunpack.c.l.b16 %v770
    %v2912 = vunpack.c.h.b16 %v770
    %v2913 = vunpack.c.l.b16 %v771
    %v2914 = vunpack.c.h.b16 %v771
    %v2915 = vunpack.c.l.b16 %v772
    %v2916 = vunpack.c.h.b16 %v772
    %v2917 = vunpack.c.l.b16 %v773
    %v2918 = vunpack.c.h.b16 %v773
    %v2919 = vunpack.c.l.b16 %v774
    %v2920 = vunpack.c.h.b16 %v774
    %v2921 = vunpack.c.l.b16 %v775
    %v2922 = vunpack.c.h.b16 %v775
    %v2923 = vunpack.c.l.b16 %v776
    %v2924 = vunpack.c.h.b16 %v776
    %v2925 = vunpack.c.l.b16 %v777
    %v2926 = vunpack.c.h.b16 %v777
    %v2927 = vunpack.c.l.b16 %v778
    %v2928 = vunpack.c.h.b16 %v778
    %v2929 = vunpack.c.l.b16 %v779
    %v2930 = vunpack.c.h.b16 %v779
    %v2931 = vunpack.c.l.b16 %v780
    %v2932 = vunpack.c.h.b16 %v780
    %v2933 = vunpack.c.l.b16 %v781
    %v2934 = vunpack.c.h.b16 %v781
    %v2935 = vunpack.c.l.b16 %v782
    %v2936 = vunpack.c.h.b16 %v782
    %v2937 = vunpack.c.l.b16 %v783
    %v2938 = vunpack.c.h.b16 %v783
    %v2939 = vunpack.c.l.b16 %v784
    %v2940 = vunpack.c.h.b16 %v784
    %v2941 = vunpack.c.l.b16 %v785
    %v2942 = vunpack.c.h.b16 %v785
    %v2943 = vunpack.c.l.b16 %v786
    %v2944 = vunpack.c.h.b16 %v786
    %v2945 = vunpack.c.l.b16 %v787
    %v2946 = vunpack.c.h.b16 %v787
    %v2947 = vunpack.c.l.b16 %v788
    %v2948 = vunpack.c.h.b16 %v788
    %v2949 = vunpack.c.l.b16 %v789
    %v2950 = vunpack.c.h.b16 %v789
    %v2951 = vunpack.c.l.b16 %v790
    %v2952 = vunpack.c.h.b16 %v790
    %v2953 = vunpack.c.l.b16 %v791
    %v2954 = vunpack.c.h.b16 %v791
    %v2955 = vunpack.c.l.b16 %v792
    %v2956 = vunpack.c.h.b16 %v792
    %v2957 = vunpack.c.l.b16 %v793
    %v2958 = vunpack.c.h.b16 %v793
    %v2959 = vunpack.c.l.b16 %v794
    %v2960 = vunpack.c.h.b16 %v794
    %v2961 = vunpack.c.l.b16 %v795
    %v2962 = vunpack.c.h.b16 %v795
    %v2963 = vunpack.c.l.b16 %v796
    %v2964 = vunpack.c.h.b16 %v796
    %v2965 = vunpack.c.l.b16 %v797
    %v2966 = vunpack.c.h.b16 %v797
    %v2967 = vunpack.c.l.b16 %v798
    %v2968 = vunpack.c.h.b16 %v798
    %v2969 = vunpack.c.l.b16 %v799
    %v2970 = vunpack.c.h.b16 %v799
    %v2971 = vunpack.c.l.b16 %v800
    %v2972 = vunpack.c.h.b16 %v800
    %v2973 = vunpack.c.l.b16 %v801
    %v2974 = vunpack.c.h.b16 %v801
    %v2975 = vunpack.c.l.b16 %v802
    %v2976 = vunpack.c.h.b16 %v802
    %v2977 = vunpack.c.l.b16 %v803
    %v2978 = vunpack.c.h.b16 %v803
    %v2979 = vunpack.c.l.b16 %v804
    %v2980 = vunpack.c.h.b16 %v804
    %v2981 = vunpack.c.l.b16 %v805
    %v2982 = vunpack.c.h.b16 %v805
    %v2983 = vunpack.c.l.b16 %v806
    %v2984 = vunpack.c.h.b16 %v806
    %v2985 = vunpack.c.l.b16 %v807
    %v2986 = vunpack.c.h.b16 %v807
    %v2987 = vunpack.c.l.b16 %v808
    %v2988 = vunpack.c.h.b16 %v808
    %v2989 = vunpack.c.l.b16 %v809
    %v2990 = vunpack.c.h.b16 %v809
    %v2991 = vunpack.c.l.b16 %v810
    %v2992 = vunpack.c.h.b16 %v810
    %v2993 = vunpack.c.l.b16 %v811
    %v2994 = vunpack.c.h.b16 %v811
    %v2995 = vunpack.c.l.b16 %v812
    %v2996 = vunpack.c.h.b16 %v812
    %v2997 = vunpack.c.l.b16 %v813
    %v2998 = vunpack.c.h.b16 %v813
    %v2999 = vunpack.c.l.b16 %v814
    %v3000 = vunpack.c.h.b16 %v814
    %v3001 = vunpack.c.l.b16 %v815
    %v3002 = vunpack.c.h.b16 %v815
    %v3003 = vunpack.c.l.b16 %v816
    %v3004 = vunpack.c.h.b16 %v816
    %v3005 = vunpack.c.l.b16 %v817
    %v3006 = vunpack.c.h.b16 %v817
    %v3007 = vunpack.c.l.b16 %v818
    %v3008 = vunpack.c.h.b16 %v818
    %v3009 = vunpack.c.l.b16 %v819
    %v3010 = vunpack.c.h.b16 %v819
    %v3011 = vunpack.c.l.b16 %v820
    %v3012 = vunpack.c.h.b16 %v820
    %v3013 = vunpack.c.l.b16 %v821
    %v3014 = vunpack.c.h.b16 %v821
    %v3015 = vunpack.c.l.b16 %v822
    %v3016 = vunpack.c.h.b16 %v822
    %v3017 = vunpack.c.l.b16 %v823
    %v3018 = vunpack.c.h.b16 %v823
    %v3019 = vunpack.c.l.b16 %v824
    %v3020 = vunpack.c.h.b16 %v824
    %v3021 = vunpack.c.l.b16 %v825
    %v3022 = vunpack.c.h.b16 %v825
    %v3023 = vunpack.c.l.b16 %v826
    %v3024 = vunpack.c.h.b16 %v826
    %v3025 = vunpack.c.l.b16 %v827
    %v3026 = vunpack.c.h.b16 %v827
    %v3027 = vunpack.c.l.b16 %v828
    %v3028 = vunpack.c.h.b16 %v828
    %v3029 = vunpack.c.l.b16 %v829
    %v3030 = vunpack.c.h.b16 %v829
    %v3031 = vunpack.c.l.b16 %v830
    %v3032 = vunpack.c.h.b16 %v830
    %v3033 = vunpack.c.l.b16 %v831
    %v3034 = vunpack.c.h.b16 %v831
    %v3035 = vunpack.c.l.b16 %v832
    %v3036 = vunpack.c.h.b16 %v832
    %v3037 = vunpack.c.l.b16 %v833
    %v3038 = vunpack.c.h.b16 %v833
    %v3039 = vunpack.c.l.b16 %v834
    %v3040 = vunpack.c.h.b16 %v834
    %v3041 = vunpack.c.l.b16 %v835
    %v3042 = vunpack.c.h.b16 %v835
    %v3043 = vunpack.c.l.b16 %v836
    %v3044 = vunpack.c.h.b16 %v836
    %v3045 = vunpack.c.l.b16 %v837
    %v3046 = vunpack.c.h.b16 %v837
    %v3047 = vunpack.c.l.b16 %v838
    %v3048 = vunpack.c.h.b16 %v838
    %v3049 = vunpack.c.l.b16 %v839
    %v3050 = vunpack.c.h.b16 %v839
    %v3051 = vunpack.c.l.b16 %v840
    %v3052 = vunpack.c.h.b16 %v840
    %v3053 = vunpack.c.l.b16 %v841
    %v3054 = vunpack.c.h.b16 %v841
    %v3055 = vunpack.c.l.b16 %v842
    %v3056 = vunpack.c.h.b16 %v842
    %v3057 = vunpack.c.l.b16 %v843
    %v3058 = vunpack.c.h.b16 %v843
    %v3059 = vunpack.c.l.b16 %v844
    %v3060 = vunpack.c.h.b16 %v844
    %v3061 = vunpack.c.l.b16 %v845
    %v3062 = vunpack.c.h.b16 %v845
    %v3063 = vunpack.c.l.b16 %v846
    %v3064 = vunpack.c.h.b16 %v846
    %v3065 = vunpack.c.l.b16 %v847
    %v3066 = vunpack.c.h.b16 %v847
    %v3067 = vunpack.c.l.b16 %v848
    %v3068 = vunpack.c.h.b16 %v848
    %v3069 = vunpack.c.l.b16 %v849
    %v3070 = vunpack.c.h.b16 %v849
    %v3071 = vunpack.c.l.b16 %v850
    %v3072 = vunpack.c.h.b16 %v850
    %v3073 = vunpack.c.l.b16 %v851
    %v3074 = vunpack.c.h.b16 %v851
    %v3075 = vunpack.c.l.b16 %v852
    %v3076 = vunpack.c.h.b16 %v852
    %v3077 = vunpack.c.l.b16 %v853
    %v3078 = vunpack.c.h.b16 %v853
    %v3079 = vunpack.c.l.b16 %v854
    %v3080 = vunpack.c.h.b16 %v854
    %v3081 = vunpack.c.l.b16 %v855
    %v3082 = vunpack.c.h.b16 %v855
    %v3083 = vunpack.c.l.b16 %v856
    %v3084 = vunpack.c.h.b16 %v856
    %v3085 = vunpack.c.l.b16 %v857
    %v3086 = vunpack.c.h.b16 %v857
    %v3087 = vunpack.c.l.b16 %v858
    %v3088 = vunpack.c.h.b16 %v858
    %v3089 = vunpack.c.l.b16 %v859
    %v3090 = vunpack.c.h.b16 %v859
    %v3091 = vunpack.c.l.b16 %v860
    %v3092 = vunpack.c.h.b16 %v860
    %v3093 = vunpack.c.l.b16 %v861
    %v3094 = vunpack.c.h.b16 %v861
    %v3095 = vunpack.c.l.b16 %v862
    %v3096 = vunpack.c.h.b16 %v862
    %v3097 = vunpack.c.l.b16 %v863
    %v3098 = vunpack.c.h.b16 %v863
    %v3099 = vunpack.c.l.b16 %v864
    %v3100 = vunpack.c.h.b16 %v864
    %v3101 = vunpack.c.l.b16 %v865
    %v3102 = vunpack.c.h.b16 %v865
    %v3103 = vunpack.c.l.b16 %v866
    %v3104 = vunpack.c.h.b16 %v866
    %v3105 = vunpack.c.l.b16 %v867
    %v3106 = vunpack.c.h.b16 %v867
    %v3107 = vunpack.c.l.b16 %v868
    %v3108 = vunpack.c.h.b16 %v868
    %v3109 = vunpack.c.l.b16 %v869
    %v3110 = vunpack.c.h.b16 %v869
    %v3111 = vunpack.c.l.b16 %v870
    %v3112 = vunpack.c.h.b16 %v870
    %v3113 = vunpack.c.l.b16 %v871
    %v3114 = vunpack.c.h.b16 %v871
    %v3115 = vunpack.c.l.b16 %v872
    %v3116 = vunpack.c.h.b16 %v872
    %v3117 = vunpack.c.l.b16 %v873
    %v3118 = vunpack.c.h.b16 %v873
    %v3119 = vunpack.c.l.b16 %v874
    %v3120 = vunpack.c.h.b16 %v874
    %v3121 = vunpack.c.l.b16 %v875
    %v3122 = vunpack.c.h.b16 %v875
    %v3123 = vunpack.c.l.b16 %v876
    %v3124 = vunpack.c.h.b16 %v876
    %v3125 = vunpack.c.l.b16 %v877
    %v3126 = vunpack.c.h.b16 %v877
    %v3127 = vunpack.c.l.b16 %v878
    %v3128 = vunpack.c.h.b16 %v878
    %v3129 = vunpack.c.l.b16 %v879
    %v3130 = vunpack.c.h.b16 %v879
    %v3131 = vunpack.c.l.b16 %v880
    %v3132 = vunpack.c.h.b16 %v880
    %v3133 = vunpack.c.l.b16 %v881
    %v3134 = vunpack.c.h.b16 %v881
    %v3135 = vunpack.c.l.b16 %v882
    %v3136 = vunpack.c.h.b16 %v882
    %v3137 = vunpack.c.l.b16 %v883
    %v3138 = vunpack.c.h.b16 %v883
    %v3139 = vunpack.c.l.b16 %v884
    %v3140 = vunpack.c.h.b16 %v884
    %v3141 = vunpack.c.l.b16 %v885
    %v3142 = vunpack.c.h.b16 %v885
    %v3143 = vunpack.c.l.b16 %v886
    %v3144 = vunpack.c.h.b16 %v886
    %v3145 = vunpack.c.l.b16 %v887
    %v3146 = vunpack.c.h.b16 %v887
    %v3147 = vunpack.c.l.b16 %v888
    %v3148 = vunpack.c.h.b16 %v888
    %v3149 = vunpack.c.l.b16 %v889
    %v3150 = vunpack.c.h.b16 %v889
    %v3151 = vunpack.c.l.b16 %v890
    %v3152 = vunpack.c.h.b16 %v890
    %v3153 = vunpack.c.l.b16 %v891
    %v3154 = vunpack.c.h.b16 %v891
    %v3155 = vunpack.c.l.b16 %v892
    %v3156 = vunpack.c.h.b16 %v892
    %v3157 = vunpack.c.l.b16 %v893
    %v3158 = vunpack.c.h.b16 %v893
    %v3159 = vunpack.c.l.b16 %v894
    %v3160 = vunpack.c.h.b16 %v894
    %v3161 = vunpack.c.l.b16 %v895
    %v3162 = vunpack.c.h.b16 %v895
    %v3163 = vunpack.c.l.b16 %v896
    %v3164 = vunpack.c.h.b16 %v896
    %v3165 = vunpack.c.l.b16 %v897
    %v3166 = vunpack.c.h.b16 %v897
    %v3167 = vunpack.c.l.b16 %v898
    %v3168 = vunpack.c.h.b16 %v898
    %v3169 = vunpack.c.l.b16 %v899
    %v3170 = vunpack.c.h.b16 %v899
    %v3171 = vunpack.c.l.b16 %v900
    %v3172 = vunpack.c.h.b16 %v900
    %v3173 = vunpack.c.l.b16 %v901
    %v3174 = vunpack.c.h.b16 %v901
    %v3175 = vunpack.c.l.b16 %v902
    %v3176 = vunpack.c.h.b16 %v902
    %v3177 = vunpack.c.l.b16 %v903
    %v3178 = vunpack.c.h.b16 %v903
    %v3179 = vunpack.c.l.b16 %v904
    %v3180 = vunpack.c.h.b16 %v904
    %v3181 = vunpack.c.l.b16 %v905
    %v3182 = vunpack.c.h.b16 %v905
    %v3183 = vunpack.c.l.b16 %v906
    %v3184 = vunpack.c.h.b16 %v906
    %v3185 = vunpack.c.l.b16 %v907
    %v3186 = vunpack.c.h.b16 %v907
    %v3187 = vunpack.c.l.b16 %v908
    %v3188 = vunpack.c.h.b16 %v908
    %v3189 = vunpack.c.l.b16 %v909
    %v3190 = vunpack.c.h.b16 %v909
    %v3191 = vunpack.c.l.b16 %v910
    %v3192 = vunpack.c.h.b16 %v910
    %v3193 = vunpack.c.l.b16 %v911
    %v3194 = vunpack.c.h.b16 %v911
    %v3195 = vunpack.c.l.b16 %v912
    %v3196 = vunpack.c.h.b16 %v912
    %v3197 = vunpack.c.l.b16 %v913
    %v3198 = vunpack.c.h.b16 %v913
    %v3199 = vunpack.c.l.b16 %v914
    %v3200 = vunpack.c.h.b16 %v914
    %v3201 = vunpack.c.l.b16 %v915
    %v3202 = vunpack.c.h.b16 %v915
    %v3203 = vunpack.c.l.b16 %v916
    %v3204 = vunpack.c.h.b16 %v916
    %v3205 = vunpack.c.l.b16 %v917
    %v3206 = vunpack.c.h.b16 %v917
    %v3207 = vunpack.c.l.b16 %v918
    %v3208 = vunpack.c.h.b16 %v918
    %v3209 = vunpack.c.l.b16 %v919
    %v3210 = vunpack.c.h.b16 %v919
    %v3211 = vunpack.c.l.b16 %v920
    %v3212 = vunpack.c.h.b16 %v920
    %v3213 = vunpack.c.l.b16 %v921
    %v3214 = vunpack.c.h.b16 %v921
    %v3215 = vunpack.c.l.b16 %v922
    %v3216 = vunpack.c.h.b16 %v922
    %v3217 = vunpack.c.l.b16 %v923
    %v3218 = vunpack.c.h.b16 %v923
    %v3219 = vunpack.c.l.b16 %v924
    %v3220 = vunpack.c.h.b16 %v924
    %v3221 = vunpack.c.l.b16 %v925
    %v3222 = vunpack.c.h.b16 %v925
    %v3223 = vunpack.c.l.b16 %v926
    %v3224 = vunpack.c.h.b16 %v926
    %v3225 = vunpack.c.l.b16 %v927
    %v3226 = vunpack.c.h.b16 %v927
    %v3227 = vunpack.c.l.b16 %v928
    %v3228 = vunpack.c.h.b16 %v928
    %v3229 = vunpack.c.l.b16 %v929
    %v3230 = vunpack.c.h.b16 %v929
    %v3231 = vunpack.c.l.b16 %v930
    %v3232 = vunpack.c.h.b16 %v930
    %v3233 = vunpack.c.l.b16 %v931
    %v3234 = vunpack.c.h.b16 %v931
    %v3235 = vunpack.c.l.b16 %v932
    %v3236 = vunpack.c.h.b16 %v932
    %v3237 = vunpack.c.l.b16 %v933
    %v3238 = vunpack.c.h.b16 %v933
    %v3239 = vunpack.c.l.b16 %v934
    %v3240 = vunpack.c.h.b16 %v934
    %v3241 = vunpack.c.l.b16 %v935
    %v3242 = vunpack.c.h.b16 %v935
    %v3243 = vunpack.c.l.b16 %v936
    %v3244 = vunpack.c.h.b16 %v936
    %v3245 = vunpack.c.l.b16 %v937
    %v3246 = vunpack.c.h.b16 %v937
    %v3247 = vunpack.c.l.b16 %v938
    %v3248 = vunpack.c.h.b16 %v938
    %v3249 = vunpack.c.l.b16 %v939
    %v3250 = vunpack.c.h.b16 %v939
    %v3251 = vunpack.c.l.b16 %v940
    %v3252 = vunpack.c.h.b16 %v940
    %v3253 = vunpack.c.l.b16 %v941
    %v3254 = vunpack.c.h.b16 %v941
    %v3255 = vunpack.c.l.b16 %v942
    %v3256 = vunpack.c.h.b16 %v942
    %v3257 = vunpack.c.l.b16 %v943
    %v3258 = vunpack.c.h.b16 %v943
    %v3259 = vunpack.c.l.b16 %v944
    %v3260 = vunpack.c.h.b16 %v944
    %v3261 = vunpack.c.l.b16 %v945
    %v3262 = vunpack.c.h.b16 %v945
    %v3263 = vunpack.c.l.b16 %v946
    %v3264 = vunpack.c.h.b16 %v946
    %v3265 = vunpack.c.l.b16 %v947
    %v3266 = vunpack.c.h.b16 %v947
    %v3267 = vunpack.c.l.b16 %v948
    %v3268 = vunpack.c.h.b16 %v948
    %v3269 = vunpack.c.l.b16 %v949
    %v3270 = vunpack.c.h.b16 %v949
    %v3271 = vunpack.c.l.b16 %v950
    %v3272 = vunpack.c.h.b16 %v950
    %v3273 = vunpack.c.l.b16 %v951
    %v3274 = vunpack.c.h.b16 %v951
    %v3275 = vunpack.c.l.b16 %v952
    %v3276 = vunpack.c.h.b16 %v952
    %v3277 = vunpack.c.l.b16 %v953
    %v3278 = vunpack.c.h.b16 %v953
    %v3279 = vunpack.c.l.b16 %v954
    %v3280 = vunpack.c.h.b16 %v954
    %v3281 = vunpack.c.l.b16 %v955
    %v3282 = vunpack.c.h.b16 %v955
    %v3283 = vunpack.c.l.b16 %v956
    %v3284 = vunpack.c.h.b16 %v956
    %v3285 = vunpack.c.l.b16 %v957
    %v3286 = vunpack.c.h.b16 %v957
    %v3287 = vunpack.c.l.b16 %v958
    %v3288 = vunpack.c.h.b16 %v958
    %v3289 = vunpack.c.l.b16 %v959
    %v3290 = vunpack.c.h.b16 %v959
    %v3291 = vunpack.c.l.b16 %v960
    %v3292 = vunpack.c.h.b16 %v960
    %v3293 = vunpack.c.l.b16 %v961
    %v3294 = vunpack.c.h.b16 %v961
    %v3295 = vunpack.c.l.b16 %v962
    %v3296 = vunpack.c.h.b16 %v962
    %v3297 = vunpack.c.l.b16 %v963
    %v3298 = vunpack.c.h.b16 %v963
    %v3299 = vunpack.c.l.b16 %v964
    %v3300 = vunpack.c.h.b16 %v964
    %v3301 = vunpack.c.l.b16 %v965
    %v3302 = vunpack.c.h.b16 %v965
    %v3303 = vunpack.c.l.b16 %v966
    %v3304 = vunpack.c.h.b16 %v966
    %v3305 = vunpack.c.l.b16 %v967
    %v3306 = vunpack.c.h.b16 %v967
    %v3307 = vunpack.c.l.b16 %v968
    %v3308 = vunpack.c.h.b16 %v968
    %v3309 = vunpack.c.l.b16 %v969
    %v3310 = vunpack.c.h.b16 %v969
    %v3311 = vunpack.c.l.b16 %v970
    %v3312 = vunpack.c.h.b16 %v970
    %v3313 = vunpack.c.l.b16 %v971
    %v3314 = vunpack.c.h.b16 %v971
    %v3315 = vunpack.c.l.b16 %v972
    %v3316 = vunpack.c.h.b16 %v972
    %v3317 = vunpack.c.l.b16 %v973
    %v3318 = vunpack.c.h.b16 %v973
    %v3319 = vunpack.c.l.b16 %v974
    %v3320 = vunpack.c.h.b16 %v974
    %v3321 = vunpack.c.l.b16 %v975
    %v3322 = vunpack.c.h.b16 %v975
    %v3323 = vunpack.c.l.b16 %v976
    %v3324 = vunpack.c.h.b16 %v976
    %v3325 = vunpack.c.l.b16 %v977
    %v3326 = vunpack.c.h.b16 %v977
    %v3327 = vunpack.c.l.b16 %v978
    %v3328 = vunpack.c.h.b16 %v978
    %v3329 = vunpack.c.l.b16 %v979
    %v3330 = vunpack.c.h.b16 %v979
    %v3331 = vunpack.c.l.b16 %v980
    %v3332 = vunpack.c.h.b16 %v980
    %v3333 = vunpack.c.l.b16 %v981
    %v3334 = vunpack.c.h.b16 %v981
    %v3335 = vunpack.c.l.b16 %v982
    %v3336 = vunpack.c.h.b16 %v982
    %v3337 = vunpack.c.l.b16 %v983
    %v3338 = vunpack.c.h.b16 %v983
    %v3339 = vunpack.c.l.b16 %v984
    %v3340 = vunpack.c.h.b16 %v984
    %v3341 = vunpack.c.l.b16 %v985
    %v3342 = vunpack.c.h.b16 %v985
    %v3343 = vunpack.c.l.b16 %v986
    %v3344 = vunpack.c.h.b16 %v986
    %v3345 = vunpack.c.l.b16 %v987
    %v3346 = vunpack.c.h.b16 %v987
    %v3347 = vunpack.c.l.b16 %v988
    %v3348 = vunpack.c.h.b16 %v988
    %v3349 = vunpack.c.l.b16 %v989
    %v3350 = vunpack.c.h.b16 %v989
    %v3351 = vunpack.c.l.b16 %v990
    %v3352 = vunpack.c.h.b16 %v990
    %v3353 = vunpack.c.l.b16 %v991
    %v3354 = vunpack.c.h.b16 %v991
    %v3355 = vunpack.c.l.b16 %v992
    %v3356 = vunpack.c.h.b16 %v992
    %v3357 = vunpack.c.l.b16 %v993
    %v3358 = vunpack.c.h.b16 %v993
    %v3359 = vunpack.c.l.b16 %v994
    %v3360 = vunpack.c.h.b16 %v994
    %v3361 = vunpack.c.l.b16 %v995
    %v3362 = vunpack.c.h.b16 %v995
    %v3363 = vunpack.c.l.b16 %v996
    %v3364 = vunpack.c.h.b16 %v996
    %v3365 = vunpack.c.l.b16 %v997
    %v3366 = vunpack.c.h.b16 %v997
    %v3367 = vunpack.c.l.b16 %v998
    %v3368 = vunpack.c.h.b16 %v998
    %v3369 = vunpack.c.l.b16 %v999
    %v3370 = vunpack.c.h.b16 %v999
    %v3371 = vunpack.c.l.b16 %v1000
    %v3372 = vunpack.c.h.b16 %v1000
    %v3373 = vunpack.c.l.b16 %v1001
    %v3374 = vunpack.c.h.b16 %v1001
    %v3375 = vunpack.c.l.b16 %v1002
    %v3376 = vunpack.c.h.b16 %v1002
    %v3377 = vunpack.c.l.b16 %v1003
    %v3378 = vunpack.c.h.b16 %v1003
    %v3379 = vunpack.c.l.b16 %v1004
    %v3380 = vunpack.c.h.b16 %v1004
    %v3381 = vunpack.c.l.b16 %v1005
    %v3382 = vunpack.c.h.b16 %v1005
    %v3383 = vunpack.c.l.b16 %v1006
    %v3384 = vunpack.c.h.b16 %v1006
    %v3385 = vunpack.c.l.b16 %v1007
    %v3386 = vunpack.c.h.b16 %v1007
    %v3387 = vunpack.c.l.b16 %v1008
    %v3388 = vunpack.c.h.b16 %v1008
    %v3389 = vunpack.c.l.b16 %v1009
    %v3390 = vunpack.c.h.b16 %v1009
    %v3391 = vunpack.c.l.b16 %v1010
    %v3392 = vunpack.c.h.b16 %v1010
    %v3393 = vunpack.c.l.b16 %v1011
    %v3394 = vunpack.c.h.b16 %v1011
    %v3395 = vunpack.c.l.b16 %v1012
    %v3396 = vunpack.c.h.b16 %v1012
    %v3397 = vunpack.c.l.b16 %v1013
    %v3398 = vunpack.c.h.b16 %v1013
    %v3399 = vunpack.c.l.b16 %v1014
    %v3400 = vunpack.c.h.b16 %v1014
    %v3401 = vunpack.c.l.b16 %v1015
    %v3402 = vunpack.c.h.b16 %v1015
    %v3403 = vunpack.c.l.b16 %v1016
    %v3404 = vunpack.c.h.b16 %v1016
    %v3405 = vunpack.c.l.b16 %v1017
    %v3406 = vunpack.c.h.b16 %v1017
    %v3407 = vunpack.c.l.b16 %v1018
    %v3408 = vunpack.c.h.b16 %v1018
    %v3409 = vunpack.c.l.b16 %v1019
    %v3410 = vunpack.c.h.b16 %v1019
    %v3411 = vunpack.c.l.b16 %v1020
    %v3412 = vunpack.c.h.b16 %v1020
    %v3413 = vunpack.c.l.b16 %v1021
    %v3414 = vunpack.c.h.b16 %v1021
    %v3415 = vunpack.c.l.b16 %v1022
    %v3416 = vunpack.c.h.b16 %v1022
    %v3417 = vunpack.c.l.b16 %v1023
    %v3418 = vunpack.c.h.b16 %v1023
    %v3419 = vunpack.c.l.b16 %v1024
    %v3420 = vunpack.c.h.b16 %v1024
    %v3421 = vpack.c.b16 %v1897, %v1885
    %v3422 = vpack.c.b16 %v1898, %v1886
    %v3423 = vpack.c.b16 %v1899, %v1887
    %v3424 = vpack.c.b16 %v1900, %v1888
    %v3425 = vpack.c.b16 %v1901, %v1889
    %v3426 = vpack.c.b16 %v1902, %v1890
    %v3427 = vpack.c.b16 %v1903, %v1891
    %v3428 = vpack.c.b16 %v1904, %v1892
    %v3429 = vpack.c.b16 %v1905, %v1893
    %v3430 = vpack.c.b16 %v1906, %v1894
    %v3431 = vpack.c.b16 %v1907, %v1895
    %v3432 = vpack.c.b16 %v1908, %v1896
    %v3433 = vpack.c.b16 %v1921, %v1909
    %v3434 = vpack.c.b16 %v1922, %v1910
    %v3435 = vpack.c.b16 %v1923, %v1911
    %v3436 = vpack.c.b16 %v1924, %v1912
    %v3437 = vpack.c.b16 %v1925, %v1913
    %v3438 = vpack.c.b16 %v1926, %v1914
    %v3439 = vpack.c.b16 %v1927, %v1915
    %v3440 = vpack.c.b16 %v1928, %v1916
    %v3441 = vpack.c.b16 %v1929, %v1917
    %v3442 = vpack.c.b16 %v1930, %v1918
    %v3443 = vpack.c.b16 %v1931, %v1919
    %v3444 = vpack.c.b16 %v1932, %v1920
    %v3445 = vpack.c.b16 %v1945, %v1933
    %v3446 = vpack.c.b16 %v1946, %v1934
    %v3447 = vpack.c.b16 %v1947, %v1935
    %v3448 = vpack.c.b16 %v1948, %v1936
    %v3449 = vpack.c.b16 %v1949, %v1937
    %v3450 = vpack.c.b16 %v1950, %v1938
    %v3451 = vpack.c.b16 %v1951, %v1939
    %v3452 = vpack.c.b16 %v1952, %v1940
    %v3453 = vpack.c.b16 %v1953, %v1941
    %v3454 = vpack.c.b16 %v1954, %v1942
    %v3455 = vpack.c.b16 %v1955, %v1943
    %v3456 = vpack.c.b16 %v1956, %v1944
    %v3457 = vpack.c.b16 %v1969, %v1957
    %v3458 = vpack.c.b16 %v1970, %v1958
    %v3459 = vpack.c.b16 %v1971, %v1959
    %v3460 = vpack.c.b16 %v1972, %v1960
    %v3461 = vpack.c.b16 %v1973, %v1961
    %v3462 = vpack.c.b16 %v1974, %v1962
    %v3463 = vpack.c.b16 %v1975, %v1963
    %v3464 = vpack.c.b16 %v1976, %v1964
    %v3465 = vpack.c.b16 %v1977, %v1965
    %v3466 = vpack.c.b16 %v1978, %v1966
    %v3467 = vpack.c.b16 %v1979, %v1967
    %v3468 = vpack.c.b16 %v1980, %v1968
    %v3469 = vpack.c.b16 %v1993, %v1981
    %v3470 = vpack.c.b16 %v1994, %v1982
    %v3471 = vpack.c.b16 %v1995, %v1983
    %v3472 = vpack.c.b16 %v1996, %v1984
    %v3473 = vpack.c.b16 %v1997, %v1985
    %v3474 = vpack.c.b16 %v1998, %v1986
    %v3475 = vpack.c.b16 %v1999, %v1987
    %v3476 = vpack.c.b16 %v2000, %v1988
    %v3477 = vpack.c.b16 %v2001, %v1989
    %v3478 = vpack.c.b16 %v2002, %v1990
    %v3479 = vpack.c.b16 %v2003, %v1991
    %v3480 = vpack.c.b16 %v2004, %v1992
    %v3481 = vpack.c.b16 %v2017, %v2005
    %v3482 = vpack.c.b16 %v2018, %v2006
    %v3483 = vpack.c.b16 %v2019, %v2007
    %v3484 = vpack.c.b16 %v2020, %v2008
    %v3485 = vpack.c.b16 %v2021, %v2009
    %v3486 = vpack.c.b16 %v2022, %v2010
    %v3487 = vpack.c.b16 %v2023, %v2011
    %v3488 = vpack.c.b16 %v2024, %v2012
    %v3489 = vpack.c.b16 %v2025, %v2013
    %v3490 = vpack.c.b16 %v2026, %v2014
    %v3491 = vpack.c.b16 %v2027, %v2015
    %v3492 = vpack.c.b16 %v2028, %v2016
    %v3493 = vpack.c.b16 %v2041, %v2029
    %v3494 = vpack.c.b16 %v2042, %v2030
    %v3495 = vpack.c.b16 %v2043, %v2031
    %v3496 = vpack.c.b16 %v2044, %v2032
    %v3497 = vpack.c.b16 %v2045, %v2033
    %v3498 = vpack.c.b16 %v2046, %v2034
    %v3499 = vpack.c.b16 %v2047, %v2035
    %v3500 = vpack.c.b16 %v2048, %v2036
    %v3501 = vpack.c.b16 %v2049, %v2037
    %v3502 = vpack.c.b16 %v2050, %v2038
    %v3503 = vpack.c.b16 %v2051, %v2039
    %v3504 = vpack.c.b16 %v2052, %v2040
    %v3505 = vpack.c.b16 %v2065, %v2053
    %v3506 = vpack.c.b16 %v2066, %v2054
    %v3507 = vpack.c.b16 %v2067, %v2055
    %v3508 = vpack.c.b16 %v2068, %v2056
    %v3509 = vpack.c.b16 %v2069, %v2057
    %v3510 = vpack.c.b16 %v2070, %v2058
    %v3511 = vpack.c.b16 %v2071, %v2059
    %v3512 = vpack.c.b16 %v2072, %v2060
    %v3513 = vpack.c.b16 %v2073, %v2061
    %v3514 = vpack.c.b16 %v2074, %v2062
    %v3515 = vpack.c.b16 %v2075, %v2063
    %v3516 = vpack.c.b16 %v2076, %v2064
    %v3517 = vpack.c.b16 %v2089, %v2077
    %v3518 = vpack.c.b16 %v2090, %v2078
    %v3519 = vpack.c.b16 %v2091, %v2079
    %v3520 = vpack.c.b16 %v2092, %v2080
    %v3521 = vpack.c.b16 %v2093, %v2081
    %v3522 = vpack.c.b16 %v2094, %v2082
    %v3523 = vpack.c.b16 %v2095, %v2083
    %v3524 = vpack.c.b16 %v2096, %v2084
    %v3525 = vpack.c.b16 %v2097, %v2085
    %v3526 = vpack.c.b16 %v2098, %v2086
    %v3527 = vpack.c.b16 %v2099, %v2087
    %v3528 = vpack.c.b16 %v2100, %v2088
    %v3529 = vpack.c.b16 %v2113, %v2101
    %v3530 = vpack.c.b16 %v2114, %v2102
    %v3531 = vpack.c.b16 %v2115, %v2103
    %v3532 = vpack.c.b16 %v2116, %v2104
    %v3533 = vpack.c.b16 %v2117, %v2105
    %v3534 = vpack.c.b16 %v2118, %v2106
    %v3535 = vpack.c.b16 %v2119, %v2107
    %v3536 = vpack.c.b16 %v2120, %v2108
    %v3537 = vpack.c.b16 %v2121, %v2109
    %v3538 = vpack.c.b16 %v2122, %v2110
    %v3539 = vpack.c.b16 %v2123, %v2111
    %v3540 = vpack.c.b16 %v2124, %v2112
    %v3541 = vpack.c.b16 %v2137, %v2125
    %v3542 = vpack.c.b16 %v2138, %v2126
    %v3543 = vpack.c.b16 %v2139, %v2127
    %v3544 = vpack.c.b16 %v2140, %v2128
    %v3545 = vpack.c.b16 %v2141, %v2129
    %v3546 = vpack.c.b16 %v2142, %v2130
    %v3547 = vpack.c.b16 %v2143, %v2131
    %v3548 = vpack.c.b16 %v2144, %v2132
    %v3549 = vpack.c.b16 %v2145, %v2133
    %v3550 = vpack.c.b16 %v2146, %v2134
    %v3551 = vpack.c.b16 %v2147, %v2135
    %v3552 = vpack.c.b16 %v2148, %v2136
    %v3553 = vpack.c.b16 %v2161, %v2149
    %v3554 = vpack.c.b16 %v2162, %v2150
    %v3555 = vpack.c.b16 %v2163, %v2151
    %v3556 = vpack.c.b16 %v2164, %v2152
    %v3557 = vpack.c.b16 %v2165, %v2153
    %v3558 = vpack.c.b16 %v2166, %v2154
    %v3559 = vpack.c.b16 %v2167, %v2155
    %v3560 = vpack.c.b16 %v2168, %v2156
    %v3561 = vpack.c.b16 %v2169, %v2157
    %v3562 = vpack.c.b16 %v2170, %v2158
    %v3563 = vpack.c.b16 %v2171, %v2159
    %v3564 = vpack.c.b16 %v2172, %v2160
    %v3565 = vpack.c.b16 %v2185, %v2173
    %v3566 = vpack.c.b16 %v2186, %v2174
    %v3567 = vpack.c.b16 %v2187, %v2175
    %v3568 = vpack.c.b16 %v2188, %v2176
    %v3569 = vpack.c.b16 %v2189, %v2177
    %v3570 = vpack.c.b16 %v2190, %v2178
    %v3571 = vpack.c.b16 %v2191, %v2179
    %v3572 = vpack.c.b16 %v2192, %v2180
    %v3573 = vpack.c.b16 %v2193, %v2181
    %v3574 = vpack.c.b16 %v2194, %v2182
    %v3575 = vpack.c.b16 %v2195, %v2183
    %v3576 = vpack.c.b16 %v2196, %v2184
    %v3577 = vpack.c.b16 %v2209, %v2197
    %v3578 = vpack.c.b16 %v2210, %v2198
    %v3579 = vpack.c.b16 %v2211, %v2199
    %v3580 = vpack.c.b16 %v2212, %v2200
    %v3581 = vpack.c.b16 %v2213, %v2201
    %v3582 = vpack.c.b16 %v2214, %v2202
    %v3583 = vpack.c.b16 %v2215, %v2203
    %v3584 = vpack.c.b16 %v2216, %v2204
    %v3585 = vpack.c.b16 %v2217, %v2205
    %v3586 = vpack.c.b16 %v2218, %v2206
    %v3587 = vpack.c.b16 %v2219, %v2207
    %v3588 = vpack.c.b16 %v2220, %v2208
    %v3589 = vpack.c.b16 %v2233, %v2221
    %v3590 = vpack.c.b16 %v2234, %v2222
    %v3591 = vpack.c.b16 %v2235, %v2223
    %v3592 = vpack.c.b16 %v2236, %v2224
    %v3593 = vpack.c.b16 %v2237, %v2225
    %v3594 = vpack.c.b16 %v2238, %v2226
    %v3595 = vpack.c.b16 %v2239, %v2227
    %v3596 = vpack.c.b16 %v2240, %v2228
    %v3597 = vpack.c.b16 %v2241, %v2229
    %v3598 = vpack.c.b16 %v2242, %v2230
    %v3599 = vpack.c.b16 %v2243, %v2231
    %v3600 = vpack.c.b16 %v2244, %v2232
    %v3601 = vpack.c.b16 %v2257, %v2245
    %v3602 = vpack.c.b16 %v2258, %v2246
    %v3603 = vpack.c.b16 %v2259, %v2247
    %v3604 = vpack.c.b16 %v2260, %v2248
    %v3605 = vpack.c.b16 %v2261, %v2249
    %v3606 = vpack.c.b16 %v2262, %v2250
    %v3607 = vpack.c.b16 %v2263, %v2251
    %v3608 = vpack.c.b16 %v2264, %v2252
    %v3609 = vpack.c.b16 %v2265, %v2253
    %v3610 = vpack.c.b16 %v2266, %v2254
    %v3611 = vpack.c.b16 %v2267, %v2255
    %v3612 = vpack.c.b16 %v2268, %v2256
    %v3613 = vpack.c.b16 %v2281, %v2269
    %v3614 = vpack.c.b16 %v2282, %v2270
    %v3615 = vpack.c.b16 %v2283, %v2271
    %v3616 = vpack.c.b16 %v2284, %v2272
    %v3617 = vpack.c.b16 %v2285, %v2273
    %v3618 = vpack.c.b16 %v2286, %v2274
    %v3619 = vpack.c.b16 %v2287, %v2275
    %v3620 = vpack.c.b16 %v2288, %v2276
    %v3621 = vpack.c.b16 %v2289, %v2277
    %v3622 = vpack.c.b16 %v2290, %v2278
    %v3623 = vpack.c.b16 %v2291, %v2279
    %v3624 = vpack.c.b16 %v2292, %v2280
    %v3625 = vpack.c.b16 %v2305, %v2293
    %v3626 = vpack.c.b16 %v2306, %v2294
    %v3627 = vpack.c.b16 %v2307, %v2295
    %v3628 = vpack.c.b16 %v2308, %v2296
    %v3629 = vpack.c.b16 %v2309, %v2297
    %v3630 = vpack.c.b16 %v2310, %v2298
    %v3631 = vpack.c.b16 %v2311, %v2299
    %v3632 = vpack.c.b16 %v2312, %v2300
    %v3633 = vpack.c.b16 %v2313, %v2301
    %v3634 = vpack.c.b16 %v2314, %v2302
    %v3635 = vpack.c.b16 %v2315, %v2303
    %v3636 = vpack.c.b16 %v2316, %v2304
    %v3637 = vpack.c.b16 %v2329, %v2317
    %v3638 = vpack.c.b16 %v2330, %v2318
    %v3639 = vpack.c.b16 %v2331, %v2319
    %v3640 = vpack.c.b16 %v2332, %v2320
    %v3641 = vpack.c.b16 %v2333, %v2321
    %v3642 = vpack.c.b16 %v2334, %v2322
    %v3643 = vpack.c.b16 %v2335, %v2323
    %v3644 = vpack.c.b16 %v2336, %v2324
    %v3645 = vpack.c.b16 %v2337, %v2325
    %v3646 = vpack.c.b16 %v2338, %v2326
    %v3647 = vpack.c.b16 %v2339, %v2327
    %v3648 = vpack.c.b16 %v2340, %v2328
    %v3649 = vpack.c.b16 %v2353, %v2341
    %v3650 = vpack.c.b16 %v2354, %v2342
    %v3651 = vpack.c.b16 %v2355, %v2343
    %v3652 = vpack.c.b16 %v2356, %v2344
    %v3653 = vpack.c.b16 %v2357, %v2345
    %v3654 = vpack.c.b16 %v2358, %v2346
    %v3655 = vpack.c.b16 %v2359, %v2347
    %v3656 = vpack.c.b16 %v2360, %v2348
    %v3657 = vpack.c.b16 %v2361, %v2349
    %v3658 = vpack.c.b16 %v2362, %v2350
    %v3659 = vpack.c.b16 %v2363, %v2351
    %v3660 = vpack.c.b16 %v2364, %v2352
    %v3661 = vpack.c.b16 %v2377, %v2365
    %v3662 = vpack.c.b16 %v2378, %v2366
    %v3663 = vpack.c.b16 %v2379, %v2367
    %v3664 = vpack.c.b16 %v2380, %v2368
    %v3665 = vpack.c.b16 %v2381, %v2369
    %v3666 = vpack.c.b16 %v2382, %v2370
    %v3667 = vpack.c.b16 %v2383, %v2371
    %v3668 = vpack.c.b16 %v2384, %v2372
    %v3669 = vpack.c.b16 %v2385, %v2373
    %v3670 = vpack.c.b16 %v2386, %v2374
    %v3671 = vpack.c.b16 %v2387, %v2375
    %v3672 = vpack.c.b16 %v2388, %v2376
    %v3673 = vpack.c.b16 %v2401, %v2389
    %v3674 = vpack.c.b16 %v2402, %v2390
    %v3675 = vpack.c.b16 %v2403, %v2391
    %v3676 = vpack.c.b16 %v2404, %v2392
    %v3677 = vpack.c.b16 %v2405, %v2393
    %v3678 = vpack.c.b16 %v2406, %v2394
    %v3679 = vpack.c.b16 %v2407, %v2395
    %v3680 = vpack.c.b16 %v2408, %v2396
    %v3681 = vpack.c.b16 %v2409, %v2397
    %v3682 = vpack.c.b16 %v2410, %v2398
    %v3683 = vpack.c.b16 %v2411, %v2399
    %v3684 = vpack.c.b16 %v2412, %v2400
    %v3685 = vpack.c.b16 %v2425, %v2413
    %v3686 = vpack.c.b16 %v2426, %v2414
    %v3687 = vpack.c.b16 %v2427, %v2415
    %v3688 = vpack.c.b16 %v2428, %v2416
    %v3689 = vpack.c.b16 %v2429, %v2417
    %v3690 = vpack.c.b16 %v2430, %v2418
    %v3691 = vpack.c.b16 %v2431, %v2419
    %v3692 = vpack.c.b16 %v2432, %v2420
    %v3693 = vpack.c.b16 %v2433, %v2421
    %v3694 = vpack.c.b16 %v2434, %v2422
    %v3695 = vpack.c.b16 %v2435, %v2423
    %v3696 = vpack.c.b16 %v2436, %v2424
    %v3697 = vpack.c.b16 %v2449, %v2437
    %v3698 = vpack.c.b16 %v2450, %v2438
    %v3699 = vpack.c.b16 %v2451, %v2439
    %v3700 = vpack.c.b16 %v2452, %v2440
    %v3701 = vpack.c.b16 %v2453, %v2441
    %v3702 = vpack.c.b16 %v2454, %v2442
    %v3703 = vpack.c.b16 %v2455, %v2443
    %v3704 = vpack.c.b16 %v2456, %v2444
    %v3705 = vpack.c.b16 %v2457, %v2445
    %v3706 = vpack.c.b16 %v2458, %v2446
    %v3707 = vpack.c.b16 %v2459, %v2447
    %v3708 = vpack.c.b16 %v2460, %v2448
    %v3709 = vpack.c.b16 %v2473, %v2461
    %v3710 = vpack.c.b16 %v2474, %v2462
    %v3711 = vpack.c.b16 %v2475, %v2463
    %v3712 = vpack.c.b16 %v2476, %v2464
    %v3713 = vpack.c.b16 %v2477, %v2465
    %v3714 = vpack.c.b16 %v2478, %v2466
    %v3715 = vpack.c.b16 %v2479, %v2467
    %v3716 = vpack.c.b16 %v2480, %v2468
    %v3717 = vpack.c.b16 %v2481, %v2469
    %v3718 = vpack.c.b16 %v2482, %v2470
    %v3719 = vpack.c.b16 %v2483, %v2471
    %v3720 = vpack.c.b16 %v2484, %v2472
    %v3721 = vpack.c.b16 %v2497, %v2485
    %v3722 = vpack.c.b16 %v2498, %v2486
    %v3723 = vpack.c.b16 %v2499, %v2487
    %v3724 = vpack.c.b16 %v2500, %v2488
    %v3725 = vpack.c.b16 %v2501, %v2489
    %v3726 = vpack.c.b16 %v2502, %v2490
    %v3727 = vpack.c.b16 %v2503, %v2491
    %v3728 = vpack.c.b16 %v2504, %v2492
    %v3729 = vpack.c.b16 %v2505, %v2493
    %v3730 = vpack.c.b16 %v2506, %v2494
    %v3731 = vpack.c.b16 %v2507, %v2495
    %v3732 = vpack.c.b16 %v2508, %v2496
    %v3733 = vpack.c.b16 %v2521, %v2509
    %v3734 = vpack.c.b16 %v2522, %v2510
    %v3735 = vpack.c.b16 %v2523, %v2511
    %v3736 = vpack.c.b16 %v2524, %v2512
    %v3737 = vpack.c.b16 %v2525, %v2513
    %v3738 = vpack.c.b16 %v2526, %v2514
    %v3739 = vpack.c.b16 %v2527, %v2515
    %v3740 = vpack.c.b16 %v2528, %v2516
    %v3741 = vpack.c.b16 %v2529, %v2517
    %v3742 = vpack.c.b16 %v2530, %v2518
    %v3743 = vpack.c.b16 %v2531, %v2519
    %v3744 = vpack.c.b16 %v2532, %v2520
    %v3745 = vpack.c.b16 %v2545, %v2533
    %v3746 = vpack.c.b16 %v2546, %v2534
    %v3747 = vpack.c.b16 %v2547, %v2535
    %v3748 = vpack.c.b16 %v2548, %v2536
    %v3749 = vpack.c.b16 %v2549, %v2537
    %v3750 = vpack.c.b16 %v2550, %v2538
    %v3751 = vpack.c.b16 %v2551, %v2539
    %v3752 = vpack.c.b16 %v2552, %v2540
    %v3753 = vpack.c.b16 %v2553, %v2541
    %v3754 = vpack.c.b16 %v2554, %v2542
    %v3755 = vpack.c.b16 %v2555, %v2543
    %v3756 = vpack.c.b16 %v2556, %v2544
    %v3757 = vpack.c.b16 %v2569, %v2557
    %v3758 = vpack.c.b16 %v2570, %v2558
    %v3759 = vpack.c.b16 %v2571, %v2559
    %v3760 = vpack.c.b16 %v2572, %v2560
    %v3761 = vpack.c.b16 %v2573, %v2561
    %v3762 = vpack.c.b16 %v2574, %v2562
    %v3763 = vpack.c.b16 %v2575, %v2563
    %v3764 = vpack.c.b16 %v2576, %v2564
    %v3765 = vpack.c.b16 %v2577, %v2565
    %v3766 = vpack.c.b16 %v2578, %v2566
    %v3767 = vpack.c.b16 %v2579, %v2567
    %v3768 = vpack.c.b16 %v2580, %v2568
    %v3769 = vpack.c.b16 %v2593, %v2581
    %v3770 = vpack.c.b16 %v2594, %v2582
    %v3771 = vpack.c.b16 %v2595, %v2583
    %v3772 = vpack.c.b16 %v2596, %v2584
    %v3773 = vpack.c.b16 %v2597, %v2585
    %v3774 = vpack.c.b16 %v2598, %v2586
    %v3775 = vpack.c.b16 %v2599, %v2587
    %v3776 = vpack.c.b16 %v2600, %v2588
    %v3777 = vpack.c.b16 %v2601, %v2589
    %v3778 = vpack.c.b16 %v2602, %v2590
    %v3779 = vpack.c.b16 %v2603, %v2591
    %v3780 = vpack.c.b16 %v2604, %v2592
    %v3781 = vpack.c.b16 %v2617, %v2605
    %v3782 = vpack.c.b16 %v2618, %v2606
    %v3783 = vpack.c.b16 %v2619, %v2607
    %v3784 = vpack.c.b16 %v2620, %v2608
    %v3785 = vpack.c.b16 %v2621, %v2609
    %v3786 = vpack.c.b16 %v2622, %v2610
    %v3787 = vpack.c.b16 %v2623, %v2611
    %v3788 = vpack.c.b16 %v2624, %v2612
    %v3789 = vpack.c.b16 %v2625, %v2613
    %v3790 = vpack.c.b16 %v2626, %v2614
    %v3791 = vpack.c.b16 %v2627, %v2615
    %v3792 = vpack.c.b16 %v2628, %v2616
    %v3793 = vpack.c.b16 %v2641, %v2629
    %v3794 = vpack.c.b16 %v2642, %v2630
    %v3795 = vpack.c.b16 %v2643, %v2631
    %v3796 = vpack.c.b16 %v2644, %v2632
    %v3797 = vpack.c.b16 %v2645, %v2633
    %v3798 = vpack.c.b16 %v2646, %v2634
    %v3799 = vpack.c.b16 %v2647, %v2635
    %v3800 = vpack.c.b16 %v2648, %v2636
    %v3801 = vpack.c.b16 %v2649, %v2637
    %v3802 = vpack.c.b16 %v2650, %v2638
    %v3803 = vpack.c.b16 %v2651, %v2639
    %v3804 = vpack.c.b16 %v2652, %v2640
    %v3805 = vpack.c.b16 %v2665, %v2653
    %v3806 = vpack.c.b16 %v2666, %v2654
    %v3807 = vpack.c.b16 %v2667, %v2655
    %v3808 = vpack.c.b16 %v2668, %v2656
    %v3809 = vpack.c.b16 %v2669, %v2657
    %v3810 = vpack.c.b16 %v2670, %v2658
    %v3811 = vpack.c.b16 %v2671, %v2659
    %v3812 = vpack.c.b16 %v2672, %v2660
    %v3813 = vpack.c.b16 %v2673, %v2661
    %v3814 = vpack.c.b16 %v2674, %v2662
    %v3815 = vpack.c.b16 %v2675, %v2663
    %v3816 = vpack.c.b16 %v2676, %v2664
    %v3817 = vpack.c.b16 %v2689, %v2677
    %v3818 = vpack.c.b16 %v2690, %v2678
    %v3819 = vpack.c.b16 %v2691, %v2679
    %v3820 = vpack.c.b16 %v2692, %v2680
    %v3821 = vpack.c.b16 %v2693, %v2681
    %v3822 = vpack.c.b16 %v2694, %v2682
    %v3823 = vpack.c.b16 %v2695, %v2683
    %v3824 = vpack.c.b16 %v2696, %v2684
    %v3825 = vpack.c.b16 %v2697, %v2685
    %v3826 = vpack.c.b16 %v2698, %v2686
    %v3827 = vpack.c.b16 %v2699, %v2687
    %v3828 = vpack.c.b16 %v2700, %v2688
    %v3829 = vpack.c.b16 %v2713, %v2701
    %v3830 = vpack.c.b16 %v2714, %v2702
    %v3831 = vpack.c.b16 %v2715, %v2703
    %v3832 = vpack.c.b16 %v2716, %v2704
    %v3833 = vpack.c.b16 %v2717, %v2705
    %v3834 = vpack.c.b16 %v2718, %v2706
    %v3835 = vpack.c.b16 %v2719, %v2707
    %v3836 = vpack.c.b16 %v2720, %v2708
    %v3837 = vpack.c.b16 %v2721, %v2709
    %v3838 = vpack.c.b16 %v2722, %v2710
    %v3839 = vpack.c.b16 %v2723, %v2711
    %v3840 = vpack.c.b16 %v2724, %v2712
    %v3841 = vpack.c.b16 %v2737, %v2725
    %v3842 = vpack.c.b16 %v2738, %v2726
    %v3843 = vpack.c.b16 %v2739, %v2727
    %v3844 = vpack.c.b16 %v2740, %v2728
    %v3845 = vpack.c.b16 %v2741, %v2729
    %v3846 = vpack.c.b16 %v2742, %v2730
    %v3847 = vpack.c.b16 %v2743, %v2731
    %v3848 = vpack.c.b16 %v2744, %v2732
    %v3849 = vpack.c.b16 %v2745, %v2733
    %v3850 = vpack.c.b16 %v2746, %v2734
    %v3851 = vpack.c.b16 %v2747, %v2735
    %v3852 = vpack.c.b16 %v2748, %v2736
    %v3853 = vpack.c.b16 %v2761, %v2749
    %v3854 = vpack.c.b16 %v2762, %v2750
    %v3855 = vpack.c.b16 %v2763, %v2751
    %v3856 = vpack.c.b16 %v2764, %v2752
    %v3857 = vpack.c.b16 %v2765, %v2753
    %v3858 = vpack.c.b16 %v2766, %v2754
    %v3859 = vpack.c.b16 %v2767, %v2755
    %v3860 = vpack.c.b16 %v2768, %v2756
    %v3861 = vpack.c.b16 %v2769, %v2757
    %v3862 = vpack.c.b16 %v2770, %v2758
    %v3863 = vpack.c.b16 %v2771, %v2759
    %v3864 = vpack.c.b16 %v2772, %v2760
    %v3865 = vpack.c.b16 %v2785, %v2773
    %v3866 = vpack.c.b16 %v2786, %v2774
    %v3867 = vpack.c.b16 %v2787, %v2775
    %v3868 = vpack.c.b16 %v2788, %v2776
    %v3869 = vpack.c.b16 %v2789, %v2777
    %v3870 = vpack.c.b16 %v2790, %v2778
    %v3871 = vpack.c.b16 %v2791, %v2779
    %v3872 = vpack.c.b16 %v2792, %v2780
    %v3873 = vpack.c.b16 %v2793, %v2781
    %v3874 = vpack.c.b16 %v2794, %v2782
    %v3875 = vpack.c.b16 %v2795, %v2783
    %v3876 = vpack.c.b16 %v2796, %v2784
    %v3877 = vpack.c.b16 %v2809, %v2797
    %v3878 = vpack.c.b16 %v2810, %v2798
    %v3879 = vpack.c.b16 %v2811, %v2799
    %v3880 = vpack.c.b16 %v2812, %v2800
    %v3881 = vpack.c.b16 %v2813, %v2801
    %v3882 = vpack.c.b16 %v2814, %v2802
    %v3883 = vpack.c.b16 %v2815, %v2803
    %v3884 = vpack.c.b16 %v2816, %v2804
    %v3885 = vpack.c.b16 %v2817, %v2805
    %v3886 = vpack.c.b16 %v2818, %v2806
    %v3887 = vpack.c.b16 %v2819, %v2807
    %v3888 = vpack.c.b16 %v2820, %v2808
    %v3889 = vpack.c.b16 %v2833, %v2821
    %v3890 = vpack.c.b16 %v2834, %v2822
    %v3891 = vpack.c.b16 %v2835, %v2823
    %v3892 = vpack.c.b16 %v2836, %v2824
    %v3893 = vpack.c.b16 %v2837, %v2825
    %v3894 = vpack.c.b16 %v2838, %v2826
    %v3895 = vpack.c.b16 %v2839, %v2827
    %v3896 = vpack.c.b16 %v2840, %v2828
    %v3897 = vpack.c.b16 %v2841, %v2829
    %v3898 = vpack.c.b16 %v2842, %v2830
    %v3899 = vpack.c.b16 %v2843, %v2831
    %v3900 = vpack.c.b16 %v2844, %v2832
    %v3901 = vpack.c.b16 %v2857, %v2845
    %v3902 = vpack.c.b16 %v2858, %v2846
    %v3903 = vpack.c.b16 %v2859, %v2847
    %v3904 = vpack.c.b16 %v2860, %v2848
    %v3905 = vpack.c.b16 %v2861, %v2849
    %v3906 = vpack.c.b16 %v2862, %v2850
    %v3907 = vpack.c.b16 %v2863, %v2851
    %v3908 = vpack.c.b16 %v2864, %v2852
    %v3909 = vpack.c.b16 %v2865, %v2853
    %v3910 = vpack.c.b16 %v2866, %v2854
    %v3911 = vpack.c.b16 %v2867, %v2855
    %v3912 = vpack.c.b16 %v2868, %v2856
    %v3913 = vpack.c.b16 %v2881, %v2869
    %v3914 = vpack.c.b16 %v2882, %v2870
    %v3915 = vpack.c.b16 %v2883, %v2871
    %v3916 = vpack.c.b16 %v2884, %v2872
    %v3917 = vpack.c.b16 %v2885, %v2873
    %v3918 = vpack.c.b16 %v2886, %v2874
    %v3919 = vpack.c.b16 %v2887, %v2875
    %v3920 = vpack.c.b16 %v2888, %v2876
    %v3921 = vpack.c.b16 %v2889, %v2877
    %v3922 = vpack.c.b16 %v2890, %v2878
    %v3923 = vpack.c.b16 %v2891, %v2879
    %v3924 = vpack.c.b16 %v2892, %v2880
    %v3925 = vpack.c.b16 %v2905, %v2893
    %v3926 = vpack.c.b16 %v2906, %v2894
    %v3927 = vpack.c.b16 %v2907, %v2895
    %v3928 = vpack.c.b16 %v2908, %v2896
    %v3929 = vpack.c.b16 %v2909, %v2897
    %v3930 = vpack.c.b16 %v2910, %v2898
    %v3931 = vpack.c.b16 %v2911, %v2899
    %v3932 = vpack.c.b16 %v2912, %v2900
    %v3933 = vpack.c.b16 %v2913, %v2901
    %v3934 = vpack.c.b16 %v2914, %v2902
    %v3935 = vpack.c.b16 %v2915, %v2903
    %v3936 = vpack.c.b16 %v2916, %v2904
    %v3937 = vpack.c.b16 %v2929, %v2917
    %v3938 = vpack.c.b16 %v2930, %v2918
    %v3939 = vpack.c.b16 %v2931, %v2919
    %v3940 = vpack.c.b16 %v2932, %v2920
    %v3941 = vpack.c.b16 %v2933, %v2921
    %v3942 = vpack.c.b16 %v2934, %v2922
    %v3943 = vpack.c.b16 %v2935, %v2923
    %v3944 = vpack.c.b16 %v2936, %v2924
    %v3945 = vpack.c.b16 %v2937, %v2925
    %v3946 = vpack.c.b16 %v2938, %v2926
    %v3947 = vpack.c.b16 %v2939, %v2927
    %v3948 = vpack.c.b16 %v2940, %v2928
    %v3949 = vpack.c.b16 %v2953, %v2941
    %v3950 = vpack.c.b16 %v2954, %v2942
    %v3951 = vpack.c.b16 %v2955, %v2943
    %v3952 = vpack.c.b16 %v2956, %v2944
    %v3953 = vpack.c.b16 %v2957, %v2945
    %v3954 = vpack.c.b16 %v2958, %v2946
    %v3955 = vpack.c.b16 %v2959, %v2947
    %v3956 = vpack.c.b16 %v2960, %v2948
    %v3957 = vpack.c.b16 %v2961, %v2949
    %v3958 = vpack.c.b16 %v2962, %v2950
    %v3959 = vpack.c.b16 %v2963, %v2951
    %v3960 = vpack.c.b16 %v2964, %v2952
    %v3961 = vpack.c.b16 %v2977, %v2965
    %v3962 = vpack.c.b16 %v2978, %v2966
    %v3963 = vpack.c.b16 %v2979, %v2967
    %v3964 = vpack.c.b16 %v2980, %v2968
    %v3965 = vpack.c.b16 %v2981, %v2969
    %v3966 = vpack.c.b16 %v2982, %v2970
    %v3967 = vpack.c.b16 %v2983, %v2971
    %v3968 = vpack.c.b16 %v2984, %v2972
    %v3969 = vpack.c.b16 %v2985, %v2973
    %v3970 = vpack.c.b16 %v2986, %v2974
    %v3971 = vpack.c.b16 %v2987, %v2975
    %v3972 = vpack.c.b16 %v2988, %v2976
    %v3973 = vpack.c.b16 %v3001, %v2989
    %v3974 = vpack.c.b16 %v3002, %v2990
    %v3975 = vpack.c.b16 %v3003, %v2991
    %v3976 = vpack.c.b16 %v3004, %v2992
    %v3977 = vpack.c.b16 %v3005, %v2993
    %v3978 = vpack.c.b16 %v3006, %v2994
    %v3979 = vpack.c.b16 %v3007, %v2995
    %v3980 = vpack.c.b16 %v3008, %v2996
    %v3981 = vpack.c.b16 %v3009, %v2997
    %v3982 = vpack.c.b16 %v3010, %v2998
    %v3983 = vpack.c.b16 %v3011, %v2999
    %v3984 = vpack.c.b16 %v3012, %v3000
    %v3985 = vpack.c.b16 %v3025, %v3013
    %v3986 = vpack.c.b16 %v3026, %v3014
    %v3987 = vpack.c.b16 %v3027, %v3015
    %v3988 = vpack.c.b16 %v3028, %v3016
    %v3989 = vpack.c.b16 %v3029, %v3017
    %v3990 = vpack.c.b16 %v3030, %v3018
    %v3991 = vpack.c.b16 %v3031, %v3019
    %v3992 = vpack.c.b16 %v3032, %v3020
    %v3993 = vpack.c.b16 %v3033, %v3021
    %v3994 = vpack.c.b16 %v3034, %v3022
    %v3995 = vpack.c.b16 %v3035, %v3023
    %v3996 = vpack.c.b16 %v3036, %v3024
    %v3997 = vpack.c.b16 %v3049, %v3037
    %v3998 = vpack.c.b16 %v3050, %v3038
    %v3999 = vpack.c.b16 %v3051, %v3039
    %v4000 = vpack.c.b16 %v3052, %v3040
    %v4001 = vpack.c.b16 %v3053, %v3041
    %v4002 = vpack.c.b16 %v3054, %v3042
    %v4003 = vpack.c.b16 %v3055, %v3043
    %v4004 = vpack.c.b16 %v3056, %v3044
    %v4005 = vpack.c.b16 %v3057, %v3045
    %v4006 = vpack.c.b16 %v3058, %v3046
    %v4007 = vpack.c.b16 %v3059, %v3047
    %v4008 = vpack.c.b16 %v3060, %v3048
    %v4009 = vpack.c.b16 %v3073, %v3061
    %v4010 = vpack.c.b16 %v3074, %v3062
    %v4011 = vpack.c.b16 %v3075, %v3063
    %v4012 = vpack.c.b16 %v3076, %v3064
    %v4013 = vpack.c.b16 %v3077, %v3065
    %v4014 = vpack.c.b16 %v3078, %v3066
    %v4015 = vpack.c.b16 %v3079, %v3067
    %v4016 = vpack.c.b16 %v3080, %v3068
    %v4017 = vpack.c.b16 %v3081, %v3069
    %v4018 = vpack.c.b16 %v3082, %v3070
    %v4019 = vpack.c.b16 %v3083, %v3071
    %v4020 = vpack.c.b16 %v3084, %v3072
    %v4021 = vpack.c.b16 %v3097, %v3085
    %v4022 = vpack.c.b16 %v3098, %v3086
    %v4023 = vpack.c.b16 %v3099, %v3087
    %v4024 = vpack.c.b16 %v3100, %v3088
    %v4025 = vpack.c.b16 %v3101, %v3089
    %v4026 = vpack.c.b16 %v3102, %v3090
    %v4027 = vpack.c.b16 %v3103, %v3091
    %v4028 = vpack.c.b16 %v3104, %v3092
    %v4029 = vpack.c.b16 %v3105, %v3093
    %v4030 = vpack.c.b16 %v3106, %v3094
    %v4031 = vpack.c.b16 %v3107, %v3095
    %v4032 = vpack.c.b16 %v3108, %v3096
    %v4033 = vpack.c.b16 %v3121, %v3109
    %v4034 = vpack.c.b16 %v3122, %v3110
    %v4035 = vpack.c.b16 %v3123, %v3111
    %v4036 = vpack.c.b16 %v3124, %v3112
    %v4037 = vpack.c.b16 %v3125, %v3113
    %v4038 = vpack.c.b16 %v3126, %v3114
    %v4039 = vpack.c.b16 %v3127, %v3115
    %v4040 = vpack.c.b16 %v3128, %v3116
    %v4041 = vpack.c.b16 %v3129, %v3117
    %v4042 = vpack.c.b16 %v3130, %v3118
    %v4043 = vpack.c.b16 %v3131, %v3119
    %v4044 = vpack.c.b16 %v3132, %v3120
    %v4045 = vpack.c.b16 %v3145, %v3133
    %v4046 = vpack.c.b16 %v3146, %v3134
    %v4047 = vpack.c.b16 %v3147, %v3135
    %v4048 = vpack.c.b16 %v3148, %v3136
    %v4049 = vpack.c.b16 %v3149, %v3137
    %v4050 = vpack.c.b16 %v3150, %v3138
    %v4051 = vpack.c.b16 %v3151, %v3139
    %v4052 = vpack.c.b16 %v3152, %v3140
    %v4053 = vpack.c.b16 %v3153, %v3141
    %v4054 = vpack.c.b16 %v3154, %v3142
    %v4055 = vpack.c.b16 %v3155, %v3143
    %v4056 = vpack.c.b16 %v3156, %v3144
    %v4057 = vpack.c.b16 %v3169, %v3157
    %v4058 = vpack.c.b16 %v3170, %v3158
    %v4059 = vpack.c.b16 %v3171, %v3159
    %v4060 = vpack.c.b16 %v3172, %v3160
    %v4061 = vpack.c.b16 %v3173, %v3161
    %v4062 = vpack.c.b16 %v3174, %v3162
    %v4063 = vpack.c.b16 %v3175, %v3163
    %v4064 = vpack.c.b16 %v3176, %v3164
    %v4065 = vpack.c.b16 %v3177, %v3165
    %v4066 = vpack.c.b16 %v3178, %v3166
    %v4067 = vpack.c.b16 %v3179, %v3167
    %v4068 = vpack.c.b16 %v3180, %v3168
    %v4069 = vpack.c.b16 %v3193, %v3181
    %v4070 = vpack.c.b16 %v3194, %v3182
    %v4071 = vpack.c.b16 %v3195, %v3183
    %v4072 = vpack.c.b16 %v3196, %v3184
    %v4073 = vpack.c.b16 %v3197, %v3185
    %v4074 = vpack.c.b16 %v3198, %v3186
    %v4075 = vpack.c.b16 %v3199, %v3187
    %v4076 = vpack.c.b16 %v3200, %v3188
    %v4077 = vpack.c.b16 %v3201, %v3189
    %v4078 = vpack.c.b16 %v3202, %v3190
    %v4079 = vpack.c.b16 %v3203, %v3191
    %v4080 = vpack.c.b16 %v3204, %v3192
    %v4081 = vpack.c.b16 %v3217, %v3205
    %v4082 = vpack.c.b16 %v3218, %v3206
    %v4083 = vpack.c.b16 %v3219, %v3207
    %v4084 = vpack.c.b16 %v3220, %v3208
    %v4085 = vpack.c.b16 %v3221, %v3209
    %v4086 = vpack.c.b16 %v3222, %v3210
    %v4087 = vpack.c.b16 %v3223, %v3211
    %v4088 = vpack.c.b16 %v3224, %v3212
    %v4089 = vpack.c.b16 %v3225, %v3213
    %v4090 = vpack.c.b16 %v3226, %v3214
    %v4091 = vpack.c.b16 %v3227, %v3215
    %v4092 = vpack.c.b16 %v3228, %v3216
    %v4093 = vpack.c.b16 %v3241, %v3229
    %v4094 = vpack.c.b16 %v3242, %v3230
    %v4095 = vpack.c.b16 %v3243, %v3231
    %v4096 = vpack.c.b16 %v3244, %v3232
    %v4097 = vpack.c.b16 %v3245, %v3233
    %v4098 = vpack.c.b16 %v3246, %v3234
    %v4099 = vpack.c.b16 %v3247, %v3235
    %v4100 = vpack.c.b16 %v3248, %v3236
    %v4101 = vpack.c.b16 %v3249, %v3237
    %v4102 = vpack.c.b16 %v3250, %v3238
    %v4103 = vpack.c.b16 %v3251, %v3239
    %v4104 = vpack.c.b16 %v3252, %v3240
    %v4105 = vpack.c.b16 %v3265, %v3253
    %v4106 = vpack.c.b16 %v3266, %v3254
    %v4107 = vpack.c.b16 %v3267, %v3255
    %v4108 = vpack.c.b16 %v3268, %v3256
    %v4109 = vpack.c.b16 %v3269, %v3257
    %v4110 = vpack.c.b16 %v3270, %v3258
    %v4111 = vpack.c.b16 %v3271, %v3259
    %v4112 = vpack.c.b16 %v3272, %v3260
    %v4113 = vpack.c.b16 %v3273, %v3261
    %v4114 = vpack.c.b16 %v3274, %v3262
    %v4115 = vpack.c.b16 %v3275, %v3263
    %v4116 = vpack.c.b16 %v3276, %v3264
    %v4117 = vpack.c.b16 %v3289, %v3277
    %v4118 = vpack.c.b16 %v3290, %v3278
    %v4119 = vpack.c.b16 %v3291, %v3279
    %v4120 = vpack.c.b16 %v3292, %v3280
    %v4121 = vpack.c.b16 %v3293, %v3281
    %v4122 = vpack.c.b16 %v3294, %v3282
    %v4123 = vpack.c.b16 %v3295, %v3283
    %v4124 = vpack.c.b16 %v3296, %v3284
    %v4125 = vpack.c.b16 %v3297, %v3285
    %v4126 = vpack.c.b16 %v3298, %v3286
    %v4127 = vpack.c.b16 %v3299, %v3287
    %v4128 = vpack.c.b16 %v3300, %v3288
    %v4129 = vpack.c.b16 %v3313, %v3301
    %v4130 = vpack.c.b16 %v3314, %v3302
    %v4131 = vpack.c.b16 %v3315, %v3303
    %v4132 = vpack.c.b16 %v3316, %v3304
    %v4133 = vpack.c.b16 %v3317, %v3305
    %v4134 = vpack.c.b16 %v3318, %v3306
    %v4135 = vpack.c.b16 %v3319, %v3307
    %v4136 = vpack.c.b16 %v3320, %v3308
    %v4137 = vpack.c.b16 %v3321, %v3309
    %v4138 = vpack.c.b16 %v3322, %v3310
    %v4139 = vpack.c.b16 %v3323, %v3311
    %v4140 = vpack.c.b16 %v3324, %v3312
    %v4141 = vpack.c.b16 %v3337, %v3325
    %v4142 = vpack.c.b16 %v3338, %v3326
    %v4143 = vpack.c.b16 %v3339, %v3327
    %v4144 = vpack.c.b16 %v3340, %v3328
    %v4145 = vpack.c.b16 %v3341, %v3329
    %v4146 = vpack.c.b16 %v3342, %v3330
    %v4147 = vpack.c.b16 %v3343, %v3331
    %v4148 = vpack.c.b16 %v3344, %v3332
    %v4149 = vpack.c.b16 %v3345, %v3333
    %v4150 = vpack.c.b16 %v3346, %v3334
    %v4151 = vpack.c.b16 %v3347, %v3335
    %v4152 = vpack.c.b16 %v3348, %v3336
    %v4153 = vpack.c.b16 %v3361, %v3349
    %v4154 = vpack.c.b16 %v3362, %v3350
    %v4155 = vpack.c.b16 %v3363, %v3351
    %v4156 = vpack.c.b16 %v3364, %v3352
    %v4157 = vpack.c.b16 %v3365, %v3353
    %v4158 = vpack.c.b16 %v3366, %v3354
    %v4159 = vpack.c.b16 %v3367, %v3355
    %v4160 = vpack.c.b16 %v3368, %v3356
    %v4161 = vpack.c.b16 %v3369, %v3357
    %v4162 = vpack.c.b16 %v3370, %v3358
    %v4163 = vpack.c.b16 %v3371, %v3359
    %v4164 = vpack.c.b16 %v3372, %v3360
    %v4165 = vpack.c.b16 %v3385, %v3373
    %v4166 = vpack.c.b16 %v3386, %v3374
    %v4167 = vpack.c.b16 %v3387, %v3375
    %v4168 = vpack.c.b16 %v3388, %v3376
    %v4169 = vpack.c.b16 %v3389, %v3377
    %v4170 = vpack.c.b16 %v3390, %v3378
    %v4171 = vpack.c.b16 %v3391, %v3379
    %v4172 = vpack.c.b16 %v3392, %v3380
    %v4173 = vpack.c.b16 %v3393, %v3381
    %v4174 = vpack.c.b16 %v3394, %v3382
    %v4175 = vpack.c.b16 %v3395, %v3383
    %v4176 = vpack.c.b16 %v3396, %v3384
    %v4177 = vpack.c.b16 %v3409, %v3397
    %v4178 = vpack.c.b16 %v3410, %v3398
    %v4179 = vpack.c.b16 %v3411, %v3399
    %v4180 = vpack.c.b16 %v3412, %v3400
    %v4181 = vpack.c.b16 %v3413, %v3401
    %v4182 = vpack.c.b16 %v3414, %v3402
    %v4183 = vpack.c.b16 %v3415, %v3403
    %v4184 = vpack.c.b16 %v3416, %v3404
    %v4185 = vpack.c.b16 %v3417, %v3405
    %v4186 = vpack.c.b16 %v3418, %v3406
    %v4187 = vpack.c.b16 %v3419, %v3407
    %v4188 = vpack.c.b16 %v3420, %v3408
    %4957 = vmatprep.subr.bf16.mxu0 %v3422
    %4958 = vmatpush1.bf16.msra.mxu0 %v3421
    %4959 = vmatprep.subr.bf16.mxu0 %v3434
    %4960 = vmatpush1.bf16.msra.mxu0 %v3433
    %4961 = vmatprep.subr.bf16.mxu0 %v3446
    %4962 = vmatpush1.bf16.msra.mxu0 %v3445
    %4963 = vmatprep.subr.bf16.mxu0 %v3458
    %4964 = vmatpush1.bf16.msra.mxu0 %v3457
    %4965 = vmatprep.subr.bf16.mxu0 %v3470
    %4966 = vmatpush1.bf16.msra.mxu0 %v3469
    %4967 = vmatprep.subr.bf16.mxu0 %v3482
    %4968 = vmatpush1.bf16.msra.mxu0 %v3481
    %4969 = vmatprep.subr.bf16.mxu0 %v3494
    %4970 = vmatpush1.bf16.msra.mxu0 %v3493
    %4971 = vmatprep.subr.bf16.mxu0 %v3506
    %4972 = vmatpush1.bf16.msra.mxu0 %v3505
    %4973 = vmatprep.subr.bf16.mxu0 %v3518
    %4974 = vmatpush1.bf16.msra.mxu0 %v3517
    %4975 = vmatprep.subr.bf16.mxu0 %v3530
    %4976 = vmatpush1.bf16.msra.mxu0 %v3529
    %4977 = vmatprep.subr.bf16.mxu0 %v3542
    %4978 = vmatpush1.bf16.msra.mxu0 %v3541
    %4979 = vmatprep.subr.bf16.mxu0 %v3554
    %4980 = vmatpush1.bf16.msra.mxu0 %v3553
    %4981 = vmatprep.subr.bf16.mxu0 %v3566
    %4982 = vmatpush1.bf16.msra.mxu0 %v3565
    %4983 = vmatprep.subr.bf16.mxu0 %v3578
    %4984 = vmatpush1.bf16.msra.mxu0 %v3577
    %4985 = vmatprep.subr.bf16.mxu0 %v3590
    %4986 = vmatpush1.bf16.msra.mxu0 %v3589
    %4987 = vmatprep.subr.bf16.mxu0 %v3602
    %4988 = vmatpush1.bf16.msra.mxu0 %v3601
    %4989 = vmatprep.mubr.bf16.mxu0 %v1102
    %4990 = vmatmul.mubr.bf16.gmra.mrb[0].mxu0 %v1101
    %v4991 = vpop.f32.mrb[0].mxu0
    %v4992 = vadd.f32 %v1032, %v4991
    %v4993 = vpop.f32.mrb[0].mxu0
    %v4994 = vadd.f32 %v1036, %v4993
    %v4995 = vpop.f32.mrb[0].mxu0
    %v4996 = vpop.f32.mrb[0].mxu0
    %4997 = vdwg.mxu0
    %4998 = vmatprep.subr.bf16.mxu0 %v3614
    %4999 = vmatpush1.bf16.msra.mxu0 %v3613
    %5000 = vmatprep.subr.bf16.mxu0 %v3626
    %5001 = vmatpush1.bf16.msra.mxu0 %v3625
    %5002 = vmatprep.subr.bf16.mxu0 %v3638
    %5003 = vmatpush1.bf16.msra.mxu0 %v3637
    %5004 = vmatprep.subr.bf16.mxu0 %v3650
    %5005 = vmatpush1.bf16.msra.mxu0 %v3649
    %5006 = vmatprep.subr.bf16.mxu0 %v3662
    %5007 = vmatpush1.bf16.msra.mxu0 %v3661
    %5008 = vmatprep.subr.bf16.mxu0 %v3674
    %5009 = vmatpush1.bf16.msra.mxu0 %v3673
    %5010 = vmatprep.subr.bf16.mxu0 %v3686
    %5011 = vmatpush1.bf16.msra.mxu0 %v3685
    %5012 = vmatprep.subr.bf16.mxu0 %v3698
    %5013 = vmatpush1.bf16.msra.mxu0 %v3697
    %5014 = vmatprep.subr.bf16.mxu0 %v3710
    %5015 = vmatpush1.bf16.msra.mxu0 %v3709
    %5016 = vmatprep.subr.bf16.mxu0 %v3722
    %5017 = vmatpush1.bf16.msra.mxu0 %v3721
    %5018 = vmatprep.subr.bf16.mxu0 %v3734
    %5019 = vmatpush1.bf16.msra.mxu0 %v3733
    %5020 = vmatprep.subr.bf16.mxu0 %v3746
    %5021 = vmatpush1.bf16.msra.mxu0 %v3745
    %5022 = vmatprep.subr.bf16.mxu0 %v3758
    %5023 = vmatpush1.bf16.msra.mxu0 %v3757
    %5024 = vmatprep.subr.bf16.mxu0 %v3770
    %5025 = vmatpush1.bf16.msra.mxu0 %v3769
    %5026 = vmatprep.subr.bf16.mxu0 %v3782
    %5027 = vmatpush1.bf16.msra.mxu0 %v3781
    %5028 = vmatprep.subr.bf16.mxu0 %v3794
    %5029 = vmatpush1.bf16.msra.mxu0 %v3793
    %5030 = vmatprep.mubr.bf16.mxu0 %v1104
    %5031 = vmatmul.mubr.bf16.gmra.mrb[0].mxu0 %v1103
    %v5032 = vpop.f32.mrb[0].mxu0
    %v5033 = vadd.f32 %v4992, %v5032
    %v5034 = vpop.f32.mrb[0].mxu0
    %v5035 = vadd.f32 %v4994, %v5034
    %v5036 = vpop.f32.mrb[0].mxu0
    %v5037 = vpop.f32.mrb[0].mxu0
    %5038 = vdwg.mxu0
    %5039 = vmatprep.subr.bf16.mxu0 %v3806
    %5040 = vmatpush1.bf16.msra.mxu0 %v3805
    %5041 = vmatprep.subr.bf16.mxu0 %v3818
    %5042 = vmatpush1.bf16.msra.mxu0 %v3817
    %5043 = vmatprep.subr.bf16.mxu0 %v3830
    %5044 = vmatpush1.bf16.msra.mxu0 %v3829
    %5045 = vmatprep.subr.bf16.mxu0 %v3842
    %5046 = vmatpush1.bf16.msra.mxu0 %v3841
    %5047 = vmatprep.subr.bf16.mxu0 %v3854
    %5048 = vmatpush1.bf16.msra.mxu0 %v3853
    %5049 = vmatprep.subr.bf16.mxu0 %v3866
    %5050 = vmatpush1.bf16.msra.mxu0 %v3865
    %5051 = vmatprep.subr.bf16.mxu0 %v3878
    %5052 = vmatpush1.bf16.msra.mxu0 %v3877
    %5053 = vmatprep.subr.bf16.mxu0 %v3890
    %5054 = vmatpush1.bf16.msra.mxu0 %v3889
    %5055 = vmatprep.subr.bf16.mxu0 %v3902
    %5056 = vmatpush1.bf16.msra.mxu0 %v3901
    %5057 = vmatprep.subr.bf16.mxu0 %v3914
    %5058 = vmatpush1.bf16.msra.mxu0 %v3913
    %5059 = vmatprep.subr.bf16.mxu0 %v3926
    %5060 = vmatpush1.bf16.msra.mxu0 %v3925
    %5061 = vmatprep.subr.bf16.mxu0 %v3938
    %5062 = vmatpush1.bf16.msra.mxu0 %v3937
    %5063 = vmatprep.subr.bf16.mxu0 %v3950
    %5064 = vmatpush1.bf16.msra.mxu0 %v3949
    %5065 = vmatprep.subr.bf16.mxu0 %v3962
    %5066 = vmatpush1.bf16.msra.mxu0 %v3961
    %5067 = vmatprep.subr.bf16.mxu0 %v3974
    %5068 = vmatpush1.bf16.msra.mxu0 %v3973
    %5069 = vmatprep.subr.bf16.mxu0 %v3986
    %5070 = vmatpush1.bf16.msra.mxu0 %v3985
    %5071 = vmatprep.mubr.bf16.mxu0 %v1106
    %5072 = vmatmul.mubr.bf16.gmra.mrb[0].mxu0 %v1105
    %v5073 = vpop.f32.mrb[0].mxu0
    %v5074 = vadd.f32 %v5033, %v5073
    %v5075 = vpop.f32.mrb[0].mxu0
    %v5076 = vadd.f32 %v5035, %v5075
    %v5077 = vpop.f32.mrb[0].mxu0
    %v5078 = vpop.f32.mrb[0].mxu0
    %5079 = vdwg.mxu0
    %5080 = vmatprep.subr.bf16.mxu0 %v3998
    %5081 = vmatpush1.bf16.msra.mxu0 %v3997
    %5082 = vmatprep.subr.bf16.mxu0 %v4010
    %5083 = vmatpush1.bf16.msra.mxu0 %v4009
    %5084 = vmatprep.subr.bf16.mxu0 %v4022
    %5085 = vmatpush1.bf16.msra.mxu0 %v4021
    %5086 = vmatprep.subr.bf16.mxu0 %v4034
    %5087 = vmatpush1.bf16.msra.mxu0 %v4033
    %5088 = vmatprep.subr.bf16.mxu0 %v4046
    %5089 = vmatpush1.bf16.msra.mxu0 %v4045
    %5090 = vmatprep.subr.bf16.mxu0 %v4058
    %5091 = vmatpush1.bf16.msra.mxu0 %v4057
    %5092 = vmatprep.subr.bf16.mxu0 %v4070
    %5093 = vmatpush1.bf16.msra.mxu0 %v4069
    %5094 = vmatprep.subr.bf16.mxu0 %v4082
    %5095 = vmatpush1.bf16.msra.mxu0 %v4081
    %5096 = vmatprep.subr.bf16.mxu0 %v4094
    %5097 = vmatpush1.bf16.msra.mxu0 %v4093
    %5098 = vmatprep.subr.bf16.mxu0 %v4106
    %5099 = vmatpush1.bf16.msra.mxu0 %v4105
    %5100 = vmatprep.subr.bf16.mxu0 %v4118
    %5101 = vmatpush1.bf16.msra.mxu0 %v4117
    %5102 = vmatprep.subr.bf16.mxu0 %v4130
    %5103 = vmatpush1.bf16.msra.mxu0 %v4129
    %5104 = vmatprep.subr.bf16.mxu0 %v4142
    %5105 = vmatpush1.bf16.msra.mxu0 %v4141
    %5106 = vmatprep.subr.bf16.mxu0 %v4154
    %5107 = vmatpush1.bf16.msra.mxu0 %v4153
    %5108 = vmatprep.subr.bf16.mxu0 %v4166
    %5109 = vmatpush1.bf16.msra.mxu0 %v4165
    %5110 = vmatprep.subr.bf16.mxu0 %v4178
    %5111 = vmatpush1.bf16.msra.mxu0 %v4177
    %5112 = vmatprep.mubr.bf16.mxu0 %v1108
    %5113 = vmatmul.mubr.bf16.gmra.mrb[0].mxu0 %v1107
    %v5114 = vpop.f32.mrb[0].mxu0
    %v5115 = vadd.f32 %v5074, %v5114
    %v5116 = vpop.f32.mrb[0].mxu0
    %v5117 = vadd.f32 %v5076, %v5116
    %v5118 = vpop.f32.mrb[0].mxu0
    %v5119 = vpop.f32.mrb[0].mxu0
    %5120 = vdwg.mxu0
    %5121 = vmatprep.subr.bf16.mxu0 %v3424
    %5122 = vmatpush1.bf16.msra.mxu0 %v3423
    %5123 = vmatprep.subr.bf16.mxu0 %v3436
    %5124 = vmatpush1.bf16.msra.mxu0 %v3435
    %5125 = vmatprep.subr.bf16.mxu0 %v3448
    %5126 = vmatpush1.bf16.msra.mxu0 %v3447
    %5127 = vmatprep.subr.bf16.mxu0 %v3460
    %5128 = vmatpush1.bf16.msra.mxu0 %v3459
    %5129 = vmatprep.subr.bf16.mxu0 %v3472
    %5130 = vmatpush1.bf16.msra.mxu0 %v3471
    %5131 = vmatprep.subr.bf16.mxu0 %v3484
    %5132 = vmatpush1.bf16.msra.mxu0 %v3483
    %5133 = vmatprep.subr.bf16.mxu0 %v3496
    %5134 = vmatpush1.bf16.msra.mxu0 %v3495
    %5135 = vmatprep.subr.bf16.mxu0 %v3508
    %5136 = vmatpush1.bf16.msra.mxu0 %v3507
    %5137 = vmatprep.subr.bf16.mxu0 %v3520
    %5138 = vmatpush1.bf16.msra.mxu0 %v3519
    %5139 = vmatprep.subr.bf16.mxu0 %v3532
    %5140 = vmatpush1.bf16.msra.mxu0 %v3531
    %5141 = vmatprep.subr.bf16.mxu0 %v3544
    %5142 = vmatpush1.bf16.msra.mxu0 %v3543
    %5143 = vmatprep.subr.bf16.mxu0 %v3556
    %5144 = vmatpush1.bf16.msra.mxu0 %v3555
    %5145 = vmatprep.subr.bf16.mxu0 %v3568
    %5146 = vmatpush1.bf16.msra.mxu0 %v3567
    %5147 = vmatprep.subr.bf16.mxu0 %v3580
    %5148 = vmatpush1.bf16.msra.mxu0 %v3579
    %5149 = vmatprep.subr.bf16.mxu0 %v3592
    %5150 = vmatpush1.bf16.msra.mxu0 %v3591
    %5151 = vmatprep.subr.bf16.mxu0 %v3604
    %5152 = vmatpush1.bf16.msra.mxu0 %v3603
    %5153 = vmatprep.mubr.bf16.mxu0 %v1102
    %5154 = vmatmul.mubr.bf16.gmra.mrb[0].mxu0 %v1101
    %v5155 = vpop.f32.mrb[0].mxu0
    %v5156 = vadd.f32 %v1040, %v5155
    %v5157 = vpop.f32.mrb[0].mxu0
    %v5158 = vadd.f32 %v1044, %v5157
    %v5159 = vpop.f32.mrb[0].mxu0
    %v5160 = vpop.f32.mrb[0].mxu0
    %5161 = vdwg.mxu0
    %5162 = vmatprep.subr.bf16.mxu0 %v3616
    %5163 = vmatpush1.bf16.msra.mxu0 %v3615
    %5164 = vmatprep.subr.bf16.mxu0 %v3628
    %5165 = vmatpush1.bf16.msra.mxu0 %v3627
    %5166 = vmatprep.subr.bf16.mxu0 %v3640
    %5167 = vmatpush1.bf16.msra.mxu0 %v3639
    %5168 = vmatprep.subr.bf16.mxu0 %v3652
    %5169 = vmatpush1.bf16.msra.mxu0 %v3651
    %5170 = vmatprep.subr.bf16.mxu0 %v3664
    %5171 = vmatpush1.bf16.msra.mxu0 %v3663
    %5172 = vmatprep.subr.bf16.mxu0 %v3676
    %5173 = vmatpush1.bf16.msra.mxu0 %v3675
    %5174 = vmatprep.subr.bf16.mxu0 %v3688
    %5175 = vmatpush1.bf16.msra.mxu0 %v3687
    %5176 = vmatprep.subr.bf16.mxu0 %v3700
    %5177 = vmatpush1.bf16.msra.mxu0 %v3699
    %5178 = vmatprep.subr.bf16.mxu0 %v3712
    %5179 = vmatpush1.bf16.msra.mxu0 %v3711
    %5180 = vmatprep.subr.bf16.mxu0 %v3724
    %5181 = vmatpush1.bf16.msra.mxu0 %v3723
    %5182 = vmatprep.subr.bf16.mxu0 %v3736
    %5183 = vmatpush1.bf16.msra.mxu0 %v3735
    %5184 = vmatprep.subr.bf16.mxu0 %v3748
    %5185 = vmatpush1.bf16.msra.mxu0 %v3747
    %5186 = vmatprep.subr.bf16.mxu0 %v3760
    %5187 = vmatpush1.bf16.msra.mxu0 %v3759
    %5188 = vmatprep.subr.bf16.mxu0 %v3772
    %5189 = vmatpush1.bf16.msra.mxu0 %v3771
    %5190 = vmatprep.subr.bf16.mxu0 %v3784
    %5191 = vmatpush1.bf16.msra.mxu0 %v3783
    %5192 = vmatprep.subr.bf16.mxu0 %v3796
    %5193 = vmatpush1.bf16.msra.mxu0 %v3795
    %5194 = vmatprep.mubr.bf16.mxu0 %v1104
    %5195 = vmatmul.mubr.bf16.gmra.mrb[0].mxu0 %v1103
    %v5196 = vpop.f32.mrb[0].mxu0
    %v5197 = vadd.f32 %v5156, %v5196
    %v5198 = vpop.f32.mrb[0].mxu0
    %v5199 = vadd.f32 %v5158, %v5198
    %v5200 = vpop.f32.mrb[0].mxu0
    %v5201 = vpop.f32.mrb[0].mxu0
    %5202 = vdwg.mxu0
    %5203 = vmatprep.subr.bf16.mxu0 %v3808
    %5204 = vmatpush1.bf16.msra.mxu0 %v3807
    %5205 = vmatprep.subr.bf16.mxu0 %v3820
    %5206 = vmatpush1.bf16.msra.mxu0 %v3819
    %5207 = vmatprep.subr.bf16.mxu0 %v3832
    %5208 = vmatpush1.bf16.msra.mxu0 %v3831
    %5209 = vmatprep.subr.bf16.mxu0 %v3844
    %5210 = vmatpush1.bf16.msra.mxu0 %v3843
    %5211 = vmatprep.subr.bf16.mxu0 %v3856
    %5212 = vmatpush1.bf16.msra.mxu0 %v3855
    %5213 = vmatprep.subr.bf16.mxu0 %v3868
    %5214 = vmatpush1.bf16.msra.mxu0 %v3867
    %5215 = vmatprep.subr.bf16.mxu0 %v3880
    %5216 = vmatpush1.bf16.msra.mxu0 %v3879
    %5217 = vmatprep.subr.bf16.mxu0 %v3892
    %5218 = vmatpush1.bf16.msra.mxu0 %v3891
    %5219 = vmatprep.subr.bf16.mxu0 %v3904
    %5220 = vmatpush1.bf16.msra.mxu0 %v3903
    %5221 = vmatprep.subr.bf16.mxu0 %v3916
    %5222 = vmatpush1.bf16.msra.mxu0 %v3915
    %5223 = vmatprep.subr.bf16.mxu0 %v3928
    %5224 = vmatpush1.bf16.msra.mxu0 %v3927
    %5225 = vmatprep.subr.bf16.mxu0 %v3940
    %5226 = vmatpush1.bf16.msra.mxu0 %v3939
    %5227 = vmatprep.subr.bf16.mxu0 %v3952
    %5228 = vmatpush1.bf16.msra.mxu0 %v3951
    %5229 = vmatprep.subr.bf16.mxu0 %v3964
    %5230 = vmatpush1.bf16.msra.mxu0 %v3963
    %5231 = vmatprep.subr.bf16.mxu0 %v3976
    %5232 = vmatpush1.bf16.msra.mxu0 %v3975
    %5233 = vmatprep.subr.bf16.mxu0 %v3988
    %5234 = vmatpush1.bf16.msra.mxu0 %v3987
    %5235 = vmatprep.mubr.bf16.mxu0 %v1106
    %5236 = vmatmul.mubr.bf16.gmra.mrb[0].mxu0 %v1105
    %v5237 = vpop.f32.mrb[0].mxu0
    %v5238 = vadd.f32 %v5197, %v5237
    %v5239 = vpop.f32.mrb[0].mxu0
    %v5240 = vadd.f32 %v5199, %v5239
    %v5241 = vpop.f32.mrb[0].mxu0
    %v5242 = vpop.f32.mrb[0].mxu0
    %5243 = vdwg.mxu0
    %5244 = vmatprep.subr.bf16.mxu0 %v4000
    %5245 = vmatpush1.bf16.msra.mxu0 %v3999
    %5246 = vmatprep.subr.bf16.mxu0 %v4012
    %5247 = vmatpush1.bf16.msra.mxu0 %v4011
    %5248 = vmatprep.subr.bf16.mxu0 %v4024
    %5249 = vmatpush1.bf16.msra.mxu0 %v4023
    %5250 = vmatprep.subr.bf16.mxu0 %v4036
    %5251 = vmatpush1.bf16.msra.mxu0 %v4035
    %5252 = vmatprep.subr.bf16.mxu0 %v4048
    %5253 = vmatpush1.bf16.msra.mxu0 %v4047
    %5254 = vmatprep.subr.bf16.mxu0 %v4060
    %5255 = vmatpush1.bf16.msra.mxu0 %v4059
    %5256 = vmatprep.subr.bf16.mxu0 %v4072
    %5257 = vmatpush1.bf16.msra.mxu0 %v4071
    %5258 = vmatprep.subr.bf16.mxu0 %v4084
    %5259 = vmatpush1.bf16.msra.mxu0 %v4083
    %5260 = vmatprep.subr.bf16.mxu0 %v4096
    %5261 = vmatpush1.bf16.msra.mxu0 %v4095
    %5262 = vmatprep.subr.bf16.mxu0 %v4108
    %5263 = vmatpush1.bf16.msra.mxu0 %v4107
    %5264 = vmatprep.subr.bf16.mxu0 %v4120
    %5265 = vmatpush1.bf16.msra.mxu0 %v4119
    %5266 = vmatprep.subr.bf16.mxu0 %v4132
    %5267 = vmatpush1.bf16.msra.mxu0 %v4131
    %5268 = vmatprep.subr.bf16.mxu0 %v4144
    %5269 = vmatpush1.bf16.msra.mxu0 %v4143
    %5270 = vmatprep.subr.bf16.mxu0 %v4156
    %5271 = vmatpush1.bf16.msra.mxu0 %v4155
    %5272 = vmatprep.subr.bf16.mxu0 %v4168
    %5273 = vmatpush1.bf16.msra.mxu0 %v4167
    %5274 = vmatprep.subr.bf16.mxu0 %v4180
    %5275 = vmatpush1.bf16.msra.mxu0 %v4179
    %5276 = vmatprep.mubr.bf16.mxu0 %v1108
    %5277 = vmatmul.mubr.bf16.gmra.mrb[0].mxu0 %v1107
    %v5278 = vpop.f32.mrb[0].mxu0
    %v5279 = vadd.f32 %v5238, %v5278
    %v5280 = vpop.f32.mrb[0].mxu0
    %v5281 = vadd.f32 %v5240, %v5280
    %v5282 = vpop.f32.mrb[0].mxu0
    %v5283 = vpop.f32.mrb[0].mxu0
    %5284 = vdwg.mxu0
    %5285 = vmatprep.subr.bf16.mxu0 %v3426
    %5286 = vmatpush1.bf16.msra.mxu0 %v3425
    %5287 = vmatprep.subr.bf16.mxu0 %v3438
    %5288 = vmatpush1.bf16.msra.mxu0 %v3437
    %5289 = vmatprep.subr.bf16.mxu0 %v3450
    %5290 = vmatpush1.bf16.msra.mxu0 %v3449
    %5291 = vmatprep.subr.bf16.mxu0 %v3462
    %5292 = vmatpush1.bf16.msra.mxu0 %v3461
    %5293 = vmatprep.subr.bf16.mxu0 %v3474
    %5294 = vmatpush1.bf16.msra.mxu0 %v3473
    %5295 = vmatprep.subr.bf16.mxu0 %v3486
    %5296 = vmatpush1.bf16.msra.mxu0 %v3485
    %5297 = vmatprep.subr.bf16.mxu0 %v3498
    %5298 = vmatpush1.bf16.msra.mxu0 %v3497
    %5299 = vmatprep.subr.bf16.mxu0 %v3510
    %5300 = vmatpush1.bf16.msra.mxu0 %v3509
    %5301 = vmatprep.subr.bf16.mxu0 %v3522
    %5302 = vmatpush1.bf16.msra.mxu0 %v3521
    %5303 = vmatprep.subr.bf16.mxu0 %v3534
    %5304 = vmatpush1.bf16.msra.mxu0 %v3533
    %5305 = vmatprep.subr.bf16.mxu0 %v3546
    %5306 = vmatpush1.bf16.msra.mxu0 %v3545
    %5307 = vmatprep.subr.bf16.mxu0 %v3558
    %5308 = vmatpush1.bf16.msra.mxu0 %v3557
    %5309 = vmatprep.subr.bf16.mxu0 %v3570
    %5310 = vmatpush1.bf16.msra.mxu0 %v3569
    %5311 = vmatprep.subr.bf16.mxu0 %v3582
    %5312 = vmatpush1.bf16.msra.mxu0 %v3581
    %5313 = vmatprep.subr.bf16.mxu0 %v3594
    %5314 = vmatpush1.bf16.msra.mxu0 %v3593
    %5315 = vmatprep.subr.bf16.mxu0 %v3606
    %5316 = vmatpush1.bf16.msra.mxu0 %v3605
    %5317 = vmatprep.mubr.bf16.mxu0 %v1102
    %5318 = vmatmul.mubr.bf16.gmra.mrb[0].mxu0 %v1101
    %v5319 = vpop.f32.mrb[0].mxu0
    %v5320 = vadd.f32 %v1048, %v5319
    %v5321 = vpop.f32.mrb[0].mxu0
    %v5322 = vadd.f32 %v1052, %v5321
    %v5323 = vpop.f32.mrb[0].mxu0
    %v5324 = vpop.f32.mrb[0].mxu0
    %5325 = vdwg.mxu0
    %5326 = vmatprep.subr.bf16.mxu0 %v3618
    %5327 = vmatpush1.bf16.msra.mxu0 %v3617
    %5328 = vmatprep.subr.bf16.mxu0 %v3630
    %5329 = vmatpush1.bf16.msra.mxu0 %v3629
    %5330 = vmatprep.subr.bf16.mxu0 %v3642
    %5331 = vmatpush1.bf16.msra.mxu0 %v3641
    %5332 = vmatprep.subr.bf16.mxu0 %v3654
    %5333 = vmatpush1.bf16.msra.mxu0 %v3653
    %5334 = vmatprep.subr.bf16.mxu0 %v3666
    %5335 = vmatpush1.bf16.msra.mxu0 %v3665
    %5336 = vmatprep.subr.bf16.mxu0 %v3678
    %5337 = vmatpush1.bf16.msra.mxu0 %v3677
    %5338 = vmatprep.subr.bf16.mxu0 %v3690
    %5339 = vmatpush1.bf16.msra.mxu0 %v3689
    %5340 = vmatprep.subr.bf16.mxu0 %v3702
    %5341 = vmatpush1.bf16.msra.mxu0 %v3701
    %5342 = vmatprep.subr.bf16.mxu0 %v3714
    %5343 = vmatpush1.bf16.msra.mxu0 %v3713
    %5344 = vmatprep.subr.bf16.mxu0 %v3726
    %5345 = vmatpush1.bf16.msra.mxu0 %v3725
    %5346 = vmatprep.subr.bf16.mxu0 %v3738
    %5347 = vmatpush1.bf16.msra.mxu0 %v3737
    %5348 = vmatprep.subr.bf16.mxu0 %v3750
    %5349 = vmatpush1.bf16.msra.mxu0 %v3749
    %5350 = vmatprep.subr.bf16.mxu0 %v3762
    %5351 = vmatpush1.bf16.msra.mxu0 %v3761
    %5352 = vmatprep.subr.bf16.mxu0 %v3774
    %5353 = vmatpush1.bf16.msra.mxu0 %v3773
    %5354 = vmatprep.subr.bf16.mxu0 %v3786
    %5355 = vmatpush1.bf16.msra.mxu0 %v3785
    %5356 = vmatprep.subr.bf16.mxu0 %v3798
    %5357 = vmatpush1.bf16.msra.mxu0 %v3797
    %5358 = vmatprep.mubr.bf16.mxu0 %v1104
    %5359 = vmatmul.mubr.bf16.gmra.mrb[0].mxu0 %v1103
    %v5360 = vpop.f32.mrb[0].mxu0
    %v5361 = vadd.f32 %v5320, %v5360
    %v5362 = vpop.f32.mrb[0].mxu0
    %v5363 = vadd.f32 %v5322, %v5362
    %v5364 = vpop.f32.mrb[0].mxu0
    %v5365 = vpop.f32.mrb[0].mxu0
    %5366 = vdwg.mxu0
    %5367 = vmatprep.subr.bf16.mxu0 %v3810
    %5368 = vmatpush1.bf16.msra.mxu0 %v3809
    %5369 = vmatprep.subr.bf16.mxu0 %v3822
    %5370 = vmatpush1.bf16.msra.mxu0 %v3821
    %5371 = vmatprep.subr.bf16.mxu0 %v3834
    %5372 = vmatpush1.bf16.msra.mxu0 %v3833
    %5373 = vmatprep.subr.bf16.mxu0 %v3846
    %5374 = vmatpush1.bf16.msra.mxu0 %v3845
    %5375 = vmatprep.subr.bf16.mxu0 %v3858
    %5376 = vmatpush1.bf16.msra.mxu0 %v3857
    %5377 = vmatprep.subr.bf16.mxu0 %v3870
    %5378 = vmatpush1.bf16.msra.mxu0 %v3869
    %5379 = vmatprep.subr.bf16.mxu0 %v3882
    %5380 = vmatpush1.bf16.msra.mxu0 %v3881
    %5381 = vmatprep.subr.bf16.mxu0 %v3894
    %5382 = vmatpush1.bf16.msra.mxu0 %v3893
    %5383 = vmatprep.subr.bf16.mxu0 %v3906
    %5384 = vmatpush1.bf16.msra.mxu0 %v3905
    %5385 = vmatprep.subr.bf16.mxu0 %v3918
    %5386 = vmatpush1.bf16.msra.mxu0 %v3917
    %5387 = vmatprep.subr.bf16.mxu0 %v3930
    %5388 = vmatpush1.bf16.msra.mxu0 %v3929
    %5389 = vmatprep.subr.bf16.mxu0 %v3942
    %5390 = vmatpush1.bf16.msra.mxu0 %v3941
    %5391 = vmatprep.subr.bf16.mxu0 %v3954
    %5392 = vmatpush1.bf16.msra.mxu0 %v3953
    %5393 = vmatprep.subr.bf16.mxu0 %v3966
    %5394 = vmatpush1.bf16.msra.mxu0 %v3965
    %5395 = vmatprep.subr.bf16.mxu0 %v3978
    %5396 = vmatpush1.bf16.msra.mxu0 %v3977
    %5397 = vmatprep.subr.bf16.mxu0 %v3990
    %5398 = vmatpush1.bf16.msra.mxu0 %v3989
    %5399 = vmatprep.mubr.bf16.mxu0 %v1106
    %5400 = vmatmul.mubr.bf16.gmra.mrb[0].mxu0 %v1105
    %v5401 = vpop.f32.mrb[0].mxu0
    %v5402 = vadd.f32 %v5361, %v5401
    %v5403 = vpop.f32.mrb[0].mxu0
    %v5404 = vadd.f32 %v5363, %v5403
    %v5405 = vpop.f32.mrb[0].mxu0
    %v5406 = vpop.f32.mrb[0].mxu0
    %5407 = vdwg.mxu0
    %5408 = vmatprep.subr.bf16.mxu0 %v4002
    %5409 = vmatpush1.bf16.msra.mxu0 %v4001
    %5410 = vmatprep.subr.bf16.mxu0 %v4014
    %5411 = vmatpush1.bf16.msra.mxu0 %v4013
    %5412 = vmatprep.subr.bf16.mxu0 %v4026
    %5413 = vmatpush1.bf16.msra.mxu0 %v4025
    %5414 = vmatprep.subr.bf16.mxu0 %v4038
    %5415 = vmatpush1.bf16.msra.mxu0 %v4037
    %5416 = vmatprep.subr.bf16.mxu0 %v4050
    %5417 = vmatpush1.bf16.msra.mxu0 %v4049
    %5418 = vmatprep.subr.bf16.mxu0 %v4062
    %5419 = vmatpush1.bf16.msra.mxu0 %v4061
    %5420 = vmatprep.subr.bf16.mxu0 %v4074
    %5421 = vmatpush1.bf16.msra.mxu0 %v4073
    %5422 = vmatprep.subr.bf16.mxu0 %v4086
    %5423 = vmatpush1.bf16.msra.mxu0 %v4085
    %5424 = vmatprep.subr.bf16.mxu0 %v4098
    %5425 = vmatpush1.bf16.msra.mxu0 %v4097
    %5426 = vmatprep.subr.bf16.mxu0 %v4110
    %5427 = vmatpush1.bf16.msra.mxu0 %v4109
    %5428 = vmatprep.subr.bf16.mxu0 %v4122
    %5429 = vmatpush1.bf16.msra.mxu0 %v4121
    %5430 = vmatprep.subr.bf16.mxu0 %v4134
    %5431 = vmatpush1.bf16.msra.mxu0 %v4133
    %5432 = vmatprep.subr.bf16.mxu0 %v4146
    %5433 = vmatpush1.bf16.msra.mxu0 %v4145
    %5434 = vmatprep.subr.bf16.mxu0 %v4158
    %5435 = vmatpush1.bf16.msra.mxu0 %v4157
    %5436 = vmatprep.subr.bf16.mxu0 %v4170
    %5437 = vmatpush1.bf16.msra.mxu0 %v4169
    %5438 = vmatprep.subr.bf16.mxu0 %v4182
    %5439 = vmatpush1.bf16.msra.mxu0 %v4181
    %5440 = vmatprep.mubr.bf16.mxu0 %v1108
    %5441 = vmatmul.mubr.bf16.gmra.mrb[0].mxu0 %v1107
    %v5442 = vpop.f32.mrb[0].mxu0
    %v5443 = vadd.f32 %v5402, %v5442
    %v5444 = vpop.f32.mrb[0].mxu0
    %v5445 = vadd.f32 %v5404, %v5444
    %v5446 = vpop.f32.mrb[0].mxu0
    %v5447 = vpop.f32.mrb[0].mxu0
    %5448 = vdwg.mxu0
    %5449 = vmatprep.subr.bf16.mxu0 %v3428
    %5450 = vmatpush1.bf16.msra.mxu0 %v3427
    %5451 = vmatprep.subr.bf16.mxu0 %v3440
    %5452 = vmatpush1.bf16.msra.mxu0 %v3439
    %5453 = vmatprep.subr.bf16.mxu0 %v3452
    %5454 = vmatpush1.bf16.msra.mxu0 %v3451
    %5455 = vmatprep.subr.bf16.mxu0 %v3464
    %5456 = vmatpush1.bf16.msra.mxu0 %v3463
    %5457 = vmatprep.subr.bf16.mxu0 %v3476
    %5458 = vmatpush1.bf16.msra.mxu0 %v3475
    %5459 = vmatprep.subr.bf16.mxu0 %v3488
    %5460 = vmatpush1.bf16.msra.mxu0 %v3487
    %5461 = vmatprep.subr.bf16.mxu0 %v3500
    %5462 = vmatpush1.bf16.msra.mxu0 %v3499
    %5463 = vmatprep.subr.bf16.mxu0 %v3512
    %5464 = vmatpush1.bf16.msra.mxu0 %v3511
    %5465 = vmatprep.subr.bf16.mxu0 %v3524
    %5466 = vmatpush1.bf16.msra.mxu0 %v3523
    %5467 = vmatprep.subr.bf16.mxu0 %v3536
    %5468 = vmatpush1.bf16.msra.mxu0 %v3535
    %5469 = vmatprep.subr.bf16.mxu0 %v3548
    %5470 = vmatpush1.bf16.msra.mxu0 %v3547
    %5471 = vmatprep.subr.bf16.mxu0 %v3560
    %5472 = vmatpush1.bf16.msra.mxu0 %v3559
    %5473 = vmatprep.subr.bf16.mxu0 %v3572
    %5474 = vmatpush1.bf16.msra.mxu0 %v3571
    %5475 = vmatprep.subr.bf16.mxu0 %v3584
    %5476 = vmatpush1.bf16.msra.mxu0 %v3583
    %5477 = vmatprep.subr.bf16.mxu0 %v3596
    %5478 = vmatpush1.bf16.msra.mxu0 %v3595
    %5479 = vmatprep.subr.bf16.mxu0 %v3608
    %5480 = vmatpush1.bf16.msra.mxu0 %v3607
    %5481 = vmatprep.mubr.bf16.mxu0 %v1102
    %5482 = vmatmul.mubr.bf16.gmra.mrb[0].mxu0 %v1101
    %v5483 = vpop.f32.mrb[0].mxu0
    %v5484 = vadd.f32 %v1056, %v5483
    %v5485 = vpop.f32.mrb[0].mxu0
    %v5486 = vadd.f32 %v1060, %v5485
    %v5487 = vpop.f32.mrb[0].mxu0
    %v5488 = vpop.f32.mrb[0].mxu0
    %5489 = vdwg.mxu0
    %5490 = vmatprep.subr.bf16.mxu0 %v3620
    %5491 = vmatpush1.bf16.msra.mxu0 %v3619
    %5492 = vmatprep.subr.bf16.mxu0 %v3632
    %5493 = vmatpush1.bf16.msra.mxu0 %v3631
    %5494 = vmatprep.subr.bf16.mxu0 %v3644
    %5495 = vmatpush1.bf16.msra.mxu0 %v3643
    %5496 = vmatprep.subr.bf16.mxu0 %v3656
    %5497 = vmatpush1.bf16.msra.mxu0 %v3655
    %5498 = vmatprep.subr.bf16.mxu0 %v3668
    %5499 = vmatpush1.bf16.msra.mxu0 %v3667
    %5500 = vmatprep.subr.bf16.mxu0 %v3680
    %5501 = vmatpush1.bf16.msra.mxu0 %v3679
    %5502 = vmatprep.subr.bf16.mxu0 %v3692
    %5503 = vmatpush1.bf16.msra.mxu0 %v3691
    %5504 = vmatprep.subr.bf16.mxu0 %v3704
    %5505 = vmatpush1.bf16.msra.mxu0 %v3703
    %5506 = vmatprep.subr.bf16.mxu0 %v3716
    %5507 = vmatpush1.bf16.msra.mxu0 %v3715
    %5508 = vmatprep.subr.bf16.mxu0 %v3728
    %5509 = vmatpush1.bf16.msra.mxu0 %v3727
    %5510 = vmatprep.subr.bf16.mxu0 %v3740
    %5511 = vmatpush1.bf16.msra.mxu0 %v3739
    %5512 = vmatprep.subr.bf16.mxu0 %v3752
    %5513 = vmatpush1.bf16.msra.mxu0 %v3751
    %5514 = vmatprep.subr.bf16.mxu0 %v3764
    %5515 = vmatpush1.bf16.msra.mxu0 %v3763
    %5516 = vmatprep.subr.bf16.mxu0 %v3776
    %5517 = vmatpush1.bf16.msra.mxu0 %v3775
    %5518 = vmatprep.subr.bf16.mxu0 %v3788
    %5519 = vmatpush1.bf16.msra.mxu0 %v3787
    %5520 = vmatprep.subr.bf16.mxu0 %v3800
    %5521 = vmatpush1.bf16.msra.mxu0 %v3799
    %5522 = vmatprep.mubr.bf16.mxu0 %v1104
    %5523 = vmatmul.mubr.bf16.gmra.mrb[0].mxu0 %v1103
    %v5524 = vpop.f32.mrb[0].mxu0
    %v5525 = vadd.f32 %v5484, %v5524
    %v5526 = vpop.f32.mrb[0].mxu0
    %v5527 = vadd.f32 %v5486, %v5526
    %v5528 = vpop.f32.mrb[0].mxu0
    %v5529 = vpop.f32.mrb[0].mxu0
    %5530 = vdwg.mxu0
    %5531 = vmatprep.subr.bf16.mxu0 %v3812
    %5532 = vmatpush1.bf16.msra.mxu0 %v3811
    %5533 = vmatprep.subr.bf16.mxu0 %v3824
    %5534 = vmatpush1.bf16.msra.mxu0 %v3823
    %5535 = vmatprep.subr.bf16.mxu0 %v3836
    %5536 = vmatpush1.bf16.msra.mxu0 %v3835
    %5537 = vmatprep.subr.bf16.mxu0 %v3848
    %5538 = vmatpush1.bf16.msra.mxu0 %v3847
    %5539 = vmatprep.subr.bf16.mxu0 %v3860
    %5540 = vmatpush1.bf16.msra.mxu0 %v3859
    %5541 = vmatprep.subr.bf16.mxu0 %v3872
    %5542 = vmatpush1.bf16.msra.mxu0 %v3871
    %5543 = vmatprep.subr.bf16.mxu0 %v3884
    %5544 = vmatpush1.bf16.msra.mxu0 %v3883
    %5545 = vmatprep.subr.bf16.mxu0 %v3896
    %5546 = vmatpush1.bf16.msra.mxu0 %v3895
    %5547 = vmatprep.subr.bf16.mxu0 %v3908
    %5548 = vmatpush1.bf16.msra.mxu0 %v3907
    %5549 = vmatprep.subr.bf16.mxu0 %v3920
    %5550 = vmatpush1.bf16.msra.mxu0 %v3919
    %5551 = vmatprep.subr.bf16.mxu0 %v3932
    %5552 = vmatpush1.bf16.msra.mxu0 %v3931
    %5553 = vmatprep.subr.bf16.mxu0 %v3944
    %5554 = vmatpush1.bf16.msra.mxu0 %v3943
    %5555 = vmatprep.subr.bf16.mxu0 %v3956
    %5556 = vmatpush1.bf16.msra.mxu0 %v3955
    %5557 = vmatprep.subr.bf16.mxu0 %v3968
    %5558 = vmatpush1.bf16.msra.mxu0 %v3967
    %5559 = vmatprep.subr.bf16.mxu0 %v3980
    %5560 = vmatpush1.bf16.msra.mxu0 %v3979
    %5561 = vmatprep.subr.bf16.mxu0 %v3992
    %5562 = vmatpush1.bf16.msra.mxu0 %v3991
    %5563 = vmatprep.mubr.bf16.mxu0 %v1106
    %5564 = vmatmul.mubr.bf16.gmra.mrb[0].mxu0 %v1105
    %v5565 = vpop.f32.mrb[0].mxu0
    %v5566 = vadd.f32 %v5525, %v5565
    %v5567 = vpop.f32.mrb[0].mxu0
    %v5568 = vadd.f32 %v5527, %v5567
    %v5569 = vpop.f32.mrb[0].mxu0
    %v5570 = vpop.f32.mrb[0].mxu0
    %5571 = vdwg.mxu0
    %5572 = vmatprep.subr.bf16.mxu0 %v4004
    %5573 = vmatpush1.bf16.msra.mxu0 %v4003
    %5574 = vmatprep.subr.bf16.mxu0 %v4016
    %5575 = vmatpush1.bf16.msra.mxu0 %v4015
    %5576 = vmatprep.subr.bf16.mxu0 %v4028
    %5577 = vmatpush1.bf16.msra.mxu0 %v4027
    %5578 = vmatprep.subr.bf16.mxu0 %v4040
    %5579 = vmatpush1.bf16.msra.mxu0 %v4039
    %5580 = vmatprep.subr.bf16.mxu0 %v4052
    %5581 = vmatpush1.bf16.msra.mxu0 %v4051
    %5582 = vmatprep.subr.bf16.mxu0 %v4064
    %5583 = vmatpush1.bf16.msra.mxu0 %v4063
    %5584 = vmatprep.subr.bf16.mxu0 %v4076
    %5585 = vmatpush1.bf16.msra.mxu0 %v4075
    %5586 = vmatprep.subr.bf16.mxu0 %v4088
    %5587 = vmatpush1.bf16.msra.mxu0 %v4087
    %5588 = vmatprep.subr.bf16.mxu0 %v4100
    %5589 = vmatpush1.bf16.msra.mxu0 %v4099
    %5590 = vmatprep.subr.bf16.mxu0 %v4112
    %5591 = vmatpush1.bf16.msra.mxu0 %v4111
    %5592 = vmatprep.subr.bf16.mxu0 %v4124
    %5593 = vmatpush1.bf16.msra.mxu0 %v4123
    %5594 = vmatprep.subr.bf16.mxu0 %v4136
    %5595 = vmatpush1.bf16.msra.mxu0 %v4135
    %5596 = vmatprep.subr.bf16.mxu0 %v4148
    %5597 = vmatpush1.bf16.msra.mxu0 %v4147
    %5598 = vmatprep.subr.bf16.mxu0 %v4160
    %5599 = vmatpush1.bf16.msra.mxu0 %v4159
    %5600 = vmatprep.subr.bf16.mxu0 %v4172
    %5601 = vmatpush1.bf16.msra.mxu0 %v4171
    %5602 = vmatprep.subr.bf16.mxu0 %v4184
    %5603 = vmatpush1.bf16.msra.mxu0 %v4183
    %5604 = vmatprep.mubr.bf16.mxu0 %v1108
    %5605 = vmatmul.mubr.bf16.gmra.mrb[0].mxu0 %v1107
    %v5606 = vpop.f32.mrb[0].mxu0
    %v5607 = vadd.f32 %v5566, %v5606
    %v5608 = vpop.f32.mrb[0].mxu0
    %v5609 = vadd.f32 %v5568, %v5608
    %v5610 = vpop.f32.mrb[0].mxu0
    %v5611 = vpop.f32.mrb[0].mxu0
    %5612 = vdwg.mxu0
    %5613 = vmatprep.subr.bf16.mxu0 %v3430
    %5614 = vmatpush1.bf16.msra.mxu0 %v3429
    %5615 = vmatprep.subr.bf16.mxu0 %v3442
    %5616 = vmatpush1.bf16.msra.mxu0 %v3441
    %5617 = vmatprep.subr.bf16.mxu0 %v3454
    %5618 = vmatpush1.bf16.msra.mxu0 %v3453
    %5619 = vmatprep.subr.bf16.mxu0 %v3466
    %5620 = vmatpush1.bf16.msra.mxu0 %v3465
    %5621 = vmatprep.subr.bf16.mxu0 %v3478
    %5622 = vmatpush1.bf16.msra.mxu0 %v3477
    %5623 = vmatprep.subr.bf16.mxu0 %v3490
    %5624 = vmatpush1.bf16.msra.mxu0 %v3489
    %5625 = vmatprep.subr.bf16.mxu0 %v3502
    %5626 = vmatpush1.bf16.msra.mxu0 %v3501
    %5627 = vmatprep.subr.bf16.mxu0 %v3514
    %5628 = vmatpush1.bf16.msra.mxu0 %v3513
    %5629 = vmatprep.subr.bf16.mxu0 %v3526
    %5630 = vmatpush1.bf16.msra.mxu0 %v3525
    %5631 = vmatprep.subr.bf16.mxu0 %v3538
    %5632 = vmatpush1.bf16.msra.mxu0 %v3537
    %5633 = vmatprep.subr.bf16.mxu0 %v3550
    %5634 = vmatpush1.bf16.msra.mxu0 %v3549
    %5635 = vmatprep.subr.bf16.mxu0 %v3562
    %5636 = vmatpush1.bf16.msra.mxu0 %v3561
    %5637 = vmatprep.subr.bf16.mxu0 %v3574
    %5638 = vmatpush1.bf16.msra.mxu0 %v3573
    %5639 = vmatprep.subr.bf16.mxu0 %v3586
    %5640 = vmatpush1.bf16.msra.mxu0 %v3585
    %5641 = vmatprep.subr.bf16.mxu0 %v3598
    %5642 = vmatpush1.bf16.msra.mxu0 %v3597
    %5643 = vmatprep.subr.bf16.mxu0 %v3610
    %5644 = vmatpush1.bf16.msra.mxu0 %v3609
    %5645 = vmatprep.mubr.bf16.mxu0 %v1102
    %5646 = vmatmul.mubr.bf16.gmra.mrb[0].mxu0 %v1101
    %v5647 = vpop.f32.mrb[0].mxu0
    %v5648 = vadd.f32 %v1064, %v5647
    %v5649 = vpop.f32.mrb[0].mxu0
    %v5650 = vadd.f32 %v1068, %v5649
    %v5651 = vpop.f32.mrb[0].mxu0
    %v5652 = vpop.f32.mrb[0].mxu0
    %5653 = vdwg.mxu0
    %5654 = vmatprep.subr.bf16.mxu0 %v3622
    %5655 = vmatpush1.bf16.msra.mxu0 %v3621
    %5656 = vmatprep.subr.bf16.mxu0 %v3634
    %5657 = vmatpush1.bf16.msra.mxu0 %v3633
    %5658 = vmatprep.subr.bf16.mxu0 %v3646
    %5659 = vmatpush1.bf16.msra.mxu0 %v3645
    %5660 = vmatprep.subr.bf16.mxu0 %v3658
    %5661 = vmatpush1.bf16.msra.mxu0 %v3657
    %5662 = vmatprep.subr.bf16.mxu0 %v3670
    %5663 = vmatpush1.bf16.msra.mxu0 %v3669
    %5664 = vmatprep.subr.bf16.mxu0 %v3682
    %5665 = vmatpush1.bf16.msra.mxu0 %v3681
    %5666 = vmatprep.subr.bf16.mxu0 %v3694
    %5667 = vmatpush1.bf16.msra.mxu0 %v3693
    %5668 = vmatprep.subr.bf16.mxu0 %v3706
    %5669 = vmatpush1.bf16.msra.mxu0 %v3705
    %5670 = vmatprep.subr.bf16.mxu0 %v3718
    %5671 = vmatpush1.bf16.msra.mxu0 %v3717
    %5672 = vmatprep.subr.bf16.mxu0 %v3730
    %5673 = vmatpush1.bf16.msra.mxu0 %v3729
    %5674 = vmatprep.subr.bf16.mxu0 %v3742
    %5675 = vmatpush1.bf16.msra.mxu0 %v3741
    %5676 = vmatprep.subr.bf16.mxu0 %v3754
    %5677 = vmatpush1.bf16.msra.mxu0 %v3753
    %5678 = vmatprep.subr.bf16.mxu0 %v3766
    %5679 = vmatpush1.bf16.msra.mxu0 %v3765
    %5680 = vmatprep.subr.bf16.mxu0 %v3778
    %5681 = vmatpush1.bf16.msra.mxu0 %v3777
    %5682 = vmatprep.subr.bf16.mxu0 %v3790
    %5683 = vmatpush1.bf16.msra.mxu0 %v3789
    %5684 = vmatprep.subr.bf16.mxu0 %v3802
    %5685 = vmatpush1.bf16.msra.mxu0 %v3801
    %5686 = vmatprep.mubr.bf16.mxu0 %v1104
    %5687 = vmatmul.mubr.bf16.gmra.mrb[0].mxu0 %v1103
    %v5688 = vpop.f32.mrb[0].mxu0
    %v5689 = vadd.f32 %v5648, %v5688
    %v5690 = vpop.f32.mrb[0].mxu0
    %v5691 = vadd.f32 %v5650, %v5690
    %v5692 = vpop.f32.mrb[0].mxu0
    %v5693 = vpop.f32.mrb[0].mxu0
    %5694 = vdwg.mxu0
    %5695 = vmatprep.subr.bf16.mxu0 %v3814
    %5696 = vmatpush1.bf16.msra.mxu0 %v3813
    %5697 = vmatprep.subr.bf16.mxu0 %v3826
    %5698 = vmatpush1.bf16.msra.mxu0 %v3825
    %5699 = vmatprep.subr.bf16.mxu0 %v3838
    %5700 = vmatpush1.bf16.msra.mxu0 %v3837
    %5701 = vmatprep.subr.bf16.mxu0 %v3850
    %5702 = vmatpush1.bf16.msra.mxu0 %v3849
    %5703 = vmatprep.subr.bf16.mxu0 %v3862
    %5704 = vmatpush1.bf16.msra.mxu0 %v3861
    %5705 = vmatprep.subr.bf16.mxu0 %v3874
    %5706 = vmatpush1.bf16.msra.mxu0 %v3873
    %5707 = vmatprep.subr.bf16.mxu0 %v3886
    %5708 = vmatpush1.bf16.msra.mxu0 %v3885
    %5709 = vmatprep.subr.bf16.mxu0 %v3898
    %5710 = vmatpush1.bf16.msra.mxu0 %v3897
    %5711 = vmatprep.subr.bf16.mxu0 %v3910
    %5712 = vmatpush1.bf16.msra.mxu0 %v3909
    %5713 = vmatprep.subr.bf16.mxu0 %v3922
    %5714 = vmatpush1.bf16.msra.mxu0 %v3921
    %5715 = vmatprep.subr.bf16.mxu0 %v3934
    %5716 = vmatpush1.bf16.msra.mxu0 %v3933
    %5717 = vmatprep.subr.bf16.mxu0 %v3946
    %5718 = vmatpush1.bf16.msra.mxu0 %v3945
    %5719 = vmatprep.subr.bf16.mxu0 %v3958
    %5720 = vmatpush1.bf16.msra.mxu0 %v3957
    %5721 = vmatprep.subr.bf16.mxu0 %v3970
    %5722 = vmatpush1.bf16.msra.mxu0 %v3969
    %5723 = vmatprep.subr.bf16.mxu0 %v3982
    %5724 = vmatpush1.bf16.msra.mxu0 %v3981
    %5725 = vmatprep.subr.bf16.mxu0 %v3994
    %5726 = vmatpush1.bf16.msra.mxu0 %v3993
    %5727 = vmatprep.mubr.bf16.mxu0 %v1106
    %5728 = vmatmul.mubr.bf16.gmra.mrb[0].mxu0 %v1105
    %v5729 = vpop.f32.mrb[0].mxu0
    %v5730 = vadd.f32 %v5689, %v5729
    %v5731 = vpop.f32.mrb[0].mxu0
    %v5732 = vadd.f32 %v5691, %v5731
    %v5733 = vpop.f32.mrb[0].mxu0
    %v5734 = vpop.f32.mrb[0].mxu0
    %5735 = vdwg.mxu0
    %5736 = vmatprep.subr.bf16.mxu0 %v4006
    %5737 = vmatpush1.bf16.msra.mxu0 %v4005
    %5738 = vmatprep.subr.bf16.mxu0 %v4018
    %5739 = vmatpush1.bf16.msra.mxu0 %v4017
    %5740 = vmatprep.subr.bf16.mxu0 %v4030
    %5741 = vmatpush1.bf16.msra.mxu0 %v4029
    %5742 = vmatprep.subr.bf16.mxu0 %v4042
    %5743 = vmatpush1.bf16.msra.mxu0 %v4041
    %5744 = vmatprep.subr.bf16.mxu0 %v4054
    %5745 = vmatpush1.bf16.msra.mxu0 %v4053
    %5746 = vmatprep.subr.bf16.mxu0 %v4066
    %5747 = vmatpush1.bf16.msra.mxu0 %v4065
    %5748 = vmatprep.subr.bf16.mxu0 %v4078
    %5749 = vmatpush1.bf16.msra.mxu0 %v4077
    %5750 = vmatprep.subr.bf16.mxu0 %v4090
    %5751 = vmatpush1.bf16.msra.mxu0 %v4089
    %5752 = vmatprep.subr.bf16.mxu0 %v4102
    %5753 = vmatpush1.bf16.msra.mxu0 %v4101
    %5754 = vmatprep.subr.bf16.mxu0 %v4114
    %5755 = vmatpush1.bf16.msra.mxu0 %v4113
    %5756 = vmatprep.subr.bf16.mxu0 %v4126
    %5757 = vmatpush1.bf16.msra.mxu0 %v4125
    %5758 = vmatprep.subr.bf16.mxu0 %v4138
    %5759 = vmatpush1.bf16.msra.mxu0 %v4137
    %5760 = vmatprep.subr.bf16.mxu0 %v4150
    %5761 = vmatpush1.bf16.msra.mxu0 %v4149
    %5762 = vmatprep.subr.bf16.mxu0 %v4162
    %5763 = vmatpush1.bf16.msra.mxu0 %v4161
    %5764 = vmatprep.subr.bf16.mxu0 %v4174
    %5765 = vmatpush1.bf16.msra.mxu0 %v4173
    %5766 = vmatprep.subr.bf16.mxu0 %v4186
    %5767 = vmatpush1.bf16.msra.mxu0 %v4185
    %5768 = vmatprep.mubr.bf16.mxu0 %v1108
    %5769 = vmatmul.mubr.bf16.gmra.mrb[0].mxu0 %v1107
    %v5770 = vpop.f32.mrb[0].mxu0
    %v5771 = vadd.f32 %v5730, %v5770
    %v5772 = vpop.f32.mrb[0].mxu0
    %v5773 = vadd.f32 %v5732, %v5772
    %v5774 = vpop.f32.mrb[0].mxu0
    %v5775 = vpop.f32.mrb[0].mxu0
    %5776 = vdwg.mxu0
    %5777 = vmatprep.subr.bf16.mxu0 %v3432
    %5778 = vmatpush1.bf16.msra.mxu0 %v3431
    %5779 = vmatprep.subr.bf16.mxu0 %v3444
    %5780 = vmatpush1.bf16.msra.mxu0 %v3443
    %5781 = vmatprep.subr.bf16.mxu0 %v3456
    %5782 = vmatpush1.bf16.msra.mxu0 %v3455
    %5783 = vmatprep.subr.bf16.mxu0 %v3468
    %5784 = vmatpush1.bf16.msra.mxu0 %v3467
    %5785 = vmatprep.subr.bf16.mxu0 %v3480
    %5786 = vmatpush1.bf16.msra.mxu0 %v3479
    %5787 = vmatprep.subr.bf16.mxu0 %v3492
    %5788 = vmatpush1.bf16.msra.mxu0 %v3491
    %5789 = vmatprep.subr.bf16.mxu0 %v3504
    %5790 = vmatpush1.bf16.msra.mxu0 %v3503
    %5791 = vmatprep.subr.bf16.mxu0 %v3516
    %5792 = vmatpush1.bf16.msra.mxu0 %v3515
    %5793 = vmatprep.subr.bf16.mxu0 %v3528
    %5794 = vmatpush1.bf16.msra.mxu0 %v3527
    %5795 = vmatprep.subr.bf16.mxu0 %v3540
    %5796 = vmatpush1.bf16.msra.mxu0 %v3539
    %5797 = vmatprep.subr.bf16.mxu0 %v3552
    %5798 = vmatpush1.bf16.msra.mxu0 %v3551
    %5799 = vmatprep.subr.bf16.mxu0 %v3564
    %5800 = vmatpush1.bf16.msra.mxu0 %v3563
    %5801 = vmatprep.subr.bf16.mxu0 %v3576
    %5802 = vmatpush1.bf16.msra.mxu0 %v3575
    %5803 = vmatprep.subr.bf16.mxu0 %v3588
    %5804 = vmatpush1.bf16.msra.mxu0 %v3587
    %5805 = vmatprep.subr.bf16.mxu0 %v3600
    %5806 = vmatpush1.bf16.msra.mxu0 %v3599
    %5807 = vmatprep.subr.bf16.mxu0 %v3612
    %5808 = vmatpush1.bf16.msra.mxu0 %v3611
    %5809 = vmatprep.mubr.bf16.mxu0 %v1102
    %5810 = vmatmul.mubr.bf16.gmra.mrb[0].mxu0 %v1101
    %v5811 = vpop.f32.mrb[0].mxu0
    %v5812 = vadd.f32 %v1072, %v5811
    %v5813 = vpop.f32.mrb[0].mxu0
    %v5814 = vadd.f32 %v1076, %v5813
    %v5815 = vpop.f32.mrb[0].mxu0
    %v5816 = vpop.f32.mrb[0].mxu0
    %5817 = vdwg.mxu0
    %5818 = vmatprep.subr.bf16.mxu0 %v3624
    %5819 = vmatpush1.bf16.msra.mxu0 %v3623
    %5820 = vmatprep.subr.bf16.mxu0 %v3636
    %5821 = vmatpush1.bf16.msra.mxu0 %v3635
    %5822 = vmatprep.subr.bf16.mxu0 %v3648
    %5823 = vmatpush1.bf16.msra.mxu0 %v3647
    %5824 = vmatprep.subr.bf16.mxu0 %v3660
    %5825 = vmatpush1.bf16.msra.mxu0 %v3659
    %5826 = vmatprep.subr.bf16.mxu0 %v3672
    %5827 = vmatpush1.bf16.msra.mxu0 %v3671
    %5828 = vmatprep.subr.bf16.mxu0 %v3684
    %5829 = vmatpush1.bf16.msra.mxu0 %v3683
    %5830 = vmatprep.subr.bf16.mxu0 %v3696
    %5831 = vmatpush1.bf16.msra.mxu0 %v3695
    %5832 = vmatprep.subr.bf16.mxu0 %v3708
    %5833 = vmatpush1.bf16.msra.mxu0 %v3707
    %5834 = vmatprep.subr.bf16.mxu0 %v3720
    %5835 = vmatpush1.bf16.msra.mxu0 %v3719
    %5836 = vmatprep.subr.bf16.mxu0 %v3732
    %5837 = vmatpush1.bf16.msra.mxu0 %v3731
    %5838 = vmatprep.subr.bf16.mxu0 %v3744
    %5839 = vmatpush1.bf16.msra.mxu0 %v3743
    %5840 = vmatprep.subr.bf16.mxu0 %v3756
    %5841 = vmatpush1.bf16.msra.mxu0 %v3755
    %5842 = vmatprep.subr.bf16.mxu0 %v3768
    %5843 = vmatpush1.bf16.msra.mxu0 %v3767
    %5844 = vmatprep.subr.bf16.mxu0 %v3780
    %5845 = vmatpush1.bf16.msra.mxu0 %v3779
    %5846 = vmatprep.subr.bf16.mxu0 %v3792
    %5847 = vmatpush1.bf16.msra.mxu0 %v3791
    %5848 = vmatprep.subr.bf16.mxu0 %v3804
    %5849 = vmatpush1.bf16.msra.mxu0 %v3803
    %5850 = vmatprep.mubr.bf16.mxu0 %v1104
    %5851 = vmatmul.mubr.bf16.gmra.mrb[0].mxu0 %v1103
    %v5852 = vpop.f32.mrb[0].mxu0
    %v5853 = vadd.f32 %v5812, %v5852
    %v5854 = vpop.f32.mrb[0].mxu0
    %v5855 = vadd.f32 %v5814, %v5854
    %v5856 = vpop.f32.mrb[0].mxu0
    %v5857 = vpop.f32.mrb[0].mxu0
    %5858 = vdwg.mxu0
    %5859 = vmatprep.subr.bf16.mxu0 %v3816
    %5860 = vmatpush1.bf16.msra.mxu0 %v3815
    %5861 = vmatprep.subr.bf16.mxu0 %v3828
    %5862 = vmatpush1.bf16.msra.mxu0 %v3827
    %5863 = vmatprep.subr.bf16.mxu0 %v3840
    %5864 = vmatpush1.bf16.msra.mxu0 %v3839
    %5865 = vmatprep.subr.bf16.mxu0 %v3852
    %5866 = vmatpush1.bf16.msra.mxu0 %v3851
    %5867 = vmatprep.subr.bf16.mxu0 %v3864
    %5868 = vmatpush1.bf16.msra.mxu0 %v3863
    %5869 = vmatprep.subr.bf16.mxu0 %v3876
    %5870 = vmatpush1.bf16.msra.mxu0 %v3875
    %5871 = vmatprep.subr.bf16.mxu0 %v3888
    %5872 = vmatpush1.bf16.msra.mxu0 %v3887
    %5873 = vmatprep.subr.bf16.mxu0 %v3900
    %5874 = vmatpush1.bf16.msra.mxu0 %v3899
    %5875 = vmatprep.subr.bf16.mxu0 %v3912
    %5876 = vmatpush1.bf16.msra.mxu0 %v3911
    %5877 = vmatprep.subr.bf16.mxu0 %v3924
    %5878 = vmatpush1.bf16.msra.mxu0 %v3923
    %5879 = vmatprep.subr.bf16.mxu0 %v3936
    %5880 = vmatpush1.bf16.msra.mxu0 %v3935
    %5881 = vmatprep.subr.bf16.mxu0 %v3948
    %5882 = vmatpush1.bf16.msra.mxu0 %v3947
    %5883 = vmatprep.subr.bf16.mxu0 %v3960
    %5884 = vmatpush1.bf16.msra.mxu0 %v3959
    %5885 = vmatprep.subr.bf16.mxu0 %v3972
    %5886 = vmatpush1.bf16.msra.mxu0 %v3971
    %5887 = vmatprep.subr.bf16.mxu0 %v3984
    %5888 = vmatpush1.bf16.msra.mxu0 %v3983
    %5889 = vmatprep.subr.bf16.mxu0 %v3996
    %5890 = vmatpush1.bf16.msra.mxu0 %v3995
    %5891 = vmatprep.mubr.bf16.mxu0 %v1106
    %5892 = vmatmul.mubr.bf16.gmra.mrb[0].mxu0 %v1105
    %v5893 = vpop.f32.mrb[0].mxu0
    %v5894 = vadd.f32 %v5853, %v5893
    %v5895 = vpop.f32.mrb[0].mxu0
    %v5896 = vadd.f32 %v5855, %v5895
    %v5897 = vpop.f32.mrb[0].mxu0
    %v5898 = vpop.f32.mrb[0].mxu0
    %5899 = vdwg.mxu0
    %5900 = vmatprep.subr.bf16.mxu0 %v4008
    %5901 = vmatpush1.bf16.msra.mxu0 %v4007
    %5902 = vmatprep.subr.bf16.mxu0 %v4020
    %5903 = vmatpush1.bf16.msra.mxu0 %v4019
    %5904 = vmatprep.subr.bf16.mxu0 %v4032
    %5905 = vmatpush1.bf16.msra.mxu0 %v4031
    %5906 = vmatprep.subr.bf16.mxu0 %v4044
    %5907 = vmatpush1.bf16.msra.mxu0 %v4043
    %5908 = vmatprep.subr.bf16.mxu0 %v4056
    %5909 = vmatpush1.bf16.msra.mxu0 %v4055
    %5910 = vmatprep.subr.bf16.mxu0 %v4068
    %5911 = vmatpush1.bf16.msra.mxu0 %v4067
    %5912 = vmatprep.subr.bf16.mxu0 %v4080
    %5913 = vmatpush1.bf16.msra.mxu0 %v4079
    %5914 = vmatprep.subr.bf16.mxu0 %v4092
    %5915 = vmatpush1.bf16.msra.mxu0 %v4091
    %5916 = vmatprep.subr.bf16.mxu0 %v4104
    %5917 = vmatpush1.bf16.msra.mxu0 %v4103
    %5918 = vmatprep.subr.bf16.mxu0 %v4116
    %5919 = vmatpush1.bf16.msra.mxu0 %v4115
    %5920 = vmatprep.subr.bf16.mxu0 %v4128
    %5921 = vmatpush1.bf16.msra.mxu0 %v4127
    %5922 = vmatprep.subr.bf16.mxu0 %v4140
    %5923 = vmatpush1.bf16.msra.mxu0 %v4139
    %5924 = vmatprep.subr.bf16.mxu0 %v4152
    %5925 = vmatpush1.bf16.msra.mxu0 %v4151
    %5926 = vmatprep.subr.bf16.mxu0 %v4164
    %5927 = vmatpush1.bf16.msra.mxu0 %v4163
    %5928 = vmatprep.subr.bf16.mxu0 %v4176
    %5929 = vmatpush1.bf16.msra.mxu0 %v4175
    %5930 = vmatprep.subr.bf16.mxu0 %v4188
    %5931 = vmatpush1.bf16.msra.mxu0 %v4187
    %5932 = vmatprep.mubr.bf16.mxu0 %v1108
    %5933 = vmatmul.mubr.bf16.gmra.mrb[0].mxu0 %v1107
    %v5934 = vpop.f32.mrb[0].mxu0
    %v5935 = vadd.f32 %v5894, %v5934
    %v5936 = vpop.f32.mrb[0].mxu0
    %v5937 = vadd.f32 %v5896, %v5936
    %v5938 = vpop.f32.mrb[0].mxu0
    %v5939 = vpop.f32.mrb[0].mxu0
    %5940 = vdwg.mxu0
    %vm5941 = vcmp.ge.f32.partialorder %v5115, 0.0
    %vm5942 = vcmp.ge.f32.partialorder %v5117, 0.0
    %vm5943 = vcmp.ge.f32.partialorder %v5279, 0.0
    %vm5944 = vcmp.ge.f32.partialorder %v5281, 0.0
    %vm5945 = vcmp.ge.f32.partialorder %v5443, 0.0
    %vm5946 = vcmp.ge.f32.partialorder %v5445, 0.0
    %vm5947 = vcmp.ge.f32.partialorder %v5607, 0.0
    %vm5948 = vcmp.ge.f32.partialorder %v5609, 0.0
    %vm5949 = vcmp.ge.f32.partialorder %v5771, 0.0
    %vm5950 = vcmp.ge.f32.partialorder %v5773, 0.0
    %vm5951 = vcmp.ge.f32.partialorder %v5935, 0.0
    %vm5952 = vcmp.ge.f32.partialorder %v5937, 0.0
    %v5953 = vstv %s247
    %v5954 = vmul.f32 %v5953, %v5115
    %v5955 = vmul.f32 %v5953, %v5117
    %v5956 = vmul.f32 %v5953, %v5279
    %v5957 = vmul.f32 %v5953, %v5281
    %v5958 = vmul.f32 %v5953, %v5443
    %v5959 = vmul.f32 %v5953, %v5445
    %v5960 = vmul.f32 %v5953, %v5607
    %v5961 = vmul.f32 %v5953, %v5609
    %v5962 = vmul.f32 %v5953, %v5771
    %v5963 = vmul.f32 %v5953, %v5773
    %v5964 = vmul.f32 %v5953, %v5935
    %v5965 = vmul.f32 %v5953, %v5937
    %v5966 = vsel %vm5941, %v5115, %v5954
    %v5967 = vsel %vm5942, %v5117, %v5955
    %v5968 = vsel %vm5943, %v5279, %v5956
    %v5969 = vsel %vm5944, %v5281, %v5957
    %v5970 = vsel %vm5945, %v5443, %v5958
    %v5971 = vsel %vm5946, %v5445, %v5959
    %v5972 = vsel %vm5947, %v5607, %v5960
    %v5973 = vsel %vm5948, %v5609, %v5961
    %v5974 = vsel %vm5949, %v5771, %v5962
    %v5975 = vsel %vm5950, %v5773, %v5963
    %v5976 = vsel %vm5951, %v5935, %v5964
    %v5977 = vsel %vm5952, %v5937, %v5965
    %v5978 = vmax.f32 %v5966, %v5969
    %v5979 = vmax.f32 %v5967, %v5970
    %v5980 = vmax.f32 %v5968, %v5971
    %v5981 = vmax.f32 %v5972, %v5975
    %v5982 = vmax.f32 %v5973, %v5976
    %v5983 = vmax.f32 %v5974, %v5977
    %v5984 = vmax.f32 %v5978, %v5981
    %v5985 = vmax.f32 %v5979, %v5982
    %v5986 = vmax.f32 %v5980, %v5983
    %v5987 = vpack.c.bf16 %v5984, %v5984
    %v5988 = vpack.c.bf16 %v5985, %v5985
    %v5989 = vpack.c.bf16 %v5986, %v5986
    %v5990 = vld [vmem:[%s4] sm:$0xf]
    %v5991 = vld [vmem:[%s4 + $0x4] sm:$0xf]
    %v5992 = vld [vmem:[%s4 + $0x8] sm:$0xf]
    %v5993 = vld [vmem:[%s4 + $0xc] sm:$0xf]
    %v5994 = vld [vmem:[%s4 + $0x10] sm:$0xf]
    %v5995 = vld [vmem:[%s4 + $0x14] sm:$0xf]
    %v5996 = vld [vmem:[%s4 + $0x18] sm:$0xf]
    %v5997 = vld [vmem:[%s4 + $0x1c] sm:$0xf]
    %v5998 = vld [vmem:[%s4 + $0x20] sm:$0xf]
    %v5999 = vld [vmem:[%s4 + $0x24] sm:$0xf]
    %v6000 = vld [vmem:[%s4 + $0x28] sm:$0xf]
    %v6001 = vld [vmem:[%s4 + $0x2c] sm:$0xf]
    %v6002 = vld [vmem:[%s4 + $0x30] sm:$0xf]
    %v6003 = vld [vmem:[%s4 + $0x34] sm:$0xf]
    %v6004 = vld [vmem:[%s4 + $0x38] sm:$0xf]
    %v6005 = vld [vmem:[%s4 + $0x3c] sm:$0xf]
    %v6006 = vld [vmem:[%s4 + $0x40] sm:$0xf]
    %v6007 = vld [vmem:[%s4 + $0x44] sm:$0xf]
    %v6008 = vld [vmem:[%s4 + $0x48] sm:$0xf]
    %v6009 = vld [vmem:[%s4 + $0x4c] sm:$0xf]
    %v6010 = vld [vmem:[%s4 + $0x50] sm:$0xf]
    %v6011 = vld [vmem:[%s4 + $0x54] sm:$0xf]
    %v6012 = vld [vmem:[%s4 + $0x58] sm:$0xf]
    %v6013 = vld [vmem:[%s4 + $0x5c] sm:$0xf]
    %v6014 = vld [vmem:[%s4 + $0x60] sm:$0xf]
    %v6015 = vld [vmem:[%s4 + $0x64] sm:$0xf]
    %v6016 = vld [vmem:[%s4 + $0x68] sm:$0xf]
    %v6017 = vld [vmem:[%s4 + $0x6c] sm:$0xf]
    %v6018 = vld [vmem:[%s4 + $0x70] sm:$0xf]
    %v6019 = vld [vmem:[%s4 + $0x74] sm:$0xf]
    %v6020 = vld [vmem:[%s4 + $0x78] sm:$0xf]
    %v6021 = vld [vmem:[%s4 + $0x7c] sm:$0xf]
    %v6022 = vld [vmem:[%s4 + $0x80] sm:$0xf]
    %v6023 = vld [vmem:[%s4 + $0x84] sm:$0xf]
    %v6024 = vld [vmem:[%s4 + $0x88] sm:$0xf]
    %v6025 = vld [vmem:[%s4 + $0x8c] sm:$0xf]
    %v6026 = vld [vmem:[%s4 + $0x90] sm:$0xf]
    %v6027 = vld [vmem:[%s4 + $0x94] sm:$0xf]
    %v6028 = vld [vmem:[%s4 + $0x98] sm:$0xf]
    %v6029 = vld [vmem:[%s4 + $0x9c] sm:$0xf]
    %v6030 = vld [vmem:[%s4 + $0xa0] sm:$0xf]
    %v6031 = vld [vmem:[%s4 + $0xa4] sm:$0xf]
    %v6032 = vld [vmem:[%s4 + $0xa8] sm:$0xf]
    %v6033 = vld [vmem:[%s4 + $0xac] sm:$0xf]
    %v6034 = vld [vmem:[%s4 + $0xb0] sm:$0xf]
    %v6035 = vld [vmem:[%s4 + $0xb4] sm:$0xf]
    %v6036 = vld [vmem:[%s4 + $0xb8] sm:$0xf]
    %v6037 = vld [vmem:[%s4 + $0xbc] sm:$0xf]
    %v6038 = vld [vmem:[#allocation8] sm:$0x1]
    %v6040 = vlaneseq
    %v6041 = vshrl.u32 %v6040, 7
    %v6042 = vsub.s32 0, %v6041
    %v6043 = vrot.slane %v6038, %v6042
    %v6093 = vunpack.c.l.b16 %v5990
    %v6094 = vunpack.c.l.b16 %v5991
    %v6095 = vunpack.c.l.b16 %v5992
    %v6096 = vunpack.c.l.b16 %v5993
    %v6097 = vunpack.c.l.b16 %v5994
    %v6098 = vunpack.c.l.b16 %v5995
    %v6099 = vunpack.c.l.b16 %v5996
    %v6100 = vunpack.c.l.b16 %v5997
    %v6101 = vunpack.c.l.b16 %v5998
    %v6102 = vunpack.c.l.b16 %v5999
    %v6103 = vunpack.c.l.b16 %v6000
    %v6104 = vunpack.c.l.b16 %v6001
    %v6105 = vunpack.c.l.b16 %v6002
    %v6106 = vunpack.c.l.b16 %v6003
    %v6107 = vunpack.c.l.b16 %v6004
    %v6108 = vunpack.c.l.b16 %v6005
    %v6109 = vunpack.c.l.b16 %v6006
    %v6110 = vunpack.c.l.b16 %v6007
    %v6111 = vunpack.c.l.b16 %v6008
    %v6112 = vunpack.c.l.b16 %v6009
    %v6113 = vunpack.c.l.b16 %v6010
    %v6114 = vunpack.c.l.b16 %v6011
    %v6115 = vunpack.c.l.b16 %v6012
    %v6116 = vunpack.c.l.b16 %v6013
    %v6117 = vunpack.c.l.b16 %v6014
    %v6118 = vunpack.c.l.b16 %v6015
    %v6119 = vunpack.c.l.b16 %v6016
    %v6120 = vunpack.c.l.b16 %v6017
    %v6121 = vunpack.c.l.b16 %v6018
    %v6122 = vunpack.c.l.b16 %v6019
    %v6123 = vunpack.c.l.b16 %v6020
    %v6124 = vunpack.c.l.b16 %v6021
    %v6125 = vunpack.c.l.b16 %v6022
    %v6126 = vunpack.c.l.b16 %v6023
    %v6127 = vunpack.c.l.b16 %v6024
    %v6128 = vunpack.c.l.b16 %v6025
    %v6129 = vunpack.c.l.b16 %v6026
    %v6130 = vunpack.c.l.b16 %v6027
    %v6131 = vunpack.c.l.b16 %v6028
    %v6132 = vunpack.c.l.b16 %v6029
    %v6133 = vunpack.c.l.b16 %v6030
    %v6134 = vunpack.c.l.b16 %v6031
    %v6135 = vunpack.c.l.b16 %v6032
    %v6136 = vunpack.c.l.b16 %v6033
    %v6137 = vunpack.c.l.b16 %v6034
    %v6138 = vunpack.c.l.b16 %v6035
    %v6139 = vunpack.c.l.b16 %v6036
    %v6140 = vunpack.c.l.b16 %v6037
    %v6141 = vpack.c.b16 %v6094, %v6093
    %v6142 = vpack.c.b16 %v6096, %v6095
    %v6143 = vpack.c.b16 %v6098, %v6097
    %v6144 = vpack.c.b16 %v6100, %v6099
    %v6145 = vpack.c.b16 %v6102, %v6101
    %v6146 = vpack.c.b16 %v6104, %v6103
    %v6147 = vpack.c.b16 %v6106, %v6105
    %v6148 = vpack.c.b16 %v6108, %v6107
    %v6149 = vpack.c.b16 %v6110, %v6109
    %v6150 = vpack.c.b16 %v6112, %v6111
    %v6151 = vpack.c.b16 %v6114, %v6113
    %v6152 = vpack.c.b16 %v6116, %v6115
    %v6153 = vpack.c.b16 %v6118, %v6117
    %v6154 = vpack.c.b16 %v6120, %v6119
    %v6155 = vpack.c.b16 %v6122, %v6121
    %v6156 = vpack.c.b16 %v6124, %v6123
    %v6157 = vpack.c.b16 %v6126, %v6125
    %v6158 = vpack.c.b16 %v6128, %v6127
    %v6159 = vpack.c.b16 %v6130, %v6129
    %v6160 = vpack.c.b16 %v6132, %v6131
    %v6161 = vpack.c.b16 %v6134, %v6133
    %v6162 = vpack.c.b16 %v6136, %v6135
    %v6163 = vpack.c.b16 %v6138, %v6137
    %v6164 = vpack.c.b16 %v6140, %v6139
    %6189 = vmatprep.subr.bf16.mxu0 0
    %6190 = vmatpush1.bf16.msra.mxu0 %v6141
    %6191 = vmatprep.subr.bf16.mxu0 0
    %6192 = vmatpush1.bf16.msra.mxu0 %v6142
    %6193 = vmatprep.subr.bf16.mxu0 0
    %6194 = vmatpush1.bf16.msra.mxu0 %v6143
    %6195 = vmatprep.subr.bf16.mxu0 0
    %6196 = vmatpush1.bf16.msra.mxu0 %v6144
    %6197 = vmatprep.subr.bf16.mxu0 0
    %6198 = vmatpush1.bf16.msra.mxu0 %v6145
    %6199 = vmatprep.subr.bf16.mxu0 0
    %6200 = vmatpush1.bf16.msra.mxu0 %v6146
    %6201 = vmatprep.subr.bf16.mxu0 0
    %6202 = vmatpush1.bf16.msra.mxu0 %v6147
    %6203 = vmatprep.subr.bf16.mxu0 0
    %6204 = vmatpush1.bf16.msra.mxu0 %v6148
    %6205 = vmatprep.subr.bf16.mxu0 0
    %6206 = vmatpush1.bf16.msra.mxu0 %v6149
    %6207 = vmatprep.subr.bf16.mxu0 0
    %6208 = vmatpush1.bf16.msra.mxu0 %v6150
    %6209 = vmatprep.subr.bf16.mxu0 0
    %6210 = vmatpush1.bf16.msra.mxu0 %v6151
    %6211 = vmatprep.subr.bf16.mxu0 0
    %6212 = vmatpush1.bf16.msra.mxu0 %v6152
    %6213 = vmatprep.subr.bf16.mxu0 0
    %6214 = vmatpush1.bf16.msra.mxu0 %v6153
    %6215 = vmatprep.subr.bf16.mxu0 0
    %6216 = vmatpush1.bf16.msra.mxu0 %v6154
    %6217 = vmatprep.subr.bf16.mxu0 0
    %6218 = vmatpush1.bf16.msra.mxu0 %v6155
    %6219 = vmatprep.subr.bf16.mxu0 0
    %6220 = vmatpush1.bf16.msra.mxu0 %v6156
    %6221 = vmatprep.mubr.bf16.mxu0 %v5988
    %6222 = vmatmul.mubr.bf16.gmra.mrb[0].mxu0 %v5987
    %v6223 = vpop.f32.mrb[0].mxu0
    %v6224 = vadd.f32 %v6043, %v6223
    %v6225 = vpop.f32.mrb[0].mxu0
    %v6226 = vpop.f32.mrb[0].mxu0
    %v6227 = vpop.f32.mrb[0].mxu0
    %6228 = vdwg.mxu0
    %6229 = vmatprep.subr.bf16.mxu0 0
    %6230 = vmatpush1.bf16.msra.mxu0 %v6157
    %6231 = vmatprep.subr.bf16.mxu0 0
    %6232 = vmatpush1.bf16.msra.mxu0 %v6158
    %6233 = vmatprep.subr.bf16.mxu0 0
    %6234 = vmatpush1.bf16.msra.mxu0 %v6159
    %6235 = vmatprep.subr.bf16.mxu0 0
    %6236 = vmatpush1.bf16.msra.mxu0 %v6160
    %6237 = vmatprep.subr.bf16.mxu0 0
    %6238 = vmatpush1.bf16.msra.mxu0 %v6161
    %6239 = vmatprep.subr.bf16.mxu0 0
    %6240 = vmatpush1.bf16.msra.mxu0 %v6162
    %6241 = vmatprep.subr.bf16.mxu0 0
    %6242 = vmatpush1.bf16.msra.mxu0 %v6163
    %6243 = vmatprep.subr.bf16.mxu0 0
    %6244 = vmatpush1.bf16.msra.mxu0 %v6164
    %6245 = vmatprep.subr.bf16.mxu0 0
    %6246 = vmatpush1.bf16.msra.mxu0 0
    %6247 = vmatprep.subr.bf16.mxu0 0
    %6248 = vmatpush1.bf16.msra.mxu0 0
    %6249 = vmatprep.subr.bf16.mxu0 0
    %6250 = vmatpush1.bf16.msra.mxu0 0
    %6251 = vmatprep.subr.bf16.mxu0 0
    %6252 = vmatpush1.bf16.msra.mxu0 0
    %6253 = vmatprep.subr.bf16.mxu0 0
    %6254 = vmatpush1.bf16.msra.mxu0 0
    %6255 = vmatprep.subr.bf16.mxu0 0
    %6256 = vmatpush1.bf16.msra.mxu0 0
    %6257 = vmatprep.subr.bf16.mxu0 0
    %6258 = vmatpush1.bf16.msra.mxu0 0
    %6259 = vmatprep.subr.bf16.mxu0 0
    %6260 = vmatpush1.bf16.msra.mxu0 0
    %6261 = vmatprep.mubr.bf16.mxu0 0
    %6262 = vmatmul.mubr.bf16.gmra.mrb[0].mxu0 %v5989
    %v6263 = vpop.f32.mrb[0].mxu0
    %v6264 = vadd.f32 %v6224, %v6263
    %v6265 = vpop.f32.mrb[0].mxu0
    %v6266 = vpop.f32.mrb[0].mxu0
    %v6267 = vpop.f32.mrb[0].mxu0
    %6268 = vdwg.mxu0
    %vm6269 = vcmp.ge.f32.partialorder %v6264, 0.0
    %v6270 = vstv %s248
    %v6271 = vmul.f32 %v6270, %v6264
    %v6272 = vsel %vm6269, %v6264, %v6271
    %v6273 = vpack.c.bf16 %v6272, %v6272
    %v6274 = vld [vmem:[%s6] sm:$0xf]
    %v6275 = vld [vmem:[%s6 + $0x4] sm:$0xf]
    %v6276 = vld [vmem:[%s6 + $0x8] sm:$0xf]
    %v6277 = vld [vmem:[%s6 + $0xc] sm:$0xf]
    %v6278 = vld [vmem:[%s6 + $0x10] sm:$0xf]
    %v6279 = vld [vmem:[%s6 + $0x14] sm:$0xf]
    %v6280 = vld [vmem:[%s6 + $0x18] sm:$0xf]
    %v6281 = vld [vmem:[%s6 + $0x1c] sm:$0xf]
    %v6282 = vld [vmem:[#allocation10] sm:$0x1]
    %v6284 = vlaneseq
    %v6285 = vshrl.u32 %v6284, 7
    %v6286 = vsub.s32 0, %v6285
    %v6287 = vrot.slane %v6282, %v6286
    %v6297 = vunpack.c.l.b16 %v6274
    %v6298 = vunpack.c.l.b16 %v6275
    %v6299 = vunpack.c.l.b16 %v6276
    %v6300 = vunpack.c.l.b16 %v6277
    %v6301 = vunpack.c.l.b16 %v6278
    %v6302 = vunpack.c.l.b16 %v6279
    %v6303 = vunpack.c.l.b16 %v6280
    %v6304 = vunpack.c.l.b16 %v6281
    %v6305 = vpack.c.b16 %v6298, %v6297
    %v6306 = vpack.c.b16 %v6300, %v6299
    %v6307 = vpack.c.b16 %v6302, %v6301
    %v6308 = vpack.c.b16 %v6304, %v6303
    %vm6313 = vcmask 523264
    %v6315 = vsel %vm6313, %v6273, 0
    %6317 = vmatprep.subr.bf16.mxu0 0
    %6318 = vmatpush1.bf16.msra.mxu0 %v6305
    %6319 = vmatprep.subr.bf16.mxu0 0
    %6320 = vmatpush1.bf16.msra.mxu0 %v6306
    %6321 = vmatprep.subr.bf16.mxu0 0
    %6322 = vmatpush1.bf16.msra.mxu0 %v6307
    %6323 = vmatprep.subr.bf16.mxu0 0
    %6324 = vmatpush1.bf16.msra.mxu0 %v6308
    %6325 = vmatprep.subr.bf16.mxu0 0
    %6326 = vmatpush1.bf16.msra.mxu0 0
    %6327 = vmatprep.subr.bf16.mxu0 0
    %6328 = vmatpush1.bf16.msra.mxu0 0
    %6329 = vmatprep.subr.bf16.mxu0 0
    %6330 = vmatpush1.bf16.msra.mxu0 0
    %6331 = vmatprep.subr.bf16.mxu0 0
    %6332 = vmatpush1.bf16.msra.mxu0 0
    %6333 = vmatprep.subr.bf16.mxu0 0
    %6334 = vmatpush1.bf16.msra.mxu0 0
    %6335 = vmatprep.subr.bf16.mxu0 0
    %6336 = vmatpush1.bf16.msra.mxu0 0
    %6337 = vmatprep.subr.bf16.mxu0 0
    %6338 = vmatpush1.bf16.msra.mxu0 0
    %6339 = vmatprep.subr.bf16.mxu0 0
    %6340 = vmatpush1.bf16.msra.mxu0 0
    %6341 = vmatprep.subr.bf16.mxu0 0
    %6342 = vmatpush1.bf16.msra.mxu0 0
    %6343 = vmatprep.subr.bf16.mxu0 0
    %6344 = vmatpush1.bf16.msra.mxu0 0
    %6345 = vmatprep.subr.bf16.mxu0 0
    %6346 = vmatpush1.bf16.msra.mxu0 0
    %6347 = vmatprep.subr.bf16.mxu0 0
    %6348 = vmatpush1.bf16.msra.mxu0 0
    %6349 = vmatprep.mubr.bf16.mxu0 0
    %6350 = vmatmul.mubr.bf16.gmra.mrb[0].mxu0 %v6315
    %v6351 = vpop.f32.mrb[0].mxu0
    %v6352 = vadd.f32 %v6287, %v6351
    %v6353 = vpop.f32.mrb[0].mxu0
    %v6354 = vpop.f32.mrb[0].mxu0
    %v6355 = vpop.f32.mrb[0].mxu0
    %6356 = vdwg.mxu0
    %v6357 = vpack.c.bf16 %v6352, %v6352
    %v6358 = vld [vmem:[#allocation11] sm:$0xff]
    %v6359 = vld [vmem:[#allocation11 + $0x8] sm:$0xff]
    %v6360 = vld [vmem:[#allocation11 + $0x10] sm:$0xff]
    %v6361 = vld [vmem:[#allocation11 + $0x18] sm:$0xff]
    %v6362 = vld [vmem:[#allocation11 + $0x20] sm:$0xff]
    %v6363 = vld [vmem:[#allocation11 + $0x28] sm:$0xff]
    %v6364 = vld [vmem:[#allocation11 + $0x30] sm:$0x33]
    %v6365 = vld [vmem:[#allocation11 + $0x38] sm:$0x33]
    %v6366 = vld [vmem:[%s0] sm:$0xff]
    %v6367 = vld [vmem:[#allocation13] sm:$0xff]
    %v6368 = vld [vmem:[#allocation13 + $0x8] sm:$0xff]
    %v6371 = vcombine.high %v6367, %v6367
    %v6372 = vcombine.high %v6368, %v6368
    %vm6373 = vcmask 31744
    %v6375 = vsel %vm6373, %v6366, 0
    %vm6377 = vcmask 1043456
    %v6378 = vsel %vm6377, %v6367, 0
    %v6380 = vsel %vm6377, %v6371, 0
    %v6382 = vsel %vm6377, %v6368, 0
    %v6384 = vsel %vm6377, %v6372, 0
    %6386 = vmatprep.subr.mxu0 %v6380
    %6387 = vmatpush1.msra.mxu0 %v6378
    %6388 = vmatprep.subr.mxu0 0.0
    %6389 = vmatpush1.msra.mxu0 0.0
    %6390 = vmatprep.subr.mxu0 0.0
    %6391 = vmatpush1.msra.mxu0 0.0
    %6392 = vmatprep.subr.mxu0 0.0
    %6393 = vmatpush1.msra.mxu0 0.0
    %6394 = vmatprep.subr.mxu0 0.0
    %6395 = vmatpush1.msra.mxu0 0.0
    %6396 = vmatprep.subr.mxu0 0.0
    %6397 = vmatpush1.msra.mxu0 0.0
    %6398 = vmatprep.subr.mxu0 0.0
    %6399 = vmatpush1.msra.mxu0 0.0
    %6400 = vmatprep.subr.mxu0 0.0
    %6401 = vmatpush1.msra.mxu0 0.0
    %6402 = vmatprep.subr.mxu0 0.0
    %6403 = vmatpush1.msra.mxu0 0.0
    %6404 = vmatprep.subr.mxu0 0.0
    %6405 = vmatpush1.msra.mxu0 0.0
    %6406 = vmatprep.subr.mxu0 0.0
    %6407 = vmatpush1.msra.mxu0 0.0
    %6408 = vmatprep.subr.mxu0 0.0
    %6409 = vmatpush1.msra.mxu0 0.0
    %6410 = vmatprep.subr.mxu0 0.0
    %6411 = vmatpush1.msra.mxu0 0.0
    %6412 = vmatprep.subr.mxu0 0.0
    %6413 = vmatpush1.msra.mxu0 0.0
    %6414 = vmatprep.subr.mxu0 0.0
    %6415 = vmatpush1.msra.mxu0 0.0
    %6416 = vmatprep.subr.mxu0 0.0
    %6417 = vmatpush1.msra.mxu0 0.0
    %6418 = vmatprep.subr.mxu0 0.0
    %6419 = vmatpush1.msra.mxu0 0.0
    %6420 = vmatprep.subr.mxu0 0.0
    %6421 = vmatpush1.msra.mxu0 0.0
    %6422 = vmatprep.subr.mxu0 0.0
    %6423 = vmatpush1.msra.mxu0 0.0
    %6424 = vmatprep.subr.mxu0 0.0
    %6425 = vmatpush1.msra.mxu0 0.0
    %6426 = vmatprep.subr.mxu0 0.0
    %6427 = vmatpush1.msra.mxu0 0.0
    %6428 = vmatprep.subr.mxu0 0.0
    %6429 = vmatpush1.msra.mxu0 0.0
    %6430 = vmatprep.subr.mxu0 0.0
    %6431 = vmatpush1.msra.mxu0 0.0
    %6432 = vmatprep.subr.mxu0 0.0
    %6433 = vmatpush1.msra.mxu0 0.0
    %6434 = vmatprep.subr.mxu0 0.0
    %6435 = vmatpush1.msra.mxu0 0.0
    %6436 = vmatprep.subr.mxu0 0.0
    %6437 = vmatpush1.msra.mxu0 0.0
    %6438 = vmatprep.subr.mxu0 0.0
    %6439 = vmatpush1.msra.mxu0 0.0
    %6440 = vmatprep.subr.mxu0 0.0
    %6441 = vmatpush1.msra.mxu0 0.0
    %6442 = vmatprep.subr.mxu0 0.0
    %6443 = vmatpush1.msra.mxu0 0.0
    %6444 = vmatprep.subr.mxu0 0.0
    %6445 = vmatpush1.msra.mxu0 0.0
    %6446 = vmatprep.subr.mxu0 0.0
    %6447 = vmatpush1.msra.mxu0 0.0
    %6448 = vmatprep.subr.mxu0 0.0
    %6449 = vmatpush1.msra.mxu0 0.0
    %6450 = vmatprep.mubr.f32.mxu0 0.0
    %6451 = vmatmul.mubr.f32.gmra.mrb[0].mxu0 %v6375
    %v6452 = vpop.f32.mrb[0].mxu0
    %v6453 = vadd.f32 0.0, %v6452
    %v6454 = vpop.f32.mrb[0].mxu0
    %v6455 = vadd.f32 0.0, %v6454
    %6456 = vdwg.mxu0
    %6457 = vmatprep.subr.mxu0 %v6384
    %6458 = vmatpush1.msra.mxu0 %v6382
    %6459 = vmatprep.subr.mxu0 0.0
    %6460 = vmatpush1.msra.mxu0 0.0
    %6461 = vmatprep.subr.mxu0 0.0
    %6462 = vmatpush1.msra.mxu0 0.0
    %6463 = vmatprep.subr.mxu0 0.0
    %6464 = vmatpush1.msra.mxu0 0.0
    %6465 = vmatprep.subr.mxu0 0.0
    %6466 = vmatpush1.msra.mxu0 0.0
    %6467 = vmatprep.subr.mxu0 0.0
    %6468 = vmatpush1.msra.mxu0 0.0
    %6469 = vmatprep.subr.mxu0 0.0
    %6470 = vmatpush1.msra.mxu0 0.0
    %6471 = vmatprep.subr.mxu0 0.0
    %6472 = vmatpush1.msra.mxu0 0.0
    %6473 = vmatprep.subr.mxu0 0.0
    %6474 = vmatpush1.msra.mxu0 0.0
    %6475 = vmatprep.subr.mxu0 0.0
    %6476 = vmatpush1.msra.mxu0 0.0
    %6477 = vmatprep.subr.mxu0 0.0
    %6478 = vmatpush1.msra.mxu0 0.0
    %6479 = vmatprep.subr.mxu0 0.0
    %6480 = vmatpush1.msra.mxu0 0.0
    %6481 = vmatprep.subr.mxu0 0.0
    %6482 = vmatpush1.msra.mxu0 0.0
    %6483 = vmatprep.subr.mxu0 0.0
    %6484 = vmatpush1.msra.mxu0 0.0
    %6485 = vmatprep.subr.mxu0 0.0
    %6486 = vmatpush1.msra.mxu0 0.0
    %6487 = vmatprep.subr.mxu0 0.0
    %6488 = vmatpush1.msra.mxu0 0.0
    %6489 = vmatprep.subr.mxu0 0.0
    %6490 = vmatpush1.msra.mxu0 0.0
    %6491 = vmatprep.subr.mxu0 0.0
    %6492 = vmatpush1.msra.mxu0 0.0
    %6493 = vmatprep.subr.mxu0 0.0
    %6494 = vmatpush1.msra.mxu0 0.0
    %6495 = vmatprep.subr.mxu0 0.0
    %6496 = vmatpush1.msra.mxu0 0.0
    %6497 = vmatprep.subr.mxu0 0.0
    %6498 = vmatpush1.msra.mxu0 0.0
    %6499 = vmatprep.subr.mxu0 0.0
    %6500 = vmatpush1.msra.mxu0 0.0
    %6501 = vmatprep.subr.mxu0 0.0
    %6502 = vmatpush1.msra.mxu0 0.0
    %6503 = vmatprep.subr.mxu0 0.0
    %6504 = vmatpush1.msra.mxu0 0.0
    %6505 = vmatprep.subr.mxu0 0.0
    %6506 = vmatpush1.msra.mxu0 0.0
    %6507 = vmatprep.subr.mxu0 0.0
    %6508 = vmatpush1.msra.mxu0 0.0
    %6509 = vmatprep.subr.mxu0 0.0
    %6510 = vmatpush1.msra.mxu0 0.0
    %6511 = vmatprep.subr.mxu0 0.0
    %6512 = vmatpush1.msra.mxu0 0.0
    %6513 = vmatprep.subr.mxu0 0.0
    %6514 = vmatpush1.msra.mxu0 0.0
    %6515 = vmatprep.subr.mxu0 0.0
    %6516 = vmatpush1.msra.mxu0 0.0
    %6517 = vmatprep.subr.mxu0 0.0
    %6518 = vmatpush1.msra.mxu0 0.0
    %6519 = vmatprep.subr.mxu0 0.0
    %6520 = vmatpush1.msra.mxu0 0.0
    %6521 = vmatprep.mubr.f32.mxu0 0.0
    %6522 = vmatmul.mubr.f32.gmra.mrb[0].mxu0 %v6375
    %v6523 = vpop.f32.mrb[0].mxu0
    %v6524 = vadd.f32 0.0, %v6523
    %v6525 = vpop.f32.mrb[0].mxu0
    %v6526 = vadd.f32 0.0, %v6525
    %6527 = vdwg.mxu0
    %v6536 = vunpack.c.l.b16 %v6358
    %v6537 = vunpack.c.h.b16 %v6358
    %v6538 = vunpack.c.l.b16 %v6359
    %v6539 = vunpack.c.h.b16 %v6359
    %v6540 = vunpack.c.l.b16 %v6360
    %v6541 = vunpack.c.h.b16 %v6360
    %v6542 = vunpack.c.l.b16 %v6361
    %v6543 = vunpack.c.h.b16 %v6361
    %v6544 = vunpack.c.l.b16 %v6362
    %v6545 = vunpack.c.h.b16 %v6362
    %v6546 = vunpack.c.l.b16 %v6363
    %v6547 = vunpack.c.h.b16 %v6363
    %v6548 = vunpack.c.l.b16 %v6364
    %v6549 = vunpack.c.h.b16 %v6364
    %v6550 = vunpack.c.l.b16 %v6365
    %v6551 = vunpack.c.h.b16 %v6365
    %v6552 = vpack.c.b16 %v6540, %v6536
    %v6553 = vpack.c.b16 %v6541, %v6537
    %v6554 = vpack.c.b16 %v6542, %v6538
    %v6555 = vpack.c.b16 %v6543, %v6539
    %v6556 = vpack.c.b16 %v6548, %v6544
    %v6557 = vpack.c.b16 %v6549, %v6545
    %v6558 = vpack.c.b16 %v6550, %v6546
    %v6559 = vpack.c.b16 %v6551, %v6547
    %vm6564 = vcmask 228352
    %v6566 = vsel %vm6564, %v6357, 0
    %vm6568 = vcmask 1045504
    %v6570 = vsel %vm6568, %v6556, 0
    %v6573 = vsel %vm6568, %v6557, 0
    %v6576 = vsel %vm6568, %v6558, 0
    %v6579 = vsel %vm6568, %v6559, 0
    %6581 = vmatprep.subr.bf16.mxu0 %v6553
    %6582 = vmatpush1.bf16.msra.mxu0 %v6552
    %6583 = vmatprep.subr.bf16.mxu0 %v6573
    %6584 = vmatpush1.bf16.msra.mxu0 %v6570
    %6585 = vmatprep.subr.bf16.mxu0 0
    %6586 = vmatpush1.bf16.msra.mxu0 0
    %6587 = vmatprep.subr.bf16.mxu0 0
    %6588 = vmatpush1.bf16.msra.mxu0 0
    %6589 = vmatprep.subr.bf16.mxu0 0
    %6590 = vmatpush1.bf16.msra.mxu0 0
    %6591 = vmatprep.subr.bf16.mxu0 0
    %6592 = vmatpush1.bf16.msra.mxu0 0
    %6593 = vmatprep.subr.bf16.mxu0 0
    %6594 = vmatpush1.bf16.msra.mxu0 0
    %6595 = vmatprep.subr.bf16.mxu0 0
    %6596 = vmatpush1.bf16.msra.mxu0 0
    %6597 = vmatprep.subr.bf16.mxu0 0
    %6598 = vmatpush1.bf16.msra.mxu0 0
    %6599 = vmatprep.subr.bf16.mxu0 0
    %6600 = vmatpush1.bf16.msra.mxu0 0
    %6601 = vmatprep.subr.bf16.mxu0 0
    %6602 = vmatpush1.bf16.msra.mxu0 0
    %6603 = vmatprep.subr.bf16.mxu0 0
    %6604 = vmatpush1.bf16.msra.mxu0 0
    %6605 = vmatprep.subr.bf16.mxu0 0
    %6606 = vmatpush1.bf16.msra.mxu0 0
    %6607 = vmatprep.subr.bf16.mxu0 0
    %6608 = vmatpush1.bf16.msra.mxu0 0
    %6609 = vmatprep.subr.bf16.mxu0 0
    %6610 = vmatpush1.bf16.msra.mxu0 0
    %6611 = vmatprep.subr.bf16.mxu0 0
    %6612 = vmatpush1.bf16.msra.mxu0 0
    %6613 = vmatprep.mubr.bf16.mxu0 0
    %6614 = vmatmul.mubr.bf16.gmra.mrb[0].mxu0 %v6566
    %v6615 = vpop.f32.mrb[0].mxu0
    %v6616 = vadd.f32 %v6453, %v6615
    %v6617 = vpop.f32.mrb[0].mxu0
    %v6618 = vadd.f32 %v6455, %v6617
    %v6619 = vpop.f32.mrb[0].mxu0
    %v6620 = vpop.f32.mrb[0].mxu0
    %6621 = vdwg.mxu0
    %6622 = vmatprep.subr.bf16.mxu0 %v6555
    %6623 = vmatpush1.bf16.msra.mxu0 %v6554
    %6624 = vmatprep.subr.bf16.mxu0 %v6579
    %6625 = vmatpush1.bf16.msra.mxu0 %v6576
    %6626 = vmatprep.subr.bf16.mxu0 0
    %6627 = vmatpush1.bf16.msra.mxu0 0
    %6628 = vmatprep.subr.bf16.mxu0 0
    %6629 = vmatpush1.bf16.msra.mxu0 0
    %6630 = vmatprep.subr.bf16.mxu0 0
    %6631 = vmatpush1.bf16.msra.mxu0 0
    %6632 = vmatprep.subr.bf16.mxu0 0
    %6633 = vmatpush1.bf16.msra.mxu0 0
    %6634 = vmatprep.subr.bf16.mxu0 0
    %6635 = vmatpush1.bf16.msra.mxu0 0
    %6636 = vmatprep.subr.bf16.mxu0 0
    %6637 = vmatpush1.bf16.msra.mxu0 0
    %6638 = vmatprep.subr.bf16.mxu0 0
    %6639 = vmatpush1.bf16.msra.mxu0 0
    %6640 = vmatprep.subr.bf16.mxu0 0
    %6641 = vmatpush1.bf16.msra.mxu0 0
    %6642 = vmatprep.subr.bf16.mxu0 0
    %6643 = vmatpush1.bf16.msra.mxu0 0
    %6644 = vmatprep.subr.bf16.mxu0 0
    %6645 = vmatpush1.bf16.msra.mxu0 0
    %6646 = vmatprep.subr.bf16.mxu0 0
    %6647 = vmatpush1.bf16.msra.mxu0 0
    %6648 = vmatprep.subr.bf16.mxu0 0
    %6649 = vmatpush1.bf16.msra.mxu0 0
    %6650 = vmatprep.subr.bf16.mxu0 0
    %6651 = vmatpush1.bf16.msra.mxu0 0
    %6652 = vmatprep.subr.bf16.mxu0 0
    %6653 = vmatpush1.bf16.msra.mxu0 0
    %6654 = vmatprep.mubr.bf16.mxu0 0
    %6655 = vmatmul.mubr.bf16.gmra.mrb[0].mxu0 %v6566
    %v6656 = vpop.f32.mrb[0].mxu0
    %v6657 = vadd.f32 %v6524, %v6656
    %v6658 = vpop.f32.mrb[0].mxu0
    %v6659 = vadd.f32 %v6526, %v6658
    %v6660 = vpop.f32.mrb[0].mxu0
    %v6661 = vpop.f32.mrb[0].mxu0
    %6662 = vdwg.mxu0
    %v6663 = vld [vmem:[#allocation14] sm:$0xf]
    %v6665 = vlaneseq
    %v6666 = vshrl.u32 %v6665, 7
    %v6667 = vsub.s32 0, %v6666
    %v6668 = vrot.slane %v6663, %v6667
    %v6669 = vlaneseq
    %v6670 = vshrl.u32 %v6669, 7
    %v6671 = vsub.s32 1, %v6670
    %v6672 = vrot.slane %v6663, %v6671
    %v6673 = vlaneseq
    %v6674 = vshrl.u32 %v6673, 7
    %v6675 = vsub.s32 2, %v6674
    %v6676 = vrot.slane %v6663, %v6675
    %v6677 = vlaneseq
    %v6678 = vshrl.u32 %v6677, 7
    %v6679 = vsub.s32 3, %v6678
    %v6680 = vrot.slane %v6663, %v6679
    %v6685 = vadd.f32 %v6616, %v6668
    %v6686 = vadd.f32 %v6618, %v6672
    %v6687 = vadd.f32 %v6657, %v6676
    %v6688 = vadd.f32 %v6659, %v6680
    %vm6689 = vcmp.ge.f32.partialorder %v6685, 0.0
    %vm6690 = vcmp.ge.f32.partialorder %v6686, 0.0
    %vm6691 = vcmp.ge.f32.partialorder %v6687, 0.0
    %vm6692 = vcmp.ge.f32.partialorder %v6688, 0.0
    %v6693 = vstv %s249
    %v6694 = vmul.f32 %v6693, %v6685
    %v6695 = vmul.f32 %v6693, %v6686
    %v6696 = vmul.f32 %v6693, %v6687
    %v6697 = vmul.f32 %v6693, %v6688
    %v6698 = vsel %vm6689, %v6685, %v6694
    %v6699 = vsel %vm6690, %v6686, %v6695
    %v6700 = vsel %vm6691, %v6687, %v6696
    %v6701 = vsel %vm6692, %v6688, %v6697
    %v6702 = vpack.c.bf16 %v6698, %v6698
    %v6703 = vpack.c.bf16 %v6699, %v6699
    %v6704 = vpack.c.bf16 %v6700, %v6700
    %v6705 = vpack.c.bf16 %v6701, %v6701
    %v6706 = vld [vmem:[#allocation16] sm:$0xff]
    %v6707 = vld [vmem:[#allocation16 + $0x8] sm:$0xff]
    %v6708 = vld [vmem:[#allocation16 + $0x10] sm:$0xff]
    %v6709 = vld [vmem:[#allocation16 + $0x18] sm:$0xff]
    %v6710 = vld [vmem:[#allocation16 + $0x20] sm:$0xff]
    %v6711 = vld [vmem:[#allocation16 + $0x28] sm:$0xff]
    %v6712 = vld [vmem:[#allocation16 + $0x30] sm:$0xff]
    %v6713 = vld [vmem:[#allocation16 + $0x38] sm:$0xff]
    %v6714 = vld [vmem:[#allocation16 + $0x40] sm:$0xff]
    %v6715 = vld [vmem:[#allocation16 + $0x48] sm:$0xff]
    %v6716 = vld [vmem:[#allocation16 + $0x50] sm:$0xff]
    %v6717 = vld [vmem:[#allocation16 + $0x58] sm:$0xff]
    %v6718 = vld [vmem:[#allocation16 + $0x60] sm:$0xff]
    %v6719 = vld [vmem:[#allocation16 + $0x68] sm:$0xff]
    %v6720 = vld [vmem:[#allocation16 + $0x70] sm:$0xff]
    %v6721 = vld [vmem:[#allocation16 + $0x78] sm:$0xff]
    %v6722 = vld [vmem:[#allocation16 + $0x80] sm:$0xff]
    %v6723 = vld [vmem:[#allocation16 + $0x88] sm:$0xff]
    %v6724 = vld [vmem:[#allocation16 + $0x90] sm:$0xff]
    %v6725 = vld [vmem:[#allocation16 + $0x98] sm:$0xff]
    %v6726 = vld [vmem:[#allocation16 + $0xa0] sm:$0xff]
    %v6727 = vld [vmem:[#allocation16 + $0xa8] sm:$0xff]
    %v6728 = vld [vmem:[#allocation16 + $0xb0] sm:$0xff]
    %v6729 = vld [vmem:[#allocation16 + $0xb8] sm:$0xff]
    %v6730 = vld [vmem:[#allocation16 + $0xc0] sm:$0xff]
    %v6731 = vld [vmem:[#allocation16 + $0xc8] sm:$0xff]
    %v6732 = vld [vmem:[#allocation16 + $0xd0] sm:$0xff]
    %v6733 = vld [vmem:[#allocation16 + $0xd8] sm:$0xff]
    %v6734 = vld [vmem:[#allocation16 + $0xe0] sm:$0xff]
    %v6735 = vld [vmem:[#allocation16 + $0xe8] sm:$0xff]
    %v6736 = vld [vmem:[#allocation16 + $0xf0] sm:$0xff]
    %v6737 = vld [vmem:[#allocation16 + $0xf8] sm:$0xff]
    %v6738 = vld [vmem:[#allocation16 + $0x100] sm:$0xff]
    %v6739 = vld [vmem:[#allocation16 + $0x108] sm:$0xff]
    %v6740 = vld [vmem:[#allocation16 + $0x110] sm:$0xff]
    %v6741 = vld [vmem:[#allocation16 + $0x118] sm:$0xff]
    %v6742 = vld [vmem:[#allocation16 + $0x120] sm:$0xff]
    %v6743 = vld [vmem:[#allocation16 + $0x128] sm:$0xff]
    %v6744 = vld [vmem:[#allocation16 + $0x130] sm:$0xff]
    %v6745 = vld [vmem:[#allocation16 + $0x138] sm:$0xff]
    %v6746 = vld [vmem:[#allocation16 + $0x140] sm:$0xff]
    %v6747 = vld [vmem:[#allocation16 + $0x148] sm:$0xff]
    %v6748 = vld [vmem:[#allocation16 + $0x150] sm:$0xff]
    %v6749 = vld [vmem:[#allocation16 + $0x158] sm:$0xff]
    %v6750 = vld [vmem:[#allocation16 + $0x160] sm:$0xff]
    %v6751 = vld [vmem:[#allocation16 + $0x168] sm:$0xff]
    %v6752 = vld [vmem:[#allocation16 + $0x170] sm:$0xff]
    %v6753 = vld [vmem:[#allocation16 + $0x178] sm:$0xff]
    %v6754 = vld [vmem:[#allocation16 + $0x180] sm:$0xff]
    %v6755 = vld [vmem:[#allocation16 + $0x188] sm:$0xff]
    %v6756 = vld [vmem:[#allocation16 + $0x190] sm:$0xff]
    %v6757 = vld [vmem:[#allocation16 + $0x198] sm:$0xff]
    %v6758 = vld [vmem:[#allocation16 + $0x1a0] sm:$0xff]
    %v6759 = vld [vmem:[#allocation16 + $0x1a8] sm:$0xff]
    %v6760 = vld [vmem:[#allocation16 + $0x1b0] sm:$0xff]
    %v6761 = vld [vmem:[#allocation16 + $0x1b8] sm:$0xff]
    %v6762 = vld [vmem:[#allocation16 + $0x1c0] sm:$0xff]
    %v6763 = vld [vmem:[#allocation16 + $0x1c8] sm:$0xff]
    %v6764 = vld [vmem:[#allocation16 + $0x1d0] sm:$0xff]
    %v6765 = vld [vmem:[#allocation16 + $0x1d8] sm:$0xff]
    %v6766 = vld [vmem:[#allocation16 + $0x1e0] sm:$0xff]
    %v6767 = vld [vmem:[#allocation16 + $0x1e8] sm:$0xff]
    %v6768 = vld [vmem:[#allocation16 + $0x1f0] sm:$0xff]
    %v6769 = vld [vmem:[#allocation16 + $0x1f8] sm:$0xff]
    %v6770 = vld [vmem:[#allocation17] sm:$0x3]
    %v6772 = vlaneseq
    %v6773 = vshrl.u32 %v6772, 7
    %v6774 = vsub.s32 0, %v6773
    %v6775 = vrot.slane %v6770, %v6774
    %v6776 = vlaneseq
    %v6777 = vshrl.u32 %v6776, 7
    %v6778 = vsub.s32 1, %v6777
    %v6779 = vrot.slane %v6770, %v6778
    %v6846 = vunpack.c.l.b16 %v6706
    %v6847 = vunpack.c.h.b16 %v6706
    %v6848 = vunpack.c.l.b16 %v6707
    %v6849 = vunpack.c.h.b16 %v6707
    %v6850 = vunpack.c.l.b16 %v6708
    %v6851 = vunpack.c.h.b16 %v6708
    %v6852 = vunpack.c.l.b16 %v6709
    %v6853 = vunpack.c.h.b16 %v6709
    %v6854 = vunpack.c.l.b16 %v6710
    %v6855 = vunpack.c.h.b16 %v6710
    %v6856 = vunpack.c.l.b16 %v6711
    %v6857 = vunpack.c.h.b16 %v6711
    %v6858 = vunpack.c.l.b16 %v6712
    %v6859 = vunpack.c.h.b16 %v6712
    %v6860 = vunpack.c.l.b16 %v6713
    %v6861 = vunpack.c.h.b16 %v6713
    %v6862 = vunpack.c.l.b16 %v6714
    %v6863 = vunpack.c.h.b16 %v6714
    %v6864 = vunpack.c.l.b16 %v6715
    %v6865 = vunpack.c.h.b16 %v6715
    %v6866 = vunpack.c.l.b16 %v6716
    %v6867 = vunpack.c.h.b16 %v6716
    %v6868 = vunpack.c.l.b16 %v6717
    %v6869 = vunpack.c.h.b16 %v6717
    %v6870 = vunpack.c.l.b16 %v6718
    %v6871 = vunpack.c.h.b16 %v6718
    %v6872 = vunpack.c.l.b16 %v6719
    %v6873 = vunpack.c.h.b16 %v6719
    %v6874 = vunpack.c.l.b16 %v6720
    %v6875 = vunpack.c.h.b16 %v6720
    %v6876 = vunpack.c.l.b16 %v6721
    %v6877 = vunpack.c.h.b16 %v6721
    %v6878 = vunpack.c.l.b16 %v6722
    %v6879 = vunpack.c.h.b16 %v6722
    %v6880 = vunpack.c.l.b16 %v6723
    %v6881 = vunpack.c.h.b16 %v6723
    %v6882 = vunpack.c.l.b16 %v6724
    %v6883 = vunpack.c.h.b16 %v6724
    %v6884 = vunpack.c.l.b16 %v6725
    %v6885 = vunpack.c.h.b16 %v6725
    %v6886 = vunpack.c.l.b16 %v6726
    %v6887 = vunpack.c.h.b16 %v6726
    %v6888 = vunpack.c.l.b16 %v6727
    %v6889 = vunpack.c.h.b16 %v6727
    %v6890 = vunpack.c.l.b16 %v6728
    %v6891 = vunpack.c.h.b16 %v6728
    %v6892 = vunpack.c.l.b16 %v6729
    %v6893 = vunpack.c.h.b16 %v6729
    %v6894 = vunpack.c.l.b16 %v6730
    %v6895 = vunpack.c.h.b16 %v6730
    %v6896 = vunpack.c.l.b16 %v6731
    %v6897 = vunpack.c.h.b16 %v6731
    %v6898 = vunpack.c.l.b16 %v6732
    %v6899 = vunpack.c.h.b16 %v6732
    %v6900 = vunpack.c.l.b16 %v6733
    %v6901 = vunpack.c.h.b16 %v6733
    %v6902 = vunpack.c.l.b16 %v6734
    %v6903 = vunpack.c.h.b16 %v6734
    %v6904 = vunpack.c.l.b16 %v6735
    %v6905 = vunpack.c.h.b16 %v6735
    %v6906 = vunpack.c.l.b16 %v6736
    %v6907 = vunpack.c.h.b16 %v6736
    %v6908 = vunpack.c.l.b16 %v6737
    %v6909 = vunpack.c.h.b16 %v6737
    %v6910 = vunpack.c.l.b16 %v6738
    %v6911 = vunpack.c.h.b16 %v6738
    %v6912 = vunpack.c.l.b16 %v6739
    %v6913 = vunpack.c.h.b16 %v6739
    %v6914 = vunpack.c.l.b16 %v6740
    %v6915 = vunpack.c.h.b16 %v6740
    %v6916 = vunpack.c.l.b16 %v6741
    %v6917 = vunpack.c.h.b16 %v6741
    %v6918 = vunpack.c.l.b16 %v6742
    %v6919 = vunpack.c.h.b16 %v6742
    %v6920 = vunpack.c.l.b16 %v6743
    %v6921 = vunpack.c.h.b16 %v6743
    %v6922 = vunpack.c.l.b16 %v6744
    %v6923 = vunpack.c.h.b16 %v6744
    %v6924 = vunpack.c.l.b16 %v6745
    %v6925 = vunpack.c.h.b16 %v6745
    %v6926 = vunpack.c.l.b16 %v6746
    %v6927 = vunpack.c.h.b16 %v6746
    %v6928 = vunpack.c.l.b16 %v6747
    %v6929 = vunpack.c.h.b16 %v6747
    %v6930 = vunpack.c.l.b16 %v6748
    %v6931 = vunpack.c.h.b16 %v6748
    %v6932 = vunpack.c.l.b16 %v6749
    %v6933 = vunpack.c.h.b16 %v6749
    %v6934 = vunpack.c.l.b16 %v6750
    %v6935 = vunpack.c.h.b16 %v6750
    %v6936 = vunpack.c.l.b16 %v6751
    %v6937 = vunpack.c.h.b16 %v6751
    %v6938 = vunpack.c.l.b16 %v6752
    %v6939 = vunpack.c.h.b16 %v6752
    %v6940 = vunpack.c.l.b16 %v6753
    %v6941 = vunpack.c.h.b16 %v6753
    %v6942 = vunpack.c.l.b16 %v6754
    %v6943 = vunpack.c.h.b16 %v6754
    %v6944 = vunpack.c.l.b16 %v6755
    %v6945 = vunpack.c.h.b16 %v6755
    %v6946 = vunpack.c.l.b16 %v6756
    %v6947 = vunpack.c.h.b16 %v6756
    %v6948 = vunpack.c.l.b16 %v6757
    %v6949 = vunpack.c.h.b16 %v6757
    %v6950 = vunpack.c.l.b16 %v6758
    %v6951 = vunpack.c.h.b16 %v6758
    %v6952 = vunpack.c.l.b16 %v6759
    %v6953 = vunpack.c.h.b16 %v6759
    %v6954 = vunpack.c.l.b16 %v6760
    %v6955 = vunpack.c.h.b16 %v6760
    %v6956 = vunpack.c.l.b16 %v6761
    %v6957 = vunpack.c.h.b16 %v6761
    %v6958 = vunpack.c.l.b16 %v6762
    %v6959 = vunpack.c.h.b16 %v6762
    %v6960 = vunpack.c.l.b16 %v6763
    %v6961 = vunpack.c.h.b16 %v6763
    %v6962 = vunpack.c.l.b16 %v6764
    %v6963 = vunpack.c.h.b16 %v6764
    %v6964 = vunpack.c.l.b16 %v6765
    %v6965 = vunpack.c.h.b16 %v6765
    %v6966 = vunpack.c.l.b16 %v6766
    %v6967 = vunpack.c.h.b16 %v6766
    %v6968 = vunpack.c.l.b16 %v6767
    %v6969 = vunpack.c.h.b16 %v6767
    %v6970 = vunpack.c.l.b16 %v6768
    %v6971 = vunpack.c.h.b16 %v6768
    %v6972 = vunpack.c.l.b16 %v6769
    %v6973 = vunpack.c.h.b16 %v6769
    %v6974 = vpack.c.b16 %v6848, %v6846
    %v6975 = vpack.c.b16 %v6849, %v6847
    %v6976 = vpack.c.b16 %v6852, %v6850
    %v6977 = vpack.c.b16 %v6853, %v6851
    %v6978 = vpack.c.b16 %v6856, %v6854
    %v6979 = vpack.c.b16 %v6857, %v6855
    %v6980 = vpack.c.b16 %v6860, %v6858
    %v6981 = vpack.c.b16 %v6861, %v6859
    %v6982 = vpack.c.b16 %v6864, %v6862
    %v6983 = vpack.c.b16 %v6865, %v6863
    %v6984 = vpack.c.b16 %v6868, %v6866
    %v6985 = vpack.c.b16 %v6869, %v6867
    %v6986 = vpack.c.b16 %v6872, %v6870
    %v6987 = vpack.c.b16 %v6873, %v6871
    %v6988 = vpack.c.b16 %v6876, %v6874
    %v6989 = vpack.c.b16 %v6877, %v6875
    %v6990 = vpack.c.b16 %v6880, %v6878
    %v6991 = vpack.c.b16 %v6881, %v6879
    %v6992 = vpack.c.b16 %v6884, %v6882
    %v6993 = vpack.c.b16 %v6885, %v6883
    %v6994 = vpack.c.b16 %v6888, %v6886
    %v6995 = vpack.c.b16 %v6889, %v6887
    %v6996 = vpack.c.b16 %v6892, %v6890
    %v6997 = vpack.c.b16 %v6893, %v6891
    %v6998 = vpack.c.b16 %v6896, %v6894
    %v6999 = vpack.c.b16 %v6897, %v6895
    %v7000 = vpack.c.b16 %v6900, %v6898
    %v7001 = vpack.c.b16 %v6901, %v6899
    %v7002 = vpack.c.b16 %v6904, %v6902
    %v7003 = vpack.c.b16 %v6905, %v6903
    %v7004 = vpack.c.b16 %v6908, %v6906
    %v7005 = vpack.c.b16 %v6909, %v6907
    %v7006 = vpack.c.b16 %v6912, %v6910
    %v7007 = vpack.c.b16 %v6913, %v6911
    %v7008 = vpack.c.b16 %v6916, %v6914
    %v7009 = vpack.c.b16 %v6917, %v6915
    %v7010 = vpack.c.b16 %v6920, %v6918
    %v7011 = vpack.c.b16 %v6921, %v6919
    %v7012 = vpack.c.b16 %v6924, %v6922
    %v7013 = vpack.c.b16 %v6925, %v6923
    %v7014 = vpack.c.b16 %v6928, %v6926
    %v7015 = vpack.c.b16 %v6929, %v6927
    %v7016 = vpack.c.b16 %v6932, %v6930
    %v7017 = vpack.c.b16 %v6933, %v6931
    %v7018 = vpack.c.b16 %v6936, %v6934
    %v7019 = vpack.c.b16 %v6937, %v6935
    %v7020 = vpack.c.b16 %v6940, %v6938
    %v7021 = vpack.c.b16 %v6941, %v6939
    %v7022 = vpack.c.b16 %v6944, %v6942
    %v7023 = vpack.c.b16 %v6945, %v6943
    %v7024 = vpack.c.b16 %v6948, %v6946
    %v7025 = vpack.c.b16 %v6949, %v6947
    %v7026 = vpack.c.b16 %v6952, %v6950
    %v7027 = vpack.c.b16 %v6953, %v6951
    %v7028 = vpack.c.b16 %v6956, %v6954
    %v7029 = vpack.c.b16 %v6957, %v6955
    %v7030 = vpack.c.b16 %v6960, %v6958
    %v7031 = vpack.c.b16 %v6961, %v6959
    %v7032 = vpack.c.b16 %v6964, %v6962
    %v7033 = vpack.c.b16 %v6965, %v6963
    %v7034 = vpack.c.b16 %v6968, %v6966
    %v7035 = vpack.c.b16 %v6969, %v6967
    %v7036 = vpack.c.b16 %v6972, %v6970
    %v7037 = vpack.c.b16 %v6973, %v6971
    %7102 = vmatprep.subr.bf16.mxu0 %v6975
    %7103 = vmatpush1.bf16.msra.mxu0 %v6974
    %7104 = vmatprep.subr.bf16.mxu0 %v6977
    %7105 = vmatpush1.bf16.msra.mxu0 %v6976
    %7106 = vmatprep.subr.bf16.mxu0 %v6979
    %7107 = vmatpush1.bf16.msra.mxu0 %v6978
    %7108 = vmatprep.subr.bf16.mxu0 %v6981
    %7109 = vmatpush1.bf16.msra.mxu0 %v6980
    %7110 = vmatprep.subr.bf16.mxu0 %v6983
    %7111 = vmatpush1.bf16.msra.mxu0 %v6982
    %7112 = vmatprep.subr.bf16.mxu0 %v6985
    %7113 = vmatpush1.bf16.msra.mxu0 %v6984
    %7114 = vmatprep.subr.bf16.mxu0 %v6987
    %7115 = vmatpush1.bf16.msra.mxu0 %v6986
    %7116 = vmatprep.subr.bf16.mxu0 %v6989
    %7117 = vmatpush1.bf16.msra.mxu0 %v6988
    %7118 = vmatprep.subr.bf16.mxu0 %v6991
    %7119 = vmatpush1.bf16.msra.mxu0 %v6990
    %7120 = vmatprep.subr.bf16.mxu0 %v6993
    %7121 = vmatpush1.bf16.msra.mxu0 %v6992
    %7122 = vmatprep.subr.bf16.mxu0 %v6995
    %7123 = vmatpush1.bf16.msra.mxu0 %v6994
    %7124 = vmatprep.subr.bf16.mxu0 %v6997
    %7125 = vmatpush1.bf16.msra.mxu0 %v6996
    %7126 = vmatprep.subr.bf16.mxu0 %v6999
    %7127 = vmatpush1.bf16.msra.mxu0 %v6998
    %7128 = vmatprep.subr.bf16.mxu0 %v7001
    %7129 = vmatpush1.bf16.msra.mxu0 %v7000
    %7130 = vmatprep.subr.bf16.mxu0 %v7003
    %7131 = vmatpush1.bf16.msra.mxu0 %v7002
    %7132 = vmatprep.subr.bf16.mxu0 %v7005
    %7133 = vmatpush1.bf16.msra.mxu0 %v7004
    %7134 = vmatprep.mubr.bf16.mxu0 %v6703
    %7135 = vmatmul.mubr.bf16.gmra.mrb[0].mxu0 %v6702
    %v7136 = vpop.f32.mrb[0].mxu0
    %v7137 = vadd.f32 %v6775, %v7136
    %v7138 = vpop.f32.mrb[0].mxu0
    %v7139 = vadd.f32 %v6779, %v7138
    %v7140 = vpop.f32.mrb[0].mxu0
    %v7141 = vpop.f32.mrb[0].mxu0
    %7142 = vdwg.mxu0
    %7143 = vmatprep.subr.bf16.mxu0 %v7007
    %7144 = vmatpush1.bf16.msra.mxu0 %v7006
    %7145 = vmatprep.subr.bf16.mxu0 %v7009
    %7146 = vmatpush1.bf16.msra.mxu0 %v7008
    %7147 = vmatprep.subr.bf16.mxu0 %v7011
    %7148 = vmatpush1.bf16.msra.mxu0 %v7010
    %7149 = vmatprep.subr.bf16.mxu0 %v7013
    %7150 = vmatpush1.bf16.msra.mxu0 %v7012
    %7151 = vmatprep.subr.bf16.mxu0 %v7015
    %7152 = vmatpush1.bf16.msra.mxu0 %v7014
    %7153 = vmatprep.subr.bf16.mxu0 %v7017
    %7154 = vmatpush1.bf16.msra.mxu0 %v7016
    %7155 = vmatprep.subr.bf16.mxu0 %v7019
    %7156 = vmatpush1.bf16.msra.mxu0 %v7018
    %7157 = vmatprep.subr.bf16.mxu0 %v7021
    %7158 = vmatpush1.bf16.msra.mxu0 %v7020
    %7159 = vmatprep.subr.bf16.mxu0 %v7023
    %7160 = vmatpush1.bf16.msra.mxu0 %v7022
    %7161 = vmatprep.subr.bf16.mxu0 %v7025
    %7162 = vmatpush1.bf16.msra.mxu0 %v7024
    %7163 = vmatprep.subr.bf16.mxu0 %v7027
    %7164 = vmatpush1.bf16.msra.mxu0 %v7026
    %7165 = vmatprep.subr.bf16.mxu0 %v7029
    %7166 = vmatpush1.bf16.msra.mxu0 %v7028
    %7167 = vmatprep.subr.bf16.mxu0 %v7031
    %7168 = vmatpush1.bf16.msra.mxu0 %v7030
    %7169 = vmatprep.subr.bf16.mxu0 %v7033
    %7170 = vmatpush1.bf16.msra.mxu0 %v7032
    %7171 = vmatprep.subr.bf16.mxu0 %v7035
    %7172 = vmatpush1.bf16.msra.mxu0 %v7034
    %7173 = vmatprep.subr.bf16.mxu0 %v7037
    %7174 = vmatpush1.bf16.msra.mxu0 %v7036
    %7175 = vmatprep.mubr.bf16.mxu0 %v6705
    %7176 = vmatmul.mubr.bf16.gmra.mrb[0].mxu0 %v6704
    %v7177 = vpop.f32.mrb[0].mxu0
    %v7178 = vadd.f32 %v7137, %v7177
    %v7179 = vpop.f32.mrb[0].mxu0
    %v7180 = vadd.f32 %v7139, %v7179
    %v7181 = vpop.f32.mrb[0].mxu0
    %v7182 = vpop.f32.mrb[0].mxu0
    %7183 = vdwg.mxu0
    %vm7184 = vcmp.ge.f32.partialorder %v7178, 0.0
    %vm7185 = vcmp.ge.f32.partialorder %v7180, 0.0
    %v7186 = vstv %s250
    %v7187 = vmul.f32 %v7186, %v7178
    %v7188 = vmul.f32 %v7186, %v7180
    %v7189 = vsel %vm7184, %v7178, %v7187
    %v7190 = vsel %vm7185, %v7180, %v7188
    %v7191 = vpack.c.bf16 %v7189, %v7189
    %v7192 = vpack.c.bf16 %v7190, %v7190
    %v7193 = vld [vmem:[#allocation19] sm:$0xf]
    %v7194 = vld [vmem:[#allocation19 + $0x4] sm:$0xf]
    %v7195 = vld [vmem:[#allocation19 + $0x8] sm:$0xf]
    %v7196 = vld [vmem:[#allocation19 + $0xc] sm:$0xf]
    %v7197 = vld [vmem:[#allocation19 + $0x10] sm:$0xf]
    %v7198 = vld [vmem:[#allocation19 + $0x14] sm:$0xf]
    %v7199 = vld [vmem:[#allocation19 + $0x18] sm:$0xf]
    %v7200 = vld [vmem:[#allocation19 + $0x1c] sm:$0xf]
    %v7201 = vld [vmem:[#allocation19 + $0x20] sm:$0xf]
    %v7202 = vld [vmem:[#allocation19 + $0x24] sm:$0xf]
    %v7203 = vld [vmem:[#allocation19 + $0x28] sm:$0xf]
    %v7204 = vld [vmem:[#allocation19 + $0x2c] sm:$0xf]
    %v7205 = vld [vmem:[#allocation19 + $0x30] sm:$0xf]
    %v7206 = vld [vmem:[#allocation19 + $0x34] sm:$0xf]
    %v7207 = vld [vmem:[#allocation19 + $0x38] sm:$0xf]
    %v7208 = vld [vmem:[#allocation19 + $0x3c] sm:$0xf]
    %v7209 = vld [vmem:[#allocation19 + $0x40] sm:$0xf]
    %v7210 = vld [vmem:[#allocation19 + $0x44] sm:$0xf]
    %v7211 = vld [vmem:[#allocation19 + $0x48] sm:$0xf]
    %v7212 = vld [vmem:[#allocation19 + $0x4c] sm:$0xf]
    %v7213 = vld [vmem:[#allocation19 + $0x50] sm:$0xf]
    %v7214 = vld [vmem:[#allocation19 + $0x54] sm:$0xf]
    %v7215 = vld [vmem:[#allocation19 + $0x58] sm:$0xf]
    %v7216 = vld [vmem:[#allocation19 + $0x5c] sm:$0xf]
    %v7217 = vld [vmem:[#allocation19 + $0x60] sm:$0xf]
    %v7218 = vld [vmem:[#allocation19 + $0x64] sm:$0xf]
    %v7219 = vld [vmem:[#allocation19 + $0x68] sm:$0xf]
    %v7220 = vld [vmem:[#allocation19 + $0x6c] sm:$0xf]
    %v7221 = vld [vmem:[#allocation19 + $0x70] sm:$0xf]
    %v7222 = vld [vmem:[#allocation19 + $0x74] sm:$0xf]
    %v7223 = vld [vmem:[#allocation19 + $0x78] sm:$0xf]
    %v7224 = vld [vmem:[#allocation19 + $0x7c] sm:$0xf]
    %v7225 = vld [vmem:[#allocation20] sm:$0x1]
    %v7227 = vlaneseq
    %v7228 = vshrl.u32 %v7227, 7
    %v7229 = vsub.s32 0, %v7228
    %v7230 = vrot.slane %v7225, %v7229
    %v7264 = vunpack.c.l.b16 %v7193
    %v7265 = vunpack.c.l.b16 %v7194
    %v7266 = vunpack.c.l.b16 %v7195
    %v7267 = vunpack.c.l.b16 %v7196
    %v7268 = vunpack.c.l.b16 %v7197
    %v7269 = vunpack.c.l.b16 %v7198
    %v7270 = vunpack.c.l.b16 %v7199
    %v7271 = vunpack.c.l.b16 %v7200
    %v7272 = vunpack.c.l.b16 %v7201
    %v7273 = vunpack.c.l.b16 %v7202
    %v7274 = vunpack.c.l.b16 %v7203
    %v7275 = vunpack.c.l.b16 %v7204
    %v7276 = vunpack.c.l.b16 %v7205
    %v7277 = vunpack.c.l.b16 %v7206
    %v7278 = vunpack.c.l.b16 %v7207
    %v7279 = vunpack.c.l.b16 %v7208
    %v7280 = vunpack.c.l.b16 %v7209
    %v7281 = vunpack.c.l.b16 %v7210
    %v7282 = vunpack.c.l.b16 %v7211
    %v7283 = vunpack.c.l.b16 %v7212
    %v7284 = vunpack.c.l.b16 %v7213
    %v7285 = vunpack.c.l.b16 %v7214
    %v7286 = vunpack.c.l.b16 %v7215
    %v7287 = vunpack.c.l.b16 %v7216
    %v7288 = vunpack.c.l.b16 %v7217
    %v7289 = vunpack.c.l.b16 %v7218
    %v7290 = vunpack.c.l.b16 %v7219
    %v7291 = vunpack.c.l.b16 %v7220
    %v7292 = vunpack.c.l.b16 %v7221
    %v7293 = vunpack.c.l.b16 %v7222
    %v7294 = vunpack.c.l.b16 %v7223
    %v7295 = vunpack.c.l.b16 %v7224
    %v7296 = vpack.c.b16 %v7265, %v7264
    %v7297 = vpack.c.b16 %v7267, %v7266
    %v7298 = vpack.c.b16 %v7269, %v7268
    %v7299 = vpack.c.b16 %v7271, %v7270
    %v7300 = vpack.c.b16 %v7273, %v7272
    %v7301 = vpack.c.b16 %v7275, %v7274
    %v7302 = vpack.c.b16 %v7277, %v7276
    %v7303 = vpack.c.b16 %v7279, %v7278
    %v7304 = vpack.c.b16 %v7281, %v7280
    %v7305 = vpack.c.b16 %v7283, %v7282
    %v7306 = vpack.c.b16 %v7285, %v7284
    %v7307 = vpack.c.b16 %v7287, %v7286
    %v7308 = vpack.c.b16 %v7289, %v7288
    %v7309 = vpack.c.b16 %v7291, %v7290
    %v7310 = vpack.c.b16 %v7293, %v7292
    %v7311 = vpack.c.b16 %v7295, %v7294
    %7328 = vmatprep.subr.bf16.mxu0 0
    %7329 = vmatpush1.bf16.msra.mxu0 %v7296
    %7330 = vmatprep.subr.bf16.mxu0 0
    %7331 = vmatpush1.bf16.msra.mxu0 %v7297
    %7332 = vmatprep.subr.bf16.mxu0 0
    %7333 = vmatpush1.bf16.msra.mxu0 %v7298
    %7334 = vmatprep.subr.bf16.mxu0 0
    %7335 = vmatpush1.bf16.msra.mxu0 %v7299
    %7336 = vmatprep.subr.bf16.mxu0 0
    %7337 = vmatpush1.bf16.msra.mxu0 %v7300
    %7338 = vmatprep.subr.bf16.mxu0 0
    %7339 = vmatpush1.bf16.msra.mxu0 %v7301
    %7340 = vmatprep.subr.bf16.mxu0 0
    %7341 = vmatpush1.bf16.msra.mxu0 %v7302
    %7342 = vmatprep.subr.bf16.mxu0 0
    %7343 = vmatpush1.bf16.msra.mxu0 %v7303
    %7344 = vmatprep.subr.bf16.mxu0 0
    %7345 = vmatpush1.bf16.msra.mxu0 %v7304
    %7346 = vmatprep.subr.bf16.mxu0 0
    %7347 = vmatpush1.bf16.msra.mxu0 %v7305
    %7348 = vmatprep.subr.bf16.mxu0 0
    %7349 = vmatpush1.bf16.msra.mxu0 %v7306
    %7350 = vmatprep.subr.bf16.mxu0 0
    %7351 = vmatpush1.bf16.msra.mxu0 %v7307
    %7352 = vmatprep.subr.bf16.mxu0 0
    %7353 = vmatpush1.bf16.msra.mxu0 %v7308
    %7354 = vmatprep.subr.bf16.mxu0 0
    %7355 = vmatpush1.bf16.msra.mxu0 %v7309
    %7356 = vmatprep.subr.bf16.mxu0 0
    %7357 = vmatpush1.bf16.msra.mxu0 %v7310
    %7358 = vmatprep.subr.bf16.mxu0 0
    %7359 = vmatpush1.bf16.msra.mxu0 %v7311
    %7360 = vmatprep.mubr.bf16.mxu0 %v7192
    %7361 = vmatmul.mubr.bf16.gmra.mrb[0].mxu0 %v7191
    %v7362 = vpop.f32.mrb[0].mxu0
    %v7363 = vadd.f32 %v7230, %v7362
    %v7364 = vpop.f32.mrb[0].mxu0
    %v7365 = vpop.f32.mrb[0].mxu0
    %v7366 = vpop.f32.mrb[0].mxu0
    %7367 = vdwg.mxu0
    %vm7368 = vcmp.ge.f32.partialorder %v7363, 0.0
    %v7369 = vstv %s251
    %v7370 = vmul.f32 %v7369, %v7363
    %v7371 = vsel %vm7368, %v7363, %v7370
    %v7372 = vpack.c.bf16 %v7371, %v7371
    %v7373 = vld [vmem:[%s15] sm:$0xf]
    %v7374 = vld [vmem:[%s15 + $0x4] sm:$0xf]
    %v7375 = vld [vmem:[%s15 + $0x8] sm:$0xf]
    %v7376 = vld [vmem:[%s15 + $0xc] sm:$0xf]
    %v7377 = vld [vmem:[%s15 + $0x10] sm:$0xf]
    %v7378 = vld [vmem:[%s15 + $0x14] sm:$0xf]
    %v7379 = vld [vmem:[%s15 + $0x18] sm:$0xf]
    %v7380 = vld [vmem:[%s15 + $0x1c] sm:$0xf]
    %v7381 = vld [vmem:[%s15 + $0x20] sm:$0xf]
    %v7382 = vld [vmem:[%s15 + $0x24] sm:$0xf]
    %v7383 = vld [vmem:[%s15 + $0x28] sm:$0xf]
    %v7384 = vld [vmem:[%s15 + $0x2c] sm:$0xf]
    %v7385 = vld [vmem:[%s15 + $0x30] sm:$0xf]
    %v7386 = vld [vmem:[%s15 + $0x34] sm:$0xf]
    %v7387 = vld [vmem:[%s15 + $0x38] sm:$0xf]
    %v7388 = vld [vmem:[%s15 + $0x3c] sm:$0xf]
    %v7389 = vld [vmem:[#allocation22] sm:$0x1]
    %v7391 = vlaneseq
    %v7392 = vshrl.u32 %v7391, 7
    %v7393 = vsub.s32 0, %v7392
    %v7394 = vrot.slane %v7389, %v7393
    %v7412 = vunpack.c.l.b16 %v7373
    %v7413 = vunpack.c.l.b16 %v7374
    %v7414 = vunpack.c.l.b16 %v7375
    %v7415 = vunpack.c.l.b16 %v7376
    %v7416 = vunpack.c.l.b16 %v7377
    %v7417 = vunpack.c.l.b16 %v7378
    %v7418 = vunpack.c.l.b16 %v7379
    %v7419 = vunpack.c.l.b16 %v7380
    %v7420 = vunpack.c.l.b16 %v7381
    %v7421 = vunpack.c.l.b16 %v7382
    %v7422 = vunpack.c.l.b16 %v7383
    %v7423 = vunpack.c.l.b16 %v7384
    %v7424 = vunpack.c.l.b16 %v7385
    %v7425 = vunpack.c.l.b16 %v7386
    %v7426 = vunpack.c.l.b16 %v7387
    %v7427 = vunpack.c.l.b16 %v7388
    %v7428 = vpack.c.b16 %v7413, %v7412
    %v7429 = vpack.c.b16 %v7415, %v7414
    %v7430 = vpack.c.b16 %v7417, %v7416
    %v7431 = vpack.c.b16 %v7419, %v7418
    %v7432 = vpack.c.b16 %v7421, %v7420
    %v7433 = vpack.c.b16 %v7423, %v7422
    %v7434 = vpack.c.b16 %v7425, %v7424
    %v7435 = vpack.c.b16 %v7427, %v7426
    %7444 = vmatprep.subr.bf16.mxu0 0
    %7445 = vmatpush1.bf16.msra.mxu0 %v7428
    %7446 = vmatprep.subr.bf16.mxu0 0
    %7447 = vmatpush1.bf16.msra.mxu0 %v7429
    %7448 = vmatprep.subr.bf16.mxu0 0
    %7449 = vmatpush1.bf16.msra.mxu0 %v7430
    %7450 = vmatprep.subr.bf16.mxu0 0
    %7451 = vmatpush1.bf16.msra.mxu0 %v7431
    %7452 = vmatprep.subr.bf16.mxu0 0
    %7453 = vmatpush1.bf16.msra.mxu0 %v7432
    %7454 = vmatprep.subr.bf16.mxu0 0
    %7455 = vmatpush1.bf16.msra.mxu0 %v7433
    %7456 = vmatprep.subr.bf16.mxu0 0
    %7457 = vmatpush1.bf16.msra.mxu0 %v7434
    %7458 = vmatprep.subr.bf16.mxu0 0
    %7459 = vmatpush1.bf16.msra.mxu0 %v7435
    %7460 = vmatprep.subr.bf16.mxu0 0
    %7461 = vmatpush1.bf16.msra.mxu0 0
    %7462 = vmatprep.subr.bf16.mxu0 0
    %7463 = vmatpush1.bf16.msra.mxu0 0
    %7464 = vmatprep.subr.bf16.mxu0 0
    %7465 = vmatpush1.bf16.msra.mxu0 0
    %7466 = vmatprep.subr.bf16.mxu0 0
    %7467 = vmatpush1.bf16.msra.mxu0 0
    %7468 = vmatprep.subr.bf16.mxu0 0
    %7469 = vmatpush1.bf16.msra.mxu0 0
    %7470 = vmatprep.subr.bf16.mxu0 0
    %7471 = vmatpush1.bf16.msra.mxu0 0
    %7472 = vmatprep.subr.bf16.mxu0 0
    %7473 = vmatpush1.bf16.msra.mxu0 0
    %7474 = vmatprep.subr.bf16.mxu0 0
    %7475 = vmatpush1.bf16.msra.mxu0 0
    %7476 = vmatprep.mubr.bf16.mxu0 0
    %7477 = vmatmul.mubr.bf16.gmra.mrb[0].mxu0 %v7372
    %v7478 = vpop.f32.mrb[0].mxu0
    %v7479 = vadd.f32 %v7394, %v7478
    %v7480 = vpop.f32.mrb[0].mxu0
    %v7481 = vpop.f32.mrb[0].mxu0
    %v7482 = vpop.f32.mrb[0].mxu0
    %7483 = vdwg.mxu0
    %vm7484 = vcmp.ge.f32.partialorder %v7479, 0.0
    %v7485 = vstv %s252
    %v7486 = vmul.f32 %v7485, %v7479
    %v7487 = vsel %vm7484, %v7479, %v7486
    %v7488 = vpack.c.bf16 %v7487, %v7487
    %v7489 = vld [vmem:[%s17] sm:$0xf]
    %v7490 = vld [vmem:[%s17 + $0x4] sm:$0xf]
    %v7491 = vld [vmem:[%s17 + $0x8] sm:$0xf]
    %v7492 = vld [vmem:[%s17 + $0xc] sm:$0xf]
    %v7493 = vld [vmem:[%s17 + $0x10] sm:$0xf]
    %v7494 = vld [vmem:[%s17 + $0x14] sm:$0xf]
    %v7495 = vld [vmem:[%s17 + $0x18] sm:$0xf]
    %v7496 = vld [vmem:[%s17 + $0x1c] sm:$0xf]
    %v7497 = vld [vmem:[#allocation23] sm:$0x1]
    %v7499 = vlaneseq
    %v7500 = vshrl.u32 %v7499, 7
    %v7501 = vsub.s32 0, %v7500
    %v7502 = vrot.slane %v7497, %v7501
    %v7512 = vunpack.c.l.b16 %v7489
    %v7513 = vunpack.c.l.b16 %v7490
    %v7514 = vunpack.c.l.b16 %v7491
    %v7515 = vunpack.c.l.b16 %v7492
    %v7516 = vunpack.c.l.b16 %v7493
    %v7517 = vunpack.c.l.b16 %v7494
    %v7518 = vunpack.c.l.b16 %v7495
    %v7519 = vunpack.c.l.b16 %v7496
    %v7520 = vpack.c.b16 %v7513, %v7512
    %v7521 = vpack.c.b16 %v7515, %v7514
    %v7522 = vpack.c.b16 %v7517, %v7516
    %v7523 = vpack.c.b16 %v7519, %v7518
    %v7529 = vsel %vm6313, %v7488, 0
    %7531 = vmatprep.subr.bf16.mxu0 0
    %7532 = vmatpush1.bf16.msra.mxu0 %v7520
    %7533 = vmatprep.subr.bf16.mxu0 0
    %7534 = vmatpush1.bf16.msra.mxu0 %v7521
    %7535 = vmatprep.subr.bf16.mxu0 0
    %7536 = vmatpush1.bf16.msra.mxu0 %v7522
    %7537 = vmatprep.subr.bf16.mxu0 0
    %7538 = vmatpush1.bf16.msra.mxu0 %v7523
    %7539 = vmatprep.subr.bf16.mxu0 0
    %7540 = vmatpush1.bf16.msra.mxu0 0
    %7541 = vmatprep.subr.bf16.mxu0 0
    %7542 = vmatpush1.bf16.msra.mxu0 0
    %7543 = vmatprep.subr.bf16.mxu0 0
    %7544 = vmatpush1.bf16.msra.mxu0 0
    %7545 = vmatprep.subr.bf16.mxu0 0
    %7546 = vmatpush1.bf16.msra.mxu0 0
    %7547 = vmatprep.subr.bf16.mxu0 0
    %7548 = vmatpush1.bf16.msra.mxu0 0
    %7549 = vmatprep.subr.bf16.mxu0 0
    %7550 = vmatpush1.bf16.msra.mxu0 0
    %7551 = vmatprep.subr.bf16.mxu0 0
    %7552 = vmatpush1.bf16.msra.mxu0 0
    %7553 = vmatprep.subr.bf16.mxu0 0
    %7554 = vmatpush1.bf16.msra.mxu0 0
    %7555 = vmatprep.subr.bf16.mxu0 0
    %7556 = vmatpush1.bf16.msra.mxu0 0
    %7557 = vmatprep.subr.bf16.mxu0 0
    %7558 = vmatpush1.bf16.msra.mxu0 0
    %7559 = vmatprep.subr.bf16.mxu0 0
    %7560 = vmatpush1.bf16.msra.mxu0 0
    %7561 = vmatprep.subr.bf16.mxu0 0
    %7562 = vmatpush1.bf16.msra.mxu0 0
    %7563 = vmatprep.mubr.bf16.mxu0 0
    %7564 = vmatmul.mubr.bf16.gmra.mrb[0].mxu0 %v7529
    %v7565 = vpop.f32.mrb[0].mxu0
    %v7566 = vadd.f32 %v7502, %v7565
    %v7567 = vpop.f32.mrb[0].mxu0
    %v7568 = vpop.f32.mrb[0].mxu0
    %v7569 = vpop.f32.mrb[0].mxu0
    %7570 = vdwg.mxu0
    %vm7571 = vcmask 15360
    %7572 = vst.msk [vmem:[%s20] sm:$0xff] %vm7571, %v7566
    // Predicated region
    $region142: #{tpu_custom_call.1} parent=1 // pred_check
      _
    $region143: #{tpu_custom_call.1} parent=1 // pred_check_branch
      %7574 = sbr.rel (0) target = $region145
    $region144: #{tpu_custom_call.1} parent=1 // pred_region
      _
    $region145: #{tpu_custom_call.1} parent=1 // pred_fallthru
      _
    // Predicated region
    $region146: #{tpu_custom_call.1} parent=1 // pred_check
      _
    $region147: #{tpu_custom_call.1} parent=1 // pred_check_branch
      %7576 = sbr.rel (0) target = $region149
    $region148: #{tpu_custom_call.1} parent=1 // pred_region
      _
    $region149: #{tpu_custom_call.1} parent=1 // pred_fallthru
      _
    %7577 = vsyncpa [#allocation3], 1
    %7578 = vsyncpa [#allocation6], 1
    %7579 = vsyncpa [#allocation9], 1
    %7580 = vsyncpa [#allocation12], 1
    %7581 = vsyncpa [#allocation15], 1
    %7582 = vsyncpa [#allocation18], 1
    %7583 = vsyncpa [#allocation21], 1
    %7584 = vsyncpa [#allocation24], 1
    %7585 = vsyncpa [#allocation4], 1

</llo_original>
